<compile_context>
chip_gen: v6e
topology: v6e:2x2x1
jax: 0.10.0
libtpu: 0.0.40
codegen_flags: <defaults>
</compile_context>

<pallas_src>
import jax
import jax.numpy as jnp
from jax.experimental import pallas as pl
from jax.experimental.pallas import tpu as pltpu

EPS = 1e-5
VMEM_LIMIT = 48 * 1024 * 1024     # <= v7x's 64 MiB physical VMEM

# ---- head (fc1) contraction tiling / padding constants -----------------
K_FC = 32 * 23 * 23               # 16928
TK = 4352                         # 34 * 128  (K tile, multiple of 128)
K_STEPS = 4
K_PAD = TK * K_STEPS              # 17408
DH_PAD = 128                      # fc1 hidden 120 -> 128 lanes
C_PAD = 128                       # classes 2 -> 128 lanes
NEG_BIG = -1e30                   # bias for padded class logits

CONV_TM = 512                     # pooled-output rows per conv grid step


# ---------------------------------------------------------------------------
# Kernel 1: fused conv (window matmul) + folded-BN shift + ReLU + 2x2 maxpool
# ---------------------------------------------------------------------------
def conv_bn_relu_pool_kernel(p_ref, w_ref, shift_ref, o_ref):
    # p_ref:     (TM, 16*Cin)      bf16   4x4 / stride-2 input windows
    # w_ref:     (4, 16*Cin, Cout) bf16   zero-padded, BN-folded weight per pool offset
    # shift_ref: (1, Cout)         f32    folded conv bias + BN shift
    # o_ref:     (TM, Cout)        bf16   pooled activations
    p = p_ref[...]
    y = jnp.dot(p, w_ref[0], preferred_element_type=jnp.float32)
    for j in range(1, 4):
        y = jnp.maximum(y, jnp.dot(p, w_ref[j],
                                   preferred_element_type=jnp.float32))
    # max_j relu(y_j + shift) == relu(max_j y_j + shift)  (shift shared by branches)
    o_ref[...] = jnp.maximum(y + shift_ref[...], 0.0).astype(o_ref.dtype)


# ---------------------------------------------------------------------------
# Kernel 2: K-tiled fc1 + BN1d (folded) + ReLU + fc2 + softmax
# ---------------------------------------------------------------------------
def head_kernel(x_ref, w1_ref, t3_ref, w2_ref, b2_ref, o_ref, acc_ref):
    k = pl.program_id(0)

    @pl.when(k == 0)
    def _init():
        acc_ref[...] = jnp.zeros_like(acc_ref)

    acc_ref[...] += jnp.dot(x_ref[...], w1_ref[...],
                            preferred_element_type=jnp.float32)

    @pl.when(k == pl.num_programs(0) - 1)
    def _epilogue():
        h = jnp.maximum(acc_ref[...] + t3_ref[...], 0.0)      # fc1 + BN1d + ReLU
        # TODO(synk): Dropout(0.5) is identity in eval mode; training-mode
        # dropout and BatchNorm batch statistics are not implemented.
        logits = jnp.dot(h.astype(jnp.bfloat16), w2_ref[...],
                         preferred_element_type=jnp.float32) + b2_ref[...]
        m = jnp.max(logits, axis=1, keepdims=True)
        e = jnp.exp(logits - m)
        o_ref[...] = e / jnp.sum(e, axis=1, keepdims=True)


# ---------------------------------------------------------------------------
# JAX glue: window-patch construction + pallas_call wrappers
# ---------------------------------------------------------------------------
def conv_bn_relu_pool(x_nhwc, w4, shift, *, tm=CONV_TM):
    """x_nhwc bf16 (N,H,W,Cin); w4 bf16 (4,16*Cin,Cout); shift f32 (1,Cout)."""
    N, H, W, Cin = x_nhwc.shape
    Hp, Wp = (H - 2) // 2, (W - 2) // 2       # conv(3x3, VALID) + MaxPool2d(2,2)
    cout = w4.shape[-1]

    # One 4x4-window / stride-2 patch matrix covers all four pool offsets.
    cols = []
    for di in range(4):
        for dj in range(4):
            cols.append(x_nhwc[:, di:di + 2 * Hp:2, dj:dj + 2 * Wp:2, :])
    pm = jnp.stack(cols, axis=3).reshape(N * Hp * Wp, 16 * Cin)

    M, K4 = pm.shape
    Mp = ((M + tm - 1) // tm) * tm
    pm = jnp.pad(pm, ((0, Mp - M), (0, 0)))

    out = pl.pallas_call(
        conv_bn_relu_pool_kernel,
        out_shape=jax.ShapeDtypeStruct((Mp, cout), jnp.bfloat16),
        grid=(Mp // tm,),
        in_specs=[pl.BlockSpec((tm, K4), lambda i: (i, 0)),
                  pl.BlockSpec((4, K4, cout), lambda i: (0, 0, 0)),
                  pl.BlockSpec((1, cout), lambda i: (0, 0))],
        out_specs=pl.BlockSpec((tm, cout), lambda i: (i, 0)),
        compiler_params=pltpu.CompilerParams(
            dimension_semantics=("parallel",),
            vmem_limit_bytes=VMEM_LIMIT),
    )(pm, w4, shift)
    return out[:M].reshape(N, Hp, Wp, cout)


def head(x_flat, w1, t3, w2, b2):
    """x_flat bf16 (N, K_PAD); w1 bf16 (K_PAD, DH_PAD); w2 bf16 (DH_PAD, C_PAD)."""
    N = x_flat.shape[0]
    return pl.pallas_call(
        head_kernel,
        out_shape=jax.ShapeDtypeStruct((N, C_PAD), jnp.float32),
        grid=(K_STEPS,),
        in_specs=[pl.BlockSpec((N, TK), lambda k: (0, k)),
                  pl.BlockSpec((TK, DH_PAD), lambda k: (k, 0)),
                  pl.BlockSpec((1, DH_PAD), lambda k: (0, 0)),
                  pl.BlockSpec((DH_PAD, C_PAD), lambda k: (0, 0)),
                  pl.BlockSpec((1, C_PAD), lambda k: (0, 0))],
        out_specs=pl.BlockSpec((N, C_PAD), lambda k: (0, 0)),
        scratch_shapes=[pltpu.VMEM((N, DH_PAD), jnp.float32)],
        compiler_params=pltpu.CompilerParams(
            dimension_semantics=("arbitrary",),
            vmem_limit_bytes=VMEM_LIMIT),
    )(x_flat, w1, t3, w2, b2)


def gender_classifier_forward(x_nchw, prep):
    x = jnp.transpose(x_nchw, (0, 2, 3, 1)).astype(jnp.bfloat16)    # NCHW -> NHWC
    x = conv_bn_relu_pool(x, prep["c1_w"], prep["c1_shift"])        # (N,49,49,16)
    x = conv_bn_relu_pool(x, prep["c2_w"], prep["c2_shift"])        # (N,23,23,32)
    N = x.shape[0]
    # fc1 rows were permuted to NHWC flatten order at prep time -> flatten directly.
    x = x.reshape(N, K_FC)
    x = jnp.pad(x, ((0, 0), (0, K_PAD - K_FC)))
    probs = head(x, prep["fc1_w"], prep["fc1_t"], prep["fc2_w"], prep["fc2_b"])
    return probs[:, :2]


# ---------------------------------------------------------------------------
# One-time parameter preparation (BN folding, padding, bf16 cast, permutation)
# ---------------------------------------------------------------------------
def prepare_params(p):
    prep = {}
    for idx, bn in ((1, "bn1"), (2, "bn2")):
        w = p[f"conv{idx}_w"]                       # (3,3,Cin,Cout) HWIO
        cin, cout = w.shape[2], w.shape[3]
        scale = p[f"{bn}_g"] / jnp.sqrt(p[f"{bn}_rv"] + EPS)
        shift = (p[f"conv{idx}_b"] - p[f"{bn}_rm"]) * scale + p[f"{bn}_b"]
        wf = w * scale                              # fold BN scale per out-channel
        branches = []
        for a in (0, 1):                            # 2x2 pool offsets
            for b in (0, 1):
                wpad = jnp.zeros((4, 4, cin, cout), jnp.float32)
                wpad = wpad.at[a:a + 3, b:b + 3, :, :].set(wf)
                branches.append(wpad.reshape(16 * cin, cout))
        prep[f"c{idx}_w"] = jnp.stack(branches, 0).astype(jnp.bfloat16)
        prep[f"c{idx}_shift"] = shift.reshape(1, cout).astype(jnp.float32)

    s3 = p["bn3_g"] / jnp.sqrt(p["bn3_rv"] + EPS)
    t3 = (p["fc1_b"] - p["bn3_rm"]) * s3 + p["bn3_b"]
    w1 = p["fc1_w"] * s3[None, :]                   # fold BN1d scale into fc1
    # permute rows from torch (C,H,W) flatten order to NHWC (H,W,C) order
    w1 = w1.reshape(32, 23, 23, 120).transpose(1, 2, 0, 3).reshape(K_FC, 120)
    w1 = jnp.pad(w1, ((0, K_PAD - K_FC), (0, DH_PAD - 120)))
    prep["fc1_w"] = w1.astype(jnp.bfloat16)
    prep["fc1_t"] = jnp.pad(t3, (0, DH_PAD - 120)).reshape(1, DH_PAD)

    w2 = jnp.pad(p["fc2_w"], ((0, DH_PAD - 120), (0, C_PAD - 2)))
    prep["fc2_w"] = w2.astype(jnp.bfloat16)
    b2 = jnp.pad(p["fc2_b"], (0, C_PAD - 2), constant_values=NEG_BIG)
    prep["fc2_b"] = b2.reshape(1, C_PAD)
    return prep


# ---------------------------------------------------------------------------
# Pure-JAX f32 reference (for correctness check)
# ---------------------------------------------------------------------------
def reference_forward(x_nchw, p):
    x = jnp.transpose(x_nchw, (0, 2, 3, 1))

    def block(x, w, b, g, be, rm, rv):
        y = jax.lax.conv_general_dilated(
            x, w, (1, 1), "VALID",
            dimension_numbers=("NHWC", "HWIO", "NHWC")) + b
        y = (y - rm) / jnp.sqrt(rv + EPS) * g + be
        y = jnp.maximum(y, 0.0)
        return jax.lax.reduce_window(y, -jnp.inf, jax.lax.max,
                                     (1, 2, 2, 1), (1, 2, 2, 1), "VALID")

    x = block(x, p["conv1_w"], p["conv1_b"], p["bn1_g"], p["bn1_b"],
              p["bn1_rm"], p["bn1_rv"])
    x = block(x, p["conv2_w"], p["conv2_b"], p["bn2_g"], p["bn2_b"],
              p["bn2_rm"], p["bn2_rv"])
    N = x.shape[0]
    x = jnp.transpose(x, (0, 3, 1, 2)).reshape(N, K_FC)     # torch (C,H,W) flatten
    h = x @ p["fc1_w"] + p["fc1_b"]
    h = (h - p["bn3_rm"]) / jnp.sqrt(p["bn3_rv"] + EPS) * p["bn3_g"] + p["bn3_b"]
    h = jnp.maximum(h, 0.0)
    logits = h @ p["fc2_w"] + p["fc2_b"]
    return jax.nn.softmax(logits, axis=1)


def init_params(key):
    ks = jax.random.split(key, 8)
    f32 = jnp.float32
    p = {
        # conv weights kept in HWIO layout (kh, kw, cin, cout)
        "conv1_w": 0.05 * jax.random.normal(ks[0], (3, 3, 3, 16), f32),
        "conv1_b": 0.05 * jax.random.normal(ks[1], (16,), f32),
        "conv2_w": 0.05 * jax.random.normal(ks[2], (3, 3, 16, 32), f32),
        "conv2_b": 0.05 * jax.random.normal(ks[3], (32,), f32),
        # fc weights stored as (in, out)
        "fc1_w": 0.01 * jax.random.normal(ks[4], (K_FC, 120), f32),
        "fc1_b": 0.05 * jax.random.normal(ks[5], (120,), f32),
        "fc2_w": 0.05 * jax.random.normal(ks[6], (120, 2), f32),
        "fc2_b": 0.05 * jax.random.normal(ks[7], (2,), f32),
    }
    for name, dim in (("bn1", 16), ("bn2", 32), ("bn3", 120)):
        p[f"{name}_g"] = jnp.ones((dim,), f32)
        p[f"{name}_b"] = 0.1 * jnp.ones((dim,), f32)
        p[f"{name}_rm"] = jnp.zeros((dim,), f32)
        p[f"{name}_rv"] = jnp.ones((dim,), f32)
    return p


if __name__ == "__main__":
    key = jax.random.PRNGKey(0)
    kx, kp = jax.random.split(key)
    params = init_params(kp)
    prep = prepare_params(params)        # one-time fold / pad / cast / permute

    # fc1 is hard-coded to 32*23*23, which forces 100x100 spatial input.
    x = jax.random.normal(kx, (2, 3, 100, 100), jnp.float32)

    fwd = jax.jit(gender_classifier_forward)
    out = jax.block_until_ready(fwd(x, prep))
    ref = jax.block_until_ready(reference_forward(x, params))

    assert out.shape == (2, 2), out.shape
    assert jnp.allclose(out, ref, atol=2e-2, rtol=2e-2), (out, ref)
    assert jnp.allclose(jnp.sum(out, axis=1), 1.0, atol=1e-4)
    print("KERNEL_OK")
</pallas_src>

<mosaic_0001>
module attributes {stable_mosaic.version = 11 : i64} {
  func.func @conv_bn_relu_pool_kernel(%arg0: i32, %arg1: memref<512x48xbf16, #tpu.memory_space<vmem>>, %arg2: memref<4x48x16xbf16, #tpu.memory_space<vmem>>, %arg3: memref<1x16xf32, #tpu.memory_space<vmem>>, %arg4: memref<512x16xbf16, #tpu.memory_space<vmem>>) attributes {dimension_semantics = [#tpu.dimension_semantics<parallel>], iteration_bounds = array<i64: 10>, scalar_prefetch = 0 : i64, scratch_operands = 0 : i64, tpu.core_type = #tpu.core_type<tc>, window_params = [{transform_indices = @transform_0, window_bounds = array<i64: 512, 48>}, {pipeline_mode = #tpu.pipeline_mode<synchronous>, transform_indices = @transform_1, window_bounds = array<i64: 4, 48, 16>}, {pipeline_mode = #tpu.pipeline_mode<synchronous>, transform_indices = @transform_2, window_bounds = array<i64: 1, 16>}, {transform_indices = @transform_3, window_bounds = array<i64: 512, 16>}]} {
    %c0 = arith.constant 0 : index
    %c0_0 = arith.constant 0 : index
    %0 = vector.load %arg1[%c0, %c0_0] : memref<512x48xbf16, #tpu.memory_space<vmem>>, vector<512x48xbf16>
    %c0_1 = arith.constant 0 : index
    %c0_2 = arith.constant 0 : index
    %c0_3 = arith.constant 0 : index
    %1 = vector.load %arg2[%c0_1, %c0_2, %c0_3] : memref<4x48x16xbf16, #tpu.memory_space<vmem>>, vector<1x48x16xbf16>
    %2 = vector.shape_cast %1 : vector<1x48x16xbf16> to vector<48x16xbf16>
    %cst = arith.constant dense<0.000000e+00> : vector<512x16xf32>
    %3 = tpu.matmul %0, %2, %cst {dimension_numbers = #tpu.dot_dimension_numbers<[1], [0], [0], [1], [0, 0, 1, 1], [], []>} : vector<512x48xbf16>, vector<48x16xbf16>, vector<512x16xf32> -> vector<512x16xf32>
    %c1 = arith.constant 1 : index
    %c0_4 = arith.constant 0 : index
    %c0_5 = arith.constant 0 : index
    %4 = vector.load %arg2[%c1, %c0_4, %c0_5] : memref<4x48x16xbf16, #tpu.memory_space<vmem>>, vector<1x48x16xbf16>
    %5 = vector.shape_cast %4 : vector<1x48x16xbf16> to vector<48x16xbf16>
    %cst_6 = arith.constant dense<0.000000e+00> : vector<512x16xf32>
    %6 = tpu.matmul %0, %5, %cst_6 {dimension_numbers = #tpu.dot_dimension_numbers<[1], [0], [0], [1], [0, 0, 1, 1], [], []>} : vector<512x48xbf16>, vector<48x16xbf16>, vector<512x16xf32> -> vector<512x16xf32>
    %7 = arith.maximumf %3, %6 : vector<512x16xf32>
    %c2 = arith.constant 2 : index
    %c0_7 = arith.constant 0 : index
    %c0_8 = arith.constant 0 : index
    %8 = vector.load %arg2[%c2, %c0_7, %c0_8] : memref<4x48x16xbf16, #tpu.memory_space<vmem>>, vector<1x48x16xbf16>
    %9 = vector.shape_cast %8 : vector<1x48x16xbf16> to vector<48x16xbf16>
    %cst_9 = arith.constant dense<0.000000e+00> : vector<512x16xf32>
    %10 = tpu.matmul %0, %9, %cst_9 {dimension_numbers = #tpu.dot_dimension_numbers<[1], [0], [0], [1], [0, 0, 1, 1], [], []>} : vector<512x48xbf16>, vector<48x16xbf16>, vector<512x16xf32> -> vector<512x16xf32>
    %11 = arith.maximumf %7, %10 : vector<512x16xf32>
    %c3 = arith.constant 3 : index
    %c0_10 = arith.constant 0 : index
    %c0_11 = arith.constant 0 : index
    %12 = vector.load %arg2[%c3, %c0_10, %c0_11] : memref<4x48x16xbf16, #tpu.memory_space<vmem>>, vector<1x48x16xbf16>
    %13 = vector.shape_cast %12 : vector<1x48x16xbf16> to vector<48x16xbf16>
    %cst_12 = arith.constant dense<0.000000e+00> : vector<512x16xf32>
    %14 = tpu.matmul %0, %13, %cst_12 {dimension_numbers = #tpu.dot_dimension_numbers<[1], [0], [0], [1], [0, 0, 1, 1], [], []>} : vector<512x48xbf16>, vector<48x16xbf16>, vector<512x16xf32> -> vector<512x16xf32>
    %15 = arith.maximumf %11, %14 : vector<512x16xf32>
    %c0_13 = arith.constant 0 : index
    %c0_14 = arith.constant 0 : index
    %16 = vector.load %arg3[%c0_13, %c0_14] : memref<1x16xf32, #tpu.memory_space<vmem>>, vector<1x16xf32>
    %17 = vector.broadcast %16 : vector<1x16xf32> to vector<512x16xf32>
    %18 = arith.addf %15, %17 : vector<512x16xf32>
    %cst_15 = arith.constant 0.000000e+00 : f32
    %19 = vector.broadcast %cst_15 : f32 to vector<512x16xf32>
    %20 = arith.maximumf %18, %19 : vector<512x16xf32>
    %21 = arith.truncf %20 : vector<512x16xf32> to vector<512x16xbf16>
    %c0_16 = arith.constant 0 : index
    %c0_17 = arith.constant 0 : index
    %22 = vector.load %arg4[%c0_16, %c0_17] : memref<512x16xbf16, #tpu.memory_space<vmem>>, vector<512x16xbf16>
    tpu.vector_store %arg4[%c0_16, %c0_17], %21 {strides = array<i32>} : memref<512x16xbf16, #tpu.memory_space<vmem>>, vector<512x16xbf16>,
    return
  }
  func.func @transform_0(%arg0: i32) -> (i32, i32) {
    %c0_i32 = arith.constant 0 : i32
    %c0_i32_0 = arith.constant 0 : i32
    return %arg0, %c0_i32 : i32, i32
  }
  func.func @transform_1(%arg0: i32) -> (i32, i32, i32) {
    %c0_i32 = arith.constant 0 : i32
    %c0_i32_0 = arith.constant 0 : i32
    %c0_i32_1 = arith.constant 0 : i32
    %c0_i32_2 = arith.constant 0 : i32
    return %c0_i32, %c0_i32_0, %c0_i32_1 : i32, i32, i32
  }
  func.func @transform_2(%arg0: i32) -> (i32, i32) {
    %c0_i32 = arith.constant 0 : i32
    %c0_i32_0 = arith.constant 0 : i32
    %c0_i32_1 = arith.constant 0 : i32
    return %c0_i32, %c0_i32_0 : i32, i32
  }
  func.func @transform_3(%arg0: i32) -> (i32, i32) {
    %c0_i32 = arith.constant 0 : i32
    %c0_i32_0 = arith.constant 0 : i32
    return %arg0, %c0_i32 : i32, i32
  }
}

module attributes {stable_mosaic.version = 11 : i64} {
  func.func @conv_bn_relu_pool_kernel(%arg0: i32, %arg1: memref<512x256xbf16, #tpu.memory_space<vmem>>, %arg2: memref<4x256x32xbf16, #tpu.memory_space<vmem>>, %arg3: memref<1x32xf32, #tpu.memory_space<vmem>>, %arg4: memref<512x32xbf16, #tpu.memory_space<vmem>>) attributes {dimension_semantics = [#tpu.dimension_semantics<parallel>], iteration_bounds = array<i64: 3>, scalar_prefetch = 0 : i64, scratch_operands = 0 : i64, tpu.core_type = #tpu.core_type<tc>, window_params = [{transform_indices = @transform_0, window_bounds = array<i64: 512, 256>}, {pipeline_mode = #tpu.pipeline_mode<synchronous>, transform_indices = @transform_1, window_bounds = array<i64: 4, 256, 32>}, {pipeline_mode = #tpu.pipeline_mode<synchronous>, transform_indices = @transform_2, window_bounds = array<i64: 1, 32>}, {transform_indices = @transform_3, window_bounds = array<i64: 512, 32>}]} {
    %c0 = arith.constant 0 : index
    %c0_0 = arith.constant 0 : index
    %0 = vector.load %arg1[%c0, %c0_0] : memref<512x256xbf16, #tpu.memory_space<vmem>>, vector<512x256xbf16>
    %c0_1 = arith.constant 0 : index
    %c0_2 = arith.constant 0 : index
    %c0_3 = arith.constant 0 : index
    %1 = vector.load %arg2[%c0_1, %c0_2, %c0_3] : memref<4x256x32xbf16, #tpu.memory_space<vmem>>, vector<1x256x32xbf16>
    %2 = vector.shape_cast %1 : vector<1x256x32xbf16> to vector<256x32xbf16>
    %cst = arith.constant dense<0.000000e+00> : vector<512x32xf32>
    %3 = tpu.matmul %0, %2, %cst {dimension_numbers = #tpu.dot_dimension_numbers<[1], [0], [0], [1], [0, 0, 1, 1], [], []>} : vector<512x256xbf16>, vector<256x32xbf16>, vector<512x32xf32> -> vector<512x32xf32>
    %c1 = arith.constant 1 : index
    %c0_4 = arith.constant 0 : index
    %c0_5 = arith.constant 0 : index
    %4 = vector.load %arg2[%c1, %c0_4, %c0_5] : memref<4x256x32xbf16, #tpu.memory_space<vmem>>, vector<1x256x32xbf16>
    %5 = vector.shape_cast %4 : vector<1x256x32xbf16> to vector<256x32xbf16>
    %cst_6 = arith.constant dense<0.000000e+00> : vector<512x32xf32>
    %6 = tpu.matmul %0, %5, %cst_6 {dimension_numbers = #tpu.dot_dimension_numbers<[1], [0], [0], [1], [0, 0, 1, 1], [], []>} : vector<512x256xbf16>, vector<256x32xbf16>, vector<512x32xf32> -> vector<512x32xf32>
    %7 = arith.maximumf %3, %6 : vector<512x32xf32>
    %c2 = arith.constant 2 : index
    %c0_7 = arith.constant 0 : index
    %c0_8 = arith.constant 0 : index
    %8 = vector.load %arg2[%c2, %c0_7, %c0_8] : memref<4x256x32xbf16, #tpu.memory_space<vmem>>, vector<1x256x32xbf16>
    %9 = vector.shape_cast %8 : vector<1x256x32xbf16> to vector<256x32xbf16>
    %cst_9 = arith.constant dense<0.000000e+00> : vector<512x32xf32>
    %10 = tpu.matmul %0, %9, %cst_9 {dimension_numbers = #tpu.dot_dimension_numbers<[1], [0], [0], [1], [0, 0, 1, 1], [], []>} : vector<512x256xbf16>, vector<256x32xbf16>, vector<512x32xf32> -> vector<512x32xf32>
    %11 = arith.maximumf %7, %10 : vector<512x32xf32>
    %c3 = arith.constant 3 : index
    %c0_10 = arith.constant 0 : index
    %c0_11 = arith.constant 0 : index
    %12 = vector.load %arg2[%c3, %c0_10, %c0_11] : memref<4x256x32xbf16, #tpu.memory_space<vmem>>, vector<1x256x32xbf16>
    %13 = vector.shape_cast %12 : vector<1x256x32xbf16> to vector<256x32xbf16>
    %cst_12 = arith.constant dense<0.000000e+00> : vector<512x32xf32>
    %14 = tpu.matmul %0, %13, %cst_12 {dimension_numbers = #tpu.dot_dimension_numbers<[1], [0], [0], [1], [0, 0, 1, 1], [], []>} : vector<512x256xbf16>, vector<256x32xbf16>, vector<512x32xf32> -> vector<512x32xf32>
    %15 = arith.maximumf %11, %14 : vector<512x32xf32>
    %c0_13 = arith.constant 0 : index
    %c0_14 = arith.constant 0 : index
    %16 = vector.load %arg3[%c0_13, %c0_14] : memref<1x32xf32, #tpu.memory_space<vmem>>, vector<1x32xf32>
    %17 = vector.broadcast %16 : vector<1x32xf32> to vector<512x32xf32>
    %18 = arith.addf %15, %17 : vector<512x32xf32>
    %cst_15 = arith.constant 0.000000e+00 : f32
    %19 = vector.broadcast %cst_15 : f32 to vector<512x32xf32>
    %20 = arith.maximumf %18, %19 : vector<512x32xf32>
    %21 = arith.truncf %20 : vector<512x32xf32> to vector<512x32xbf16>
    %c0_16 = arith.constant 0 : index
    %c0_17 = arith.constant 0 : index
    %22 = vector.load %arg4[%c0_16, %c0_17] : memref<512x32xbf16, #tpu.memory_space<vmem>>, vector<512x32xbf16>
    tpu.vector_store %arg4[%c0_16, %c0_17], %21 {strides = array<i32>} : memref<512x32xbf16, #tpu.memory_space<vmem>>, vector<512x32xbf16>,
    return
  }
  func.func @transform_0(%arg0: i32) -> (i32, i32) {
    %c0_i32 = arith.constant 0 : i32
    %c0_i32_0 = arith.constant 0 : i32
    return %arg0, %c0_i32 : i32, i32
  }
  func.func @transform_1(%arg0: i32) -> (i32, i32, i32) {
    %c0_i32 = arith.constant 0 : i32
    %c0_i32_0 = arith.constant 0 : i32
    %c0_i32_1 = arith.constant 0 : i32
    %c0_i32_2 = arith.constant 0 : i32
    return %c0_i32, %c0_i32_0, %c0_i32_1 : i32, i32, i32
  }
  func.func @transform_2(%arg0: i32) -> (i32, i32) {
    %c0_i32 = arith.constant 0 : i32
    %c0_i32_0 = arith.constant 0 : i32
    %c0_i32_1 = arith.constant 0 : i32
    return %c0_i32, %c0_i32_0 : i32, i32
  }
  func.func @transform_3(%arg0: i32) -> (i32, i32) {
    %c0_i32 = arith.constant 0 : i32
    %c0_i32_0 = arith.constant 0 : i32
    return %arg0, %c0_i32 : i32, i32
  }
}

module attributes {stable_mosaic.version = 11 : i64} {
  func.func @head_kernel(%arg0: i32, %arg1: memref<2x4352xbf16, #tpu.memory_space<vmem>>, %arg2: memref<4352x128xbf16, #tpu.memory_space<vmem>>, %arg3: memref<1x128xf32, #tpu.memory_space<vmem>>, %arg4: memref<128x128xbf16, #tpu.memory_space<vmem>>, %arg5: memref<1x128xf32, #tpu.memory_space<vmem>>, %arg6: memref<2x128xf32, #tpu.memory_space<vmem>>, %arg7: memref<2x128xf32, #tpu.memory_space<vmem>>) attributes {dimension_semantics = [#tpu.dimension_semantics<arbitrary>], iteration_bounds = array<i64: 4>, scalar_prefetch = 0 : i64, scratch_operands = 1 : i64, tpu.core_type = #tpu.core_type<tc>, window_params = [{transform_indices = @transform_0, window_bounds = array<i64: 2, 4352>}, {transform_indices = @transform_1, window_bounds = array<i64: 4352, 128>}, {pipeline_mode = #tpu.pipeline_mode<synchronous>, transform_indices = @transform_2, window_bounds = array<i64: 1, 128>}, {pipeline_mode = #tpu.pipeline_mode<synchronous>, transform_indices = @transform_3, window_bounds = array<i64: 128, 128>}, {pipeline_mode = #tpu.pipeline_mode<synchronous>, transform_indices = @transform_4, window_bounds = array<i64: 1, 128>}, {pipeline_mode = #tpu.pipeline_mode<synchronous>, transform_indices = @transform_5, window_bounds = array<i64: 2, 128>}]} {
    %c0_i32 = arith.constant 0 : i32
    %0 = arith.cmpi eq, %arg0, %c0_i32 : i32
    %1 = arith.extui %0 : i1 to i32
    %c0_i32_0 = arith.constant 0 : i32
    %2 = arith.cmpi ne, %1, %c0_i32_0 : i32
    scf.if %2 {
      %cst_9 = arith.constant 0.000000e+00 : f32
      %12 = vector.broadcast %cst_9 : f32 to vector<2x128xf32>
      %c0_10 = arith.constant 0 : index
      %c0_11 = arith.constant 0 : index
      %13 = vector.load %arg7[%c0_10, %c0_11] : memref<2x128xf32, #tpu.memory_space<vmem>>, vector<2x128xf32>
      tpu.vector_store %arg7[%c0_10, %c0_11], %12 {strides = array<i32>} : memref<2x128xf32, #tpu.memory_space<vmem>>, vector<2x128xf32>,
    } else {
    }
    %c0 = arith.constant 0 : index
    %c0_1 = arith.constant 0 : index
    %3 = vector.load %arg7[%c0, %c0_1] : memref<2x128xf32, #tpu.memory_space<vmem>>, vector<2x128xf32>
    %c0_2 = arith.constant 0 : index
    %c0_3 = arith.constant 0 : index
    %4 = vector.load %arg1[%c0_2, %c0_3] : memref<2x4352xbf16, #tpu.memory_space<vmem>>, vector<2x4352xbf16>
    %c0_4 = arith.constant 0 : index
    %c0_5 = arith.constant 0 : index
    %5 = vector.load %arg2[%c0_4, %c0_5] : memref<4352x128xbf16, #tpu.memory_space<vmem>>, vector<4352x128xbf16>
    %cst = arith.constant dense<0.000000e+00> : vector<2x128xf32>
    %6 = tpu.matmul %4, %5, %cst {dimension_numbers = #tpu.dot_dimension_numbers<[1], [0], [0], [1], [0, 0, 1, 1], [], []>} : vector<2x4352xbf16>, vector<4352x128xbf16>, vector<2x128xf32> -> vector<2x128xf32>
    %7 = arith.addf %3, %6 : vector<2x128xf32>
    %c0_6 = arith.constant 0 : index
    %c0_7 = arith.constant 0 : index
    %8 = vector.load %arg7[%c0_6, %c0_7] : memref<2x128xf32, #tpu.memory_space<vmem>>, vector<2x128xf32>
    tpu.vector_store %arg7[%c0_6, %c0_7], %7 {strides = array<i32>} : memref<2x128xf32, #tpu.memory_space<vmem>>, vector<2x128xf32>,
    %c3_i32 = arith.constant 3 : i32
    %9 = arith.cmpi eq, %arg0, %c3_i32 : i32
    %10 = arith.extui %9 : i1 to i32
    %c0_i32_8 = arith.constant 0 : i32
    %11 = arith.cmpi ne, %10, %c0_i32_8 : i32
    scf.if %11 {
      %c0_9 = arith.constant 0 : index
      %c0_10 = arith.constant 0 : index
      %12 = vector.load %arg7[%c0_9, %c0_10] : memref<2x128xf32, #tpu.memory_space<vmem>>, vector<2x128xf32>
      %c0_11 = arith.constant 0 : index
      %c0_12 = arith.constant 0 : index
      %13 = vector.load %arg3[%c0_11, %c0_12] : memref<1x128xf32, #tpu.memory_space<vmem>>, vector<1x128xf32>
      %14 = vector.broadcast %13 : vector<1x128xf32> to vector<2x128xf32>
      %15 = arith.addf %12, %14 : vector<2x128xf32>
      %cst_13 = arith.constant 0.000000e+00 : f32
      %16 = vector.broadcast %cst_13 : f32 to vector<2x128xf32>
      %17 = arith.maximumf %15, %16 : vector<2x128xf32>
      %18 = arith.truncf %17 : vector<2x128xf32> to vector<2x128xbf16>
      %c0_14 = arith.constant 0 : index
      %c0_15 = arith.constant 0 : index
      %19 = vector.load %arg4[%c0_14, %c0_15] : memref<128x128xbf16, #tpu.memory_space<vmem>>, vector<128x128xbf16>
      %cst_16 = arith.constant dense<0.000000e+00> : vector<2x128xf32>
      %20 = tpu.matmul %18, %19, %cst_16 {dimension_numbers = #tpu.dot_dimension_numbers<[1], [0], [0], [1], [0, 0, 1, 1], [], []>} : vector<2x128xbf16>, vector<128x128xbf16>, vector<2x128xf32> -> vector<2x128xf32>
      %c0_17 = arith.constant 0 : index
      %c0_18 = arith.constant 0 : index
      %21 = vector.load %arg5[%c0_17, %c0_18] : memref<1x128xf32, #tpu.memory_space<vmem>>, vector<1x128xf32>
      %22 = vector.broadcast %21 : vector<1x128xf32> to vector<2x128xf32>
      %23 = arith.addf %20, %22 : vector<2x128xf32>
      %cst_19 = arith.constant dense<0xFF800000> : vector<2xf32>
      %24 = vector.multi_reduction <maximumf>, %23, %cst_19 [1] : vector<2x128xf32> to vector<2xf32>
      %25 = vector.shape_cast %24 : vector<2xf32> to vector<2x1xf32>
      %26 = vector.broadcast %25 : vector<2x1xf32> to vector<2x128xf32>
      %27 = arith.subf %23, %26 : vector<2x128xf32>
      %28 = math.exp %27 : vector<2x128xf32>
      %cst_20 = arith.constant dense<0.000000e+00> : vector<2xf32>
      %29 = vector.multi_reduction <add>, %28, %cst_20 [1] : vector<2x128xf32> to vector<2xf32>
      %30 = vector.shape_cast %29 : vector<2xf32> to vector<2x1xf32>
      %31 = vector.broadcast %30 : vector<2x1xf32> to vector<2x128xf32>
      %32 = arith.divf %28, %31 : vector<2x128xf32>
      %c0_21 = arith.constant 0 : index
      %c0_22 = arith.constant 0 : index
      %33 = vector.load %arg6[%c0_21, %c0_22] : memref<2x128xf32, #tpu.memory_space<vmem>>, vector<2x128xf32>
      tpu.vector_store %arg6[%c0_21, %c0_22], %32 {strides = array<i32>} : memref<2x128xf32, #tpu.memory_space<vmem>>, vector<2x128xf32>,
    } else {
    }
    return
  }
  func.func @transform_0(%arg0: i32) -> (i32, i32) {
    %c0_i32 = arith.constant 0 : i32
    %c0_i32_0 = arith.constant 0 : i32
    return %c0_i32, %arg0 : i32, i32
  }
  func.func @transform_1(%arg0: i32) -> (i32, i32) {
    %c0_i32 = arith.constant 0 : i32
    %c0_i32_0 = arith.constant 0 : i32
    return %arg0, %c0_i32 : i32, i32
  }
  func.func @transform_2(%arg0: i32) -> (i32, i32) {
    %c0_i32 = arith.constant 0 : i32
    %c0_i32_0 = arith.constant 0 : i32
    %c0_i32_1 = arith.constant 0 : i32
    return %c0_i32, %c0_i32_0 : i32, i32
  }
  func.func @transform_3(%arg0: i32) -> (i32, i32) {
    %c0_i32 = arith.constant 0 : i32
    %c0_i32_0 = arith.constant 0 : i32
    %c0_i32_1 = arith.constant 0 : i32
    return %c0_i32, %c0_i32_0 : i32, i32
  }
  func.func @transform_4(%arg0: i32) -> (i32, i32) {
    %c0_i32 = arith.constant 0 : i32
    %c0_i32_0 = arith.constant 0 : i32
    %c0_i32_1 = arith.constant 0 : i32
    return %c0_i32, %c0_i32_0 : i32, i32
  }
  func.func @transform_5(%arg0: i32) -> (i32, i32) {
    %c0_i32 = arith.constant 0 : i32
    %c0_i32_0 = arith.constant 0 : i32
    %c0_i32_1 = arith.constant 0 : i32
    return %c0_i32, %c0_i32_0 : i32, i32
  }
}

</mosaic_0001>

<llo_original>
// kernel: gender_classifier_forward.3
$region0: #{gender_classifier_forward.3}
  #allocation0 [shape = 'u32[]', space=smem, size = 0x4, offset = 0x4, fixed_abs, tag = 'smem constant byte address 0x4 - core index']
  #allocation1 [shape = 'u32[144,128]{1,0:T(1,128)}', space=vmem, size = 0x12000, scoped, tag = 'internal scratch']
  %s0 = inlined_call_operand.vmem [shape: bf16[5120,48], index: 0, kind: input, shape index: {}]
  %s1 = inlined_call_operand.vmem [shape: bf16[4,48,16], index: 1, kind: input, shape index: {}]
  %s2 = inlined_call_operand.vmem [shape: f32[1,16], index: 2, kind: input, shape index: {}]
  %s3 = inlined_call_operand.vmem [shape: bf16[5120,16], index: 3, kind: output, shape index: {}]
  %s4 = sld [smem:[#allocation0]]
  $region45: #{gender_classifier_forward.3} parent=0
    _
  %s6 = ssub.s32 1, %s4
  %s7 = scalar_select 0, %s6, %s4
  loop: start=0, step=1, limit=12
  $region2: #{gender_classifier_forward.3} parent=0 // loop_pre_header
    _
  $region3: #{gender_classifier_forward.3} parent=0 // loop_header
    %s9 = sphi 0, %s13
    %p10 = scmp.ge.s32.totalorder %s9, 12
    %s19 = sphi 0, %s21
    %s22 = sphi 0, %s19
    %s23 = sphi 0, %s22
    %s39 = sphi 0, %s23
    %s43 = sphi 0, %s43
    %s45 = sphi 0, %s43
    %s46 = sphi 0, %s45
    %s60 = sphi 0, %s46
    %s64 = sphi 0, %s64
    %s66 = sphi 0, %s64
    %s67 = sphi 0, %s66
    %s81 = sphi 0, %s67
    %s87 = sphi 0, %s89
    %s90 = sphi 0, %s87
    %s91 = sphi 0, %s90
    %s107 = sphi 0, %s91
  $region4: #{gender_classifier_forward.3} parent=0 // loop_header_branch
    %12 = sbr.rel (%p10) target = $region8
  $region5: #{gender_classifier_forward.3} parent=0 // loop_body
    %s14 = ssub.s32 %s9, 1
    %s15 = ssub.s32 %s9, 2
    %s16 = sadd.s32 %s9, 1
    %s17 = ssub.s32 %s9, %s16
    %p18 = scmp.eq.s32.totalorder %s17, 0
    %s20 = sadd.s32 %s19, 1
    %s21 = scalar_select %p18, %s19, %s20
    %p24 = pneg %p18
    %p25 = scmp.eq.s32.totalorder %s9, 9
    %p26 = por %p24, %p25
    %p27 = scmp.ne.s32.totalorder %s19, %s22
    %p28 = scmp.eq.s32.totalorder %s9, 0
    %p29 = por %p27, %p28
    %p30 = scmp.ne.s32.totalorder %s19, %s22
    %p31 = scmp.eq.s32.totalorder %s14, 9
    %p32 = por %p30, %p31
    %p33 = scmp.ne.s32.totalorder %s22, %s23
    %p34 = scmp.eq.s32.totalorder %s14, 0
    %p35 = por %p33, %p34
    %p36 = scmp.ne.s32.totalorder %s22, %s23
    %p37 = scmp.eq.s32.totalorder %s15, 9
    %p38 = por %p36, %p37
    %p40 = scmp.ne.s32.totalorder %s23, %s39
    %p41 = scmp.eq.s32.totalorder %s15, 0
    %p42 = por %p40, %p41
    %s44 = sadd.s32 %s43, 1
    %p47 = scmp.eq.s32.totalorder %s9, 9
    %p48 = scmp.ne.s32.totalorder %s43, %s45
    %p49 = scmp.eq.s32.totalorder %s9, 0
    %p50 = por %p48, %p49
    %p51 = scmp.ne.s32.totalorder %s43, %s45
    %p52 = scmp.eq.s32.totalorder %s14, 9
    %p53 = por %p51, %p52
    %p54 = scmp.ne.s32.totalorder %s45, %s46
    %p55 = scmp.eq.s32.totalorder %s14, 0
    %p56 = por %p54, %p55
    %p57 = scmp.ne.s32.totalorder %s45, %s46
    %p58 = scmp.eq.s32.totalorder %s15, 9
    %p59 = por %p57, %p58
    %p61 = scmp.ne.s32.totalorder %s46, %s60
    %p62 = scmp.eq.s32.totalorder %s15, 0
    %p63 = por %p61, %p62
    %s65 = sadd.s32 %s64, 1
    %p68 = scmp.eq.s32.totalorder %s9, 9
    %p69 = scmp.ne.s32.totalorder %s64, %s66
    %p70 = scmp.eq.s32.totalorder %s9, 0
    %p71 = por %p69, %p70
    %p72 = scmp.ne.s32.totalorder %s64, %s66
    %p73 = scmp.eq.s32.totalorder %s14, 9
    %p74 = por %p72, %p73
    %p75 = scmp.ne.s32.totalorder %s66, %s67
    %p76 = scmp.eq.s32.totalorder %s14, 0
    %p77 = por %p75, %p76
    %p78 = scmp.ne.s32.totalorder %s66, %s67
    %p79 = scmp.eq.s32.totalorder %s15, 9
    %p80 = por %p78, %p79
    %p82 = scmp.ne.s32.totalorder %s67, %s81
    %p83 = scmp.eq.s32.totalorder %s15, 0
    %p84 = por %p82, %p83
    %s85 = ssub.s32 %s9, %s16
    %p86 = scmp.eq.s32.totalorder %s85, 0
    %s88 = sadd.s32 %s87, 1
    %s89 = scalar_select %p86, %s87, %s88
    %p92 = pneg %p86
    %p93 = scmp.eq.s32.totalorder %s9, 9
    %p94 = por %p92, %p93
    %p95 = scmp.ne.s32.totalorder %s87, %s90
    %p96 = scmp.eq.s32.totalorder %s9, 0
    %p97 = por %p95, %p96
    %p98 = scmp.ne.s32.totalorder %s87, %s90
    %p99 = scmp.eq.s32.totalorder %s14, 9
    %p100 = por %p98, %p99
    %p101 = scmp.ne.s32.totalorder %s90, %s91
    %p102 = scmp.eq.s32.totalorder %s14, 0
    %p103 = por %p101, %p102
    %p104 = scmp.ne.s32.totalorder %s90, %s91
    %p105 = scmp.eq.s32.totalorder %s15, 9
    %p106 = por %p104, %p105
    %p108 = scmp.ne.s32.totalorder %s91, %s107
    %p109 = scmp.eq.s32.totalorder %s15, 0
    %p110 = por %p108, %p109
    %p111 = scmp.le.s32.totalorder 1, %s9
    %p112 = scmp.lt.s32.totalorder %s9, 11
    %p113 = pnand %p111, %p112
    %p114 = pneg %p113
    // Predicated region
    $region9: #{gender_classifier_forward.3} parent=5 // pred_check
      _
    $region10: #{gender_classifier_forward.3} parent=5 // pred_check_branch
      %116 = sbr.rel (%p113) target = $region12
    $region11: #{gender_classifier_forward.3} parent=5 // pred_region
      %s117 = ssub.s32 %s9, 1
      // Predicated region
      $region13: #{gender_classifier_forward.3} parent=11 // pred_check
        %p118 = pneg %p56
      $region14: #{gender_classifier_forward.3} parent=11 // pred_check_branch
        %120 = sbr.rel (%p118) target = $region16
      $region15: #{gender_classifier_forward.3} parent=11 // pred_region
        _
      $region16: #{gender_classifier_forward.3} parent=11 // pred_fallthru
        _
      // Predicated region
      $region17: #{gender_classifier_forward.3} parent=11 // pred_check
        %p121 = pneg %p77
      $region18: #{gender_classifier_forward.3} parent=11 // pred_check_branch
        %123 = sbr.rel (%p121) target = $region20
      $region19: #{gender_classifier_forward.3} parent=11 // pred_region
        _
      $region20: #{gender_classifier_forward.3} parent=11 // pred_fallthru
        _
    $region12: #{gender_classifier_forward.3} parent=5 // pred_fallthru
      _
    %p124 = scmp.lt.s32.totalorder %s9, 10
    // Predicated region
    $region21: #{gender_classifier_forward.3} parent=5 // pred_check
      %p125 = pneg %p124
    $region22: #{gender_classifier_forward.3} parent=5 // pred_check_branch
      %127 = sbr.rel (%p125) target = $region24
    $region23: #{gender_classifier_forward.3} parent=5 // pred_region
      // Predicated region
      $region25: #{gender_classifier_forward.3} parent=23 // pred_check
        %p128 = pneg %p29
      $region26: #{gender_classifier_forward.3} parent=23 // pred_check_branch
        %130 = sbr.rel (%p128) target = $region28
      $region27: #{gender_classifier_forward.3} parent=23 // pred_region
        %s131 = smul.u32 64, %s9
        %p132 = scmp.lt.s32.totalorder %s131, 639
        %s133 = scalar_select %p132, %s131, 639
        %s134 = smul.addr %s133, 4
        %s135 = scalar_lea.vmem %s0, %s134
        %s136 = smul.u32 64, %s9
      $region28: #{gender_classifier_forward.3} parent=23 // pred_fallthru
        _
    $region24: #{gender_classifier_forward.3} parent=5 // pred_fallthru
      _
    %p137 = scmp.le.s32.totalorder 1, %s9
    %p138 = scmp.lt.s32.totalorder %s9, 11
    %p139 = pnand %p137, %p138
    %p140 = pneg %p139
    // Predicated region
    $region29: #{gender_classifier_forward.3} parent=5 // pred_check
      _
    $region30: #{gender_classifier_forward.3} parent=5 // pred_check_branch
      %142 = sbr.rel (%p139) target = $region32
    $region31: #{gender_classifier_forward.3} parent=5 // pred_region
      %s143 = ssub.s32 %s9, 1
      %s144 = smul.u32 64, %s14
      %p145 = scmp.lt.s32.totalorder %s144, 639
      %s146 = scalar_select %p145, %s144, 639
      %s147 = smul.addr %s146, 4
      %s148 = scalar_lea.vmem %s0, %s147
      %p149 = pneg %p35
      %p150 = pneg %p32
      %p151 = pneg %p56
      %p152 = pneg %p53
      %p153 = pneg %p77
      %p154 = pneg %p74
      %p155 = pneg %p103
      %p156 = pneg %p100
      %s157 = smul.u32 64, %s14
      %p158 = scmp.lt.s32.totalorder %s157, 639
      %s159 = scalar_select %p158, %s157, 639
      %s160 = smul.addr %s159, 4
      %s161 = scalar_lea.vmem %s3, %s160
      %s162 = smul.u32 64, %s14
      %p163 = scmp.lt.s32.totalorder %s162, 639
      %s164 = scalar_select %p163, %s162, 639
      %s165 = smul.addr %s164, 4
      %s166 = scalar_lea.vmem %s0, %s165
      %s167 = smul.u32 64, %s14
      %s168 = smul.u32 64, %s14
      %p169 = scmp.lt.s32.totalorder %s168, 639
      %s170 = scalar_select %p169, %s168, 639
      %s171 = smul.addr %s170, 4
      %s172 = scalar_lea.vmem %s3, %s171
      %s173 = smul.u32 64, %s14
      %v175 = vld [vmem:[%s166] sm:$0xf]
      %v176 = vld [vmem:[%s166 + $0x4] sm:$0xf]
      %v177 = vld [vmem:[%s166 + $0x8] sm:$0xf]
      %v178 = vld [vmem:[%s166 + $0xc] sm:$0xf]
      %v179 = vld [vmem:[%s166 + $0x10] sm:$0xf]
      %v180 = vld [vmem:[%s166 + $0x14] sm:$0xf]
      %v181 = vld [vmem:[%s166 + $0x18] sm:$0xf]
      %v182 = vld [vmem:[%s166 + $0x1c] sm:$0xf]
      %v183 = vld [vmem:[%s166 + $0x20] sm:$0xf]
      %v184 = vld [vmem:[%s166 + $0x24] sm:$0xf]
      %v185 = vld [vmem:[%s166 + $0x28] sm:$0xf]
      %v186 = vld [vmem:[%s166 + $0x2c] sm:$0xf]
      %v187 = vld [vmem:[%s166 + $0x30] sm:$0xf]
      %v188 = vld [vmem:[%s166 + $0x34] sm:$0xf]
      %v189 = vld [vmem:[%s166 + $0x38] sm:$0xf]
      %v190 = vld [vmem:[%s166 + $0x3c] sm:$0xf]
      %v191 = vld [vmem:[%s166 + $0x40] sm:$0xf]
      %v192 = vld [vmem:[%s166 + $0x44] sm:$0xf]
      %v193 = vld [vmem:[%s166 + $0x48] sm:$0xf]
      %v194 = vld [vmem:[%s166 + $0x4c] sm:$0xf]
      %v195 = vld [vmem:[%s166 + $0x50] sm:$0xf]
      %v196 = vld [vmem:[%s166 + $0x54] sm:$0xf]
      %v197 = vld [vmem:[%s166 + $0x58] sm:$0xf]
      %v198 = vld [vmem:[%s166 + $0x5c] sm:$0xf]
      %v199 = vld [vmem:[%s166 + $0x60] sm:$0xf]
      %v200 = vld [vmem:[%s166 + $0x64] sm:$0xf]
      %v201 = vld [vmem:[%s166 + $0x68] sm:$0xf]
      %v202 = vld [vmem:[%s166 + $0x6c] sm:$0xf]
      %v203 = vld [vmem:[%s166 + $0x70] sm:$0xf]
      %v204 = vld [vmem:[%s166 + $0x74] sm:$0xf]
      %v205 = vld [vmem:[%s166 + $0x78] sm:$0xf]
      %v206 = vld [vmem:[%s166 + $0x7c] sm:$0xf]
      %v207 = vld [vmem:[%s166 + $0x80] sm:$0xf]
      %v208 = vld [vmem:[%s166 + $0x84] sm:$0xf]
      %v209 = vld [vmem:[%s166 + $0x88] sm:$0xf]
      %v210 = vld [vmem:[%s166 + $0x8c] sm:$0xf]
      %v211 = vld [vmem:[%s166 + $0x90] sm:$0xf]
      %v212 = vld [vmem:[%s166 + $0x94] sm:$0xf]
      %v213 = vld [vmem:[%s166 + $0x98] sm:$0xf]
      %v214 = vld [vmem:[%s166 + $0x9c] sm:$0xf]
      %v215 = vld [vmem:[%s166 + $0xa0] sm:$0xf]
      %v216 = vld [vmem:[%s166 + $0xa4] sm:$0xf]
      %v217 = vld [vmem:[%s166 + $0xa8] sm:$0xf]
      %v218 = vld [vmem:[%s166 + $0xac] sm:$0xf]
      %v219 = vld [vmem:[%s166 + $0xb0] sm:$0xf]
      %v220 = vld [vmem:[%s166 + $0xb4] sm:$0xf]
      %v221 = vld [vmem:[%s166 + $0xb8] sm:$0xf]
      %v222 = vld [vmem:[%s166 + $0xbc] sm:$0xf]
      %v223 = vld [vmem:[%s166 + $0xc0] sm:$0xf]
      %v224 = vld [vmem:[%s166 + $0xc4] sm:$0xf]
      %v225 = vld [vmem:[%s166 + $0xc8] sm:$0xf]
      %v226 = vld [vmem:[%s166 + $0xcc] sm:$0xf]
      %v227 = vld [vmem:[%s166 + $0xd0] sm:$0xf]
      %v228 = vld [vmem:[%s166 + $0xd4] sm:$0xf]
      %v229 = vld [vmem:[%s166 + $0xd8] sm:$0xf]
      %v230 = vld [vmem:[%s166 + $0xdc] sm:$0xf]
      %v231 = vld [vmem:[%s166 + $0xe0] sm:$0xf]
      %v232 = vld [vmem:[%s166 + $0xe4] sm:$0xf]
      %v233 = vld [vmem:[%s166 + $0xe8] sm:$0xf]
      %v234 = vld [vmem:[%s166 + $0xec] sm:$0xf]
      %v235 = vld [vmem:[%s166 + $0xf0] sm:$0xf]
      %v236 = vld [vmem:[%s166 + $0xf4] sm:$0xf]
      %v237 = vld [vmem:[%s166 + $0xf8] sm:$0xf]
      %v238 = vld [vmem:[%s166 + $0xfc] sm:$0xf]
      %v239 = vld [vmem:[%s1] sm:$0xf]
      %v240 = vld [vmem:[%s1 + $0x4] sm:$0xf]
      %v241 = vld [vmem:[%s1 + $0x8] sm:$0xf]
      %v242 = vld [vmem:[%s1 + $0xc] sm:$0xf]
      %v243 = vld [vmem:[%s1 + $0x10] sm:$0xf]
      %v244 = vld [vmem:[%s1 + $0x14] sm:$0xf]
      %v309 = vunpack.c.l.b16 %v175
      %v310 = vunpack.c.l.b16 %v176
      %v311 = vunpack.c.l.b16 %v177
      %v312 = vunpack.c.l.b16 %v178
      %v313 = vunpack.c.l.b16 %v179
      %v314 = vunpack.c.l.b16 %v180
      %v315 = vunpack.c.l.b16 %v181
      %v316 = vunpack.c.l.b16 %v182
      %v317 = vunpack.c.l.b16 %v183
      %v318 = vunpack.c.l.b16 %v184
      %v319 = vunpack.c.l.b16 %v185
      %v320 = vunpack.c.l.b16 %v186
      %v321 = vunpack.c.l.b16 %v187
      %v322 = vunpack.c.l.b16 %v188
      %v323 = vunpack.c.l.b16 %v189
      %v324 = vunpack.c.l.b16 %v190
      %v325 = vunpack.c.l.b16 %v191
      %v326 = vunpack.c.l.b16 %v192
      %v327 = vunpack.c.l.b16 %v193
      %v328 = vunpack.c.l.b16 %v194
      %v329 = vunpack.c.l.b16 %v195
      %v330 = vunpack.c.l.b16 %v196
      %v331 = vunpack.c.l.b16 %v197
      %v332 = vunpack.c.l.b16 %v198
      %v333 = vunpack.c.l.b16 %v199
      %v334 = vunpack.c.l.b16 %v200
      %v335 = vunpack.c.l.b16 %v201
      %v336 = vunpack.c.l.b16 %v202
      %v337 = vunpack.c.l.b16 %v203
      %v338 = vunpack.c.l.b16 %v204
      %v339 = vunpack.c.l.b16 %v205
      %v340 = vunpack.c.l.b16 %v206
      %v341 = vunpack.c.l.b16 %v207
      %v342 = vunpack.c.l.b16 %v208
      %v343 = vunpack.c.l.b16 %v209
      %v344 = vunpack.c.l.b16 %v210
      %v345 = vunpack.c.l.b16 %v211
      %v346 = vunpack.c.l.b16 %v212
      %v347 = vunpack.c.l.b16 %v213
      %v348 = vunpack.c.l.b16 %v214
      %v349 = vunpack.c.l.b16 %v215
      %v350 = vunpack.c.l.b16 %v216
      %v351 = vunpack.c.l.b16 %v217
      %v352 = vunpack.c.l.b16 %v218
      %v353 = vunpack.c.l.b16 %v219
      %v354 = vunpack.c.l.b16 %v220
      %v355 = vunpack.c.l.b16 %v221
      %v356 = vunpack.c.l.b16 %v222
      %v357 = vunpack.c.l.b16 %v223
      %v358 = vunpack.c.l.b16 %v224
      %v359 = vunpack.c.l.b16 %v225
      %v360 = vunpack.c.l.b16 %v226
      %v361 = vunpack.c.l.b16 %v227
      %v362 = vunpack.c.l.b16 %v228
      %v363 = vunpack.c.l.b16 %v229
      %v364 = vunpack.c.l.b16 %v230
      %v365 = vunpack.c.l.b16 %v231
      %v366 = vunpack.c.l.b16 %v232
      %v367 = vunpack.c.l.b16 %v233
      %v368 = vunpack.c.l.b16 %v234
      %v369 = vunpack.c.l.b16 %v235
      %v370 = vunpack.c.l.b16 %v236
      %v371 = vunpack.c.l.b16 %v237
      %v372 = vunpack.c.l.b16 %v238
      %v373 = vpack.c.b16 %v310, %v309
      %v374 = vpack.c.b16 %v312, %v311
      %v375 = vpack.c.b16 %v314, %v313
      %v376 = vpack.c.b16 %v316, %v315
      %v377 = vpack.c.b16 %v318, %v317
      %v378 = vpack.c.b16 %v320, %v319
      %v379 = vpack.c.b16 %v322, %v321
      %v380 = vpack.c.b16 %v324, %v323
      %v381 = vpack.c.b16 %v326, %v325
      %v382 = vpack.c.b16 %v328, %v327
      %v383 = vpack.c.b16 %v330, %v329
      %v384 = vpack.c.b16 %v332, %v331
      %v385 = vpack.c.b16 %v334, %v333
      %v386 = vpack.c.b16 %v336, %v335
      %v387 = vpack.c.b16 %v338, %v337
      %v388 = vpack.c.b16 %v340, %v339
      %v389 = vpack.c.b16 %v342, %v341
      %v390 = vpack.c.b16 %v344, %v343
      %v391 = vpack.c.b16 %v346, %v345
      %v392 = vpack.c.b16 %v348, %v347
      %v393 = vpack.c.b16 %v350, %v349
      %v394 = vpack.c.b16 %v352, %v351
      %v395 = vpack.c.b16 %v354, %v353
      %v396 = vpack.c.b16 %v356, %v355
      %v397 = vpack.c.b16 %v358, %v357
      %v398 = vpack.c.b16 %v360, %v359
      %v399 = vpack.c.b16 %v362, %v361
      %v400 = vpack.c.b16 %v364, %v363
      %v401 = vpack.c.b16 %v366, %v365
      %v402 = vpack.c.b16 %v368, %v367
      %v403 = vpack.c.b16 %v370, %v369
      %v404 = vpack.c.b16 %v372, %v371
      %v411 = vunpack.c.l.b16 %v239
      %v412 = vunpack.c.l.b16 %v240
      %v413 = vunpack.c.l.b16 %v241
      %v414 = vunpack.c.l.b16 %v242
      %v415 = vunpack.c.l.b16 %v243
      %v416 = vunpack.c.l.b16 %v244
      %v417 = vpack.c.b16 %v412, %v411
      %v418 = vpack.c.b16 %v414, %v413
      %v419 = vpack.c.b16 %v416, %v415
      %vm423 = vcmask 392192
      %v425 = vsel %vm423, %v373, 0
      %v428 = vsel %vm423, %v374, 0
      %v431 = vsel %vm423, %v375, 0
      %v434 = vsel %vm423, %v376, 0
      %v437 = vsel %vm423, %v377, 0
      %v440 = vsel %vm423, %v378, 0
      %v443 = vsel %vm423, %v379, 0
      %v446 = vsel %vm423, %v380, 0
      %v449 = vsel %vm423, %v381, 0
      %v452 = vsel %vm423, %v382, 0
      %v455 = vsel %vm423, %v383, 0
      %v458 = vsel %vm423, %v384, 0
      %v461 = vsel %vm423, %v385, 0
      %v464 = vsel %vm423, %v386, 0
      %v467 = vsel %vm423, %v387, 0
      %v470 = vsel %vm423, %v388, 0
      %v473 = vsel %vm423, %v389, 0
      %v476 = vsel %vm423, %v390, 0
      %v479 = vsel %vm423, %v391, 0
      %v482 = vsel %vm423, %v392, 0
      %v485 = vsel %vm423, %v393, 0
      %v488 = vsel %vm423, %v394, 0
      %v491 = vsel %vm423, %v395, 0
      %v494 = vsel %vm423, %v396, 0
      %v497 = vsel %vm423, %v397, 0
      %v500 = vsel %vm423, %v398, 0
      %v503 = vsel %vm423, %v399, 0
      %v506 = vsel %vm423, %v400, 0
      %v509 = vsel %vm423, %v401, 0
      %v512 = vsel %vm423, %v402, 0
      %v515 = vsel %vm423, %v403, 0
      %v518 = vsel %vm423, %v404, 0
      %520 = vmatprep.subr.bf16.mxu0 0
      %521 = vmatpush1.bf16.msra.mxu0 0
      %522 = vmatprep.subr.bf16.mxu0 0
      %523 = vmatpush1.bf16.msra.mxu0 0
      %524 = vmatprep.subr.bf16.mxu0 0
      %525 = vmatpush1.bf16.msra.mxu0 0
      %526 = vmatprep.subr.bf16.mxu0 0
      %527 = vmatpush1.bf16.msra.mxu0 0
      %528 = vmatprep.subr.bf16.mxu0 0
      %529 = vmatpush1.bf16.msra.mxu0 0
      %530 = vmatprep.subr.bf16.mxu0 0
      %531 = vmatpush1.bf16.msra.mxu0 %v419
      %532 = vmatprep.subr.bf16.mxu0 0
      %533 = vmatpush1.bf16.msra.mxu0 %v418
      %534 = vmatprep.subr.bf16.mxu0 0
      %535 = vmatpush1.bf16.msra.mxu0 %v417
      %536 = vmatprep.subr.bf16.mxu0 0
      %537 = vmatpush2.bf16.msra.mxu0 0
      %538 = vmatprep.subr.bf16.mxu0 0
      %539 = vmatpush2.bf16.msra.mxu0 0
      %540 = vmatprep.subr.bf16.mxu0 0
      %541 = vmatpush2.bf16.msra.mxu0 0
      %542 = vmatprep.subr.bf16.mxu0 0
      %543 = vmatpush2.bf16.msra.mxu0 0
      %544 = vmatprep.subr.bf16.mxu0 0
      %545 = vmatpush2.bf16.msra.mxu0 0
      %546 = vmatprep.subr.bf16.mxu0 0
      %547 = vmatpush2.bf16.msra.mxu0 0
      %548 = vmatprep.subr.bf16.mxu0 0
      %549 = vmatpush2.bf16.msra.mxu0 0
      %550 = vmatprep.subr.bf16.mxu0 0
      %551 = vmatpush2.bf16.msra.mxu0 0
      %552 = vmatprep.mubr.bf16.mxu0 0
      %553 = vmatmul.mubr.bf16.gmra.mxu0 %v425
      %v554 = vpop.f32.mrf.mxu0
      %v555 = vadd.f32 0.0, %v554
      %v556 = vpop.f32.mrf.mxu0
      %v557 = vpop.f32.mrf.mxu0
      %v558 = vadd.f32 0.0, %v557
      %v559 = vpop.f32.mrf.mxu0
      %560 = vmatprep.mubr.bf16.mxu0 0
      %561 = vmatmul.mubr.bf16.gmra.mxu0 %v428
      %v562 = vpop.f32.mrf.mxu0
      %v563 = vadd.f32 0.0, %v562
      %v564 = vpop.f32.mrf.mxu0
      %v565 = vpop.f32.mrf.mxu0
      %v566 = vadd.f32 0.0, %v565
      %v567 = vpop.f32.mrf.mxu0
      %568 = vmatprep.mubr.bf16.mxu0 0
      %569 = vmatmul.mubr.bf16.gmra.mxu0 %v431
      %v570 = vpop.f32.mrf.mxu0
      %v571 = vadd.f32 0.0, %v570
      %v572 = vpop.f32.mrf.mxu0
      %v573 = vpop.f32.mrf.mxu0
      %v574 = vadd.f32 0.0, %v573
      %v575 = vpop.f32.mrf.mxu0
      %576 = vmatprep.mubr.bf16.mxu0 0
      %577 = vmatmul.mubr.bf16.gmra.mxu0 %v434
      %v578 = vpop.f32.mrf.mxu0
      %v579 = vadd.f32 0.0, %v578
      %v580 = vpop.f32.mrf.mxu0
      %v581 = vpop.f32.mrf.mxu0
      %v582 = vadd.f32 0.0, %v581
      %v583 = vpop.f32.mrf.mxu0
      %584 = vmatprep.mubr.bf16.mxu0 0
      %585 = vmatmul.mubr.bf16.gmra.mxu0 %v437
      %v586 = vpop.f32.mrf.mxu0
      %v587 = vadd.f32 0.0, %v586
      %v588 = vpop.f32.mrf.mxu0
      %v589 = vpop.f32.mrf.mxu0
      %v590 = vadd.f32 0.0, %v589
      %v591 = vpop.f32.mrf.mxu0
      %592 = vmatprep.mubr.bf16.mxu0 0
      %593 = vmatmul.mubr.bf16.gmra.mxu0 %v440
      %v594 = vpop.f32.mrf.mxu0
      %v595 = vadd.f32 0.0, %v594
      %v596 = vpop.f32.mrf.mxu0
      %v597 = vpop.f32.mrf.mxu0
      %v598 = vadd.f32 0.0, %v597
      %v599 = vpop.f32.mrf.mxu0
      %600 = vmatprep.mubr.bf16.mxu0 0
      %601 = vmatmul.mubr.bf16.gmra.mxu0 %v443
      %v602 = vpop.f32.mrf.mxu0
      %v603 = vadd.f32 0.0, %v602
      %v604 = vpop.f32.mrf.mxu0
      %v605 = vpop.f32.mrf.mxu0
      %v606 = vadd.f32 0.0, %v605
      %v607 = vpop.f32.mrf.mxu0
      %608 = vmatprep.mubr.bf16.mxu0 0
      %609 = vmatmul.mubr.bf16.gmra.mxu0 %v446
      %v610 = vpop.f32.mrf.mxu0
      %v611 = vadd.f32 0.0, %v610
      %v612 = vpop.f32.mrf.mxu0
      %v613 = vpop.f32.mrf.mxu0
      %v614 = vadd.f32 0.0, %v613
      %v615 = vpop.f32.mrf.mxu0
      %616 = vmatprep.mubr.bf16.mxu0 0
      %617 = vmatmul.mubr.bf16.gmra.mxu0 %v449
      %v618 = vpop.f32.mrf.mxu0
      %v619 = vadd.f32 0.0, %v618
      %v620 = vpop.f32.mrf.mxu0
      %v621 = vpop.f32.mrf.mxu0
      %v622 = vadd.f32 0.0, %v621
      %v623 = vpop.f32.mrf.mxu0
      %624 = vmatprep.mubr.bf16.mxu0 0
      %625 = vmatmul.mubr.bf16.gmra.mxu0 %v452
      %v626 = vpop.f32.mrf.mxu0
      %v627 = vadd.f32 0.0, %v626
      %v628 = vpop.f32.mrf.mxu0
      %v629 = vpop.f32.mrf.mxu0
      %v630 = vadd.f32 0.0, %v629
      %v631 = vpop.f32.mrf.mxu0
      %632 = vmatprep.mubr.bf16.mxu0 0
      %633 = vmatmul.mubr.bf16.gmra.mxu0 %v455
      %v634 = vpop.f32.mrf.mxu0
      %v635 = vadd.f32 0.0, %v634
      %v636 = vpop.f32.mrf.mxu0
      %v637 = vpop.f32.mrf.mxu0
      %v638 = vadd.f32 0.0, %v637
      %v639 = vpop.f32.mrf.mxu0
      %640 = vmatprep.mubr.bf16.mxu0 0
      %641 = vmatmul.mubr.bf16.gmra.mxu0 %v458
      %v642 = vpop.f32.mrf.mxu0
      %v643 = vadd.f32 0.0, %v642
      %v644 = vpop.f32.mrf.mxu0
      %v645 = vpop.f32.mrf.mxu0
      %v646 = vadd.f32 0.0, %v645
      %v647 = vpop.f32.mrf.mxu0
      %648 = vmatprep.mubr.bf16.mxu0 0
      %649 = vmatmul.mubr.bf16.gmra.mxu0 %v461
      %v650 = vpop.f32.mrf.mxu0
      %v651 = vadd.f32 0.0, %v650
      %v652 = vpop.f32.mrf.mxu0
      %v653 = vpop.f32.mrf.mxu0
      %v654 = vadd.f32 0.0, %v653
      %v655 = vpop.f32.mrf.mxu0
      %656 = vmatprep.mubr.bf16.mxu0 0
      %657 = vmatmul.mubr.bf16.gmra.mxu0 %v464
      %v658 = vpop.f32.mrf.mxu0
      %v659 = vadd.f32 0.0, %v658
      %v660 = vpop.f32.mrf.mxu0
      %v661 = vpop.f32.mrf.mxu0
      %v662 = vadd.f32 0.0, %v661
      %v663 = vpop.f32.mrf.mxu0
      %664 = vmatprep.mubr.bf16.mxu0 0
      %665 = vmatmul.mubr.bf16.gmra.mxu0 %v467
      %v666 = vpop.f32.mrf.mxu0
      %v667 = vadd.f32 0.0, %v666
      %v668 = vpop.f32.mrf.mxu0
      %v669 = vpop.f32.mrf.mxu0
      %v670 = vadd.f32 0.0, %v669
      %v671 = vpop.f32.mrf.mxu0
      %672 = vmatprep.mubr.bf16.mxu0 0
      %673 = vmatmul.mubr.bf16.gmra.mxu0 %v470
      %v674 = vpop.f32.mrf.mxu0
      %v675 = vadd.f32 0.0, %v674
      %v676 = vpop.f32.mrf.mxu0
      %v677 = vpop.f32.mrf.mxu0
      %v678 = vadd.f32 0.0, %v677
      %v679 = vpop.f32.mrf.mxu0
      %680 = vmatprep.mubr.bf16.mxu0 0
      %681 = vmatmul.mubr.bf16.gmra.mxu0 %v473
      %v682 = vpop.f32.mrf.mxu0
      %v683 = vadd.f32 0.0, %v682
      %v684 = vpop.f32.mrf.mxu0
      %v685 = vpop.f32.mrf.mxu0
      %v686 = vadd.f32 0.0, %v685
      %v687 = vpop.f32.mrf.mxu0
      %688 = vmatprep.mubr.bf16.mxu0 0
      %689 = vmatmul.mubr.bf16.gmra.mxu0 %v476
      %v690 = vpop.f32.mrf.mxu0
      %v691 = vadd.f32 0.0, %v690
      %v692 = vpop.f32.mrf.mxu0
      %v693 = vpop.f32.mrf.mxu0
      %v694 = vadd.f32 0.0, %v693
      %v695 = vpop.f32.mrf.mxu0
      %696 = vmatprep.mubr.bf16.mxu0 0
      %697 = vmatmul.mubr.bf16.gmra.mxu0 %v479
      %v698 = vpop.f32.mrf.mxu0
      %v699 = vadd.f32 0.0, %v698
      %v700 = vpop.f32.mrf.mxu0
      %v701 = vpop.f32.mrf.mxu0
      %v702 = vadd.f32 0.0, %v701
      %v703 = vpop.f32.mrf.mxu0
      %704 = vmatprep.mubr.bf16.mxu0 0
      %705 = vmatmul.mubr.bf16.gmra.mxu0 %v482
      %v706 = vpop.f32.mrf.mxu0
      %v707 = vadd.f32 0.0, %v706
      %v708 = vpop.f32.mrf.mxu0
      %v709 = vpop.f32.mrf.mxu0
      %v710 = vadd.f32 0.0, %v709
      %v711 = vpop.f32.mrf.mxu0
      %712 = vmatprep.mubr.bf16.mxu0 0
      %713 = vmatmul.mubr.bf16.gmra.mxu0 %v485
      %v714 = vpop.f32.mrf.mxu0
      %v715 = vadd.f32 0.0, %v714
      %v716 = vpop.f32.mrf.mxu0
      %v717 = vpop.f32.mrf.mxu0
      %v718 = vadd.f32 0.0, %v717
      %v719 = vpop.f32.mrf.mxu0
      %720 = vmatprep.mubr.bf16.mxu0 0
      %721 = vmatmul.mubr.bf16.gmra.mxu0 %v488
      %v722 = vpop.f32.mrf.mxu0
      %v723 = vadd.f32 0.0, %v722
      %v724 = vpop.f32.mrf.mxu0
      %v725 = vpop.f32.mrf.mxu0
      %v726 = vadd.f32 0.0, %v725
      %v727 = vpop.f32.mrf.mxu0
      %728 = vmatprep.mubr.bf16.mxu0 0
      %729 = vmatmul.mubr.bf16.gmra.mxu0 %v491
      %v730 = vpop.f32.mrf.mxu0
      %v731 = vadd.f32 0.0, %v730
      %v732 = vpop.f32.mrf.mxu0
      %v733 = vpop.f32.mrf.mxu0
      %v734 = vadd.f32 0.0, %v733
      %v735 = vpop.f32.mrf.mxu0
      %736 = vmatprep.mubr.bf16.mxu0 0
      %737 = vmatmul.mubr.bf16.gmra.mxu0 %v494
      %v738 = vpop.f32.mrf.mxu0
      %v739 = vadd.f32 0.0, %v738
      %v740 = vpop.f32.mrf.mxu0
      %v741 = vpop.f32.mrf.mxu0
      %v742 = vadd.f32 0.0, %v741
      %v743 = vpop.f32.mrf.mxu0
      %744 = vmatprep.mubr.bf16.mxu0 0
      %745 = vmatmul.mubr.bf16.gmra.mxu0 %v497
      %v746 = vpop.f32.mrf.mxu0
      %v747 = vadd.f32 0.0, %v746
      %v748 = vpop.f32.mrf.mxu0
      %v749 = vpop.f32.mrf.mxu0
      %v750 = vadd.f32 0.0, %v749
      %v751 = vpop.f32.mrf.mxu0
      %752 = vmatprep.mubr.bf16.mxu0 0
      %753 = vmatmul.mubr.bf16.gmra.mxu0 %v500
      %v754 = vpop.f32.mrf.mxu0
      %v755 = vadd.f32 0.0, %v754
      %v756 = vpop.f32.mrf.mxu0
      %v757 = vpop.f32.mrf.mxu0
      %v758 = vadd.f32 0.0, %v757
      %v759 = vpop.f32.mrf.mxu0
      %760 = vmatprep.mubr.bf16.mxu0 0
      %761 = vmatmul.mubr.bf16.gmra.mxu0 %v503
      %v762 = vpop.f32.mrf.mxu0
      %v763 = vadd.f32 0.0, %v762
      %v764 = vpop.f32.mrf.mxu0
      %v765 = vpop.f32.mrf.mxu0
      %v766 = vadd.f32 0.0, %v765
      %v767 = vpop.f32.mrf.mxu0
      %768 = vmatprep.mubr.bf16.mxu0 0
      %769 = vmatmul.mubr.bf16.gmra.mxu0 %v506
      %v770 = vpop.f32.mrf.mxu0
      %v771 = vadd.f32 0.0, %v770
      %v772 = vpop.f32.mrf.mxu0
      %v773 = vpop.f32.mrf.mxu0
      %v774 = vadd.f32 0.0, %v773
      %v775 = vpop.f32.mrf.mxu0
      %776 = vmatprep.mubr.bf16.mxu0 0
      %777 = vmatmul.mubr.bf16.gmra.mxu0 %v509
      %v778 = vpop.f32.mrf.mxu0
      %v779 = vadd.f32 0.0, %v778
      %v780 = vpop.f32.mrf.mxu0
      %v781 = vpop.f32.mrf.mxu0
      %v782 = vadd.f32 0.0, %v781
      %v783 = vpop.f32.mrf.mxu0
      %784 = vmatprep.mubr.bf16.mxu0 0
      %785 = vmatmul.mubr.bf16.gmra.mxu0 %v512
      %v786 = vpop.f32.mrf.mxu0
      %v787 = vadd.f32 0.0, %v786
      %v788 = vpop.f32.mrf.mxu0
      %v789 = vpop.f32.mrf.mxu0
      %v790 = vadd.f32 0.0, %v789
      %v791 = vpop.f32.mrf.mxu0
      %792 = vmatprep.mubr.bf16.mxu0 0
      %793 = vmatmul.mubr.bf16.gmra.mxu0 %v515
      %v794 = vpop.f32.mrf.mxu0
      %v795 = vadd.f32 0.0, %v794
      %v796 = vpop.f32.mrf.mxu0
      %v797 = vpop.f32.mrf.mxu0
      %v798 = vadd.f32 0.0, %v797
      %v799 = vpop.f32.mrf.mxu0
      %800 = vmatprep.mubr.bf16.mxu0 0
      %801 = vmatmul.mubr.bf16.gmra.mxu0 %v518
      %v802 = vpop.f32.mrf.mxu0
      %v803 = vadd.f32 0.0, %v802
      %v804 = vpop.f32.mrf.mxu0
      %v805 = vpop.f32.mrf.mxu0
      %v806 = vadd.f32 0.0, %v805
      %v807 = vpop.f32.mrf.mxu0
      %808 = vdwg.mxu0
      %s809 = scalar_lea.vmem %s1, 24
      %v810 = vld [vmem:[%s809] sm:$0xf]
      %v811 = vld [vmem:[%s809 + $0x4] sm:$0xf]
      %v812 = vld [vmem:[%s809 + $0x8] sm:$0xf]
      %v813 = vld [vmem:[%s809 + $0xc] sm:$0xf]
      %v814 = vld [vmem:[%s809 + $0x10] sm:$0xf]
      %v815 = vld [vmem:[%s809 + $0x14] sm:$0xf]
      %v822 = vunpack.c.l.b16 %v810
      %v823 = vunpack.c.l.b16 %v811
      %v824 = vunpack.c.l.b16 %v812
      %v825 = vunpack.c.l.b16 %v813
      %v826 = vunpack.c.l.b16 %v814
      %v827 = vunpack.c.l.b16 %v815
      %v828 = vpack.c.b16 %v823, %v822
      %v829 = vpack.c.b16 %v825, %v824
      %v830 = vpack.c.b16 %v827, %v826
      %834 = vmatprep.subr.bf16.mxu0 0
      %835 = vmatpush1.bf16.msra.mxu0 0
      %836 = vmatprep.subr.bf16.mxu0 0
      %837 = vmatpush1.bf16.msra.mxu0 0
      %838 = vmatprep.subr.bf16.mxu0 0
      %839 = vmatpush1.bf16.msra.mxu0 0
      %840 = vmatprep.subr.bf16.mxu0 0
      %841 = vmatpush1.bf16.msra.mxu0 0
      %842 = vmatprep.subr.bf16.mxu0 0
      %843 = vmatpush1.bf16.msra.mxu0 0
      %844 = vmatprep.subr.bf16.mxu0 0
      %845 = vmatpush1.bf16.msra.mxu0 %v830
      %846 = vmatprep.subr.bf16.mxu0 0
      %847 = vmatpush1.bf16.msra.mxu0 %v829
      %848 = vmatprep.subr.bf16.mxu0 0
      %849 = vmatpush1.bf16.msra.mxu0 %v828
      %850 = vmatprep.subr.bf16.mxu0 0
      %851 = vmatpush2.bf16.msra.mxu0 0
      %852 = vmatprep.subr.bf16.mxu0 0
      %853 = vmatpush2.bf16.msra.mxu0 0
      %854 = vmatprep.subr.bf16.mxu0 0
      %855 = vmatpush2.bf16.msra.mxu0 0
      %856 = vmatprep.subr.bf16.mxu0 0
      %857 = vmatpush2.bf16.msra.mxu0 0
      %858 = vmatprep.subr.bf16.mxu0 0
      %859 = vmatpush2.bf16.msra.mxu0 0
      %860 = vmatprep.subr.bf16.mxu0 0
      %861 = vmatpush2.bf16.msra.mxu0 0
      %862 = vmatprep.subr.bf16.mxu0 0
      %863 = vmatpush2.bf16.msra.mxu0 0
      %864 = vmatprep.subr.bf16.mxu0 0
      %865 = vmatpush2.bf16.msra.mxu0 0
      %866 = vmatprep.mubr.bf16.mxu0 0
      %867 = vmatmul.mubr.bf16.gmra.mxu0 %v425
      %v868 = vpop.f32.mrf.mxu0
      %v869 = vadd.f32 0.0, %v868
      %v870 = vpop.f32.mrf.mxu0
      %v871 = vpop.f32.mrf.mxu0
      %v872 = vadd.f32 0.0, %v871
      %v873 = vpop.f32.mrf.mxu0
      %874 = vmatprep.mubr.bf16.mxu0 0
      %875 = vmatmul.mubr.bf16.gmra.mxu0 %v428
      %v876 = vpop.f32.mrf.mxu0
      %v877 = vadd.f32 0.0, %v876
      %v878 = vpop.f32.mrf.mxu0
      %v879 = vpop.f32.mrf.mxu0
      %v880 = vadd.f32 0.0, %v879
      %v881 = vpop.f32.mrf.mxu0
      %882 = vmatprep.mubr.bf16.mxu0 0
      %883 = vmatmul.mubr.bf16.gmra.mxu0 %v431
      %v884 = vpop.f32.mrf.mxu0
      %v885 = vadd.f32 0.0, %v884
      %v886 = vpop.f32.mrf.mxu0
      %v887 = vpop.f32.mrf.mxu0
      %v888 = vadd.f32 0.0, %v887
      %v889 = vpop.f32.mrf.mxu0
      %890 = vmatprep.mubr.bf16.mxu0 0
      %891 = vmatmul.mubr.bf16.gmra.mxu0 %v434
      %v892 = vpop.f32.mrf.mxu0
      %v893 = vadd.f32 0.0, %v892
      %v894 = vpop.f32.mrf.mxu0
      %v895 = vpop.f32.mrf.mxu0
      %v896 = vadd.f32 0.0, %v895
      %v897 = vpop.f32.mrf.mxu0
      %898 = vmatprep.mubr.bf16.mxu0 0
      %899 = vmatmul.mubr.bf16.gmra.mxu0 %v437
      %v900 = vpop.f32.mrf.mxu0
      %v901 = vadd.f32 0.0, %v900
      %v902 = vpop.f32.mrf.mxu0
      %v903 = vpop.f32.mrf.mxu0
      %v904 = vadd.f32 0.0, %v903
      %v905 = vpop.f32.mrf.mxu0
      %906 = vmatprep.mubr.bf16.mxu0 0
      %907 = vmatmul.mubr.bf16.gmra.mxu0 %v440
      %v908 = vpop.f32.mrf.mxu0
      %v909 = vadd.f32 0.0, %v908
      %v910 = vpop.f32.mrf.mxu0
      %v911 = vpop.f32.mrf.mxu0
      %v912 = vadd.f32 0.0, %v911
      %v913 = vpop.f32.mrf.mxu0
      %914 = vmatprep.mubr.bf16.mxu0 0
      %915 = vmatmul.mubr.bf16.gmra.mxu0 %v443
      %v916 = vpop.f32.mrf.mxu0
      %v917 = vadd.f32 0.0, %v916
      %v918 = vpop.f32.mrf.mxu0
      %v919 = vpop.f32.mrf.mxu0
      %v920 = vadd.f32 0.0, %v919
      %v921 = vpop.f32.mrf.mxu0
      %922 = vmatprep.mubr.bf16.mxu0 0
      %923 = vmatmul.mubr.bf16.gmra.mxu0 %v446
      %v924 = vpop.f32.mrf.mxu0
      %v925 = vadd.f32 0.0, %v924
      %v926 = vpop.f32.mrf.mxu0
      %v927 = vpop.f32.mrf.mxu0
      %v928 = vadd.f32 0.0, %v927
      %v929 = vpop.f32.mrf.mxu0
      %930 = vmatprep.mubr.bf16.mxu0 0
      %931 = vmatmul.mubr.bf16.gmra.mxu0 %v449
      %v932 = vpop.f32.mrf.mxu0
      %v933 = vadd.f32 0.0, %v932
      %v934 = vpop.f32.mrf.mxu0
      %v935 = vpop.f32.mrf.mxu0
      %v936 = vadd.f32 0.0, %v935
      %v937 = vpop.f32.mrf.mxu0
      %938 = vmatprep.mubr.bf16.mxu0 0
      %939 = vmatmul.mubr.bf16.gmra.mxu0 %v452
      %v940 = vpop.f32.mrf.mxu0
      %v941 = vadd.f32 0.0, %v940
      %v942 = vpop.f32.mrf.mxu0
      %v943 = vpop.f32.mrf.mxu0
      %v944 = vadd.f32 0.0, %v943
      %v945 = vpop.f32.mrf.mxu0
      %946 = vmatprep.mubr.bf16.mxu0 0
      %947 = vmatmul.mubr.bf16.gmra.mxu0 %v455
      %v948 = vpop.f32.mrf.mxu0
      %v949 = vadd.f32 0.0, %v948
      %v950 = vpop.f32.mrf.mxu0
      %v951 = vpop.f32.mrf.mxu0
      %v952 = vadd.f32 0.0, %v951
      %v953 = vpop.f32.mrf.mxu0
      %954 = vmatprep.mubr.bf16.mxu0 0
      %955 = vmatmul.mubr.bf16.gmra.mxu0 %v458
      %v956 = vpop.f32.mrf.mxu0
      %v957 = vadd.f32 0.0, %v956
      %v958 = vpop.f32.mrf.mxu0
      %v959 = vpop.f32.mrf.mxu0
      %v960 = vadd.f32 0.0, %v959
      %v961 = vpop.f32.mrf.mxu0
      %962 = vmatprep.mubr.bf16.mxu0 0
      %963 = vmatmul.mubr.bf16.gmra.mxu0 %v461
      %v964 = vpop.f32.mrf.mxu0
      %v965 = vadd.f32 0.0, %v964
      %v966 = vpop.f32.mrf.mxu0
      %v967 = vpop.f32.mrf.mxu0
      %v968 = vadd.f32 0.0, %v967
      %v969 = vpop.f32.mrf.mxu0
      %970 = vmatprep.mubr.bf16.mxu0 0
      %971 = vmatmul.mubr.bf16.gmra.mxu0 %v464
      %v972 = vpop.f32.mrf.mxu0
      %v973 = vadd.f32 0.0, %v972
      %v974 = vpop.f32.mrf.mxu0
      %v975 = vpop.f32.mrf.mxu0
      %v976 = vadd.f32 0.0, %v975
      %v977 = vpop.f32.mrf.mxu0
      %978 = vmatprep.mubr.bf16.mxu0 0
      %979 = vmatmul.mubr.bf16.gmra.mxu0 %v467
      %v980 = vpop.f32.mrf.mxu0
      %v981 = vadd.f32 0.0, %v980
      %v982 = vpop.f32.mrf.mxu0
      %v983 = vpop.f32.mrf.mxu0
      %v984 = vadd.f32 0.0, %v983
      %v985 = vpop.f32.mrf.mxu0
      %986 = vmatprep.mubr.bf16.mxu0 0
      %987 = vmatmul.mubr.bf16.gmra.mxu0 %v470
      %v988 = vpop.f32.mrf.mxu0
      %v989 = vadd.f32 0.0, %v988
      %v990 = vpop.f32.mrf.mxu0
      %v991 = vpop.f32.mrf.mxu0
      %v992 = vadd.f32 0.0, %v991
      %v993 = vpop.f32.mrf.mxu0
      %994 = vmatprep.mubr.bf16.mxu0 0
      %995 = vmatmul.mubr.bf16.gmra.mxu0 %v473
      %v996 = vpop.f32.mrf.mxu0
      %v997 = vadd.f32 0.0, %v996
      %v998 = vpop.f32.mrf.mxu0
      %v999 = vpop.f32.mrf.mxu0
      %v1000 = vadd.f32 0.0, %v999
      %v1001 = vpop.f32.mrf.mxu0
      %1002 = vmatprep.mubr.bf16.mxu0 0
      %1003 = vmatmul.mubr.bf16.gmra.mxu0 %v476
      %v1004 = vpop.f32.mrf.mxu0
      %v1005 = vadd.f32 0.0, %v1004
      %v1006 = vpop.f32.mrf.mxu0
      %v1007 = vpop.f32.mrf.mxu0
      %v1008 = vadd.f32 0.0, %v1007
      %v1009 = vpop.f32.mrf.mxu0
      %1010 = vmatprep.mubr.bf16.mxu0 0
      %1011 = vmatmul.mubr.bf16.gmra.mxu0 %v479
      %v1012 = vpop.f32.mrf.mxu0
      %v1013 = vadd.f32 0.0, %v1012
      %v1014 = vpop.f32.mrf.mxu0
      %v1015 = vpop.f32.mrf.mxu0
      %v1016 = vadd.f32 0.0, %v1015
      %v1017 = vpop.f32.mrf.mxu0
      %1018 = vmatprep.mubr.bf16.mxu0 0
      %1019 = vmatmul.mubr.bf16.gmra.mxu0 %v482
      %v1020 = vpop.f32.mrf.mxu0
      %v1021 = vadd.f32 0.0, %v1020
      %v1022 = vpop.f32.mrf.mxu0
      %v1023 = vpop.f32.mrf.mxu0
      %v1024 = vadd.f32 0.0, %v1023
      %v1025 = vpop.f32.mrf.mxu0
      %1026 = vmatprep.mubr.bf16.mxu0 0
      %1027 = vmatmul.mubr.bf16.gmra.mxu0 %v485
      %v1028 = vpop.f32.mrf.mxu0
      %v1029 = vadd.f32 0.0, %v1028
      %v1030 = vpop.f32.mrf.mxu0
      %v1031 = vpop.f32.mrf.mxu0
      %v1032 = vadd.f32 0.0, %v1031
      %v1033 = vpop.f32.mrf.mxu0
      %1034 = vmatprep.mubr.bf16.mxu0 0
      %1035 = vmatmul.mubr.bf16.gmra.mxu0 %v488
      %v1036 = vpop.f32.mrf.mxu0
      %v1037 = vadd.f32 0.0, %v1036
      %v1038 = vpop.f32.mrf.mxu0
      %v1039 = vpop.f32.mrf.mxu0
      %v1040 = vadd.f32 0.0, %v1039
      %v1041 = vpop.f32.mrf.mxu0
      %1042 = vmatprep.mubr.bf16.mxu0 0
      %1043 = vmatmul.mubr.bf16.gmra.mxu0 %v491
      %v1044 = vpop.f32.mrf.mxu0
      %v1045 = vadd.f32 0.0, %v1044
      %v1046 = vpop.f32.mrf.mxu0
      %v1047 = vpop.f32.mrf.mxu0
      %v1048 = vadd.f32 0.0, %v1047
      %v1049 = vpop.f32.mrf.mxu0
      %1050 = vmatprep.mubr.bf16.mxu0 0
      %1051 = vmatmul.mubr.bf16.gmra.mxu0 %v494
      %v1052 = vpop.f32.mrf.mxu0
      %v1053 = vadd.f32 0.0, %v1052
      %v1054 = vpop.f32.mrf.mxu0
      %v1055 = vpop.f32.mrf.mxu0
      %v1056 = vadd.f32 0.0, %v1055
      %v1057 = vpop.f32.mrf.mxu0
      %1058 = vmatprep.mubr.bf16.mxu0 0
      %1059 = vmatmul.mubr.bf16.gmra.mxu0 %v497
      %v1060 = vpop.f32.mrf.mxu0
      %v1061 = vadd.f32 0.0, %v1060
      %v1062 = vpop.f32.mrf.mxu0
      %v1063 = vpop.f32.mrf.mxu0
      %v1064 = vadd.f32 0.0, %v1063
      %v1065 = vpop.f32.mrf.mxu0
      %1066 = vmatprep.mubr.bf16.mxu0 0
      %1067 = vmatmul.mubr.bf16.gmra.mxu0 %v500
      %v1068 = vpop.f32.mrf.mxu0
      %v1069 = vadd.f32 0.0, %v1068
      %v1070 = vpop.f32.mrf.mxu0
      %v1071 = vpop.f32.mrf.mxu0
      %v1072 = vadd.f32 0.0, %v1071
      %v1073 = vpop.f32.mrf.mxu0
      %1074 = vmatprep.mubr.bf16.mxu0 0
      %1075 = vmatmul.mubr.bf16.gmra.mxu0 %v503
      %v1076 = vpop.f32.mrf.mxu0
      %v1077 = vadd.f32 0.0, %v1076
      %v1078 = vpop.f32.mrf.mxu0
      %v1079 = vpop.f32.mrf.mxu0
      %v1080 = vadd.f32 0.0, %v1079
      %v1081 = vpop.f32.mrf.mxu0
      %1082 = vmatprep.mubr.bf16.mxu0 0
      %1083 = vmatmul.mubr.bf16.gmra.mxu0 %v506
      %v1084 = vpop.f32.mrf.mxu0
      %v1085 = vadd.f32 0.0, %v1084
      %v1086 = vpop.f32.mrf.mxu0
      %v1087 = vpop.f32.mrf.mxu0
      %v1088 = vadd.f32 0.0, %v1087
      %v1089 = vpop.f32.mrf.mxu0
      %1090 = vmatprep.mubr.bf16.mxu0 0
      %1091 = vmatmul.mubr.bf16.gmra.mxu0 %v509
      %v1092 = vpop.f32.mrf.mxu0
      %v1093 = vadd.f32 0.0, %v1092
      %v1094 = vpop.f32.mrf.mxu0
      %v1095 = vpop.f32.mrf.mxu0
      %v1096 = vadd.f32 0.0, %v1095
      %v1097 = vpop.f32.mrf.mxu0
      %1098 = vmatprep.mubr.bf16.mxu0 0
      %1099 = vmatmul.mubr.bf16.gmra.mxu0 %v512
      %v1100 = vpop.f32.mrf.mxu0
      %v1101 = vadd.f32 0.0, %v1100
      %v1102 = vpop.f32.mrf.mxu0
      %v1103 = vpop.f32.mrf.mxu0
      %v1104 = vadd.f32 0.0, %v1103
      %v1105 = vpop.f32.mrf.mxu0
      %1106 = vmatprep.mubr.bf16.mxu0 0
      %1107 = vmatmul.mubr.bf16.gmra.mxu0 %v515
      %v1108 = vpop.f32.mrf.mxu0
      %v1109 = vadd.f32 0.0, %v1108
      %v1110 = vpop.f32.mrf.mxu0
      %v1111 = vpop.f32.mrf.mxu0
      %v1112 = vadd.f32 0.0, %v1111
      %v1113 = vpop.f32.mrf.mxu0
      %1114 = vmatprep.mubr.bf16.mxu0 0
      %1115 = vmatmul.mubr.bf16.gmra.mxu0 %v518
      %v1116 = vpop.f32.mrf.mxu0
      %v1117 = vadd.f32 0.0, %v1116
      %v1118 = vpop.f32.mrf.mxu0
      %v1119 = vpop.f32.mrf.mxu0
      %v1120 = vadd.f32 0.0, %v1119
      %v1121 = vpop.f32.mrf.mxu0
      %1122 = vdwg.mxu0
      %v1123 = vmax.f32 %v555, %v869
      %v1124 = vmax.f32 %v558, %v872
      %v1125 = vmax.f32 %v563, %v877
      %v1126 = vmax.f32 %v566, %v880
      %v1127 = vmax.f32 %v571, %v885
      %v1128 = vmax.f32 %v574, %v888
      %v1129 = vmax.f32 %v579, %v893
      %v1130 = vmax.f32 %v582, %v896
      %v1131 = vmax.f32 %v587, %v901
      %v1132 = vmax.f32 %v590, %v904
      %v1133 = vmax.f32 %v595, %v909
      %v1134 = vmax.f32 %v598, %v912
      %v1135 = vmax.f32 %v603, %v917
      %v1136 = vmax.f32 %v606, %v920
      %v1137 = vmax.f32 %v611, %v925
      %v1138 = vmax.f32 %v614, %v928
      %v1139 = vmax.f32 %v619, %v933
      %v1140 = vmax.f32 %v622, %v936
      %v1141 = vmax.f32 %v627, %v941
      %v1142 = vmax.f32 %v630, %v944
      %v1143 = vmax.f32 %v635, %v949
      %v1144 = vmax.f32 %v638, %v952
      %v1145 = vmax.f32 %v643, %v957
      %v1146 = vmax.f32 %v646, %v960
      %v1147 = vmax.f32 %v651, %v965
      %v1148 = vmax.f32 %v654, %v968
      %v1149 = vmax.f32 %v659, %v973
      %v1150 = vmax.f32 %v662, %v976
      %v1151 = vmax.f32 %v667, %v981
      %v1152 = vmax.f32 %v670, %v984
      %v1153 = vmax.f32 %v675, %v989
      %v1154 = vmax.f32 %v678, %v992
      %v1155 = vmax.f32 %v683, %v997
      %v1156 = vmax.f32 %v686, %v1000
      %v1157 = vmax.f32 %v691, %v1005
      %v1158 = vmax.f32 %v694, %v1008
      %v1159 = vmax.f32 %v699, %v1013
      %v1160 = vmax.f32 %v702, %v1016
      %v1161 = vmax.f32 %v707, %v1021
      %v1162 = vmax.f32 %v710, %v1024
      %v1163 = vmax.f32 %v715, %v1029
      %v1164 = vmax.f32 %v718, %v1032
      %v1165 = vmax.f32 %v723, %v1037
      %v1166 = vmax.f32 %v726, %v1040
      %v1167 = vmax.f32 %v731, %v1045
      %v1168 = vmax.f32 %v734, %v1048
      %v1169 = vmax.f32 %v739, %v1053
      %v1170 = vmax.f32 %v742, %v1056
      %v1171 = vmax.f32 %v747, %v1061
      %v1172 = vmax.f32 %v750, %v1064
      %v1173 = vmax.f32 %v755, %v1069
      %v1174 = vmax.f32 %v758, %v1072
      %v1175 = vmax.f32 %v763, %v1077
      %v1176 = vmax.f32 %v766, %v1080
      %v1177 = vmax.f32 %v771, %v1085
      %v1178 = vmax.f32 %v774, %v1088
      %v1179 = vmax.f32 %v779, %v1093
      %v1180 = vmax.f32 %v782, %v1096
      %v1181 = vmax.f32 %v787, %v1101
      %v1182 = vmax.f32 %v790, %v1104
      %v1183 = vmax.f32 %v795, %v1109
      %v1184 = vmax.f32 %v798, %v1112
      %v1185 = vmax.f32 %v803, %v1117
      %v1186 = vmax.f32 %v806, %v1120
      %s1187 = scalar_lea.vmem %s1, 48
      %v1188 = vld [vmem:[%s1187] sm:$0xf]
      %v1189 = vld [vmem:[%s1187 + $0x4] sm:$0xf]
      %v1190 = vld [vmem:[%s1187 + $0x8] sm:$0xf]
      %v1191 = vld [vmem:[%s1187 + $0xc] sm:$0xf]
      %v1192 = vld [vmem:[%s1187 + $0x10] sm:$0xf]
      %v1193 = vld [vmem:[%s1187 + $0x14] sm:$0xf]
      %v1200 = vunpack.c.l.b16 %v1188
      %v1201 = vunpack.c.l.b16 %v1189
      %v1202 = vunpack.c.l.b16 %v1190
      %v1203 = vunpack.c.l.b16 %v1191
      %v1204 = vunpack.c.l.b16 %v1192
      %v1205 = vunpack.c.l.b16 %v1193
      %v1206 = vpack.c.b16 %v1201, %v1200
      %v1207 = vpack.c.b16 %v1203, %v1202
      %v1208 = vpack.c.b16 %v1205, %v1204
      %1212 = vmatprep.subr.bf16.mxu0 0
      %1213 = vmatpush1.bf16.msra.mxu0 0
      %1214 = vmatprep.subr.bf16.mxu0 0
      %1215 = vmatpush1.bf16.msra.mxu0 0
      %1216 = vmatprep.subr.bf16.mxu0 0
      %1217 = vmatpush1.bf16.msra.mxu0 0
      %1218 = vmatprep.subr.bf16.mxu0 0
      %1219 = vmatpush1.bf16.msra.mxu0 0
      %1220 = vmatprep.subr.bf16.mxu0 0
      %1221 = vmatpush1.bf16.msra.mxu0 0
      %1222 = vmatprep.subr.bf16.mxu0 0
      %1223 = vmatpush1.bf16.msra.mxu0 %v1208
      %1224 = vmatprep.subr.bf16.mxu0 0
      %1225 = vmatpush1.bf16.msra.mxu0 %v1207
      %1226 = vmatprep.subr.bf16.mxu0 0
      %1227 = vmatpush1.bf16.msra.mxu0 %v1206
      %1228 = vmatprep.subr.bf16.mxu0 0
      %1229 = vmatpush2.bf16.msra.mxu0 0
      %1230 = vmatprep.subr.bf16.mxu0 0
      %1231 = vmatpush2.bf16.msra.mxu0 0
      %1232 = vmatprep.subr.bf16.mxu0 0
      %1233 = vmatpush2.bf16.msra.mxu0 0
      %1234 = vmatprep.subr.bf16.mxu0 0
      %1235 = vmatpush2.bf16.msra.mxu0 0
      %1236 = vmatprep.subr.bf16.mxu0 0
      %1237 = vmatpush2.bf16.msra.mxu0 0
      %1238 = vmatprep.subr.bf16.mxu0 0
      %1239 = vmatpush2.bf16.msra.mxu0 0
      %1240 = vmatprep.subr.bf16.mxu0 0
      %1241 = vmatpush2.bf16.msra.mxu0 0
      %1242 = vmatprep.subr.bf16.mxu0 0
      %1243 = vmatpush2.bf16.msra.mxu0 0
      %1244 = vmatprep.mubr.bf16.mxu0 0
      %1245 = vmatmul.mubr.bf16.gmra.mxu0 %v425
      %v1246 = vpop.f32.mrf.mxu0
      %v1247 = vadd.f32 0.0, %v1246
      %v1248 = vpop.f32.mrf.mxu0
      %v1249 = vpop.f32.mrf.mxu0
      %v1250 = vadd.f32 0.0, %v1249
      %v1251 = vpop.f32.mrf.mxu0
      %1252 = vmatprep.mubr.bf16.mxu0 0
      %1253 = vmatmul.mubr.bf16.gmra.mxu0 %v428
      %v1254 = vpop.f32.mrf.mxu0
      %v1255 = vadd.f32 0.0, %v1254
      %v1256 = vpop.f32.mrf.mxu0
      %v1257 = vpop.f32.mrf.mxu0
      %v1258 = vadd.f32 0.0, %v1257
      %v1259 = vpop.f32.mrf.mxu0
      %1260 = vmatprep.mubr.bf16.mxu0 0
      %1261 = vmatmul.mubr.bf16.gmra.mxu0 %v431
      %v1262 = vpop.f32.mrf.mxu0
      %v1263 = vadd.f32 0.0, %v1262
      %v1264 = vpop.f32.mrf.mxu0
      %v1265 = vpop.f32.mrf.mxu0
      %v1266 = vadd.f32 0.0, %v1265
      %v1267 = vpop.f32.mrf.mxu0
      %1268 = vmatprep.mubr.bf16.mxu0 0
      %1269 = vmatmul.mubr.bf16.gmra.mxu0 %v434
      %v1270 = vpop.f32.mrf.mxu0
      %v1271 = vadd.f32 0.0, %v1270
      %v1272 = vpop.f32.mrf.mxu0
      %v1273 = vpop.f32.mrf.mxu0
      %v1274 = vadd.f32 0.0, %v1273
      %v1275 = vpop.f32.mrf.mxu0
      %1276 = vmatprep.mubr.bf16.mxu0 0
      %1277 = vmatmul.mubr.bf16.gmra.mxu0 %v437
      %v1278 = vpop.f32.mrf.mxu0
      %v1279 = vadd.f32 0.0, %v1278
      %v1280 = vpop.f32.mrf.mxu0
      %v1281 = vpop.f32.mrf.mxu0
      %v1282 = vadd.f32 0.0, %v1281
      %v1283 = vpop.f32.mrf.mxu0
      %1284 = vmatprep.mubr.bf16.mxu0 0
      %1285 = vmatmul.mubr.bf16.gmra.mxu0 %v440
      %v1286 = vpop.f32.mrf.mxu0
      %v1287 = vadd.f32 0.0, %v1286
      %v1288 = vpop.f32.mrf.mxu0
      %v1289 = vpop.f32.mrf.mxu0
      %v1290 = vadd.f32 0.0, %v1289
      %v1291 = vpop.f32.mrf.mxu0
      %1292 = vmatprep.mubr.bf16.mxu0 0
      %1293 = vmatmul.mubr.bf16.gmra.mxu0 %v443
      %v1294 = vpop.f32.mrf.mxu0
      %v1295 = vadd.f32 0.0, %v1294
      %v1296 = vpop.f32.mrf.mxu0
      %v1297 = vpop.f32.mrf.mxu0
      %v1298 = vadd.f32 0.0, %v1297
      %v1299 = vpop.f32.mrf.mxu0
      %1300 = vmatprep.mubr.bf16.mxu0 0
      %1301 = vmatmul.mubr.bf16.gmra.mxu0 %v446
      %v1302 = vpop.f32.mrf.mxu0
      %v1303 = vadd.f32 0.0, %v1302
      %v1304 = vpop.f32.mrf.mxu0
      %v1305 = vpop.f32.mrf.mxu0
      %v1306 = vadd.f32 0.0, %v1305
      %v1307 = vpop.f32.mrf.mxu0
      %1308 = vmatprep.mubr.bf16.mxu0 0
      %1309 = vmatmul.mubr.bf16.gmra.mxu0 %v449
      %v1310 = vpop.f32.mrf.mxu0
      %v1311 = vadd.f32 0.0, %v1310
      %v1312 = vpop.f32.mrf.mxu0
      %v1313 = vpop.f32.mrf.mxu0
      %v1314 = vadd.f32 0.0, %v1313
      %v1315 = vpop.f32.mrf.mxu0
      %1316 = vmatprep.mubr.bf16.mxu0 0
      %1317 = vmatmul.mubr.bf16.gmra.mxu0 %v452
      %v1318 = vpop.f32.mrf.mxu0
      %v1319 = vadd.f32 0.0, %v1318
      %v1320 = vpop.f32.mrf.mxu0
      %v1321 = vpop.f32.mrf.mxu0
      %v1322 = vadd.f32 0.0, %v1321
      %v1323 = vpop.f32.mrf.mxu0
      %1324 = vmatprep.mubr.bf16.mxu0 0
      %1325 = vmatmul.mubr.bf16.gmra.mxu0 %v455
      %v1326 = vpop.f32.mrf.mxu0
      %v1327 = vadd.f32 0.0, %v1326
      %v1328 = vpop.f32.mrf.mxu0
      %v1329 = vpop.f32.mrf.mxu0
      %v1330 = vadd.f32 0.0, %v1329
      %v1331 = vpop.f32.mrf.mxu0
      %1332 = vmatprep.mubr.bf16.mxu0 0
      %1333 = vmatmul.mubr.bf16.gmra.mxu0 %v458
      %v1334 = vpop.f32.mrf.mxu0
      %v1335 = vadd.f32 0.0, %v1334
      %v1336 = vpop.f32.mrf.mxu0
      %v1337 = vpop.f32.mrf.mxu0
      %v1338 = vadd.f32 0.0, %v1337
      %v1339 = vpop.f32.mrf.mxu0
      %1340 = vmatprep.mubr.bf16.mxu0 0
      %1341 = vmatmul.mubr.bf16.gmra.mxu0 %v461
      %v1342 = vpop.f32.mrf.mxu0
      %v1343 = vadd.f32 0.0, %v1342
      %v1344 = vpop.f32.mrf.mxu0
      %v1345 = vpop.f32.mrf.mxu0
      %v1346 = vadd.f32 0.0, %v1345
      %v1347 = vpop.f32.mrf.mxu0
      %1348 = vmatprep.mubr.bf16.mxu0 0
      %1349 = vmatmul.mubr.bf16.gmra.mxu0 %v464
      %v1350 = vpop.f32.mrf.mxu0
      %v1351 = vadd.f32 0.0, %v1350
      %v1352 = vpop.f32.mrf.mxu0
      %v1353 = vpop.f32.mrf.mxu0
      %v1354 = vadd.f32 0.0, %v1353
      %v1355 = vpop.f32.mrf.mxu0
      %1356 = vmatprep.mubr.bf16.mxu0 0
      %1357 = vmatmul.mubr.bf16.gmra.mxu0 %v467
      %v1358 = vpop.f32.mrf.mxu0
      %v1359 = vadd.f32 0.0, %v1358
      %v1360 = vpop.f32.mrf.mxu0
      %v1361 = vpop.f32.mrf.mxu0
      %v1362 = vadd.f32 0.0, %v1361
      %v1363 = vpop.f32.mrf.mxu0
      %1364 = vmatprep.mubr.bf16.mxu0 0
      %1365 = vmatmul.mubr.bf16.gmra.mxu0 %v470
      %v1366 = vpop.f32.mrf.mxu0
      %v1367 = vadd.f32 0.0, %v1366
      %v1368 = vpop.f32.mrf.mxu0
      %v1369 = vpop.f32.mrf.mxu0
      %v1370 = vadd.f32 0.0, %v1369
      %v1371 = vpop.f32.mrf.mxu0
      %1372 = vmatprep.mubr.bf16.mxu0 0
      %1373 = vmatmul.mubr.bf16.gmra.mxu0 %v473
      %v1374 = vpop.f32.mrf.mxu0
      %v1375 = vadd.f32 0.0, %v1374
      %v1376 = vpop.f32.mrf.mxu0
      %v1377 = vpop.f32.mrf.mxu0
      %v1378 = vadd.f32 0.0, %v1377
      %v1379 = vpop.f32.mrf.mxu0
      %1380 = vmatprep.mubr.bf16.mxu0 0
      %1381 = vmatmul.mubr.bf16.gmra.mxu0 %v476
      %v1382 = vpop.f32.mrf.mxu0
      %v1383 = vadd.f32 0.0, %v1382
      %v1384 = vpop.f32.mrf.mxu0
      %v1385 = vpop.f32.mrf.mxu0
      %v1386 = vadd.f32 0.0, %v1385
      %v1387 = vpop.f32.mrf.mxu0
      %1388 = vmatprep.mubr.bf16.mxu0 0
      %1389 = vmatmul.mubr.bf16.gmra.mxu0 %v479
      %v1390 = vpop.f32.mrf.mxu0
      %v1391 = vadd.f32 0.0, %v1390
      %v1392 = vpop.f32.mrf.mxu0
      %v1393 = vpop.f32.mrf.mxu0
      %v1394 = vadd.f32 0.0, %v1393
      %v1395 = vpop.f32.mrf.mxu0
      %1396 = vmatprep.mubr.bf16.mxu0 0
      %1397 = vmatmul.mubr.bf16.gmra.mxu0 %v482
      %v1398 = vpop.f32.mrf.mxu0
      %v1399 = vadd.f32 0.0, %v1398
      %v1400 = vpop.f32.mrf.mxu0
      %v1401 = vpop.f32.mrf.mxu0
      %v1402 = vadd.f32 0.0, %v1401
      %v1403 = vpop.f32.mrf.mxu0
      %1404 = vmatprep.mubr.bf16.mxu0 0
      %1405 = vmatmul.mubr.bf16.gmra.mxu0 %v485
      %v1406 = vpop.f32.mrf.mxu0
      %v1407 = vadd.f32 0.0, %v1406
      %v1408 = vpop.f32.mrf.mxu0
      %v1409 = vpop.f32.mrf.mxu0
      %v1410 = vadd.f32 0.0, %v1409
      %v1411 = vpop.f32.mrf.mxu0
      %1412 = vmatprep.mubr.bf16.mxu0 0
      %1413 = vmatmul.mubr.bf16.gmra.mxu0 %v488
      %v1414 = vpop.f32.mrf.mxu0
      %v1415 = vadd.f32 0.0, %v1414
      %v1416 = vpop.f32.mrf.mxu0
      %v1417 = vpop.f32.mrf.mxu0
      %v1418 = vadd.f32 0.0, %v1417
      %v1419 = vpop.f32.mrf.mxu0
      %1420 = vmatprep.mubr.bf16.mxu0 0
      %1421 = vmatmul.mubr.bf16.gmra.mxu0 %v491
      %v1422 = vpop.f32.mrf.mxu0
      %v1423 = vadd.f32 0.0, %v1422
      %v1424 = vpop.f32.mrf.mxu0
      %v1425 = vpop.f32.mrf.mxu0
      %v1426 = vadd.f32 0.0, %v1425
      %v1427 = vpop.f32.mrf.mxu0
      %1428 = vmatprep.mubr.bf16.mxu0 0
      %1429 = vmatmul.mubr.bf16.gmra.mxu0 %v494
      %v1430 = vpop.f32.mrf.mxu0
      %v1431 = vadd.f32 0.0, %v1430
      %v1432 = vpop.f32.mrf.mxu0
      %v1433 = vpop.f32.mrf.mxu0
      %v1434 = vadd.f32 0.0, %v1433
      %v1435 = vpop.f32.mrf.mxu0
      %1436 = vmatprep.mubr.bf16.mxu0 0
      %1437 = vmatmul.mubr.bf16.gmra.mxu0 %v497
      %v1438 = vpop.f32.mrf.mxu0
      %v1439 = vadd.f32 0.0, %v1438
      %v1440 = vpop.f32.mrf.mxu0
      %v1441 = vpop.f32.mrf.mxu0
      %v1442 = vadd.f32 0.0, %v1441
      %v1443 = vpop.f32.mrf.mxu0
      %1444 = vmatprep.mubr.bf16.mxu0 0
      %1445 = vmatmul.mubr.bf16.gmra.mxu0 %v500
      %v1446 = vpop.f32.mrf.mxu0
      %v1447 = vadd.f32 0.0, %v1446
      %v1448 = vpop.f32.mrf.mxu0
      %v1449 = vpop.f32.mrf.mxu0
      %v1450 = vadd.f32 0.0, %v1449
      %v1451 = vpop.f32.mrf.mxu0
      %1452 = vmatprep.mubr.bf16.mxu0 0
      %1453 = vmatmul.mubr.bf16.gmra.mxu0 %v503
      %v1454 = vpop.f32.mrf.mxu0
      %v1455 = vadd.f32 0.0, %v1454
      %v1456 = vpop.f32.mrf.mxu0
      %v1457 = vpop.f32.mrf.mxu0
      %v1458 = vadd.f32 0.0, %v1457
      %v1459 = vpop.f32.mrf.mxu0
      %1460 = vmatprep.mubr.bf16.mxu0 0
      %1461 = vmatmul.mubr.bf16.gmra.mxu0 %v506
      %v1462 = vpop.f32.mrf.mxu0
      %v1463 = vadd.f32 0.0, %v1462
      %v1464 = vpop.f32.mrf.mxu0
      %v1465 = vpop.f32.mrf.mxu0
      %v1466 = vadd.f32 0.0, %v1465
      %v1467 = vpop.f32.mrf.mxu0
      %1468 = vmatprep.mubr.bf16.mxu0 0
      %1469 = vmatmul.mubr.bf16.gmra.mxu0 %v509
      %v1470 = vpop.f32.mrf.mxu0
      %v1471 = vadd.f32 0.0, %v1470
      %v1472 = vpop.f32.mrf.mxu0
      %v1473 = vpop.f32.mrf.mxu0
      %v1474 = vadd.f32 0.0, %v1473
      %v1475 = vpop.f32.mrf.mxu0
      %1476 = vmatprep.mubr.bf16.mxu0 0
      %1477 = vmatmul.mubr.bf16.gmra.mxu0 %v512
      %v1478 = vpop.f32.mrf.mxu0
      %v1479 = vadd.f32 0.0, %v1478
      %v1480 = vpop.f32.mrf.mxu0
      %v1481 = vpop.f32.mrf.mxu0
      %v1482 = vadd.f32 0.0, %v1481
      %v1483 = vpop.f32.mrf.mxu0
      %1484 = vmatprep.mubr.bf16.mxu0 0
      %1485 = vmatmul.mubr.bf16.gmra.mxu0 %v515
      %v1486 = vpop.f32.mrf.mxu0
      %v1487 = vadd.f32 0.0, %v1486
      %v1488 = vpop.f32.mrf.mxu0
      %v1489 = vpop.f32.mrf.mxu0
      %v1490 = vadd.f32 0.0, %v1489
      %v1491 = vpop.f32.mrf.mxu0
      %1492 = vmatprep.mubr.bf16.mxu0 0
      %1493 = vmatmul.mubr.bf16.gmra.mxu0 %v518
      %v1494 = vpop.f32.mrf.mxu0
      %v1495 = vadd.f32 0.0, %v1494
      %v1496 = vpop.f32.mrf.mxu0
      %v1497 = vpop.f32.mrf.mxu0
      %v1498 = vadd.f32 0.0, %v1497
      %v1499 = vpop.f32.mrf.mxu0
      %1500 = vdwg.mxu0
      %v1501 = vmax.f32 %v1123, %v1247
      %v1502 = vmax.f32 %v1124, %v1250
      %v1503 = vmax.f32 %v1125, %v1255
      %v1504 = vmax.f32 %v1126, %v1258
      %v1505 = vmax.f32 %v1127, %v1263
      %v1506 = vmax.f32 %v1128, %v1266
      %v1507 = vmax.f32 %v1129, %v1271
      %v1508 = vmax.f32 %v1130, %v1274
      %v1509 = vmax.f32 %v1131, %v1279
      %v1510 = vmax.f32 %v1132, %v1282
      %v1511 = vmax.f32 %v1133, %v1287
      %v1512 = vmax.f32 %v1134, %v1290
      %v1513 = vmax.f32 %v1135, %v1295
      %v1514 = vmax.f32 %v1136, %v1298
      %v1515 = vmax.f32 %v1137, %v1303
      %v1516 = vmax.f32 %v1138, %v1306
      %v1517 = vmax.f32 %v1139, %v1311
      %v1518 = vmax.f32 %v1140, %v1314
      %v1519 = vmax.f32 %v1141, %v1319
      %v1520 = vmax.f32 %v1142, %v1322
      %v1521 = vmax.f32 %v1143, %v1327
      %v1522 = vmax.f32 %v1144, %v1330
      %v1523 = vmax.f32 %v1145, %v1335
      %v1524 = vmax.f32 %v1146, %v1338
      %v1525 = vmax.f32 %v1147, %v1343
      %v1526 = vmax.f32 %v1148, %v1346
      %v1527 = vmax.f32 %v1149, %v1351
      %v1528 = vmax.f32 %v1150, %v1354
      %v1529 = vmax.f32 %v1151, %v1359
      %v1530 = vmax.f32 %v1152, %v1362
      %v1531 = vmax.f32 %v1153, %v1367
      %v1532 = vmax.f32 %v1154, %v1370
      %v1533 = vmax.f32 %v1155, %v1375
      %v1534 = vmax.f32 %v1156, %v1378
      %v1535 = vmax.f32 %v1157, %v1383
      %v1536 = vmax.f32 %v1158, %v1386
      %v1537 = vmax.f32 %v1159, %v1391
      %v1538 = vmax.f32 %v1160, %v1394
      %v1539 = vmax.f32 %v1161, %v1399
      %v1540 = vmax.f32 %v1162, %v1402
      %v1541 = vmax.f32 %v1163, %v1407
      %v1542 = vmax.f32 %v1164, %v1410
      %v1543 = vmax.f32 %v1165, %v1415
      %v1544 = vmax.f32 %v1166, %v1418
      %v1545 = vmax.f32 %v1167, %v1423
      %v1546 = vmax.f32 %v1168, %v1426
      %v1547 = vmax.f32 %v1169, %v1431
      %v1548 = vmax.f32 %v1170, %v1434
      %v1549 = vmax.f32 %v1171, %v1439
      %v1550 = vmax.f32 %v1172, %v1442
      %v1551 = vmax.f32 %v1173, %v1447
      %v1552 = vmax.f32 %v1174, %v1450
      %v1553 = vmax.f32 %v1175, %v1455
      %v1554 = vmax.f32 %v1176, %v1458
      %v1555 = vmax.f32 %v1177, %v1463
      %v1556 = vmax.f32 %v1178, %v1466
      %v1557 = vmax.f32 %v1179, %v1471
      %v1558 = vmax.f32 %v1180, %v1474
      %v1559 = vmax.f32 %v1181, %v1479
      %v1560 = vmax.f32 %v1182, %v1482
      %v1561 = vmax.f32 %v1183, %v1487
      %v1562 = vmax.f32 %v1184, %v1490
      %v1563 = vmax.f32 %v1185, %v1495
      %v1564 = vmax.f32 %v1186, %v1498
      %s1565 = scalar_lea.vmem %s1, 72
      %v1566 = vld [vmem:[%s1565] sm:$0xf]
      %v1567 = vld [vmem:[%s1565 + $0x4] sm:$0xf]
      %v1568 = vld [vmem:[%s1565 + $0x8] sm:$0xf]
      %v1569 = vld [vmem:[%s1565 + $0xc] sm:$0xf]
      %v1570 = vld [vmem:[%s1565 + $0x10] sm:$0xf]
      %v1571 = vld [vmem:[%s1565 + $0x14] sm:$0xf]
      %v1578 = vunpack.c.l.b16 %v1566
      %v1579 = vunpack.c.l.b16 %v1567
      %v1580 = vunpack.c.l.b16 %v1568
      %v1581 = vunpack.c.l.b16 %v1569
      %v1582 = vunpack.c.l.b16 %v1570
      %v1583 = vunpack.c.l.b16 %v1571
      %v1584 = vpack.c.b16 %v1579, %v1578
      %v1585 = vpack.c.b16 %v1581, %v1580
      %v1586 = vpack.c.b16 %v1583, %v1582
      %1590 = vmatprep.subr.bf16.mxu0 0
      %1591 = vmatpush1.bf16.msra.mxu0 0
      %1592 = vmatprep.subr.bf16.mxu0 0
      %1593 = vmatpush1.bf16.msra.mxu0 0
      %1594 = vmatprep.subr.bf16.mxu0 0
      %1595 = vmatpush1.bf16.msra.mxu0 0
      %1596 = vmatprep.subr.bf16.mxu0 0
      %1597 = vmatpush1.bf16.msra.mxu0 0
      %1598 = vmatprep.subr.bf16.mxu0 0
      %1599 = vmatpush1.bf16.msra.mxu0 0
      %1600 = vmatprep.subr.bf16.mxu0 0
      %1601 = vmatpush1.bf16.msra.mxu0 %v1586
      %1602 = vmatprep.subr.bf16.mxu0 0
      %1603 = vmatpush1.bf16.msra.mxu0 %v1585
      %1604 = vmatprep.subr.bf16.mxu0 0
      %1605 = vmatpush1.bf16.msra.mxu0 %v1584
      %1606 = vmatprep.subr.bf16.mxu0 0
      %1607 = vmatpush2.bf16.msra.mxu0 0
      %1608 = vmatprep.subr.bf16.mxu0 0
      %1609 = vmatpush2.bf16.msra.mxu0 0
      %1610 = vmatprep.subr.bf16.mxu0 0
      %1611 = vmatpush2.bf16.msra.mxu0 0
      %1612 = vmatprep.subr.bf16.mxu0 0
      %1613 = vmatpush2.bf16.msra.mxu0 0
      %1614 = vmatprep.subr.bf16.mxu0 0
      %1615 = vmatpush2.bf16.msra.mxu0 0
      %1616 = vmatprep.subr.bf16.mxu0 0
      %1617 = vmatpush2.bf16.msra.mxu0 0
      %1618 = vmatprep.subr.bf16.mxu0 0
      %1619 = vmatpush2.bf16.msra.mxu0 0
      %1620 = vmatprep.subr.bf16.mxu0 0
      %1621 = vmatpush2.bf16.msra.mxu0 0
      %1622 = vmatprep.mubr.bf16.mxu0 0
      %1623 = vmatmul.mubr.bf16.gmra.mxu0 %v425
      %v1624 = vpop.f32.mrf.mxu0
      %v1625 = vadd.f32 0.0, %v1624
      %v1626 = vpop.f32.mrf.mxu0
      %v1627 = vpop.f32.mrf.mxu0
      %v1628 = vadd.f32 0.0, %v1627
      %v1629 = vpop.f32.mrf.mxu0
      %1630 = vmatprep.mubr.bf16.mxu0 0
      %1631 = vmatmul.mubr.bf16.gmra.mxu0 %v428
      %v1632 = vpop.f32.mrf.mxu0
      %v1633 = vadd.f32 0.0, %v1632
      %v1634 = vpop.f32.mrf.mxu0
      %v1635 = vpop.f32.mrf.mxu0
      %v1636 = vadd.f32 0.0, %v1635
      %v1637 = vpop.f32.mrf.mxu0
      %1638 = vmatprep.mubr.bf16.mxu0 0
      %1639 = vmatmul.mubr.bf16.gmra.mxu0 %v431
      %v1640 = vpop.f32.mrf.mxu0
      %v1641 = vadd.f32 0.0, %v1640
      %v1642 = vpop.f32.mrf.mxu0
      %v1643 = vpop.f32.mrf.mxu0
      %v1644 = vadd.f32 0.0, %v1643
      %v1645 = vpop.f32.mrf.mxu0
      %1646 = vmatprep.mubr.bf16.mxu0 0
      %1647 = vmatmul.mubr.bf16.gmra.mxu0 %v434
      %v1648 = vpop.f32.mrf.mxu0
      %v1649 = vadd.f32 0.0, %v1648
      %v1650 = vpop.f32.mrf.mxu0
      %v1651 = vpop.f32.mrf.mxu0
      %v1652 = vadd.f32 0.0, %v1651
      %v1653 = vpop.f32.mrf.mxu0
      %1654 = vmatprep.mubr.bf16.mxu0 0
      %1655 = vmatmul.mubr.bf16.gmra.mxu0 %v437
      %v1656 = vpop.f32.mrf.mxu0
      %v1657 = vadd.f32 0.0, %v1656
      %v1658 = vpop.f32.mrf.mxu0
      %v1659 = vpop.f32.mrf.mxu0
      %v1660 = vadd.f32 0.0, %v1659
      %v1661 = vpop.f32.mrf.mxu0
      %1662 = vmatprep.mubr.bf16.mxu0 0
      %1663 = vmatmul.mubr.bf16.gmra.mxu0 %v440
      %v1664 = vpop.f32.mrf.mxu0
      %v1665 = vadd.f32 0.0, %v1664
      %v1666 = vpop.f32.mrf.mxu0
      %v1667 = vpop.f32.mrf.mxu0
      %v1668 = vadd.f32 0.0, %v1667
      %v1669 = vpop.f32.mrf.mxu0
      %1670 = vmatprep.mubr.bf16.mxu0 0
      %1671 = vmatmul.mubr.bf16.gmra.mxu0 %v443
      %v1672 = vpop.f32.mrf.mxu0
      %v1673 = vadd.f32 0.0, %v1672
      %v1674 = vpop.f32.mrf.mxu0
      %v1675 = vpop.f32.mrf.mxu0
      %v1676 = vadd.f32 0.0, %v1675
      %v1677 = vpop.f32.mrf.mxu0
      %1678 = vmatprep.mubr.bf16.mxu0 0
      %1679 = vmatmul.mubr.bf16.gmra.mxu0 %v446
      %v1680 = vpop.f32.mrf.mxu0
      %v1681 = vadd.f32 0.0, %v1680
      %v1682 = vpop.f32.mrf.mxu0
      %v1683 = vpop.f32.mrf.mxu0
      %v1684 = vadd.f32 0.0, %v1683
      %v1685 = vpop.f32.mrf.mxu0
      %1686 = vmatprep.mubr.bf16.mxu0 0
      %1687 = vmatmul.mubr.bf16.gmra.mxu0 %v449
      %v1688 = vpop.f32.mrf.mxu0
      %v1689 = vadd.f32 0.0, %v1688
      %v1690 = vpop.f32.mrf.mxu0
      %v1691 = vpop.f32.mrf.mxu0
      %v1692 = vadd.f32 0.0, %v1691
      %v1693 = vpop.f32.mrf.mxu0
      %1694 = vmatprep.mubr.bf16.mxu0 0
      %1695 = vmatmul.mubr.bf16.gmra.mxu0 %v452
      %v1696 = vpop.f32.mrf.mxu0
      %v1697 = vadd.f32 0.0, %v1696
      %v1698 = vpop.f32.mrf.mxu0
      %v1699 = vpop.f32.mrf.mxu0
      %v1700 = vadd.f32 0.0, %v1699
      %v1701 = vpop.f32.mrf.mxu0
      %1702 = vmatprep.mubr.bf16.mxu0 0
      %1703 = vmatmul.mubr.bf16.gmra.mxu0 %v455
      %v1704 = vpop.f32.mrf.mxu0
      %v1705 = vadd.f32 0.0, %v1704
      %v1706 = vpop.f32.mrf.mxu0
      %v1707 = vpop.f32.mrf.mxu0
      %v1708 = vadd.f32 0.0, %v1707
      %v1709 = vpop.f32.mrf.mxu0
      %1710 = vmatprep.mubr.bf16.mxu0 0
      %1711 = vmatmul.mubr.bf16.gmra.mxu0 %v458
      %v1712 = vpop.f32.mrf.mxu0
      %v1713 = vadd.f32 0.0, %v1712
      %v1714 = vpop.f32.mrf.mxu0
      %v1715 = vpop.f32.mrf.mxu0
      %v1716 = vadd.f32 0.0, %v1715
      %v1717 = vpop.f32.mrf.mxu0
      %1718 = vmatprep.mubr.bf16.mxu0 0
      %1719 = vmatmul.mubr.bf16.gmra.mxu0 %v461
      %v1720 = vpop.f32.mrf.mxu0
      %v1721 = vadd.f32 0.0, %v1720
      %v1722 = vpop.f32.mrf.mxu0
      %v1723 = vpop.f32.mrf.mxu0
      %v1724 = vadd.f32 0.0, %v1723
      %v1725 = vpop.f32.mrf.mxu0
      %1726 = vmatprep.mubr.bf16.mxu0 0
      %1727 = vmatmul.mubr.bf16.gmra.mxu0 %v464
      %v1728 = vpop.f32.mrf.mxu0
      %v1729 = vadd.f32 0.0, %v1728
      %v1730 = vpop.f32.mrf.mxu0
      %v1731 = vpop.f32.mrf.mxu0
      %v1732 = vadd.f32 0.0, %v1731
      %v1733 = vpop.f32.mrf.mxu0
      %1734 = vmatprep.mubr.bf16.mxu0 0
      %1735 = vmatmul.mubr.bf16.gmra.mxu0 %v467
      %v1736 = vpop.f32.mrf.mxu0
      %v1737 = vadd.f32 0.0, %v1736
      %v1738 = vpop.f32.mrf.mxu0
      %v1739 = vpop.f32.mrf.mxu0
      %v1740 = vadd.f32 0.0, %v1739
      %v1741 = vpop.f32.mrf.mxu0
      %1742 = vmatprep.mubr.bf16.mxu0 0
      %1743 = vmatmul.mubr.bf16.gmra.mxu0 %v470
      %v1744 = vpop.f32.mrf.mxu0
      %v1745 = vadd.f32 0.0, %v1744
      %v1746 = vpop.f32.mrf.mxu0
      %v1747 = vpop.f32.mrf.mxu0
      %v1748 = vadd.f32 0.0, %v1747
      %v1749 = vpop.f32.mrf.mxu0
      %1750 = vmatprep.mubr.bf16.mxu0 0
      %1751 = vmatmul.mubr.bf16.gmra.mxu0 %v473
      %v1752 = vpop.f32.mrf.mxu0
      %v1753 = vadd.f32 0.0, %v1752
      %v1754 = vpop.f32.mrf.mxu0
      %v1755 = vpop.f32.mrf.mxu0
      %v1756 = vadd.f32 0.0, %v1755
      %v1757 = vpop.f32.mrf.mxu0
      %1758 = vmatprep.mubr.bf16.mxu0 0
      %1759 = vmatmul.mubr.bf16.gmra.mxu0 %v476
      %v1760 = vpop.f32.mrf.mxu0
      %v1761 = vadd.f32 0.0, %v1760
      %v1762 = vpop.f32.mrf.mxu0
      %v1763 = vpop.f32.mrf.mxu0
      %v1764 = vadd.f32 0.0, %v1763
      %v1765 = vpop.f32.mrf.mxu0
      %1766 = vmatprep.mubr.bf16.mxu0 0
      %1767 = vmatmul.mubr.bf16.gmra.mxu0 %v479
      %v1768 = vpop.f32.mrf.mxu0
      %v1769 = vadd.f32 0.0, %v1768
      %v1770 = vpop.f32.mrf.mxu0
      %v1771 = vpop.f32.mrf.mxu0
      %v1772 = vadd.f32 0.0, %v1771
      %v1773 = vpop.f32.mrf.mxu0
      %1774 = vmatprep.mubr.bf16.mxu0 0
      %1775 = vmatmul.mubr.bf16.gmra.mxu0 %v482
      %v1776 = vpop.f32.mrf.mxu0
      %v1777 = vadd.f32 0.0, %v1776
      %v1778 = vpop.f32.mrf.mxu0
      %v1779 = vpop.f32.mrf.mxu0
      %v1780 = vadd.f32 0.0, %v1779
      %v1781 = vpop.f32.mrf.mxu0
      %1782 = vmatprep.mubr.bf16.mxu0 0
      %1783 = vmatmul.mubr.bf16.gmra.mxu0 %v485
      %v1784 = vpop.f32.mrf.mxu0
      %v1785 = vadd.f32 0.0, %v1784
      %v1786 = vpop.f32.mrf.mxu0
      %v1787 = vpop.f32.mrf.mxu0
      %v1788 = vadd.f32 0.0, %v1787
      %v1789 = vpop.f32.mrf.mxu0
      %1790 = vmatprep.mubr.bf16.mxu0 0
      %1791 = vmatmul.mubr.bf16.gmra.mxu0 %v488
      %v1792 = vpop.f32.mrf.mxu0
      %v1793 = vadd.f32 0.0, %v1792
      %v1794 = vpop.f32.mrf.mxu0
      %v1795 = vpop.f32.mrf.mxu0
      %v1796 = vadd.f32 0.0, %v1795
      %v1797 = vpop.f32.mrf.mxu0
      %1798 = vmatprep.mubr.bf16.mxu0 0
      %1799 = vmatmul.mubr.bf16.gmra.mxu0 %v491
      %v1800 = vpop.f32.mrf.mxu0
      %v1801 = vadd.f32 0.0, %v1800
      %v1802 = vpop.f32.mrf.mxu0
      %v1803 = vpop.f32.mrf.mxu0
      %v1804 = vadd.f32 0.0, %v1803
      %v1805 = vpop.f32.mrf.mxu0
      %1806 = vmatprep.mubr.bf16.mxu0 0
      %1807 = vmatmul.mubr.bf16.gmra.mxu0 %v494
      %v1808 = vpop.f32.mrf.mxu0
      %v1809 = vadd.f32 0.0, %v1808
      %v1810 = vpop.f32.mrf.mxu0
      %v1811 = vpop.f32.mrf.mxu0
      %v1812 = vadd.f32 0.0, %v1811
      %v1813 = vpop.f32.mrf.mxu0
      %1814 = vmatprep.mubr.bf16.mxu0 0
      %1815 = vmatmul.mubr.bf16.gmra.mxu0 %v497
      %v1816 = vpop.f32.mrf.mxu0
      %v1817 = vadd.f32 0.0, %v1816
      %v1818 = vpop.f32.mrf.mxu0
      %v1819 = vpop.f32.mrf.mxu0
      %v1820 = vadd.f32 0.0, %v1819
      %v1821 = vpop.f32.mrf.mxu0
      %1822 = vmatprep.mubr.bf16.mxu0 0
      %1823 = vmatmul.mubr.bf16.gmra.mxu0 %v500
      %v1824 = vpop.f32.mrf.mxu0
      %v1825 = vadd.f32 0.0, %v1824
      %v1826 = vpop.f32.mrf.mxu0
      %v1827 = vpop.f32.mrf.mxu0
      %v1828 = vadd.f32 0.0, %v1827
      %v1829 = vpop.f32.mrf.mxu0
      %1830 = vmatprep.mubr.bf16.mxu0 0
      %1831 = vmatmul.mubr.bf16.gmra.mxu0 %v503
      %v1832 = vpop.f32.mrf.mxu0
      %v1833 = vadd.f32 0.0, %v1832
      %v1834 = vpop.f32.mrf.mxu0
      %v1835 = vpop.f32.mrf.mxu0
      %v1836 = vadd.f32 0.0, %v1835
      %v1837 = vpop.f32.mrf.mxu0
      %1838 = vmatprep.mubr.bf16.mxu0 0
      %1839 = vmatmul.mubr.bf16.gmra.mxu0 %v506
      %v1840 = vpop.f32.mrf.mxu0
      %v1841 = vadd.f32 0.0, %v1840
      %v1842 = vpop.f32.mrf.mxu0
      %v1843 = vpop.f32.mrf.mxu0
      %v1844 = vadd.f32 0.0, %v1843
      %v1845 = vpop.f32.mrf.mxu0
      %1846 = vmatprep.mubr.bf16.mxu0 0
      %1847 = vmatmul.mubr.bf16.gmra.mxu0 %v509
      %v1848 = vpop.f32.mrf.mxu0
      %v1849 = vadd.f32 0.0, %v1848
      %v1850 = vpop.f32.mrf.mxu0
      %v1851 = vpop.f32.mrf.mxu0
      %v1852 = vadd.f32 0.0, %v1851
      %v1853 = vpop.f32.mrf.mxu0
      %1854 = vmatprep.mubr.bf16.mxu0 0
      %1855 = vmatmul.mubr.bf16.gmra.mxu0 %v512
      %v1856 = vpop.f32.mrf.mxu0
      %v1857 = vadd.f32 0.0, %v1856
      %v1858 = vpop.f32.mrf.mxu0
      %v1859 = vpop.f32.mrf.mxu0
      %v1860 = vadd.f32 0.0, %v1859
      %v1861 = vpop.f32.mrf.mxu0
      %1862 = vmatprep.mubr.bf16.mxu0 0
      %1863 = vmatmul.mubr.bf16.gmra.mxu0 %v515
      %v1864 = vpop.f32.mrf.mxu0
      %v1865 = vadd.f32 0.0, %v1864
      %v1866 = vpop.f32.mrf.mxu0
      %v1867 = vpop.f32.mrf.mxu0
      %v1868 = vadd.f32 0.0, %v1867
      %v1869 = vpop.f32.mrf.mxu0
      %1870 = vmatprep.mubr.bf16.mxu0 0
      %1871 = vmatmul.mubr.bf16.gmra.mxu0 %v518
      %v1872 = vpop.f32.mrf.mxu0
      %v1873 = vadd.f32 0.0, %v1872
      %v1874 = vpop.f32.mrf.mxu0
      %v1875 = vpop.f32.mrf.mxu0
      %v1876 = vadd.f32 0.0, %v1875
      %v1877 = vpop.f32.mrf.mxu0
      %1878 = vdwg.mxu0
      %v1879 = vmax.f32 %v1501, %v1625
      %v1880 = vmax.f32 %v1502, %v1628
      %v1881 = vmax.f32 %v1503, %v1633
      %v1882 = vmax.f32 %v1504, %v1636
      %v1883 = vmax.f32 %v1505, %v1641
      %v1884 = vmax.f32 %v1506, %v1644
      %v1885 = vmax.f32 %v1507, %v1649
      %v1886 = vmax.f32 %v1508, %v1652
      %v1887 = vmax.f32 %v1509, %v1657
      %v1888 = vmax.f32 %v1510, %v1660
      %v1889 = vmax.f32 %v1511, %v1665
      %v1890 = vmax.f32 %v1512, %v1668
      %v1891 = vmax.f32 %v1513, %v1673
      %v1892 = vmax.f32 %v1514, %v1676
      %v1893 = vmax.f32 %v1515, %v1681
      %v1894 = vmax.f32 %v1516, %v1684
      %v1895 = vmax.f32 %v1517, %v1689
      %v1896 = vmax.f32 %v1518, %v1692
      %v1897 = vmax.f32 %v1519, %v1697
      %v1898 = vmax.f32 %v1520, %v1700
      %v1899 = vmax.f32 %v1521, %v1705
      %v1900 = vmax.f32 %v1522, %v1708
      %v1901 = vmax.f32 %v1523, %v1713
      %v1902 = vmax.f32 %v1524, %v1716
      %v1903 = vmax.f32 %v1525, %v1721
      %v1904 = vmax.f32 %v1526, %v1724
      %v1905 = vmax.f32 %v1527, %v1729
      %v1906 = vmax.f32 %v1528, %v1732
      %v1907 = vmax.f32 %v1529, %v1737
      %v1908 = vmax.f32 %v1530, %v1740
      %v1909 = vmax.f32 %v1531, %v1745
      %v1910 = vmax.f32 %v1532, %v1748
      %v1911 = vmax.f32 %v1533, %v1753
      %v1912 = vmax.f32 %v1534, %v1756
      %v1913 = vmax.f32 %v1535, %v1761
      %v1914 = vmax.f32 %v1536, %v1764
      %v1915 = vmax.f32 %v1537, %v1769
      %v1916 = vmax.f32 %v1538, %v1772
      %v1917 = vmax.f32 %v1539, %v1777
      %v1918 = vmax.f32 %v1540, %v1780
      %v1919 = vmax.f32 %v1541, %v1785
      %v1920 = vmax.f32 %v1542, %v1788
      %v1921 = vmax.f32 %v1543, %v1793
      %v1922 = vmax.f32 %v1544, %v1796
      %v1923 = vmax.f32 %v1545, %v1801
      %v1924 = vmax.f32 %v1546, %v1804
      %v1925 = vmax.f32 %v1547, %v1809
      %v1926 = vmax.f32 %v1548, %v1812
      %v1927 = vmax.f32 %v1549, %v1817
      %v1928 = vmax.f32 %v1550, %v1820
      %v1929 = vmax.f32 %v1551, %v1825
      %v1930 = vmax.f32 %v1552, %v1828
      %v1931 = vmax.f32 %v1553, %v1833
      %v1932 = vmax.f32 %v1554, %v1836
      %v1933 = vmax.f32 %v1555, %v1841
      %v1934 = vmax.f32 %v1556, %v1844
      %v1935 = vmax.f32 %v1557, %v1849
      %v1936 = vmax.f32 %v1558, %v1852
      %v1937 = vmax.f32 %v1559, %v1857
      %v1938 = vmax.f32 %v1560, %v1860
      %v1939 = vmax.f32 %v1561, %v1865
      %v1940 = vmax.f32 %v1562, %v1868
      %v1941 = vmax.f32 %v1563, %v1873
      %v1942 = vmax.f32 %v1564, %v1876
      %v1943 = vld [vmem:[%s2] sm:$0x1]
      %v1945 = vlaneseq
      %v1946 = vshrl.u32 %v1945, 7
      %v1947 = vsub.s32 0, %v1946
      %v1948 = vrot.slane %v1943, %v1947
      %v1950 = vadd.f32 %v1879, %v1948
      %v1951 = vadd.f32 %v1880, %v1948
      %v1952 = vadd.f32 %v1881, %v1948
      %v1953 = vadd.f32 %v1882, %v1948
      %v1954 = vadd.f32 %v1883, %v1948
      %v1955 = vadd.f32 %v1884, %v1948
      %v1956 = vadd.f32 %v1885, %v1948
      %v1957 = vadd.f32 %v1886, %v1948
      %v1958 = vadd.f32 %v1887, %v1948
      %v1959 = vadd.f32 %v1888, %v1948
      %v1960 = vadd.f32 %v1889, %v1948
      %v1961 = vadd.f32 %v1890, %v1948
      %v1962 = vadd.f32 %v1891, %v1948
      %v1963 = vadd.f32 %v1892, %v1948
      %v1964 = vadd.f32 %v1893, %v1948
      %v1965 = vadd.f32 %v1894, %v1948
      %v1966 = vadd.f32 %v1895, %v1948
      %v1967 = vadd.f32 %v1896, %v1948
      %v1968 = vadd.f32 %v1897, %v1948
      %v1969 = vadd.f32 %v1898, %v1948
      %v1970 = vadd.f32 %v1899, %v1948
      %v1971 = vadd.f32 %v1900, %v1948
      %v1972 = vadd.f32 %v1901, %v1948
      %v1973 = vadd.f32 %v1902, %v1948
      %v1974 = vadd.f32 %v1903, %v1948
      %v1975 = vadd.f32 %v1904, %v1948
      %v1976 = vadd.f32 %v1905, %v1948
      %v1977 = vadd.f32 %v1906, %v1948
      %v1978 = vadd.f32 %v1907, %v1948
      %v1979 = vadd.f32 %v1908, %v1948
      %v1980 = vadd.f32 %v1909, %v1948
      %v1981 = vadd.f32 %v1910, %v1948
      %v1982 = vadd.f32 %v1911, %v1948
      %v1983 = vadd.f32 %v1912, %v1948
      %v1984 = vadd.f32 %v1913, %v1948
      %v1985 = vadd.f32 %v1914, %v1948
      %v1986 = vadd.f32 %v1915, %v1948
      %v1987 = vadd.f32 %v1916, %v1948
      %v1988 = vadd.f32 %v1917, %v1948
      %v1989 = vadd.f32 %v1918, %v1948
      %v1990 = vadd.f32 %v1919, %v1948
      %v1991 = vadd.f32 %v1920, %v1948
      %v1992 = vadd.f32 %v1921, %v1948
      %v1993 = vadd.f32 %v1922, %v1948
      %v1994 = vadd.f32 %v1923, %v1948
      %v1995 = vadd.f32 %v1924, %v1948
      %v1996 = vadd.f32 %v1925, %v1948
      %v1997 = vadd.f32 %v1926, %v1948
      %v1998 = vadd.f32 %v1927, %v1948
      %v1999 = vadd.f32 %v1928, %v1948
      %v2000 = vadd.f32 %v1929, %v1948
      %v2001 = vadd.f32 %v1930, %v1948
      %v2002 = vadd.f32 %v1931, %v1948
      %v2003 = vadd.f32 %v1932, %v1948
      %v2004 = vadd.f32 %v1933, %v1948
      %v2005 = vadd.f32 %v1934, %v1948
      %v2006 = vadd.f32 %v1935, %v1948
      %v2007 = vadd.f32 %v1936, %v1948
      %v2008 = vadd.f32 %v1937, %v1948
      %v2009 = vadd.f32 %v1938, %v1948
      %v2010 = vadd.f32 %v1939, %v1948
      %v2011 = vadd.f32 %v1940, %v1948
      %v2012 = vadd.f32 %v1941, %v1948
      %v2013 = vadd.f32 %v1942, %v1948
      %v2014 = vmax.f32 %v1950, 0.0
      %v2015 = vmax.f32 %v1951, 0.0
      %v2016 = vmax.f32 %v1952, 0.0
      %v2017 = vmax.f32 %v1953, 0.0
      %v2018 = vmax.f32 %v1954, 0.0
      %v2019 = vmax.f32 %v1955, 0.0
      %v2020 = vmax.f32 %v1956, 0.0
      %v2021 = vmax.f32 %v1957, 0.0
      %v2022 = vmax.f32 %v1958, 0.0
      %v2023 = vmax.f32 %v1959, 0.0
      %v2024 = vmax.f32 %v1960, 0.0
      %v2025 = vmax.f32 %v1961, 0.0
      %v2026 = vmax.f32 %v1962, 0.0
      %v2027 = vmax.f32 %v1963, 0.0
      %v2028 = vmax.f32 %v1964, 0.0
      %v2029 = vmax.f32 %v1965, 0.0
      %v2030 = vmax.f32 %v1966, 0.0
      %v2031 = vmax.f32 %v1967, 0.0
      %v2032 = vmax.f32 %v1968, 0.0
      %v2033 = vmax.f32 %v1969, 0.0
      %v2034 = vmax.f32 %v1970, 0.0
      %v2035 = vmax.f32 %v1971, 0.0
      %v2036 = vmax.f32 %v1972, 0.0
      %v2037 = vmax.f32 %v1973, 0.0
      %v2038 = vmax.f32 %v1974, 0.0
      %v2039 = vmax.f32 %v1975, 0.0
      %v2040 = vmax.f32 %v1976, 0.0
      %v2041 = vmax.f32 %v1977, 0.0
      %v2042 = vmax.f32 %v1978, 0.0
      %v2043 = vmax.f32 %v1979, 0.0
      %v2044 = vmax.f32 %v1980, 0.0
      %v2045 = vmax.f32 %v1981, 0.0
      %v2046 = vmax.f32 %v1982, 0.0
      %v2047 = vmax.f32 %v1983, 0.0
      %v2048 = vmax.f32 %v1984, 0.0
      %v2049 = vmax.f32 %v1985, 0.0
      %v2050 = vmax.f32 %v1986, 0.0
      %v2051 = vmax.f32 %v1987, 0.0
      %v2052 = vmax.f32 %v1988, 0.0
      %v2053 = vmax.f32 %v1989, 0.0
      %v2054 = vmax.f32 %v1990, 0.0
      %v2055 = vmax.f32 %v1991, 0.0
      %v2056 = vmax.f32 %v1992, 0.0
      %v2057 = vmax.f32 %v1993, 0.0
      %v2058 = vmax.f32 %v1994, 0.0
      %v2059 = vmax.f32 %v1995, 0.0
      %v2060 = vmax.f32 %v1996, 0.0
      %v2061 = vmax.f32 %v1997, 0.0
      %v2062 = vmax.f32 %v1998, 0.0
      %v2063 = vmax.f32 %v1999, 0.0
      %v2064 = vmax.f32 %v2000, 0.0
      %v2065 = vmax.f32 %v2001, 0.0
      %v2066 = vmax.f32 %v2002, 0.0
      %v2067 = vmax.f32 %v2003, 0.0
      %v2068 = vmax.f32 %v2004, 0.0
      %v2069 = vmax.f32 %v2005, 0.0
      %v2070 = vmax.f32 %v2006, 0.0
      %v2071 = vmax.f32 %v2007, 0.0
      %v2072 = vmax.f32 %v2008, 0.0
      %v2073 = vmax.f32 %v2009, 0.0
      %v2074 = vmax.f32 %v2010, 0.0
      %v2075 = vmax.f32 %v2011, 0.0
      %v2076 = vmax.f32 %v2012, 0.0
      %v2077 = vmax.f32 %v2013, 0.0
      %v2078 = vpack.c.bf16 %v2015, %v2014
      %v2079 = vpack.c.bf16 %v2017, %v2016
      %v2080 = vpack.c.bf16 %v2019, %v2018
      %v2081 = vpack.c.bf16 %v2021, %v2020
      %v2082 = vpack.c.bf16 %v2023, %v2022
      %v2083 = vpack.c.bf16 %v2025, %v2024
      %v2084 = vpack.c.bf16 %v2027, %v2026
      %v2085 = vpack.c.bf16 %v2029, %v2028
      %v2086 = vpack.c.bf16 %v2031, %v2030
      %v2087 = vpack.c.bf16 %v2033, %v2032
      %v2088 = vpack.c.bf16 %v2035, %v2034
      %v2089 = vpack.c.bf16 %v2037, %v2036
      %v2090 = vpack.c.bf16 %v2039, %v2038
      %v2091 = vpack.c.bf16 %v2041, %v2040
      %v2092 = vpack.c.bf16 %v2043, %v2042
      %v2093 = vpack.c.bf16 %v2045, %v2044
      %v2094 = vpack.c.bf16 %v2047, %v2046
      %v2095 = vpack.c.bf16 %v2049, %v2048
      %v2096 = vpack.c.bf16 %v2051, %v2050
      %v2097 = vpack.c.bf16 %v2053, %v2052
      %v2098 = vpack.c.bf16 %v2055, %v2054
      %v2099 = vpack.c.bf16 %v2057, %v2056
      %v2100 = vpack.c.bf16 %v2059, %v2058
      %v2101 = vpack.c.bf16 %v2061, %v2060
      %v2102 = vpack.c.bf16 %v2063, %v2062
      %v2103 = vpack.c.bf16 %v2065, %v2064
      %v2104 = vpack.c.bf16 %v2067, %v2066
      %v2105 = vpack.c.bf16 %v2069, %v2068
      %v2106 = vpack.c.bf16 %v2071, %v2070
      %v2107 = vpack.c.bf16 %v2073, %v2072
      %v2108 = vpack.c.bf16 %v2075, %v2074
      %v2109 = vpack.c.bf16 %v2077, %v2076
      %v2142 = vunpack.c.l.b16 %v2078
      %v2143 = vunpack.c.h.b16 %v2078
      %v2144 = vunpack.c.l.b16 %v2079
      %v2145 = vunpack.c.h.b16 %v2079
      %v2146 = vunpack.c.l.b16 %v2080
      %v2147 = vunpack.c.h.b16 %v2080
      %v2148 = vunpack.c.l.b16 %v2081
      %v2149 = vunpack.c.h.b16 %v2081
      %v2150 = vunpack.c.l.b16 %v2082
      %v2151 = vunpack.c.h.b16 %v2082
      %v2152 = vunpack.c.l.b16 %v2083
      %v2153 = vunpack.c.h.b16 %v2083
      %v2154 = vunpack.c.l.b16 %v2084
      %v2155 = vunpack.c.h.b16 %v2084
      %v2156 = vunpack.c.l.b16 %v2085
      %v2157 = vunpack.c.h.b16 %v2085
      %v2158 = vunpack.c.l.b16 %v2086
      %v2159 = vunpack.c.h.b16 %v2086
      %v2160 = vunpack.c.l.b16 %v2087
      %v2161 = vunpack.c.h.b16 %v2087
      %v2162 = vunpack.c.l.b16 %v2088
      %v2163 = vunpack.c.h.b16 %v2088
      %v2164 = vunpack.c.l.b16 %v2089
      %v2165 = vunpack.c.h.b16 %v2089
      %v2166 = vunpack.c.l.b16 %v2090
      %v2167 = vunpack.c.h.b16 %v2090
      %v2168 = vunpack.c.l.b16 %v2091
      %v2169 = vunpack.c.h.b16 %v2091
      %v2170 = vunpack.c.l.b16 %v2092
      %v2171 = vunpack.c.h.b16 %v2092
      %v2172 = vunpack.c.l.b16 %v2093
      %v2173 = vunpack.c.h.b16 %v2093
      %v2174 = vunpack.c.l.b16 %v2094
      %v2175 = vunpack.c.h.b16 %v2094
      %v2176 = vunpack.c.l.b16 %v2095
      %v2177 = vunpack.c.h.b16 %v2095
      %v2178 = vunpack.c.l.b16 %v2096
      %v2179 = vunpack.c.h.b16 %v2096
      %v2180 = vunpack.c.l.b16 %v2097
      %v2181 = vunpack.c.h.b16 %v2097
      %v2182 = vunpack.c.l.b16 %v2098
      %v2183 = vunpack.c.h.b16 %v2098
      %v2184 = vunpack.c.l.b16 %v2099
      %v2185 = vunpack.c.h.b16 %v2099
      %v2186 = vunpack.c.l.b16 %v2100
      %v2187 = vunpack.c.h.b16 %v2100
      %v2188 = vunpack.c.l.b16 %v2101
      %v2189 = vunpack.c.h.b16 %v2101
      %v2190 = vunpack.c.l.b16 %v2102
      %v2191 = vunpack.c.h.b16 %v2102
      %v2192 = vunpack.c.l.b16 %v2103
      %v2193 = vunpack.c.h.b16 %v2103
      %v2194 = vunpack.c.l.b16 %v2104
      %v2195 = vunpack.c.h.b16 %v2104
      %v2196 = vunpack.c.l.b16 %v2105
      %v2197 = vunpack.c.h.b16 %v2105
      %v2198 = vunpack.c.l.b16 %v2106
      %v2199 = vunpack.c.h.b16 %v2106
      %v2200 = vunpack.c.l.b16 %v2107
      %v2201 = vunpack.c.h.b16 %v2107
      %v2202 = vunpack.c.l.b16 %v2108
      %v2203 = vunpack.c.h.b16 %v2108
      %v2204 = vunpack.c.l.b16 %v2109
      %v2205 = vunpack.c.h.b16 %v2109
      %v2206 = vpack.c.b16 %v2142, %v2142
      %v2207 = vpack.c.b16 %v2143, %v2143
      %v2208 = vpack.c.b16 %v2144, %v2144
      %v2209 = vpack.c.b16 %v2145, %v2145
      %v2210 = vpack.c.b16 %v2146, %v2146
      %v2211 = vpack.c.b16 %v2147, %v2147
      %v2212 = vpack.c.b16 %v2148, %v2148
      %v2213 = vpack.c.b16 %v2149, %v2149
      %v2214 = vpack.c.b16 %v2150, %v2150
      %v2215 = vpack.c.b16 %v2151, %v2151
      %v2216 = vpack.c.b16 %v2152, %v2152
      %v2217 = vpack.c.b16 %v2153, %v2153
      %v2218 = vpack.c.b16 %v2154, %v2154
      %v2219 = vpack.c.b16 %v2155, %v2155
      %v2220 = vpack.c.b16 %v2156, %v2156
      %v2221 = vpack.c.b16 %v2157, %v2157
      %v2222 = vpack.c.b16 %v2158, %v2158
      %v2223 = vpack.c.b16 %v2159, %v2159
      %v2224 = vpack.c.b16 %v2160, %v2160
      %v2225 = vpack.c.b16 %v2161, %v2161
      %v2226 = vpack.c.b16 %v2162, %v2162
      %v2227 = vpack.c.b16 %v2163, %v2163
      %v2228 = vpack.c.b16 %v2164, %v2164
      %v2229 = vpack.c.b16 %v2165, %v2165
      %v2230 = vpack.c.b16 %v2166, %v2166
      %v2231 = vpack.c.b16 %v2167, %v2167
      %v2232 = vpack.c.b16 %v2168, %v2168
      %v2233 = vpack.c.b16 %v2169, %v2169
      %v2234 = vpack.c.b16 %v2170, %v2170
      %v2235 = vpack.c.b16 %v2171, %v2171
      %v2236 = vpack.c.b16 %v2172, %v2172
      %v2237 = vpack.c.b16 %v2173, %v2173
      %v2238 = vpack.c.b16 %v2174, %v2174
      %v2239 = vpack.c.b16 %v2175, %v2175
      %v2240 = vpack.c.b16 %v2176, %v2176
      %v2241 = vpack.c.b16 %v2177, %v2177
      %v2242 = vpack.c.b16 %v2178, %v2178
      %v2243 = vpack.c.b16 %v2179, %v2179
      %v2244 = vpack.c.b16 %v2180, %v2180
      %v2245 = vpack.c.b16 %v2181, %v2181
      %v2246 = vpack.c.b16 %v2182, %v2182
      %v2247 = vpack.c.b16 %v2183, %v2183
      %v2248 = vpack.c.b16 %v2184, %v2184
      %v2249 = vpack.c.b16 %v2185, %v2185
      %v2250 = vpack.c.b16 %v2186, %v2186
      %v2251 = vpack.c.b16 %v2187, %v2187
      %v2252 = vpack.c.b16 %v2188, %v2188
      %v2253 = vpack.c.b16 %v2189, %v2189
      %v2254 = vpack.c.b16 %v2190, %v2190
      %v2255 = vpack.c.b16 %v2191, %v2191
      %v2256 = vpack.c.b16 %v2192, %v2192
      %v2257 = vpack.c.b16 %v2193, %v2193
      %v2258 = vpack.c.b16 %v2194, %v2194
      %v2259 = vpack.c.b16 %v2195, %v2195
      %v2260 = vpack.c.b16 %v2196, %v2196
      %v2261 = vpack.c.b16 %v2197, %v2197
      %v2262 = vpack.c.b16 %v2198, %v2198
      %v2263 = vpack.c.b16 %v2199, %v2199
      %v2264 = vpack.c.b16 %v2200, %v2200
      %v2265 = vpack.c.b16 %v2201, %v2201
      %v2266 = vpack.c.b16 %v2202, %v2202
      %v2267 = vpack.c.b16 %v2203, %v2203
      %v2268 = vpack.c.b16 %v2204, %v2204
      %v2269 = vpack.c.b16 %v2205, %v2205
      %vm2334 = vcmask 125952
      %2335 = vst.msk [vmem:[%s172] sm:$0xf] %vm2334, %v2206
      %2336 = vst.msk [vmem:[%s172 + $0x4] sm:$0xf] %vm2334, %v2207
      %2337 = vst.msk [vmem:[%s172 + $0x8] sm:$0xf] %vm2334, %v2208
      %2338 = vst.msk [vmem:[%s172 + $0xc] sm:$0xf] %vm2334, %v2209
      %2339 = vst.msk [vmem:[%s172 + $0x10] sm:$0xf] %vm2334, %v2210
      %2340 = vst.msk [vmem:[%s172 + $0x14] sm:$0xf] %vm2334, %v2211
      %2341 = vst.msk [vmem:[%s172 + $0x18] sm:$0xf] %vm2334, %v2212
      %2342 = vst.msk [vmem:[%s172 + $0x1c] sm:$0xf] %vm2334, %v2213
      %2343 = vst.msk [vmem:[%s172 + $0x20] sm:$0xf] %vm2334, %v2214
      %2344 = vst.msk [vmem:[%s172 + $0x24] sm:$0xf] %vm2334, %v2215
      %2345 = vst.msk [vmem:[%s172 + $0x28] sm:$0xf] %vm2334, %v2216
      %2346 = vst.msk [vmem:[%s172 + $0x2c] sm:$0xf] %vm2334, %v2217
      %2347 = vst.msk [vmem:[%s172 + $0x30] sm:$0xf] %vm2334, %v2218
      %2348 = vst.msk [vmem:[%s172 + $0x34] sm:$0xf] %vm2334, %v2219
      %2349 = vst.msk [vmem:[%s172 + $0x38] sm:$0xf] %vm2334, %v2220
      %2350 = vst.msk [vmem:[%s172 + $0x3c] sm:$0xf] %vm2334, %v2221
      %2351 = vst.msk [vmem:[%s172 + $0x40] sm:$0xf] %vm2334, %v2222
      %2352 = vst.msk [vmem:[%s172 + $0x44] sm:$0xf] %vm2334, %v2223
      %2353 = vst.msk [vmem:[%s172 + $0x48] sm:$0xf] %vm2334, %v2224
      %2354 = vst.msk [vmem:[%s172 + $0x4c] sm:$0xf] %vm2334, %v2225
      %2355 = vst.msk [vmem:[%s172 + $0x50] sm:$0xf] %vm2334, %v2226
      %2356 = vst.msk [vmem:[%s172 + $0x54] sm:$0xf] %vm2334, %v2227
      %2357 = vst.msk [vmem:[%s172 + $0x58] sm:$0xf] %vm2334, %v2228
      %2358 = vst.msk [vmem:[%s172 + $0x5c] sm:$0xf] %vm2334, %v2229
      %2359 = vst.msk [vmem:[%s172 + $0x60] sm:$0xf] %vm2334, %v2230
      %2360 = vst.msk [vmem:[%s172 + $0x64] sm:$0xf] %vm2334, %v2231
      %2361 = vst.msk [vmem:[%s172 + $0x68] sm:$0xf] %vm2334, %v2232
      %2362 = vst.msk [vmem:[%s172 + $0x6c] sm:$0xf] %vm2334, %v2233
      %2363 = vst.msk [vmem:[%s172 + $0x70] sm:$0xf] %vm2334, %v2234
      %2364 = vst.msk [vmem:[%s172 + $0x74] sm:$0xf] %vm2334, %v2235
      %2365 = vst.msk [vmem:[%s172 + $0x78] sm:$0xf] %vm2334, %v2236
      %2366 = vst.msk [vmem:[%s172 + $0x7c] sm:$0xf] %vm2334, %v2237
      %2367 = vst.msk [vmem:[%s172 + $0x80] sm:$0xf] %vm2334, %v2238
      %2368 = vst.msk [vmem:[%s172 + $0x84] sm:$0xf] %vm2334, %v2239
      %2369 = vst.msk [vmem:[%s172 + $0x88] sm:$0xf] %vm2334, %v2240
      %2370 = vst.msk [vmem:[%s172 + $0x8c] sm:$0xf] %vm2334, %v2241
      %2371 = vst.msk [vmem:[%s172 + $0x90] sm:$0xf] %vm2334, %v2242
      %2372 = vst.msk [vmem:[%s172 + $0x94] sm:$0xf] %vm2334, %v2243
      %2373 = vst.msk [vmem:[%s172 + $0x98] sm:$0xf] %vm2334, %v2244
      %2374 = vst.msk [vmem:[%s172 + $0x9c] sm:$0xf] %vm2334, %v2245
      %2375 = vst.msk [vmem:[%s172 + $0xa0] sm:$0xf] %vm2334, %v2246
      %2376 = vst.msk [vmem:[%s172 + $0xa4] sm:$0xf] %vm2334, %v2247
      %2377 = vst.msk [vmem:[%s172 + $0xa8] sm:$0xf] %vm2334, %v2248
      %2378 = vst.msk [vmem:[%s172 + $0xac] sm:$0xf] %vm2334, %v2249
      %2379 = vst.msk [vmem:[%s172 + $0xb0] sm:$0xf] %vm2334, %v2250
      %2380 = vst.msk [vmem:[%s172 + $0xb4] sm:$0xf] %vm2334, %v2251
      %2381 = vst.msk [vmem:[%s172 + $0xb8] sm:$0xf] %vm2334, %v2252
      %2382 = vst.msk [vmem:[%s172 + $0xbc] sm:$0xf] %vm2334, %v2253
      %2383 = vst.msk [vmem:[%s172 + $0xc0] sm:$0xf] %vm2334, %v2254
      %2384 = vst.msk [vmem:[%s172 + $0xc4] sm:$0xf] %vm2334, %v2255
      %2385 = vst.msk [vmem:[%s172 + $0xc8] sm:$0xf] %vm2334, %v2256
      %2386 = vst.msk [vmem:[%s172 + $0xcc] sm:$0xf] %vm2334, %v2257
      %2387 = vst.msk [vmem:[%s172 + $0xd0] sm:$0xf] %vm2334, %v2258
      %2388 = vst.msk [vmem:[%s172 + $0xd4] sm:$0xf] %vm2334, %v2259
      %2389 = vst.msk [vmem:[%s172 + $0xd8] sm:$0xf] %vm2334, %v2260
      %2390 = vst.msk [vmem:[%s172 + $0xdc] sm:$0xf] %vm2334, %v2261
      %2391 = vst.msk [vmem:[%s172 + $0xe0] sm:$0xf] %vm2334, %v2262
      %2392 = vst.msk [vmem:[%s172 + $0xe4] sm:$0xf] %vm2334, %v2263
      %2393 = vst.msk [vmem:[%s172 + $0xe8] sm:$0xf] %vm2334, %v2264
      %2394 = vst.msk [vmem:[%s172 + $0xec] sm:$0xf] %vm2334, %v2265
      %2395 = vst.msk [vmem:[%s172 + $0xf0] sm:$0xf] %vm2334, %v2266
      %2396 = vst.msk [vmem:[%s172 + $0xf4] sm:$0xf] %vm2334, %v2267
      %2397 = vst.msk [vmem:[%s172 + $0xf8] sm:$0xf] %vm2334, %v2268
      %2398 = vst.msk [vmem:[%s172 + $0xfc] sm:$0xf] %vm2334, %v2269
      %s2399 = smul.u32 64, %s14
      %p2400 = scmp.lt.s32.totalorder %s2399, 639
      %s2401 = scalar_select %p2400, %s2399, 639
      %s2402 = smul.addr %s2401, 4
      %s2403 = scalar_lea.vmem %s3, %s2402
      // Predicated region
      $region33: #{gender_classifier_forward.3} parent=31 // pred_check
        %p2404 = pneg %p100
      $region34: #{gender_classifier_forward.3} parent=31 // pred_check_branch
        %2406 = sbr.rel (%p2404) target = $region36
      $region35: #{gender_classifier_forward.3} parent=31 // pred_region
        %s2407 = smul.u32 64, %s14
      $region36: #{gender_classifier_forward.3} parent=31 // pred_fallthru
        _
    $region32: #{gender_classifier_forward.3} parent=5 // pred_fallthru
      _
    %p2408 = scmp.le.s32.totalorder 2, %s9
    // Predicated region
    $region37: #{gender_classifier_forward.3} parent=5 // pred_check
      %p2409 = pneg %p2408
    $region38: #{gender_classifier_forward.3} parent=5 // pred_check_branch
      %2411 = sbr.rel (%p2409) target = $region40
    $region39: #{gender_classifier_forward.3} parent=5 // pred_region
      %s2412 = ssub.s32 %s9, 2
      // Predicated region
      $region41: #{gender_classifier_forward.3} parent=39 // pred_check
        %p2413 = pneg %p106
      $region42: #{gender_classifier_forward.3} parent=39 // pred_check_branch
        %2415 = sbr.rel (%p2413) target = $region44
      $region43: #{gender_classifier_forward.3} parent=39 // pred_region
        %s2416 = smul.u32 64, %s15
        %p2417 = scmp.lt.s32.totalorder %s2416, 639
        %s2418 = scalar_select %p2417, %s2416, 639
        %s2419 = smul.addr %s2418, 4
        %s2420 = scalar_lea.vmem %s3, %s2419
      $region44: #{gender_classifier_forward.3} parent=39 // pred_fallthru
        _
    $region40: #{gender_classifier_forward.3} parent=5 // pred_fallthru
      _
  $region6: #{gender_classifier_forward.3} parent=0 // loop_footer
    %s13 = sadd.s32 1, %s9
  $region7: #{gender_classifier_forward.3} parent=0 // loop_footer_branch
    %8 = sbr.rel target = $region3
  $region8: #{gender_classifier_forward.3} parent=0 // loop_exit
    _

// kernel: gender_classifier_forward.4
$region0: #{gender_classifier_forward.4}
  #allocation0 [shape = 'u32[]', space=smem, size = 0x4, offset = 0x4, fixed_abs, tag = 'smem constant byte address 0x4 - core index']
  #allocation1 [shape = 'u32[144,128]{1,0:T(1,128)}', space=vmem, size = 0x12000, scoped, tag = 'internal scratch']
  %s0 = inlined_call_operand.vmem [shape: bf16[1536,256], index: 0, kind: input, shape index: {}]
  %s1 = inlined_call_operand.vmem [shape: bf16[4,256,32], index: 1, kind: input, shape index: {}]
  %s2 = inlined_call_operand.vmem [shape: f32[1,32], index: 2, kind: input, shape index: {}]
  %s3 = inlined_call_operand.vmem [shape: bf16[1536,32], index: 3, kind: output, shape index: {}]
  %s4 = sld [smem:[#allocation0]]
  $region45: #{gender_classifier_forward.4} parent=0
    _
  %s6 = ssub.s32 1, %s4
  %s7 = scalar_select 0, %s6, %s4
  loop: start=0, step=1, limit=5
  $region2: #{gender_classifier_forward.4} parent=0 // loop_pre_header
    _
  $region3: #{gender_classifier_forward.4} parent=0 // loop_header
    %s9 = sphi 0, %s13
    %p10 = scmp.ge.s32.totalorder %s9, 5
    %s19 = sphi 0, %s21
    %s22 = sphi 0, %s19
    %s23 = sphi 0, %s22
    %s39 = sphi 0, %s23
    %s43 = sphi 0, %s43
    %s45 = sphi 0, %s43
    %s46 = sphi 0, %s45
    %s60 = sphi 0, %s46
    %s64 = sphi 0, %s64
    %s66 = sphi 0, %s64
    %s67 = sphi 0, %s66
    %s81 = sphi 0, %s67
    %s87 = sphi 0, %s89
    %s90 = sphi 0, %s87
    %s91 = sphi 0, %s90
    %s107 = sphi 0, %s91
  $region4: #{gender_classifier_forward.4} parent=0 // loop_header_branch
    %12 = sbr.rel (%p10) target = $region8
  $region5: #{gender_classifier_forward.4} parent=0 // loop_body
    %s14 = ssub.s32 %s9, 1
    %s15 = ssub.s32 %s9, 2
    %s16 = sadd.s32 %s9, 1
    %s17 = ssub.s32 %s9, %s16
    %p18 = scmp.eq.s32.totalorder %s17, 0
    %s20 = sadd.s32 %s19, 1
    %s21 = scalar_select %p18, %s19, %s20
    %p24 = pneg %p18
    %p25 = scmp.eq.s32.totalorder %s9, 2
    %p26 = por %p24, %p25
    %p27 = scmp.ne.s32.totalorder %s19, %s22
    %p28 = scmp.eq.s32.totalorder %s9, 0
    %p29 = por %p27, %p28
    %p30 = scmp.ne.s32.totalorder %s19, %s22
    %p31 = scmp.eq.s32.totalorder %s14, 2
    %p32 = por %p30, %p31
    %p33 = scmp.ne.s32.totalorder %s22, %s23
    %p34 = scmp.eq.s32.totalorder %s14, 0
    %p35 = por %p33, %p34
    %p36 = scmp.ne.s32.totalorder %s22, %s23
    %p37 = scmp.eq.s32.totalorder %s15, 2
    %p38 = por %p36, %p37
    %p40 = scmp.ne.s32.totalorder %s23, %s39
    %p41 = scmp.eq.s32.totalorder %s15, 0
    %p42 = por %p40, %p41
    %s44 = sadd.s32 %s43, 1
    %p47 = scmp.eq.s32.totalorder %s9, 2
    %p48 = scmp.ne.s32.totalorder %s43, %s45
    %p49 = scmp.eq.s32.totalorder %s9, 0
    %p50 = por %p48, %p49
    %p51 = scmp.ne.s32.totalorder %s43, %s45
    %p52 = scmp.eq.s32.totalorder %s14, 2
    %p53 = por %p51, %p52
    %p54 = scmp.ne.s32.totalorder %s45, %s46
    %p55 = scmp.eq.s32.totalorder %s14, 0
    %p56 = por %p54, %p55
    %p57 = scmp.ne.s32.totalorder %s45, %s46
    %p58 = scmp.eq.s32.totalorder %s15, 2
    %p59 = por %p57, %p58
    %p61 = scmp.ne.s32.totalorder %s46, %s60
    %p62 = scmp.eq.s32.totalorder %s15, 0
    %p63 = por %p61, %p62
    %s65 = sadd.s32 %s64, 1
    %p68 = scmp.eq.s32.totalorder %s9, 2
    %p69 = scmp.ne.s32.totalorder %s64, %s66
    %p70 = scmp.eq.s32.totalorder %s9, 0
    %p71 = por %p69, %p70
    %p72 = scmp.ne.s32.totalorder %s64, %s66
    %p73 = scmp.eq.s32.totalorder %s14, 2
    %p74 = por %p72, %p73
    %p75 = scmp.ne.s32.totalorder %s66, %s67
    %p76 = scmp.eq.s32.totalorder %s14, 0
    %p77 = por %p75, %p76
    %p78 = scmp.ne.s32.totalorder %s66, %s67
    %p79 = scmp.eq.s32.totalorder %s15, 2
    %p80 = por %p78, %p79
    %p82 = scmp.ne.s32.totalorder %s67, %s81
    %p83 = scmp.eq.s32.totalorder %s15, 0
    %p84 = por %p82, %p83
    %s85 = ssub.s32 %s9, %s16
    %p86 = scmp.eq.s32.totalorder %s85, 0
    %s88 = sadd.s32 %s87, 1
    %s89 = scalar_select %p86, %s87, %s88
    %p92 = pneg %p86
    %p93 = scmp.eq.s32.totalorder %s9, 2
    %p94 = por %p92, %p93
    %p95 = scmp.ne.s32.totalorder %s87, %s90
    %p96 = scmp.eq.s32.totalorder %s9, 0
    %p97 = por %p95, %p96
    %p98 = scmp.ne.s32.totalorder %s87, %s90
    %p99 = scmp.eq.s32.totalorder %s14, 2
    %p100 = por %p98, %p99
    %p101 = scmp.ne.s32.totalorder %s90, %s91
    %p102 = scmp.eq.s32.totalorder %s14, 0
    %p103 = por %p101, %p102
    %p104 = scmp.ne.s32.totalorder %s90, %s91
    %p105 = scmp.eq.s32.totalorder %s15, 2
    %p106 = por %p104, %p105
    %p108 = scmp.ne.s32.totalorder %s91, %s107
    %p109 = scmp.eq.s32.totalorder %s15, 0
    %p110 = por %p108, %p109
    %p111 = scmp.le.s32.totalorder 1, %s9
    %p112 = scmp.lt.s32.totalorder %s9, 4
    %p113 = pnand %p111, %p112
    %p114 = pneg %p113
    // Predicated region
    $region9: #{gender_classifier_forward.4} parent=5 // pred_check
      _
    $region10: #{gender_classifier_forward.4} parent=5 // pred_check_branch
      %116 = sbr.rel (%p113) target = $region12
    $region11: #{gender_classifier_forward.4} parent=5 // pred_region
      %s117 = ssub.s32 %s9, 1
      // Predicated region
      $region13: #{gender_classifier_forward.4} parent=11 // pred_check
        %p118 = pneg %p56
      $region14: #{gender_classifier_forward.4} parent=11 // pred_check_branch
        %120 = sbr.rel (%p118) target = $region16
      $region15: #{gender_classifier_forward.4} parent=11 // pred_region
        _
      $region16: #{gender_classifier_forward.4} parent=11 // pred_fallthru
        _
      // Predicated region
      $region17: #{gender_classifier_forward.4} parent=11 // pred_check
        %p121 = pneg %p77
      $region18: #{gender_classifier_forward.4} parent=11 // pred_check_branch
        %123 = sbr.rel (%p121) target = $region20
      $region19: #{gender_classifier_forward.4} parent=11 // pred_region
        _
      $region20: #{gender_classifier_forward.4} parent=11 // pred_fallthru
        _
    $region12: #{gender_classifier_forward.4} parent=5 // pred_fallthru
      _
    %p124 = scmp.lt.s32.totalorder %s9, 3
    // Predicated region
    $region21: #{gender_classifier_forward.4} parent=5 // pred_check
      %p125 = pneg %p124
    $region22: #{gender_classifier_forward.4} parent=5 // pred_check_branch
      %127 = sbr.rel (%p125) target = $region24
    $region23: #{gender_classifier_forward.4} parent=5 // pred_region
      // Predicated region
      $region25: #{gender_classifier_forward.4} parent=23 // pred_check
        %p128 = pneg %p29
      $region26: #{gender_classifier_forward.4} parent=23 // pred_check_branch
        %130 = sbr.rel (%p128) target = $region28
      $region27: #{gender_classifier_forward.4} parent=23 // pred_region
        %s131 = smul.u32 64, %s9
        %p132 = scmp.lt.s32.totalorder %s131, 191
        %s133 = scalar_select %p132, %s131, 191
        %s134 = smul.addr %s133, 2
        %s135 = smul.addr %s134, 4
        %s136 = scalar_lea.vmem %s0, %s135
        %s137 = smul.u32 64, %s9
      $region28: #{gender_classifier_forward.4} parent=23 // pred_fallthru
        _
    $region24: #{gender_classifier_forward.4} parent=5 // pred_fallthru
      _
    %p138 = scmp.le.s32.totalorder 1, %s9
    %p139 = scmp.lt.s32.totalorder %s9, 4
    %p140 = pnand %p138, %p139
    %p141 = pneg %p140
    // Predicated region
    $region29: #{gender_classifier_forward.4} parent=5 // pred_check
      _
    $region30: #{gender_classifier_forward.4} parent=5 // pred_check_branch
      %143 = sbr.rel (%p140) target = $region32
    $region31: #{gender_classifier_forward.4} parent=5 // pred_region
      %s144 = ssub.s32 %s9, 1
      %s145 = smul.u32 64, %s14
      %p146 = scmp.lt.s32.totalorder %s145, 191
      %s147 = scalar_select %p146, %s145, 191
      %s148 = smul.addr %s147, 2
      %s149 = smul.addr %s148, 4
      %s150 = scalar_lea.vmem %s0, %s149
      %p151 = pneg %p35
      %p152 = pneg %p32
      %p153 = pneg %p56
      %p154 = pneg %p53
      %p155 = pneg %p77
      %p156 = pneg %p74
      %p157 = pneg %p103
      %p158 = pneg %p100
      %s159 = smul.u32 64, %s14
      %p160 = scmp.lt.s32.totalorder %s159, 191
      %s161 = scalar_select %p160, %s159, 191
      %s162 = smul.addr %s161, 4
      %s163 = scalar_lea.vmem %s3, %s162
      %s164 = smul.u32 64, %s14
      %p165 = scmp.lt.s32.totalorder %s164, 191
      %s166 = scalar_select %p165, %s164, 191
      %s167 = smul.addr %s166, 2
      %s168 = smul.addr %s167, 4
      %s169 = scalar_lea.vmem %s0, %s168
      %s170 = smul.u32 64, %s14
      %s171 = smul.u32 64, %s14
      %p172 = scmp.lt.s32.totalorder %s171, 191
      %s173 = scalar_select %p172, %s171, 191
      %s174 = smul.addr %s173, 4
      %s175 = scalar_lea.vmem %s3, %s174
      %s176 = smul.u32 64, %s14
      %v178 = vld [vmem:[%s169] sm:$0xff]
      %v179 = vld [vmem:[%s169 + $0x8] sm:$0xff]
      %v180 = vld [vmem:[%s169 + $0x10] sm:$0xff]
      %v181 = vld [vmem:[%s169 + $0x18] sm:$0xff]
      %v182 = vld [vmem:[%s169 + $0x20] sm:$0xff]
      %v183 = vld [vmem:[%s169 + $0x28] sm:$0xff]
      %v184 = vld [vmem:[%s169 + $0x30] sm:$0xff]
      %v185 = vld [vmem:[%s169 + $0x38] sm:$0xff]
      %v186 = vld [vmem:[%s169 + $0x40] sm:$0xff]
      %v187 = vld [vmem:[%s169 + $0x48] sm:$0xff]
      %v188 = vld [vmem:[%s169 + $0x50] sm:$0xff]
      %v189 = vld [vmem:[%s169 + $0x58] sm:$0xff]
      %v190 = vld [vmem:[%s169 + $0x60] sm:$0xff]
      %v191 = vld [vmem:[%s169 + $0x68] sm:$0xff]
      %v192 = vld [vmem:[%s169 + $0x70] sm:$0xff]
      %v193 = vld [vmem:[%s169 + $0x78] sm:$0xff]
      %v194 = vld [vmem:[%s169 + $0x80] sm:$0xff]
      %v195 = vld [vmem:[%s169 + $0x88] sm:$0xff]
      %v196 = vld [vmem:[%s169 + $0x90] sm:$0xff]
      %v197 = vld [vmem:[%s169 + $0x98] sm:$0xff]
      %v198 = vld [vmem:[%s169 + $0xa0] sm:$0xff]
      %v199 = vld [vmem:[%s169 + $0xa8] sm:$0xff]
      %v200 = vld [vmem:[%s169 + $0xb0] sm:$0xff]
      %v201 = vld [vmem:[%s169 + $0xb8] sm:$0xff]
      %v202 = vld [vmem:[%s169 + $0xc0] sm:$0xff]
      %v203 = vld [vmem:[%s169 + $0xc8] sm:$0xff]
      %v204 = vld [vmem:[%s169 + $0xd0] sm:$0xff]
      %v205 = vld [vmem:[%s169 + $0xd8] sm:$0xff]
      %v206 = vld [vmem:[%s169 + $0xe0] sm:$0xff]
      %v207 = vld [vmem:[%s169 + $0xe8] sm:$0xff]
      %v208 = vld [vmem:[%s169 + $0xf0] sm:$0xff]
      %v209 = vld [vmem:[%s169 + $0xf8] sm:$0xff]
      %v210 = vld [vmem:[%s169 + $0x100] sm:$0xff]
      %v211 = vld [vmem:[%s169 + $0x108] sm:$0xff]
      %v212 = vld [vmem:[%s169 + $0x110] sm:$0xff]
      %v213 = vld [vmem:[%s169 + $0x118] sm:$0xff]
      %v214 = vld [vmem:[%s169 + $0x120] sm:$0xff]
      %v215 = vld [vmem:[%s169 + $0x128] sm:$0xff]
      %v216 = vld [vmem:[%s169 + $0x130] sm:$0xff]
      %v217 = vld [vmem:[%s169 + $0x138] sm:$0xff]
      %v218 = vld [vmem:[%s169 + $0x140] sm:$0xff]
      %v219 = vld [vmem:[%s169 + $0x148] sm:$0xff]
      %v220 = vld [vmem:[%s169 + $0x150] sm:$0xff]
      %v221 = vld [vmem:[%s169 + $0x158] sm:$0xff]
      %v222 = vld [vmem:[%s169 + $0x160] sm:$0xff]
      %v223 = vld [vmem:[%s169 + $0x168] sm:$0xff]
      %v224 = vld [vmem:[%s169 + $0x170] sm:$0xff]
      %v225 = vld [vmem:[%s169 + $0x178] sm:$0xff]
      %v226 = vld [vmem:[%s169 + $0x180] sm:$0xff]
      %v227 = vld [vmem:[%s169 + $0x188] sm:$0xff]
      %v228 = vld [vmem:[%s169 + $0x190] sm:$0xff]
      %v229 = vld [vmem:[%s169 + $0x198] sm:$0xff]
      %v230 = vld [vmem:[%s169 + $0x1a0] sm:$0xff]
      %v231 = vld [vmem:[%s169 + $0x1a8] sm:$0xff]
      %v232 = vld [vmem:[%s169 + $0x1b0] sm:$0xff]
      %v233 = vld [vmem:[%s169 + $0x1b8] sm:$0xff]
      %v234 = vld [vmem:[%s169 + $0x1c0] sm:$0xff]
      %v235 = vld [vmem:[%s169 + $0x1c8] sm:$0xff]
      %v236 = vld [vmem:[%s169 + $0x1d0] sm:$0xff]
      %v237 = vld [vmem:[%s169 + $0x1d8] sm:$0xff]
      %v238 = vld [vmem:[%s169 + $0x1e0] sm:$0xff]
      %v239 = vld [vmem:[%s169 + $0x1e8] sm:$0xff]
      %v240 = vld [vmem:[%s169 + $0x1f0] sm:$0xff]
      %v241 = vld [vmem:[%s169 + $0x1f8] sm:$0xff]
      %v242 = vld [vmem:[%s1] sm:$0xf]
      %v243 = vld [vmem:[%s1 + $0x4] sm:$0xf]
      %v244 = vld [vmem:[%s1 + $0x8] sm:$0xf]
      %v245 = vld [vmem:[%s1 + $0xc] sm:$0xf]
      %v246 = vld [vmem:[%s1 + $0x10] sm:$0xf]
      %v247 = vld [vmem:[%s1 + $0x14] sm:$0xf]
      %v248 = vld [vmem:[%s1 + $0x18] sm:$0xf]
      %v249 = vld [vmem:[%s1 + $0x1c] sm:$0xf]
      %v250 = vld [vmem:[%s1 + $0x20] sm:$0xf]
      %v251 = vld [vmem:[%s1 + $0x24] sm:$0xf]
      %v252 = vld [vmem:[%s1 + $0x28] sm:$0xf]
      %v253 = vld [vmem:[%s1 + $0x2c] sm:$0xf]
      %v254 = vld [vmem:[%s1 + $0x30] sm:$0xf]
      %v255 = vld [vmem:[%s1 + $0x34] sm:$0xf]
      %v256 = vld [vmem:[%s1 + $0x38] sm:$0xf]
      %v257 = vld [vmem:[%s1 + $0x3c] sm:$0xf]
      %v258 = vld [vmem:[%s1 + $0x40] sm:$0xf]
      %v259 = vld [vmem:[%s1 + $0x44] sm:$0xf]
      %v260 = vld [vmem:[%s1 + $0x48] sm:$0xf]
      %v261 = vld [vmem:[%s1 + $0x4c] sm:$0xf]
      %v262 = vld [vmem:[%s1 + $0x50] sm:$0xf]
      %v263 = vld [vmem:[%s1 + $0x54] sm:$0xf]
      %v264 = vld [vmem:[%s1 + $0x58] sm:$0xf]
      %v265 = vld [vmem:[%s1 + $0x5c] sm:$0xf]
      %v266 = vld [vmem:[%s1 + $0x60] sm:$0xf]
      %v267 = vld [vmem:[%s1 + $0x64] sm:$0xf]
      %v268 = vld [vmem:[%s1 + $0x68] sm:$0xf]
      %v269 = vld [vmem:[%s1 + $0x6c] sm:$0xf]
      %v270 = vld [vmem:[%s1 + $0x70] sm:$0xf]
      %v271 = vld [vmem:[%s1 + $0x74] sm:$0xf]
      %v272 = vld [vmem:[%s1 + $0x78] sm:$0xf]
      %v273 = vld [vmem:[%s1 + $0x7c] sm:$0xf]
      %v338 = vunpack.c.l.b16 %v178
      %v339 = vunpack.c.h.b16 %v178
      %v340 = vunpack.c.l.b16 %v179
      %v341 = vunpack.c.h.b16 %v179
      %v342 = vunpack.c.l.b16 %v180
      %v343 = vunpack.c.h.b16 %v180
      %v344 = vunpack.c.l.b16 %v181
      %v345 = vunpack.c.h.b16 %v181
      %v346 = vunpack.c.l.b16 %v182
      %v347 = vunpack.c.h.b16 %v182
      %v348 = vunpack.c.l.b16 %v183
      %v349 = vunpack.c.h.b16 %v183
      %v350 = vunpack.c.l.b16 %v184
      %v351 = vunpack.c.h.b16 %v184
      %v352 = vunpack.c.l.b16 %v185
      %v353 = vunpack.c.h.b16 %v185
      %v354 = vunpack.c.l.b16 %v186
      %v355 = vunpack.c.h.b16 %v186
      %v356 = vunpack.c.l.b16 %v187
      %v357 = vunpack.c.h.b16 %v187
      %v358 = vunpack.c.l.b16 %v188
      %v359 = vunpack.c.h.b16 %v188
      %v360 = vunpack.c.l.b16 %v189
      %v361 = vunpack.c.h.b16 %v189
      %v362 = vunpack.c.l.b16 %v190
      %v363 = vunpack.c.h.b16 %v190
      %v364 = vunpack.c.l.b16 %v191
      %v365 = vunpack.c.h.b16 %v191
      %v366 = vunpack.c.l.b16 %v192
      %v367 = vunpack.c.h.b16 %v192
      %v368 = vunpack.c.l.b16 %v193
      %v369 = vunpack.c.h.b16 %v193
      %v370 = vunpack.c.l.b16 %v194
      %v371 = vunpack.c.h.b16 %v194
      %v372 = vunpack.c.l.b16 %v195
      %v373 = vunpack.c.h.b16 %v195
      %v374 = vunpack.c.l.b16 %v196
      %v375 = vunpack.c.h.b16 %v196
      %v376 = vunpack.c.l.b16 %v197
      %v377 = vunpack.c.h.b16 %v197
      %v378 = vunpack.c.l.b16 %v198
      %v379 = vunpack.c.h.b16 %v198
      %v380 = vunpack.c.l.b16 %v199
      %v381 = vunpack.c.h.b16 %v199
      %v382 = vunpack.c.l.b16 %v200
      %v383 = vunpack.c.h.b16 %v200
      %v384 = vunpack.c.l.b16 %v201
      %v385 = vunpack.c.h.b16 %v201
      %v386 = vunpack.c.l.b16 %v202
      %v387 = vunpack.c.h.b16 %v202
      %v388 = vunpack.c.l.b16 %v203
      %v389 = vunpack.c.h.b16 %v203
      %v390 = vunpack.c.l.b16 %v204
      %v391 = vunpack.c.h.b16 %v204
      %v392 = vunpack.c.l.b16 %v205
      %v393 = vunpack.c.h.b16 %v205
      %v394 = vunpack.c.l.b16 %v206
      %v395 = vunpack.c.h.b16 %v206
      %v396 = vunpack.c.l.b16 %v207
      %v397 = vunpack.c.h.b16 %v207
      %v398 = vunpack.c.l.b16 %v208
      %v399 = vunpack.c.h.b16 %v208
      %v400 = vunpack.c.l.b16 %v209
      %v401 = vunpack.c.h.b16 %v209
      %v402 = vunpack.c.l.b16 %v210
      %v403 = vunpack.c.h.b16 %v210
      %v404 = vunpack.c.l.b16 %v211
      %v405 = vunpack.c.h.b16 %v211
      %v406 = vunpack.c.l.b16 %v212
      %v407 = vunpack.c.h.b16 %v212
      %v408 = vunpack.c.l.b16 %v213
      %v409 = vunpack.c.h.b16 %v213
      %v410 = vunpack.c.l.b16 %v214
      %v411 = vunpack.c.h.b16 %v214
      %v412 = vunpack.c.l.b16 %v215
      %v413 = vunpack.c.h.b16 %v215
      %v414 = vunpack.c.l.b16 %v216
      %v415 = vunpack.c.h.b16 %v216
      %v416 = vunpack.c.l.b16 %v217
      %v417 = vunpack.c.h.b16 %v217
      %v418 = vunpack.c.l.b16 %v218
      %v419 = vunpack.c.h.b16 %v218
      %v420 = vunpack.c.l.b16 %v219
      %v421 = vunpack.c.h.b16 %v219
      %v422 = vunpack.c.l.b16 %v220
      %v423 = vunpack.c.h.b16 %v220
      %v424 = vunpack.c.l.b16 %v221
      %v425 = vunpack.c.h.b16 %v221
      %v426 = vunpack.c.l.b16 %v222
      %v427 = vunpack.c.h.b16 %v222
      %v428 = vunpack.c.l.b16 %v223
      %v429 = vunpack.c.h.b16 %v223
      %v430 = vunpack.c.l.b16 %v224
      %v431 = vunpack.c.h.b16 %v224
      %v432 = vunpack.c.l.b16 %v225
      %v433 = vunpack.c.h.b16 %v225
      %v434 = vunpack.c.l.b16 %v226
      %v435 = vunpack.c.h.b16 %v226
      %v436 = vunpack.c.l.b16 %v227
      %v437 = vunpack.c.h.b16 %v227
      %v438 = vunpack.c.l.b16 %v228
      %v439 = vunpack.c.h.b16 %v228
      %v440 = vunpack.c.l.b16 %v229
      %v441 = vunpack.c.h.b16 %v229
      %v442 = vunpack.c.l.b16 %v230
      %v443 = vunpack.c.h.b16 %v230
      %v444 = vunpack.c.l.b16 %v231
      %v445 = vunpack.c.h.b16 %v231
      %v446 = vunpack.c.l.b16 %v232
      %v447 = vunpack.c.h.b16 %v232
      %v448 = vunpack.c.l.b16 %v233
      %v449 = vunpack.c.h.b16 %v233
      %v450 = vunpack.c.l.b16 %v234
      %v451 = vunpack.c.h.b16 %v234
      %v452 = vunpack.c.l.b16 %v235
      %v453 = vunpack.c.h.b16 %v235
      %v454 = vunpack.c.l.b16 %v236
      %v455 = vunpack.c.h.b16 %v236
      %v456 = vunpack.c.l.b16 %v237
      %v457 = vunpack.c.h.b16 %v237
      %v458 = vunpack.c.l.b16 %v238
      %v459 = vunpack.c.h.b16 %v238
      %v460 = vunpack.c.l.b16 %v239
      %v461 = vunpack.c.h.b16 %v239
      %v462 = vunpack.c.l.b16 %v240
      %v463 = vunpack.c.h.b16 %v240
      %v464 = vunpack.c.l.b16 %v241
      %v465 = vunpack.c.h.b16 %v241
      %v466 = vpack.c.b16 %v340, %v338
      %v467 = vpack.c.b16 %v341, %v339
      %v468 = vpack.c.b16 %v344, %v342
      %v469 = vpack.c.b16 %v345, %v343
      %v470 = vpack.c.b16 %v348, %v346
      %v471 = vpack.c.b16 %v349, %v347
      %v472 = vpack.c.b16 %v352, %v350
      %v473 = vpack.c.b16 %v353, %v351
      %v474 = vpack.c.b16 %v356, %v354
      %v475 = vpack.c.b16 %v357, %v355
      %v476 = vpack.c.b16 %v360, %v358
      %v477 = vpack.c.b16 %v361, %v359
      %v478 = vpack.c.b16 %v364, %v362
      %v479 = vpack.c.b16 %v365, %v363
      %v480 = vpack.c.b16 %v368, %v366
      %v481 = vpack.c.b16 %v369, %v367
      %v482 = vpack.c.b16 %v372, %v370
      %v483 = vpack.c.b16 %v373, %v371
      %v484 = vpack.c.b16 %v376, %v374
      %v485 = vpack.c.b16 %v377, %v375
      %v486 = vpack.c.b16 %v380, %v378
      %v487 = vpack.c.b16 %v381, %v379
      %v488 = vpack.c.b16 %v384, %v382
      %v489 = vpack.c.b16 %v385, %v383
      %v490 = vpack.c.b16 %v388, %v386
      %v491 = vpack.c.b16 %v389, %v387
      %v492 = vpack.c.b16 %v392, %v390
      %v493 = vpack.c.b16 %v393, %v391
      %v494 = vpack.c.b16 %v396, %v394
      %v495 = vpack.c.b16 %v397, %v395
      %v496 = vpack.c.b16 %v400, %v398
      %v497 = vpack.c.b16 %v401, %v399
      %v498 = vpack.c.b16 %v404, %v402
      %v499 = vpack.c.b16 %v405, %v403
      %v500 = vpack.c.b16 %v408, %v406
      %v501 = vpack.c.b16 %v409, %v407
      %v502 = vpack.c.b16 %v412, %v410
      %v503 = vpack.c.b16 %v413, %v411
      %v504 = vpack.c.b16 %v416, %v414
      %v505 = vpack.c.b16 %v417, %v415
      %v506 = vpack.c.b16 %v420, %v418
      %v507 = vpack.c.b16 %v421, %v419
      %v508 = vpack.c.b16 %v424, %v422
      %v509 = vpack.c.b16 %v425, %v423
      %v510 = vpack.c.b16 %v428, %v426
      %v511 = vpack.c.b16 %v429, %v427
      %v512 = vpack.c.b16 %v432, %v430
      %v513 = vpack.c.b16 %v433, %v431
      %v514 = vpack.c.b16 %v436, %v434
      %v515 = vpack.c.b16 %v437, %v435
      %v516 = vpack.c.b16 %v440, %v438
      %v517 = vpack.c.b16 %v441, %v439
      %v518 = vpack.c.b16 %v444, %v442
      %v519 = vpack.c.b16 %v445, %v443
      %v520 = vpack.c.b16 %v448, %v446
      %v521 = vpack.c.b16 %v449, %v447
      %v522 = vpack.c.b16 %v452, %v450
      %v523 = vpack.c.b16 %v453, %v451
      %v524 = vpack.c.b16 %v456, %v454
      %v525 = vpack.c.b16 %v457, %v455
      %v526 = vpack.c.b16 %v460, %v458
      %v527 = vpack.c.b16 %v461, %v459
      %v528 = vpack.c.b16 %v464, %v462
      %v529 = vpack.c.b16 %v465, %v463
      %v626 = vunpack.c.l.b16 %v242
      %v627 = vunpack.c.l.b16 %v243
      %v628 = vunpack.c.l.b16 %v244
      %v629 = vunpack.c.l.b16 %v245
      %v630 = vunpack.c.l.b16 %v246
      %v631 = vunpack.c.l.b16 %v247
      %v632 = vunpack.c.l.b16 %v248
      %v633 = vunpack.c.l.b16 %v249
      %v634 = vunpack.c.l.b16 %v250
      %v635 = vunpack.c.l.b16 %v251
      %v636 = vunpack.c.l.b16 %v252
      %v637 = vunpack.c.l.b16 %v253
      %v638 = vunpack.c.l.b16 %v254
      %v639 = vunpack.c.l.b16 %v255
      %v640 = vunpack.c.l.b16 %v256
      %v641 = vunpack.c.l.b16 %v257
      %v642 = vunpack.c.l.b16 %v258
      %v643 = vunpack.c.l.b16 %v259
      %v644 = vunpack.c.l.b16 %v260
      %v645 = vunpack.c.l.b16 %v261
      %v646 = vunpack.c.l.b16 %v262
      %v647 = vunpack.c.l.b16 %v263
      %v648 = vunpack.c.l.b16 %v264
      %v649 = vunpack.c.l.b16 %v265
      %v650 = vunpack.c.l.b16 %v266
      %v651 = vunpack.c.l.b16 %v267
      %v652 = vunpack.c.l.b16 %v268
      %v653 = vunpack.c.l.b16 %v269
      %v654 = vunpack.c.l.b16 %v270
      %v655 = vunpack.c.l.b16 %v271
      %v656 = vunpack.c.l.b16 %v272
      %v657 = vunpack.c.l.b16 %v273
      %v658 = vpack.c.b16 %v627, %v626
      %v659 = vpack.c.b16 %v629, %v628
      %v660 = vpack.c.b16 %v631, %v630
      %v661 = vpack.c.b16 %v633, %v632
      %v662 = vpack.c.b16 %v635, %v634
      %v663 = vpack.c.b16 %v637, %v636
      %v664 = vpack.c.b16 %v639, %v638
      %v665 = vpack.c.b16 %v641, %v640
      %v666 = vpack.c.b16 %v643, %v642
      %v667 = vpack.c.b16 %v645, %v644
      %v668 = vpack.c.b16 %v647, %v646
      %v669 = vpack.c.b16 %v649, %v648
      %v670 = vpack.c.b16 %v651, %v650
      %v671 = vpack.c.b16 %v653, %v652
      %v672 = vpack.c.b16 %v655, %v654
      %v673 = vpack.c.b16 %v657, %v656
      %690 = vmatprep.subr.bf16.mxu0 0
      %691 = vmatpush1.bf16.msra.mxu0 %v665
      %692 = vmatprep.subr.bf16.mxu0 0
      %693 = vmatpush1.bf16.msra.mxu0 %v664
      %694 = vmatprep.subr.bf16.mxu0 0
      %695 = vmatpush1.bf16.msra.mxu0 %v663
      %696 = vmatprep.subr.bf16.mxu0 0
      %697 = vmatpush1.bf16.msra.mxu0 %v662
      %698 = vmatprep.subr.bf16.mxu0 0
      %699 = vmatpush1.bf16.msra.mxu0 %v661
      %700 = vmatprep.subr.bf16.mxu0 0
      %701 = vmatpush1.bf16.msra.mxu0 %v660
      %702 = vmatprep.subr.bf16.mxu0 0
      %703 = vmatpush1.bf16.msra.mxu0 %v659
      %704 = vmatprep.subr.bf16.mxu0 0
      %705 = vmatpush1.bf16.msra.mxu0 %v658
      %706 = vmatprep.subr.bf16.mxu0 0
      %707 = vmatpush2.bf16.msra.mxu0 %v673
      %708 = vmatprep.subr.bf16.mxu0 0
      %709 = vmatpush2.bf16.msra.mxu0 %v672
      %710 = vmatprep.subr.bf16.mxu0 0
      %711 = vmatpush2.bf16.msra.mxu0 %v671
      %712 = vmatprep.subr.bf16.mxu0 0
      %713 = vmatpush2.bf16.msra.mxu0 %v670
      %714 = vmatprep.subr.bf16.mxu0 0
      %715 = vmatpush2.bf16.msra.mxu0 %v669
      %716 = vmatprep.subr.bf16.mxu0 0
      %717 = vmatpush2.bf16.msra.mxu0 %v668
      %718 = vmatprep.subr.bf16.mxu0 0
      %719 = vmatpush2.bf16.msra.mxu0 %v667
      %720 = vmatprep.subr.bf16.mxu0 0
      %721 = vmatpush2.bf16.msra.mxu0 %v666
      %722 = vmatprep.mubr.bf16.mxu0 %v467
      %723 = vmatmul.mubr.bf16.gmra.mxu0 %v466
      %v724 = vpop.f32.mrf.mxu0
      %v725 = vadd.f32 0.0, %v724
      %v726 = vpop.f32.mrf.mxu0
      %v727 = vpop.f32.mrf.mxu0
      %v728 = vadd.f32 0.0, %v727
      %v729 = vpop.f32.mrf.mxu0
      %730 = vmatprep.mubr.bf16.mxu0 %v469
      %731 = vmatmul.mubr.bf16.gmra.mxu0 %v468
      %v732 = vpop.f32.mrf.mxu0
      %v733 = vadd.f32 0.0, %v732
      %v734 = vpop.f32.mrf.mxu0
      %v735 = vpop.f32.mrf.mxu0
      %v736 = vadd.f32 0.0, %v735
      %v737 = vpop.f32.mrf.mxu0
      %738 = vmatprep.mubr.bf16.mxu0 %v471
      %739 = vmatmul.mubr.bf16.gmra.mxu0 %v470
      %v740 = vpop.f32.mrf.mxu0
      %v741 = vadd.f32 0.0, %v740
      %v742 = vpop.f32.mrf.mxu0
      %v743 = vpop.f32.mrf.mxu0
      %v744 = vadd.f32 0.0, %v743
      %v745 = vpop.f32.mrf.mxu0
      %746 = vmatprep.mubr.bf16.mxu0 %v473
      %747 = vmatmul.mubr.bf16.gmra.mxu0 %v472
      %v748 = vpop.f32.mrf.mxu0
      %v749 = vadd.f32 0.0, %v748
      %v750 = vpop.f32.mrf.mxu0
      %v751 = vpop.f32.mrf.mxu0
      %v752 = vadd.f32 0.0, %v751
      %v753 = vpop.f32.mrf.mxu0
      %754 = vmatprep.mubr.bf16.mxu0 %v475
      %755 = vmatmul.mubr.bf16.gmra.mxu0 %v474
      %v756 = vpop.f32.mrf.mxu0
      %v757 = vadd.f32 0.0, %v756
      %v758 = vpop.f32.mrf.mxu0
      %v759 = vpop.f32.mrf.mxu0
      %v760 = vadd.f32 0.0, %v759
      %v761 = vpop.f32.mrf.mxu0
      %762 = vmatprep.mubr.bf16.mxu0 %v477
      %763 = vmatmul.mubr.bf16.gmra.mxu0 %v476
      %v764 = vpop.f32.mrf.mxu0
      %v765 = vadd.f32 0.0, %v764
      %v766 = vpop.f32.mrf.mxu0
      %v767 = vpop.f32.mrf.mxu0
      %v768 = vadd.f32 0.0, %v767
      %v769 = vpop.f32.mrf.mxu0
      %770 = vmatprep.mubr.bf16.mxu0 %v479
      %771 = vmatmul.mubr.bf16.gmra.mxu0 %v478
      %v772 = vpop.f32.mrf.mxu0
      %v773 = vadd.f32 0.0, %v772
      %v774 = vpop.f32.mrf.mxu0
      %v775 = vpop.f32.mrf.mxu0
      %v776 = vadd.f32 0.0, %v775
      %v777 = vpop.f32.mrf.mxu0
      %778 = vmatprep.mubr.bf16.mxu0 %v481
      %779 = vmatmul.mubr.bf16.gmra.mxu0 %v480
      %v780 = vpop.f32.mrf.mxu0
      %v781 = vadd.f32 0.0, %v780
      %v782 = vpop.f32.mrf.mxu0
      %v783 = vpop.f32.mrf.mxu0
      %v784 = vadd.f32 0.0, %v783
      %v785 = vpop.f32.mrf.mxu0
      %786 = vmatprep.mubr.bf16.mxu0 %v483
      %787 = vmatmul.mubr.bf16.gmra.mxu0 %v482
      %v788 = vpop.f32.mrf.mxu0
      %v789 = vadd.f32 0.0, %v788
      %v790 = vpop.f32.mrf.mxu0
      %v791 = vpop.f32.mrf.mxu0
      %v792 = vadd.f32 0.0, %v791
      %v793 = vpop.f32.mrf.mxu0
      %794 = vmatprep.mubr.bf16.mxu0 %v485
      %795 = vmatmul.mubr.bf16.gmra.mxu0 %v484
      %v796 = vpop.f32.mrf.mxu0
      %v797 = vadd.f32 0.0, %v796
      %v798 = vpop.f32.mrf.mxu0
      %v799 = vpop.f32.mrf.mxu0
      %v800 = vadd.f32 0.0, %v799
      %v801 = vpop.f32.mrf.mxu0
      %802 = vmatprep.mubr.bf16.mxu0 %v487
      %803 = vmatmul.mubr.bf16.gmra.mxu0 %v486
      %v804 = vpop.f32.mrf.mxu0
      %v805 = vadd.f32 0.0, %v804
      %v806 = vpop.f32.mrf.mxu0
      %v807 = vpop.f32.mrf.mxu0
      %v808 = vadd.f32 0.0, %v807
      %v809 = vpop.f32.mrf.mxu0
      %810 = vmatprep.mubr.bf16.mxu0 %v489
      %811 = vmatmul.mubr.bf16.gmra.mxu0 %v488
      %v812 = vpop.f32.mrf.mxu0
      %v813 = vadd.f32 0.0, %v812
      %v814 = vpop.f32.mrf.mxu0
      %v815 = vpop.f32.mrf.mxu0
      %v816 = vadd.f32 0.0, %v815
      %v817 = vpop.f32.mrf.mxu0
      %818 = vmatprep.mubr.bf16.mxu0 %v491
      %819 = vmatmul.mubr.bf16.gmra.mxu0 %v490
      %v820 = vpop.f32.mrf.mxu0
      %v821 = vadd.f32 0.0, %v820
      %v822 = vpop.f32.mrf.mxu0
      %v823 = vpop.f32.mrf.mxu0
      %v824 = vadd.f32 0.0, %v823
      %v825 = vpop.f32.mrf.mxu0
      %826 = vmatprep.mubr.bf16.mxu0 %v493
      %827 = vmatmul.mubr.bf16.gmra.mxu0 %v492
      %v828 = vpop.f32.mrf.mxu0
      %v829 = vadd.f32 0.0, %v828
      %v830 = vpop.f32.mrf.mxu0
      %v831 = vpop.f32.mrf.mxu0
      %v832 = vadd.f32 0.0, %v831
      %v833 = vpop.f32.mrf.mxu0
      %834 = vmatprep.mubr.bf16.mxu0 %v495
      %835 = vmatmul.mubr.bf16.gmra.mxu0 %v494
      %v836 = vpop.f32.mrf.mxu0
      %v837 = vadd.f32 0.0, %v836
      %v838 = vpop.f32.mrf.mxu0
      %v839 = vpop.f32.mrf.mxu0
      %v840 = vadd.f32 0.0, %v839
      %v841 = vpop.f32.mrf.mxu0
      %842 = vmatprep.mubr.bf16.mxu0 %v497
      %843 = vmatmul.mubr.bf16.gmra.mxu0 %v496
      %v844 = vpop.f32.mrf.mxu0
      %v845 = vadd.f32 0.0, %v844
      %v846 = vpop.f32.mrf.mxu0
      %v847 = vpop.f32.mrf.mxu0
      %v848 = vadd.f32 0.0, %v847
      %v849 = vpop.f32.mrf.mxu0
      %850 = vmatprep.mubr.bf16.mxu0 %v499
      %851 = vmatmul.mubr.bf16.gmra.mxu0 %v498
      %v852 = vpop.f32.mrf.mxu0
      %v853 = vadd.f32 0.0, %v852
      %v854 = vpop.f32.mrf.mxu0
      %v855 = vpop.f32.mrf.mxu0
      %v856 = vadd.f32 0.0, %v855
      %v857 = vpop.f32.mrf.mxu0
      %858 = vmatprep.mubr.bf16.mxu0 %v501
      %859 = vmatmul.mubr.bf16.gmra.mxu0 %v500
      %v860 = vpop.f32.mrf.mxu0
      %v861 = vadd.f32 0.0, %v860
      %v862 = vpop.f32.mrf.mxu0
      %v863 = vpop.f32.mrf.mxu0
      %v864 = vadd.f32 0.0, %v863
      %v865 = vpop.f32.mrf.mxu0
      %866 = vmatprep.mubr.bf16.mxu0 %v503
      %867 = vmatmul.mubr.bf16.gmra.mxu0 %v502
      %v868 = vpop.f32.mrf.mxu0
      %v869 = vadd.f32 0.0, %v868
      %v870 = vpop.f32.mrf.mxu0
      %v871 = vpop.f32.mrf.mxu0
      %v872 = vadd.f32 0.0, %v871
      %v873 = vpop.f32.mrf.mxu0
      %874 = vmatprep.mubr.bf16.mxu0 %v505
      %875 = vmatmul.mubr.bf16.gmra.mxu0 %v504
      %v876 = vpop.f32.mrf.mxu0
      %v877 = vadd.f32 0.0, %v876
      %v878 = vpop.f32.mrf.mxu0
      %v879 = vpop.f32.mrf.mxu0
      %v880 = vadd.f32 0.0, %v879
      %v881 = vpop.f32.mrf.mxu0
      %882 = vmatprep.mubr.bf16.mxu0 %v507
      %883 = vmatmul.mubr.bf16.gmra.mxu0 %v506
      %v884 = vpop.f32.mrf.mxu0
      %v885 = vadd.f32 0.0, %v884
      %v886 = vpop.f32.mrf.mxu0
      %v887 = vpop.f32.mrf.mxu0
      %v888 = vadd.f32 0.0, %v887
      %v889 = vpop.f32.mrf.mxu0
      %890 = vmatprep.mubr.bf16.mxu0 %v509
      %891 = vmatmul.mubr.bf16.gmra.mxu0 %v508
      %v892 = vpop.f32.mrf.mxu0
      %v893 = vadd.f32 0.0, %v892
      %v894 = vpop.f32.mrf.mxu0
      %v895 = vpop.f32.mrf.mxu0
      %v896 = vadd.f32 0.0, %v895
      %v897 = vpop.f32.mrf.mxu0
      %898 = vmatprep.mubr.bf16.mxu0 %v511
      %899 = vmatmul.mubr.bf16.gmra.mxu0 %v510
      %v900 = vpop.f32.mrf.mxu0
      %v901 = vadd.f32 0.0, %v900
      %v902 = vpop.f32.mrf.mxu0
      %v903 = vpop.f32.mrf.mxu0
      %v904 = vadd.f32 0.0, %v903
      %v905 = vpop.f32.mrf.mxu0
      %906 = vmatprep.mubr.bf16.mxu0 %v513
      %907 = vmatmul.mubr.bf16.gmra.mxu0 %v512
      %v908 = vpop.f32.mrf.mxu0
      %v909 = vadd.f32 0.0, %v908
      %v910 = vpop.f32.mrf.mxu0
      %v911 = vpop.f32.mrf.mxu0
      %v912 = vadd.f32 0.0, %v911
      %v913 = vpop.f32.mrf.mxu0
      %914 = vmatprep.mubr.bf16.mxu0 %v515
      %915 = vmatmul.mubr.bf16.gmra.mxu0 %v514
      %v916 = vpop.f32.mrf.mxu0
      %v917 = vadd.f32 0.0, %v916
      %v918 = vpop.f32.mrf.mxu0
      %v919 = vpop.f32.mrf.mxu0
      %v920 = vadd.f32 0.0, %v919
      %v921 = vpop.f32.mrf.mxu0
      %922 = vmatprep.mubr.bf16.mxu0 %v517
      %923 = vmatmul.mubr.bf16.gmra.mxu0 %v516
      %v924 = vpop.f32.mrf.mxu0
      %v925 = vadd.f32 0.0, %v924
      %v926 = vpop.f32.mrf.mxu0
      %v927 = vpop.f32.mrf.mxu0
      %v928 = vadd.f32 0.0, %v927
      %v929 = vpop.f32.mrf.mxu0
      %930 = vmatprep.mubr.bf16.mxu0 %v519
      %931 = vmatmul.mubr.bf16.gmra.mxu0 %v518
      %v932 = vpop.f32.mrf.mxu0
      %v933 = vadd.f32 0.0, %v932
      %v934 = vpop.f32.mrf.mxu0
      %v935 = vpop.f32.mrf.mxu0
      %v936 = vadd.f32 0.0, %v935
      %v937 = vpop.f32.mrf.mxu0
      %938 = vmatprep.mubr.bf16.mxu0 %v521
      %939 = vmatmul.mubr.bf16.gmra.mxu0 %v520
      %v940 = vpop.f32.mrf.mxu0
      %v941 = vadd.f32 0.0, %v940
      %v942 = vpop.f32.mrf.mxu0
      %v943 = vpop.f32.mrf.mxu0
      %v944 = vadd.f32 0.0, %v943
      %v945 = vpop.f32.mrf.mxu0
      %946 = vmatprep.mubr.bf16.mxu0 %v523
      %947 = vmatmul.mubr.bf16.gmra.mxu0 %v522
      %v948 = vpop.f32.mrf.mxu0
      %v949 = vadd.f32 0.0, %v948
      %v950 = vpop.f32.mrf.mxu0
      %v951 = vpop.f32.mrf.mxu0
      %v952 = vadd.f32 0.0, %v951
      %v953 = vpop.f32.mrf.mxu0
      %954 = vmatprep.mubr.bf16.mxu0 %v525
      %955 = vmatmul.mubr.bf16.gmra.mxu0 %v524
      %v956 = vpop.f32.mrf.mxu0
      %v957 = vadd.f32 0.0, %v956
      %v958 = vpop.f32.mrf.mxu0
      %v959 = vpop.f32.mrf.mxu0
      %v960 = vadd.f32 0.0, %v959
      %v961 = vpop.f32.mrf.mxu0
      %962 = vmatprep.mubr.bf16.mxu0 %v527
      %963 = vmatmul.mubr.bf16.gmra.mxu0 %v526
      %v964 = vpop.f32.mrf.mxu0
      %v965 = vadd.f32 0.0, %v964
      %v966 = vpop.f32.mrf.mxu0
      %v967 = vpop.f32.mrf.mxu0
      %v968 = vadd.f32 0.0, %v967
      %v969 = vpop.f32.mrf.mxu0
      %970 = vmatprep.mubr.bf16.mxu0 %v529
      %971 = vmatmul.mubr.bf16.gmra.mxu0 %v528
      %v972 = vpop.f32.mrf.mxu0
      %v973 = vadd.f32 0.0, %v972
      %v974 = vpop.f32.mrf.mxu0
      %v975 = vpop.f32.mrf.mxu0
      %v976 = vadd.f32 0.0, %v975
      %v977 = vpop.f32.mrf.mxu0
      %978 = vdwg.mxu0
      %s979 = scalar_lea.vmem %s1, 128
      %v980 = vld [vmem:[%s979] sm:$0xf]
      %v981 = vld [vmem:[%s979 + $0x4] sm:$0xf]
      %v982 = vld [vmem:[%s979 + $0x8] sm:$0xf]
      %v983 = vld [vmem:[%s979 + $0xc] sm:$0xf]
      %v984 = vld [vmem:[%s979 + $0x10] sm:$0xf]
      %v985 = vld [vmem:[%s979 + $0x14] sm:$0xf]
      %v986 = vld [vmem:[%s979 + $0x18] sm:$0xf]
      %v987 = vld [vmem:[%s979 + $0x1c] sm:$0xf]
      %v988 = vld [vmem:[%s979 + $0x20] sm:$0xf]
      %v989 = vld [vmem:[%s979 + $0x24] sm:$0xf]
      %v990 = vld [vmem:[%s979 + $0x28] sm:$0xf]
      %v991 = vld [vmem:[%s979 + $0x2c] sm:$0xf]
      %v992 = vld [vmem:[%s979 + $0x30] sm:$0xf]
      %v993 = vld [vmem:[%s979 + $0x34] sm:$0xf]
      %v994 = vld [vmem:[%s979 + $0x38] sm:$0xf]
      %v995 = vld [vmem:[%s979 + $0x3c] sm:$0xf]
      %v996 = vld [vmem:[%s979 + $0x40] sm:$0xf]
      %v997 = vld [vmem:[%s979 + $0x44] sm:$0xf]
      %v998 = vld [vmem:[%s979 + $0x48] sm:$0xf]
      %v999 = vld [vmem:[%s979 + $0x4c] sm:$0xf]
      %v1000 = vld [vmem:[%s979 + $0x50] sm:$0xf]
      %v1001 = vld [vmem:[%s979 + $0x54] sm:$0xf]
      %v1002 = vld [vmem:[%s979 + $0x58] sm:$0xf]
      %v1003 = vld [vmem:[%s979 + $0x5c] sm:$0xf]
      %v1004 = vld [vmem:[%s979 + $0x60] sm:$0xf]
      %v1005 = vld [vmem:[%s979 + $0x64] sm:$0xf]
      %v1006 = vld [vmem:[%s979 + $0x68] sm:$0xf]
      %v1007 = vld [vmem:[%s979 + $0x6c] sm:$0xf]
      %v1008 = vld [vmem:[%s979 + $0x70] sm:$0xf]
      %v1009 = vld [vmem:[%s979 + $0x74] sm:$0xf]
      %v1010 = vld [vmem:[%s979 + $0x78] sm:$0xf]
      %v1011 = vld [vmem:[%s979 + $0x7c] sm:$0xf]
      %v1044 = vunpack.c.l.b16 %v980
      %v1045 = vunpack.c.l.b16 %v981
      %v1046 = vunpack.c.l.b16 %v982
      %v1047 = vunpack.c.l.b16 %v983
      %v1048 = vunpack.c.l.b16 %v984
      %v1049 = vunpack.c.l.b16 %v985
      %v1050 = vunpack.c.l.b16 %v986
      %v1051 = vunpack.c.l.b16 %v987
      %v1052 = vunpack.c.l.b16 %v988
      %v1053 = vunpack.c.l.b16 %v989
      %v1054 = vunpack.c.l.b16 %v990
      %v1055 = vunpack.c.l.b16 %v991
      %v1056 = vunpack.c.l.b16 %v992
      %v1057 = vunpack.c.l.b16 %v993
      %v1058 = vunpack.c.l.b16 %v994
      %v1059 = vunpack.c.l.b16 %v995
      %v1060 = vunpack.c.l.b16 %v996
      %v1061 = vunpack.c.l.b16 %v997
      %v1062 = vunpack.c.l.b16 %v998
      %v1063 = vunpack.c.l.b16 %v999
      %v1064 = vunpack.c.l.b16 %v1000
      %v1065 = vunpack.c.l.b16 %v1001
      %v1066 = vunpack.c.l.b16 %v1002
      %v1067 = vunpack.c.l.b16 %v1003
      %v1068 = vunpack.c.l.b16 %v1004
      %v1069 = vunpack.c.l.b16 %v1005
      %v1070 = vunpack.c.l.b16 %v1006
      %v1071 = vunpack.c.l.b16 %v1007
      %v1072 = vunpack.c.l.b16 %v1008
      %v1073 = vunpack.c.l.b16 %v1009
      %v1074 = vunpack.c.l.b16 %v1010
      %v1075 = vunpack.c.l.b16 %v1011
      %v1076 = vpack.c.b16 %v1045, %v1044
      %v1077 = vpack.c.b16 %v1047, %v1046
      %v1078 = vpack.c.b16 %v1049, %v1048
      %v1079 = vpack.c.b16 %v1051, %v1050
      %v1080 = vpack.c.b16 %v1053, %v1052
      %v1081 = vpack.c.b16 %v1055, %v1054
      %v1082 = vpack.c.b16 %v1057, %v1056
      %v1083 = vpack.c.b16 %v1059, %v1058
      %v1084 = vpack.c.b16 %v1061, %v1060
      %v1085 = vpack.c.b16 %v1063, %v1062
      %v1086 = vpack.c.b16 %v1065, %v1064
      %v1087 = vpack.c.b16 %v1067, %v1066
      %v1088 = vpack.c.b16 %v1069, %v1068
      %v1089 = vpack.c.b16 %v1071, %v1070
      %v1090 = vpack.c.b16 %v1073, %v1072
      %v1091 = vpack.c.b16 %v1075, %v1074
      %1108 = vmatprep.subr.bf16.mxu0 0
      %1109 = vmatpush1.bf16.msra.mxu0 %v1083
      %1110 = vmatprep.subr.bf16.mxu0 0
      %1111 = vmatpush1.bf16.msra.mxu0 %v1082
      %1112 = vmatprep.subr.bf16.mxu0 0
      %1113 = vmatpush1.bf16.msra.mxu0 %v1081
      %1114 = vmatprep.subr.bf16.mxu0 0
      %1115 = vmatpush1.bf16.msra.mxu0 %v1080
      %1116 = vmatprep.subr.bf16.mxu0 0
      %1117 = vmatpush1.bf16.msra.mxu0 %v1079
      %1118 = vmatprep.subr.bf16.mxu0 0
      %1119 = vmatpush1.bf16.msra.mxu0 %v1078
      %1120 = vmatprep.subr.bf16.mxu0 0
      %1121 = vmatpush1.bf16.msra.mxu0 %v1077
      %1122 = vmatprep.subr.bf16.mxu0 0
      %1123 = vmatpush1.bf16.msra.mxu0 %v1076
      %1124 = vmatprep.subr.bf16.mxu0 0
      %1125 = vmatpush2.bf16.msra.mxu0 %v1091
      %1126 = vmatprep.subr.bf16.mxu0 0
      %1127 = vmatpush2.bf16.msra.mxu0 %v1090
      %1128 = vmatprep.subr.bf16.mxu0 0
      %1129 = vmatpush2.bf16.msra.mxu0 %v1089
      %1130 = vmatprep.subr.bf16.mxu0 0
      %1131 = vmatpush2.bf16.msra.mxu0 %v1088
      %1132 = vmatprep.subr.bf16.mxu0 0
      %1133 = vmatpush2.bf16.msra.mxu0 %v1087
      %1134 = vmatprep.subr.bf16.mxu0 0
      %1135 = vmatpush2.bf16.msra.mxu0 %v1086
      %1136 = vmatprep.subr.bf16.mxu0 0
      %1137 = vmatpush2.bf16.msra.mxu0 %v1085
      %1138 = vmatprep.subr.bf16.mxu0 0
      %1139 = vmatpush2.bf16.msra.mxu0 %v1084
      %1140 = vmatprep.mubr.bf16.mxu0 %v467
      %1141 = vmatmul.mubr.bf16.gmra.mxu0 %v466
      %v1142 = vpop.f32.mrf.mxu0
      %v1143 = vadd.f32 0.0, %v1142
      %v1144 = vpop.f32.mrf.mxu0
      %v1145 = vpop.f32.mrf.mxu0
      %v1146 = vadd.f32 0.0, %v1145
      %v1147 = vpop.f32.mrf.mxu0
      %1148 = vmatprep.mubr.bf16.mxu0 %v469
      %1149 = vmatmul.mubr.bf16.gmra.mxu0 %v468
      %v1150 = vpop.f32.mrf.mxu0
      %v1151 = vadd.f32 0.0, %v1150
      %v1152 = vpop.f32.mrf.mxu0
      %v1153 = vpop.f32.mrf.mxu0
      %v1154 = vadd.f32 0.0, %v1153
      %v1155 = vpop.f32.mrf.mxu0
      %1156 = vmatprep.mubr.bf16.mxu0 %v471
      %1157 = vmatmul.mubr.bf16.gmra.mxu0 %v470
      %v1158 = vpop.f32.mrf.mxu0
      %v1159 = vadd.f32 0.0, %v1158
      %v1160 = vpop.f32.mrf.mxu0
      %v1161 = vpop.f32.mrf.mxu0
      %v1162 = vadd.f32 0.0, %v1161
      %v1163 = vpop.f32.mrf.mxu0
      %1164 = vmatprep.mubr.bf16.mxu0 %v473
      %1165 = vmatmul.mubr.bf16.gmra.mxu0 %v472
      %v1166 = vpop.f32.mrf.mxu0
      %v1167 = vadd.f32 0.0, %v1166
      %v1168 = vpop.f32.mrf.mxu0
      %v1169 = vpop.f32.mrf.mxu0
      %v1170 = vadd.f32 0.0, %v1169
      %v1171 = vpop.f32.mrf.mxu0
      %1172 = vmatprep.mubr.bf16.mxu0 %v475
      %1173 = vmatmul.mubr.bf16.gmra.mxu0 %v474
      %v1174 = vpop.f32.mrf.mxu0
      %v1175 = vadd.f32 0.0, %v1174
      %v1176 = vpop.f32.mrf.mxu0
      %v1177 = vpop.f32.mrf.mxu0
      %v1178 = vadd.f32 0.0, %v1177
      %v1179 = vpop.f32.mrf.mxu0
      %1180 = vmatprep.mubr.bf16.mxu0 %v477
      %1181 = vmatmul.mubr.bf16.gmra.mxu0 %v476
      %v1182 = vpop.f32.mrf.mxu0
      %v1183 = vadd.f32 0.0, %v1182
      %v1184 = vpop.f32.mrf.mxu0
      %v1185 = vpop.f32.mrf.mxu0
      %v1186 = vadd.f32 0.0, %v1185
      %v1187 = vpop.f32.mrf.mxu0
      %1188 = vmatprep.mubr.bf16.mxu0 %v479
      %1189 = vmatmul.mubr.bf16.gmra.mxu0 %v478
      %v1190 = vpop.f32.mrf.mxu0
      %v1191 = vadd.f32 0.0, %v1190
      %v1192 = vpop.f32.mrf.mxu0
      %v1193 = vpop.f32.mrf.mxu0
      %v1194 = vadd.f32 0.0, %v1193
      %v1195 = vpop.f32.mrf.mxu0
      %1196 = vmatprep.mubr.bf16.mxu0 %v481
      %1197 = vmatmul.mubr.bf16.gmra.mxu0 %v480
      %v1198 = vpop.f32.mrf.mxu0
      %v1199 = vadd.f32 0.0, %v1198
      %v1200 = vpop.f32.mrf.mxu0
      %v1201 = vpop.f32.mrf.mxu0
      %v1202 = vadd.f32 0.0, %v1201
      %v1203 = vpop.f32.mrf.mxu0
      %1204 = vmatprep.mubr.bf16.mxu0 %v483
      %1205 = vmatmul.mubr.bf16.gmra.mxu0 %v482
      %v1206 = vpop.f32.mrf.mxu0
      %v1207 = vadd.f32 0.0, %v1206
      %v1208 = vpop.f32.mrf.mxu0
      %v1209 = vpop.f32.mrf.mxu0
      %v1210 = vadd.f32 0.0, %v1209
      %v1211 = vpop.f32.mrf.mxu0
      %1212 = vmatprep.mubr.bf16.mxu0 %v485
      %1213 = vmatmul.mubr.bf16.gmra.mxu0 %v484
      %v1214 = vpop.f32.mrf.mxu0
      %v1215 = vadd.f32 0.0, %v1214
      %v1216 = vpop.f32.mrf.mxu0
      %v1217 = vpop.f32.mrf.mxu0
      %v1218 = vadd.f32 0.0, %v1217
      %v1219 = vpop.f32.mrf.mxu0
      %1220 = vmatprep.mubr.bf16.mxu0 %v487
      %1221 = vmatmul.mubr.bf16.gmra.mxu0 %v486
      %v1222 = vpop.f32.mrf.mxu0
      %v1223 = vadd.f32 0.0, %v1222
      %v1224 = vpop.f32.mrf.mxu0
      %v1225 = vpop.f32.mrf.mxu0
      %v1226 = vadd.f32 0.0, %v1225
      %v1227 = vpop.f32.mrf.mxu0
      %1228 = vmatprep.mubr.bf16.mxu0 %v489
      %1229 = vmatmul.mubr.bf16.gmra.mxu0 %v488
      %v1230 = vpop.f32.mrf.mxu0
      %v1231 = vadd.f32 0.0, %v1230
      %v1232 = vpop.f32.mrf.mxu0
      %v1233 = vpop.f32.mrf.mxu0
      %v1234 = vadd.f32 0.0, %v1233
      %v1235 = vpop.f32.mrf.mxu0
      %1236 = vmatprep.mubr.bf16.mxu0 %v491
      %1237 = vmatmul.mubr.bf16.gmra.mxu0 %v490
      %v1238 = vpop.f32.mrf.mxu0
      %v1239 = vadd.f32 0.0, %v1238
      %v1240 = vpop.f32.mrf.mxu0
      %v1241 = vpop.f32.mrf.mxu0
      %v1242 = vadd.f32 0.0, %v1241
      %v1243 = vpop.f32.mrf.mxu0
      %1244 = vmatprep.mubr.bf16.mxu0 %v493
      %1245 = vmatmul.mubr.bf16.gmra.mxu0 %v492
      %v1246 = vpop.f32.mrf.mxu0
      %v1247 = vadd.f32 0.0, %v1246
      %v1248 = vpop.f32.mrf.mxu0
      %v1249 = vpop.f32.mrf.mxu0
      %v1250 = vadd.f32 0.0, %v1249
      %v1251 = vpop.f32.mrf.mxu0
      %1252 = vmatprep.mubr.bf16.mxu0 %v495
      %1253 = vmatmul.mubr.bf16.gmra.mxu0 %v494
      %v1254 = vpop.f32.mrf.mxu0
      %v1255 = vadd.f32 0.0, %v1254
      %v1256 = vpop.f32.mrf.mxu0
      %v1257 = vpop.f32.mrf.mxu0
      %v1258 = vadd.f32 0.0, %v1257
      %v1259 = vpop.f32.mrf.mxu0
      %1260 = vmatprep.mubr.bf16.mxu0 %v497
      %1261 = vmatmul.mubr.bf16.gmra.mxu0 %v496
      %v1262 = vpop.f32.mrf.mxu0
      %v1263 = vadd.f32 0.0, %v1262
      %v1264 = vpop.f32.mrf.mxu0
      %v1265 = vpop.f32.mrf.mxu0
      %v1266 = vadd.f32 0.0, %v1265
      %v1267 = vpop.f32.mrf.mxu0
      %1268 = vmatprep.mubr.bf16.mxu0 %v499
      %1269 = vmatmul.mubr.bf16.gmra.mxu0 %v498
      %v1270 = vpop.f32.mrf.mxu0
      %v1271 = vadd.f32 0.0, %v1270
      %v1272 = vpop.f32.mrf.mxu0
      %v1273 = vpop.f32.mrf.mxu0
      %v1274 = vadd.f32 0.0, %v1273
      %v1275 = vpop.f32.mrf.mxu0
      %1276 = vmatprep.mubr.bf16.mxu0 %v501
      %1277 = vmatmul.mubr.bf16.gmra.mxu0 %v500
      %v1278 = vpop.f32.mrf.mxu0
      %v1279 = vadd.f32 0.0, %v1278
      %v1280 = vpop.f32.mrf.mxu0
      %v1281 = vpop.f32.mrf.mxu0
      %v1282 = vadd.f32 0.0, %v1281
      %v1283 = vpop.f32.mrf.mxu0
      %1284 = vmatprep.mubr.bf16.mxu0 %v503
      %1285 = vmatmul.mubr.bf16.gmra.mxu0 %v502
      %v1286 = vpop.f32.mrf.mxu0
      %v1287 = vadd.f32 0.0, %v1286
      %v1288 = vpop.f32.mrf.mxu0
      %v1289 = vpop.f32.mrf.mxu0
      %v1290 = vadd.f32 0.0, %v1289
      %v1291 = vpop.f32.mrf.mxu0
      %1292 = vmatprep.mubr.bf16.mxu0 %v505
      %1293 = vmatmul.mubr.bf16.gmra.mxu0 %v504
      %v1294 = vpop.f32.mrf.mxu0
      %v1295 = vadd.f32 0.0, %v1294
      %v1296 = vpop.f32.mrf.mxu0
      %v1297 = vpop.f32.mrf.mxu0
      %v1298 = vadd.f32 0.0, %v1297
      %v1299 = vpop.f32.mrf.mxu0
      %1300 = vmatprep.mubr.bf16.mxu0 %v507
      %1301 = vmatmul.mubr.bf16.gmra.mxu0 %v506
      %v1302 = vpop.f32.mrf.mxu0
      %v1303 = vadd.f32 0.0, %v1302
      %v1304 = vpop.f32.mrf.mxu0
      %v1305 = vpop.f32.mrf.mxu0
      %v1306 = vadd.f32 0.0, %v1305
      %v1307 = vpop.f32.mrf.mxu0
      %1308 = vmatprep.mubr.bf16.mxu0 %v509
      %1309 = vmatmul.mubr.bf16.gmra.mxu0 %v508
      %v1310 = vpop.f32.mrf.mxu0
      %v1311 = vadd.f32 0.0, %v1310
      %v1312 = vpop.f32.mrf.mxu0
      %v1313 = vpop.f32.mrf.mxu0
      %v1314 = vadd.f32 0.0, %v1313
      %v1315 = vpop.f32.mrf.mxu0
      %1316 = vmatprep.mubr.bf16.mxu0 %v511
      %1317 = vmatmul.mubr.bf16.gmra.mxu0 %v510
      %v1318 = vpop.f32.mrf.mxu0
      %v1319 = vadd.f32 0.0, %v1318
      %v1320 = vpop.f32.mrf.mxu0
      %v1321 = vpop.f32.mrf.mxu0
      %v1322 = vadd.f32 0.0, %v1321
      %v1323 = vpop.f32.mrf.mxu0
      %1324 = vmatprep.mubr.bf16.mxu0 %v513
      %1325 = vmatmul.mubr.bf16.gmra.mxu0 %v512
      %v1326 = vpop.f32.mrf.mxu0
      %v1327 = vadd.f32 0.0, %v1326
      %v1328 = vpop.f32.mrf.mxu0
      %v1329 = vpop.f32.mrf.mxu0
      %v1330 = vadd.f32 0.0, %v1329
      %v1331 = vpop.f32.mrf.mxu0
      %1332 = vmatprep.mubr.bf16.mxu0 %v515
      %1333 = vmatmul.mubr.bf16.gmra.mxu0 %v514
      %v1334 = vpop.f32.mrf.mxu0
      %v1335 = vadd.f32 0.0, %v1334
      %v1336 = vpop.f32.mrf.mxu0
      %v1337 = vpop.f32.mrf.mxu0
      %v1338 = vadd.f32 0.0, %v1337
      %v1339 = vpop.f32.mrf.mxu0
      %1340 = vmatprep.mubr.bf16.mxu0 %v517
      %1341 = vmatmul.mubr.bf16.gmra.mxu0 %v516
      %v1342 = vpop.f32.mrf.mxu0
      %v1343 = vadd.f32 0.0, %v1342
      %v1344 = vpop.f32.mrf.mxu0
      %v1345 = vpop.f32.mrf.mxu0
      %v1346 = vadd.f32 0.0, %v1345
      %v1347 = vpop.f32.mrf.mxu0
      %1348 = vmatprep.mubr.bf16.mxu0 %v519
      %1349 = vmatmul.mubr.bf16.gmra.mxu0 %v518
      %v1350 = vpop.f32.mrf.mxu0
      %v1351 = vadd.f32 0.0, %v1350
      %v1352 = vpop.f32.mrf.mxu0
      %v1353 = vpop.f32.mrf.mxu0
      %v1354 = vadd.f32 0.0, %v1353
      %v1355 = vpop.f32.mrf.mxu0
      %1356 = vmatprep.mubr.bf16.mxu0 %v521
      %1357 = vmatmul.mubr.bf16.gmra.mxu0 %v520
      %v1358 = vpop.f32.mrf.mxu0
      %v1359 = vadd.f32 0.0, %v1358
      %v1360 = vpop.f32.mrf.mxu0
      %v1361 = vpop.f32.mrf.mxu0
      %v1362 = vadd.f32 0.0, %v1361
      %v1363 = vpop.f32.mrf.mxu0
      %1364 = vmatprep.mubr.bf16.mxu0 %v523
      %1365 = vmatmul.mubr.bf16.gmra.mxu0 %v522
      %v1366 = vpop.f32.mrf.mxu0
      %v1367 = vadd.f32 0.0, %v1366
      %v1368 = vpop.f32.mrf.mxu0
      %v1369 = vpop.f32.mrf.mxu0
      %v1370 = vadd.f32 0.0, %v1369
      %v1371 = vpop.f32.mrf.mxu0
      %1372 = vmatprep.mubr.bf16.mxu0 %v525
      %1373 = vmatmul.mubr.bf16.gmra.mxu0 %v524
      %v1374 = vpop.f32.mrf.mxu0
      %v1375 = vadd.f32 0.0, %v1374
      %v1376 = vpop.f32.mrf.mxu0
      %v1377 = vpop.f32.mrf.mxu0
      %v1378 = vadd.f32 0.0, %v1377
      %v1379 = vpop.f32.mrf.mxu0
      %1380 = vmatprep.mubr.bf16.mxu0 %v527
      %1381 = vmatmul.mubr.bf16.gmra.mxu0 %v526
      %v1382 = vpop.f32.mrf.mxu0
      %v1383 = vadd.f32 0.0, %v1382
      %v1384 = vpop.f32.mrf.mxu0
      %v1385 = vpop.f32.mrf.mxu0
      %v1386 = vadd.f32 0.0, %v1385
      %v1387 = vpop.f32.mrf.mxu0
      %1388 = vmatprep.mubr.bf16.mxu0 %v529
      %1389 = vmatmul.mubr.bf16.gmra.mxu0 %v528
      %v1390 = vpop.f32.mrf.mxu0
      %v1391 = vadd.f32 0.0, %v1390
      %v1392 = vpop.f32.mrf.mxu0
      %v1393 = vpop.f32.mrf.mxu0
      %v1394 = vadd.f32 0.0, %v1393
      %v1395 = vpop.f32.mrf.mxu0
      %1396 = vdwg.mxu0
      %v1397 = vmax.f32 %v725, %v1143
      %v1398 = vmax.f32 %v728, %v1146
      %v1399 = vmax.f32 %v733, %v1151
      %v1400 = vmax.f32 %v736, %v1154
      %v1401 = vmax.f32 %v741, %v1159
      %v1402 = vmax.f32 %v744, %v1162
      %v1403 = vmax.f32 %v749, %v1167
      %v1404 = vmax.f32 %v752, %v1170
      %v1405 = vmax.f32 %v757, %v1175
      %v1406 = vmax.f32 %v760, %v1178
      %v1407 = vmax.f32 %v765, %v1183
      %v1408 = vmax.f32 %v768, %v1186
      %v1409 = vmax.f32 %v773, %v1191
      %v1410 = vmax.f32 %v776, %v1194
      %v1411 = vmax.f32 %v781, %v1199
      %v1412 = vmax.f32 %v784, %v1202
      %v1413 = vmax.f32 %v789, %v1207
      %v1414 = vmax.f32 %v792, %v1210
      %v1415 = vmax.f32 %v797, %v1215
      %v1416 = vmax.f32 %v800, %v1218
      %v1417 = vmax.f32 %v805, %v1223
      %v1418 = vmax.f32 %v808, %v1226
      %v1419 = vmax.f32 %v813, %v1231
      %v1420 = vmax.f32 %v816, %v1234
      %v1421 = vmax.f32 %v821, %v1239
      %v1422 = vmax.f32 %v824, %v1242
      %v1423 = vmax.f32 %v829, %v1247
      %v1424 = vmax.f32 %v832, %v1250
      %v1425 = vmax.f32 %v837, %v1255
      %v1426 = vmax.f32 %v840, %v1258
      %v1427 = vmax.f32 %v845, %v1263
      %v1428 = vmax.f32 %v848, %v1266
      %v1429 = vmax.f32 %v853, %v1271
      %v1430 = vmax.f32 %v856, %v1274
      %v1431 = vmax.f32 %v861, %v1279
      %v1432 = vmax.f32 %v864, %v1282
      %v1433 = vmax.f32 %v869, %v1287
      %v1434 = vmax.f32 %v872, %v1290
      %v1435 = vmax.f32 %v877, %v1295
      %v1436 = vmax.f32 %v880, %v1298
      %v1437 = vmax.f32 %v885, %v1303
      %v1438 = vmax.f32 %v888, %v1306
      %v1439 = vmax.f32 %v893, %v1311
      %v1440 = vmax.f32 %v896, %v1314
      %v1441 = vmax.f32 %v901, %v1319
      %v1442 = vmax.f32 %v904, %v1322
      %v1443 = vmax.f32 %v909, %v1327
      %v1444 = vmax.f32 %v912, %v1330
      %v1445 = vmax.f32 %v917, %v1335
      %v1446 = vmax.f32 %v920, %v1338
      %v1447 = vmax.f32 %v925, %v1343
      %v1448 = vmax.f32 %v928, %v1346
      %v1449 = vmax.f32 %v933, %v1351
      %v1450 = vmax.f32 %v936, %v1354
      %v1451 = vmax.f32 %v941, %v1359
      %v1452 = vmax.f32 %v944, %v1362
      %v1453 = vmax.f32 %v949, %v1367
      %v1454 = vmax.f32 %v952, %v1370
      %v1455 = vmax.f32 %v957, %v1375
      %v1456 = vmax.f32 %v960, %v1378
      %v1457 = vmax.f32 %v965, %v1383
      %v1458 = vmax.f32 %v968, %v1386
      %v1459 = vmax.f32 %v973, %v1391
      %v1460 = vmax.f32 %v976, %v1394
      %s1461 = scalar_lea.vmem %s1, 256
      %v1462 = vld [vmem:[%s1461] sm:$0xf]
      %v1463 = vld [vmem:[%s1461 + $0x4] sm:$0xf]
      %v1464 = vld [vmem:[%s1461 + $0x8] sm:$0xf]
      %v1465 = vld [vmem:[%s1461 + $0xc] sm:$0xf]
      %v1466 = vld [vmem:[%s1461 + $0x10] sm:$0xf]
      %v1467 = vld [vmem:[%s1461 + $0x14] sm:$0xf]
      %v1468 = vld [vmem:[%s1461 + $0x18] sm:$0xf]
      %v1469 = vld [vmem:[%s1461 + $0x1c] sm:$0xf]
      %v1470 = vld [vmem:[%s1461 + $0x20] sm:$0xf]
      %v1471 = vld [vmem:[%s1461 + $0x24] sm:$0xf]
      %v1472 = vld [vmem:[%s1461 + $0x28] sm:$0xf]
      %v1473 = vld [vmem:[%s1461 + $0x2c] sm:$0xf]
      %v1474 = vld [vmem:[%s1461 + $0x30] sm:$0xf]
      %v1475 = vld [vmem:[%s1461 + $0x34] sm:$0xf]
      %v1476 = vld [vmem:[%s1461 + $0x38] sm:$0xf]
      %v1477 = vld [vmem:[%s1461 + $0x3c] sm:$0xf]
      %v1478 = vld [vmem:[%s1461 + $0x40] sm:$0xf]
      %v1479 = vld [vmem:[%s1461 + $0x44] sm:$0xf]
      %v1480 = vld [vmem:[%s1461 + $0x48] sm:$0xf]
      %v1481 = vld [vmem:[%s1461 + $0x4c] sm:$0xf]
      %v1482 = vld [vmem:[%s1461 + $0x50] sm:$0xf]
      %v1483 = vld [vmem:[%s1461 + $0x54] sm:$0xf]
      %v1484 = vld [vmem:[%s1461 + $0x58] sm:$0xf]
      %v1485 = vld [vmem:[%s1461 + $0x5c] sm:$0xf]
      %v1486 = vld [vmem:[%s1461 + $0x60] sm:$0xf]
      %v1487 = vld [vmem:[%s1461 + $0x64] sm:$0xf]
      %v1488 = vld [vmem:[%s1461 + $0x68] sm:$0xf]
      %v1489 = vld [vmem:[%s1461 + $0x6c] sm:$0xf]
      %v1490 = vld [vmem:[%s1461 + $0x70] sm:$0xf]
      %v1491 = vld [vmem:[%s1461 + $0x74] sm:$0xf]
      %v1492 = vld [vmem:[%s1461 + $0x78] sm:$0xf]
      %v1493 = vld [vmem:[%s1461 + $0x7c] sm:$0xf]
      %v1526 = vunpack.c.l.b16 %v1462
      %v1527 = vunpack.c.l.b16 %v1463
      %v1528 = vunpack.c.l.b16 %v1464
      %v1529 = vunpack.c.l.b16 %v1465
      %v1530 = vunpack.c.l.b16 %v1466
      %v1531 = vunpack.c.l.b16 %v1467
      %v1532 = vunpack.c.l.b16 %v1468
      %v1533 = vunpack.c.l.b16 %v1469
      %v1534 = vunpack.c.l.b16 %v1470
      %v1535 = vunpack.c.l.b16 %v1471
      %v1536 = vunpack.c.l.b16 %v1472
      %v1537 = vunpack.c.l.b16 %v1473
      %v1538 = vunpack.c.l.b16 %v1474
      %v1539 = vunpack.c.l.b16 %v1475
      %v1540 = vunpack.c.l.b16 %v1476
      %v1541 = vunpack.c.l.b16 %v1477
      %v1542 = vunpack.c.l.b16 %v1478
      %v1543 = vunpack.c.l.b16 %v1479
      %v1544 = vunpack.c.l.b16 %v1480
      %v1545 = vunpack.c.l.b16 %v1481
      %v1546 = vunpack.c.l.b16 %v1482
      %v1547 = vunpack.c.l.b16 %v1483
      %v1548 = vunpack.c.l.b16 %v1484
      %v1549 = vunpack.c.l.b16 %v1485
      %v1550 = vunpack.c.l.b16 %v1486
      %v1551 = vunpack.c.l.b16 %v1487
      %v1552 = vunpack.c.l.b16 %v1488
      %v1553 = vunpack.c.l.b16 %v1489
      %v1554 = vunpack.c.l.b16 %v1490
      %v1555 = vunpack.c.l.b16 %v1491
      %v1556 = vunpack.c.l.b16 %v1492
      %v1557 = vunpack.c.l.b16 %v1493
      %v1558 = vpack.c.b16 %v1527, %v1526
      %v1559 = vpack.c.b16 %v1529, %v1528
      %v1560 = vpack.c.b16 %v1531, %v1530
      %v1561 = vpack.c.b16 %v1533, %v1532
      %v1562 = vpack.c.b16 %v1535, %v1534
      %v1563 = vpack.c.b16 %v1537, %v1536
      %v1564 = vpack.c.b16 %v1539, %v1538
      %v1565 = vpack.c.b16 %v1541, %v1540
      %v1566 = vpack.c.b16 %v1543, %v1542
      %v1567 = vpack.c.b16 %v1545, %v1544
      %v1568 = vpack.c.b16 %v1547, %v1546
      %v1569 = vpack.c.b16 %v1549, %v1548
      %v1570 = vpack.c.b16 %v1551, %v1550
      %v1571 = vpack.c.b16 %v1553, %v1552
      %v1572 = vpack.c.b16 %v1555, %v1554
      %v1573 = vpack.c.b16 %v1557, %v1556
      %1590 = vmatprep.subr.bf16.mxu0 0
      %1591 = vmatpush1.bf16.msra.mxu0 %v1565
      %1592 = vmatprep.subr.bf16.mxu0 0
      %1593 = vmatpush1.bf16.msra.mxu0 %v1564
      %1594 = vmatprep.subr.bf16.mxu0 0
      %1595 = vmatpush1.bf16.msra.mxu0 %v1563
      %1596 = vmatprep.subr.bf16.mxu0 0
      %1597 = vmatpush1.bf16.msra.mxu0 %v1562
      %1598 = vmatprep.subr.bf16.mxu0 0
      %1599 = vmatpush1.bf16.msra.mxu0 %v1561
      %1600 = vmatprep.subr.bf16.mxu0 0
      %1601 = vmatpush1.bf16.msra.mxu0 %v1560
      %1602 = vmatprep.subr.bf16.mxu0 0
      %1603 = vmatpush1.bf16.msra.mxu0 %v1559
      %1604 = vmatprep.subr.bf16.mxu0 0
      %1605 = vmatpush1.bf16.msra.mxu0 %v1558
      %1606 = vmatprep.subr.bf16.mxu0 0
      %1607 = vmatpush2.bf16.msra.mxu0 %v1573
      %1608 = vmatprep.subr.bf16.mxu0 0
      %1609 = vmatpush2.bf16.msra.mxu0 %v1572
      %1610 = vmatprep.subr.bf16.mxu0 0
      %1611 = vmatpush2.bf16.msra.mxu0 %v1571
      %1612 = vmatprep.subr.bf16.mxu0 0
      %1613 = vmatpush2.bf16.msra.mxu0 %v1570
      %1614 = vmatprep.subr.bf16.mxu0 0
      %1615 = vmatpush2.bf16.msra.mxu0 %v1569
      %1616 = vmatprep.subr.bf16.mxu0 0
      %1617 = vmatpush2.bf16.msra.mxu0 %v1568
      %1618 = vmatprep.subr.bf16.mxu0 0
      %1619 = vmatpush2.bf16.msra.mxu0 %v1567
      %1620 = vmatprep.subr.bf16.mxu0 0
      %1621 = vmatpush2.bf16.msra.mxu0 %v1566
      %1622 = vmatprep.mubr.bf16.mxu0 %v467
      %1623 = vmatmul.mubr.bf16.gmra.mxu0 %v466
      %v1624 = vpop.f32.mrf.mxu0
      %v1625 = vadd.f32 0.0, %v1624
      %v1626 = vpop.f32.mrf.mxu0
      %v1627 = vpop.f32.mrf.mxu0
      %v1628 = vadd.f32 0.0, %v1627
      %v1629 = vpop.f32.mrf.mxu0
      %1630 = vmatprep.mubr.bf16.mxu0 %v469
      %1631 = vmatmul.mubr.bf16.gmra.mxu0 %v468
      %v1632 = vpop.f32.mrf.mxu0
      %v1633 = vadd.f32 0.0, %v1632
      %v1634 = vpop.f32.mrf.mxu0
      %v1635 = vpop.f32.mrf.mxu0
      %v1636 = vadd.f32 0.0, %v1635
      %v1637 = vpop.f32.mrf.mxu0
      %1638 = vmatprep.mubr.bf16.mxu0 %v471
      %1639 = vmatmul.mubr.bf16.gmra.mxu0 %v470
      %v1640 = vpop.f32.mrf.mxu0
      %v1641 = vadd.f32 0.0, %v1640
      %v1642 = vpop.f32.mrf.mxu0
      %v1643 = vpop.f32.mrf.mxu0
      %v1644 = vadd.f32 0.0, %v1643
      %v1645 = vpop.f32.mrf.mxu0
      %1646 = vmatprep.mubr.bf16.mxu0 %v473
      %1647 = vmatmul.mubr.bf16.gmra.mxu0 %v472
      %v1648 = vpop.f32.mrf.mxu0
      %v1649 = vadd.f32 0.0, %v1648
      %v1650 = vpop.f32.mrf.mxu0
      %v1651 = vpop.f32.mrf.mxu0
      %v1652 = vadd.f32 0.0, %v1651
      %v1653 = vpop.f32.mrf.mxu0
      %1654 = vmatprep.mubr.bf16.mxu0 %v475
      %1655 = vmatmul.mubr.bf16.gmra.mxu0 %v474
      %v1656 = vpop.f32.mrf.mxu0
      %v1657 = vadd.f32 0.0, %v1656
      %v1658 = vpop.f32.mrf.mxu0
      %v1659 = vpop.f32.mrf.mxu0
      %v1660 = vadd.f32 0.0, %v1659
      %v1661 = vpop.f32.mrf.mxu0
      %1662 = vmatprep.mubr.bf16.mxu0 %v477
      %1663 = vmatmul.mubr.bf16.gmra.mxu0 %v476
      %v1664 = vpop.f32.mrf.mxu0
      %v1665 = vadd.f32 0.0, %v1664
      %v1666 = vpop.f32.mrf.mxu0
      %v1667 = vpop.f32.mrf.mxu0
      %v1668 = vadd.f32 0.0, %v1667
      %v1669 = vpop.f32.mrf.mxu0
      %1670 = vmatprep.mubr.bf16.mxu0 %v479
      %1671 = vmatmul.mubr.bf16.gmra.mxu0 %v478
      %v1672 = vpop.f32.mrf.mxu0
      %v1673 = vadd.f32 0.0, %v1672
      %v1674 = vpop.f32.mrf.mxu0
      %v1675 = vpop.f32.mrf.mxu0
      %v1676 = vadd.f32 0.0, %v1675
      %v1677 = vpop.f32.mrf.mxu0
      %1678 = vmatprep.mubr.bf16.mxu0 %v481
      %1679 = vmatmul.mubr.bf16.gmra.mxu0 %v480
      %v1680 = vpop.f32.mrf.mxu0
      %v1681 = vadd.f32 0.0, %v1680
      %v1682 = vpop.f32.mrf.mxu0
      %v1683 = vpop.f32.mrf.mxu0
      %v1684 = vadd.f32 0.0, %v1683
      %v1685 = vpop.f32.mrf.mxu0
      %1686 = vmatprep.mubr.bf16.mxu0 %v483
      %1687 = vmatmul.mubr.bf16.gmra.mxu0 %v482
      %v1688 = vpop.f32.mrf.mxu0
      %v1689 = vadd.f32 0.0, %v1688
      %v1690 = vpop.f32.mrf.mxu0
      %v1691 = vpop.f32.mrf.mxu0
      %v1692 = vadd.f32 0.0, %v1691
      %v1693 = vpop.f32.mrf.mxu0
      %1694 = vmatprep.mubr.bf16.mxu0 %v485
      %1695 = vmatmul.mubr.bf16.gmra.mxu0 %v484
      %v1696 = vpop.f32.mrf.mxu0
      %v1697 = vadd.f32 0.0, %v1696
      %v1698 = vpop.f32.mrf.mxu0
      %v1699 = vpop.f32.mrf.mxu0
      %v1700 = vadd.f32 0.0, %v1699
      %v1701 = vpop.f32.mrf.mxu0
      %1702 = vmatprep.mubr.bf16.mxu0 %v487
      %1703 = vmatmul.mubr.bf16.gmra.mxu0 %v486
      %v1704 = vpop.f32.mrf.mxu0
      %v1705 = vadd.f32 0.0, %v1704
      %v1706 = vpop.f32.mrf.mxu0
      %v1707 = vpop.f32.mrf.mxu0
      %v1708 = vadd.f32 0.0, %v1707
      %v1709 = vpop.f32.mrf.mxu0
      %1710 = vmatprep.mubr.bf16.mxu0 %v489
      %1711 = vmatmul.mubr.bf16.gmra.mxu0 %v488
      %v1712 = vpop.f32.mrf.mxu0
      %v1713 = vadd.f32 0.0, %v1712
      %v1714 = vpop.f32.mrf.mxu0
      %v1715 = vpop.f32.mrf.mxu0
      %v1716 = vadd.f32 0.0, %v1715
      %v1717 = vpop.f32.mrf.mxu0
      %1718 = vmatprep.mubr.bf16.mxu0 %v491
      %1719 = vmatmul.mubr.bf16.gmra.mxu0 %v490
      %v1720 = vpop.f32.mrf.mxu0
      %v1721 = vadd.f32 0.0, %v1720
      %v1722 = vpop.f32.mrf.mxu0
      %v1723 = vpop.f32.mrf.mxu0
      %v1724 = vadd.f32 0.0, %v1723
      %v1725 = vpop.f32.mrf.mxu0
      %1726 = vmatprep.mubr.bf16.mxu0 %v493
      %1727 = vmatmul.mubr.bf16.gmra.mxu0 %v492
      %v1728 = vpop.f32.mrf.mxu0
      %v1729 = vadd.f32 0.0, %v1728
      %v1730 = vpop.f32.mrf.mxu0
      %v1731 = vpop.f32.mrf.mxu0
      %v1732 = vadd.f32 0.0, %v1731
      %v1733 = vpop.f32.mrf.mxu0
      %1734 = vmatprep.mubr.bf16.mxu0 %v495
      %1735 = vmatmul.mubr.bf16.gmra.mxu0 %v494
      %v1736 = vpop.f32.mrf.mxu0
      %v1737 = vadd.f32 0.0, %v1736
      %v1738 = vpop.f32.mrf.mxu0
      %v1739 = vpop.f32.mrf.mxu0
      %v1740 = vadd.f32 0.0, %v1739
      %v1741 = vpop.f32.mrf.mxu0
      %1742 = vmatprep.mubr.bf16.mxu0 %v497
      %1743 = vmatmul.mubr.bf16.gmra.mxu0 %v496
      %v1744 = vpop.f32.mrf.mxu0
      %v1745 = vadd.f32 0.0, %v1744
      %v1746 = vpop.f32.mrf.mxu0
      %v1747 = vpop.f32.mrf.mxu0
      %v1748 = vadd.f32 0.0, %v1747
      %v1749 = vpop.f32.mrf.mxu0
      %1750 = vmatprep.mubr.bf16.mxu0 %v499
      %1751 = vmatmul.mubr.bf16.gmra.mxu0 %v498
      %v1752 = vpop.f32.mrf.mxu0
      %v1753 = vadd.f32 0.0, %v1752
      %v1754 = vpop.f32.mrf.mxu0
      %v1755 = vpop.f32.mrf.mxu0
      %v1756 = vadd.f32 0.0, %v1755
      %v1757 = vpop.f32.mrf.mxu0
      %1758 = vmatprep.mubr.bf16.mxu0 %v501
      %1759 = vmatmul.mubr.bf16.gmra.mxu0 %v500
      %v1760 = vpop.f32.mrf.mxu0
      %v1761 = vadd.f32 0.0, %v1760
      %v1762 = vpop.f32.mrf.mxu0
      %v1763 = vpop.f32.mrf.mxu0
      %v1764 = vadd.f32 0.0, %v1763
      %v1765 = vpop.f32.mrf.mxu0
      %1766 = vmatprep.mubr.bf16.mxu0 %v503
      %1767 = vmatmul.mubr.bf16.gmra.mxu0 %v502
      %v1768 = vpop.f32.mrf.mxu0
      %v1769 = vadd.f32 0.0, %v1768
      %v1770 = vpop.f32.mrf.mxu0
      %v1771 = vpop.f32.mrf.mxu0
      %v1772 = vadd.f32 0.0, %v1771
      %v1773 = vpop.f32.mrf.mxu0
      %1774 = vmatprep.mubr.bf16.mxu0 %v505
      %1775 = vmatmul.mubr.bf16.gmra.mxu0 %v504
      %v1776 = vpop.f32.mrf.mxu0
      %v1777 = vadd.f32 0.0, %v1776
      %v1778 = vpop.f32.mrf.mxu0
      %v1779 = vpop.f32.mrf.mxu0
      %v1780 = vadd.f32 0.0, %v1779
      %v1781 = vpop.f32.mrf.mxu0
      %1782 = vmatprep.mubr.bf16.mxu0 %v507
      %1783 = vmatmul.mubr.bf16.gmra.mxu0 %v506
      %v1784 = vpop.f32.mrf.mxu0
      %v1785 = vadd.f32 0.0, %v1784
      %v1786 = vpop.f32.mrf.mxu0
      %v1787 = vpop.f32.mrf.mxu0
      %v1788 = vadd.f32 0.0, %v1787
      %v1789 = vpop.f32.mrf.mxu0
      %1790 = vmatprep.mubr.bf16.mxu0 %v509
      %1791 = vmatmul.mubr.bf16.gmra.mxu0 %v508
      %v1792 = vpop.f32.mrf.mxu0
      %v1793 = vadd.f32 0.0, %v1792
      %v1794 = vpop.f32.mrf.mxu0
      %v1795 = vpop.f32.mrf.mxu0
      %v1796 = vadd.f32 0.0, %v1795
      %v1797 = vpop.f32.mrf.mxu0
      %1798 = vmatprep.mubr.bf16.mxu0 %v511
      %1799 = vmatmul.mubr.bf16.gmra.mxu0 %v510
      %v1800 = vpop.f32.mrf.mxu0
      %v1801 = vadd.f32 0.0, %v1800
      %v1802 = vpop.f32.mrf.mxu0
      %v1803 = vpop.f32.mrf.mxu0
      %v1804 = vadd.f32 0.0, %v1803
      %v1805 = vpop.f32.mrf.mxu0
      %1806 = vmatprep.mubr.bf16.mxu0 %v513
      %1807 = vmatmul.mubr.bf16.gmra.mxu0 %v512
      %v1808 = vpop.f32.mrf.mxu0
      %v1809 = vadd.f32 0.0, %v1808
      %v1810 = vpop.f32.mrf.mxu0
      %v1811 = vpop.f32.mrf.mxu0
      %v1812 = vadd.f32 0.0, %v1811
      %v1813 = vpop.f32.mrf.mxu0
      %1814 = vmatprep.mubr.bf16.mxu0 %v515
      %1815 = vmatmul.mubr.bf16.gmra.mxu0 %v514
      %v1816 = vpop.f32.mrf.mxu0
      %v1817 = vadd.f32 0.0, %v1816
      %v1818 = vpop.f32.mrf.mxu0
      %v1819 = vpop.f32.mrf.mxu0
      %v1820 = vadd.f32 0.0, %v1819
      %v1821 = vpop.f32.mrf.mxu0
      %1822 = vmatprep.mubr.bf16.mxu0 %v517
      %1823 = vmatmul.mubr.bf16.gmra.mxu0 %v516
      %v1824 = vpop.f32.mrf.mxu0
      %v1825 = vadd.f32 0.0, %v1824
      %v1826 = vpop.f32.mrf.mxu0
      %v1827 = vpop.f32.mrf.mxu0
      %v1828 = vadd.f32 0.0, %v1827
      %v1829 = vpop.f32.mrf.mxu0
      %1830 = vmatprep.mubr.bf16.mxu0 %v519
      %1831 = vmatmul.mubr.bf16.gmra.mxu0 %v518
      %v1832 = vpop.f32.mrf.mxu0
      %v1833 = vadd.f32 0.0, %v1832
      %v1834 = vpop.f32.mrf.mxu0
      %v1835 = vpop.f32.mrf.mxu0
      %v1836 = vadd.f32 0.0, %v1835
      %v1837 = vpop.f32.mrf.mxu0
      %1838 = vmatprep.mubr.bf16.mxu0 %v521
      %1839 = vmatmul.mubr.bf16.gmra.mxu0 %v520
      %v1840 = vpop.f32.mrf.mxu0
      %v1841 = vadd.f32 0.0, %v1840
      %v1842 = vpop.f32.mrf.mxu0
      %v1843 = vpop.f32.mrf.mxu0
      %v1844 = vadd.f32 0.0, %v1843
      %v1845 = vpop.f32.mrf.mxu0
      %1846 = vmatprep.mubr.bf16.mxu0 %v523
      %1847 = vmatmul.mubr.bf16.gmra.mxu0 %v522
      %v1848 = vpop.f32.mrf.mxu0
      %v1849 = vadd.f32 0.0, %v1848
      %v1850 = vpop.f32.mrf.mxu0
      %v1851 = vpop.f32.mrf.mxu0
      %v1852 = vadd.f32 0.0, %v1851
      %v1853 = vpop.f32.mrf.mxu0
      %1854 = vmatprep.mubr.bf16.mxu0 %v525
      %1855 = vmatmul.mubr.bf16.gmra.mxu0 %v524
      %v1856 = vpop.f32.mrf.mxu0
      %v1857 = vadd.f32 0.0, %v1856
      %v1858 = vpop.f32.mrf.mxu0
      %v1859 = vpop.f32.mrf.mxu0
      %v1860 = vadd.f32 0.0, %v1859
      %v1861 = vpop.f32.mrf.mxu0
      %1862 = vmatprep.mubr.bf16.mxu0 %v527
      %1863 = vmatmul.mubr.bf16.gmra.mxu0 %v526
      %v1864 = vpop.f32.mrf.mxu0
      %v1865 = vadd.f32 0.0, %v1864
      %v1866 = vpop.f32.mrf.mxu0
      %v1867 = vpop.f32.mrf.mxu0
      %v1868 = vadd.f32 0.0, %v1867
      %v1869 = vpop.f32.mrf.mxu0
      %1870 = vmatprep.mubr.bf16.mxu0 %v529
      %1871 = vmatmul.mubr.bf16.gmra.mxu0 %v528
      %v1872 = vpop.f32.mrf.mxu0
      %v1873 = vadd.f32 0.0, %v1872
      %v1874 = vpop.f32.mrf.mxu0
      %v1875 = vpop.f32.mrf.mxu0
      %v1876 = vadd.f32 0.0, %v1875
      %v1877 = vpop.f32.mrf.mxu0
      %1878 = vdwg.mxu0
      %v1879 = vmax.f32 %v1397, %v1625
      %v1880 = vmax.f32 %v1398, %v1628
      %v1881 = vmax.f32 %v1399, %v1633
      %v1882 = vmax.f32 %v1400, %v1636
      %v1883 = vmax.f32 %v1401, %v1641
      %v1884 = vmax.f32 %v1402, %v1644
      %v1885 = vmax.f32 %v1403, %v1649
      %v1886 = vmax.f32 %v1404, %v1652
      %v1887 = vmax.f32 %v1405, %v1657
      %v1888 = vmax.f32 %v1406, %v1660
      %v1889 = vmax.f32 %v1407, %v1665
      %v1890 = vmax.f32 %v1408, %v1668
      %v1891 = vmax.f32 %v1409, %v1673
      %v1892 = vmax.f32 %v1410, %v1676
      %v1893 = vmax.f32 %v1411, %v1681
      %v1894 = vmax.f32 %v1412, %v1684
      %v1895 = vmax.f32 %v1413, %v1689
      %v1896 = vmax.f32 %v1414, %v1692
      %v1897 = vmax.f32 %v1415, %v1697
      %v1898 = vmax.f32 %v1416, %v1700
      %v1899 = vmax.f32 %v1417, %v1705
      %v1900 = vmax.f32 %v1418, %v1708
      %v1901 = vmax.f32 %v1419, %v1713
      %v1902 = vmax.f32 %v1420, %v1716
      %v1903 = vmax.f32 %v1421, %v1721
      %v1904 = vmax.f32 %v1422, %v1724
      %v1905 = vmax.f32 %v1423, %v1729
      %v1906 = vmax.f32 %v1424, %v1732
      %v1907 = vmax.f32 %v1425, %v1737
      %v1908 = vmax.f32 %v1426, %v1740
      %v1909 = vmax.f32 %v1427, %v1745
      %v1910 = vmax.f32 %v1428, %v1748
      %v1911 = vmax.f32 %v1429, %v1753
      %v1912 = vmax.f32 %v1430, %v1756
      %v1913 = vmax.f32 %v1431, %v1761
      %v1914 = vmax.f32 %v1432, %v1764
      %v1915 = vmax.f32 %v1433, %v1769
      %v1916 = vmax.f32 %v1434, %v1772
      %v1917 = vmax.f32 %v1435, %v1777
      %v1918 = vmax.f32 %v1436, %v1780
      %v1919 = vmax.f32 %v1437, %v1785
      %v1920 = vmax.f32 %v1438, %v1788
      %v1921 = vmax.f32 %v1439, %v1793
      %v1922 = vmax.f32 %v1440, %v1796
      %v1923 = vmax.f32 %v1441, %v1801
      %v1924 = vmax.f32 %v1442, %v1804
      %v1925 = vmax.f32 %v1443, %v1809
      %v1926 = vmax.f32 %v1444, %v1812
      %v1927 = vmax.f32 %v1445, %v1817
      %v1928 = vmax.f32 %v1446, %v1820
      %v1929 = vmax.f32 %v1447, %v1825
      %v1930 = vmax.f32 %v1448, %v1828
      %v1931 = vmax.f32 %v1449, %v1833
      %v1932 = vmax.f32 %v1450, %v1836
      %v1933 = vmax.f32 %v1451, %v1841
      %v1934 = vmax.f32 %v1452, %v1844
      %v1935 = vmax.f32 %v1453, %v1849
      %v1936 = vmax.f32 %v1454, %v1852
      %v1937 = vmax.f32 %v1455, %v1857
      %v1938 = vmax.f32 %v1456, %v1860
      %v1939 = vmax.f32 %v1457, %v1865
      %v1940 = vmax.f32 %v1458, %v1868
      %v1941 = vmax.f32 %v1459, %v1873
      %v1942 = vmax.f32 %v1460, %v1876
      %s1943 = scalar_lea.vmem %s1, 384
      %v1944 = vld [vmem:[%s1943] sm:$0xf]
      %v1945 = vld [vmem:[%s1943 + $0x4] sm:$0xf]
      %v1946 = vld [vmem:[%s1943 + $0x8] sm:$0xf]
      %v1947 = vld [vmem:[%s1943 + $0xc] sm:$0xf]
      %v1948 = vld [vmem:[%s1943 + $0x10] sm:$0xf]
      %v1949 = vld [vmem:[%s1943 + $0x14] sm:$0xf]
      %v1950 = vld [vmem:[%s1943 + $0x18] sm:$0xf]
      %v1951 = vld [vmem:[%s1943 + $0x1c] sm:$0xf]
      %v1952 = vld [vmem:[%s1943 + $0x20] sm:$0xf]
      %v1953 = vld [vmem:[%s1943 + $0x24] sm:$0xf]
      %v1954 = vld [vmem:[%s1943 + $0x28] sm:$0xf]
      %v1955 = vld [vmem:[%s1943 + $0x2c] sm:$0xf]
      %v1956 = vld [vmem:[%s1943 + $0x30] sm:$0xf]
      %v1957 = vld [vmem:[%s1943 + $0x34] sm:$0xf]
      %v1958 = vld [vmem:[%s1943 + $0x38] sm:$0xf]
      %v1959 = vld [vmem:[%s1943 + $0x3c] sm:$0xf]
      %v1960 = vld [vmem:[%s1943 + $0x40] sm:$0xf]
      %v1961 = vld [vmem:[%s1943 + $0x44] sm:$0xf]
      %v1962 = vld [vmem:[%s1943 + $0x48] sm:$0xf]
      %v1963 = vld [vmem:[%s1943 + $0x4c] sm:$0xf]
      %v1964 = vld [vmem:[%s1943 + $0x50] sm:$0xf]
      %v1965 = vld [vmem:[%s1943 + $0x54] sm:$0xf]
      %v1966 = vld [vmem:[%s1943 + $0x58] sm:$0xf]
      %v1967 = vld [vmem:[%s1943 + $0x5c] sm:$0xf]
      %v1968 = vld [vmem:[%s1943 + $0x60] sm:$0xf]
      %v1969 = vld [vmem:[%s1943 + $0x64] sm:$0xf]
      %v1970 = vld [vmem:[%s1943 + $0x68] sm:$0xf]
      %v1971 = vld [vmem:[%s1943 + $0x6c] sm:$0xf]
      %v1972 = vld [vmem:[%s1943 + $0x70] sm:$0xf]
      %v1973 = vld [vmem:[%s1943 + $0x74] sm:$0xf]
      %v1974 = vld [vmem:[%s1943 + $0x78] sm:$0xf]
      %v1975 = vld [vmem:[%s1943 + $0x7c] sm:$0xf]
      %v2008 = vunpack.c.l.b16 %v1944
      %v2009 = vunpack.c.l.b16 %v1945
      %v2010 = vunpack.c.l.b16 %v1946
      %v2011 = vunpack.c.l.b16 %v1947
      %v2012 = vunpack.c.l.b16 %v1948
      %v2013 = vunpack.c.l.b16 %v1949
      %v2014 = vunpack.c.l.b16 %v1950
      %v2015 = vunpack.c.l.b16 %v1951
      %v2016 = vunpack.c.l.b16 %v1952
      %v2017 = vunpack.c.l.b16 %v1953
      %v2018 = vunpack.c.l.b16 %v1954
      %v2019 = vunpack.c.l.b16 %v1955
      %v2020 = vunpack.c.l.b16 %v1956
      %v2021 = vunpack.c.l.b16 %v1957
      %v2022 = vunpack.c.l.b16 %v1958
      %v2023 = vunpack.c.l.b16 %v1959
      %v2024 = vunpack.c.l.b16 %v1960
      %v2025 = vunpack.c.l.b16 %v1961
      %v2026 = vunpack.c.l.b16 %v1962
      %v2027 = vunpack.c.l.b16 %v1963
      %v2028 = vunpack.c.l.b16 %v1964
      %v2029 = vunpack.c.l.b16 %v1965
      %v2030 = vunpack.c.l.b16 %v1966
      %v2031 = vunpack.c.l.b16 %v1967
      %v2032 = vunpack.c.l.b16 %v1968
      %v2033 = vunpack.c.l.b16 %v1969
      %v2034 = vunpack.c.l.b16 %v1970
      %v2035 = vunpack.c.l.b16 %v1971
      %v2036 = vunpack.c.l.b16 %v1972
      %v2037 = vunpack.c.l.b16 %v1973
      %v2038 = vunpack.c.l.b16 %v1974
      %v2039 = vunpack.c.l.b16 %v1975
      %v2040 = vpack.c.b16 %v2009, %v2008
      %v2041 = vpack.c.b16 %v2011, %v2010
      %v2042 = vpack.c.b16 %v2013, %v2012
      %v2043 = vpack.c.b16 %v2015, %v2014
      %v2044 = vpack.c.b16 %v2017, %v2016
      %v2045 = vpack.c.b16 %v2019, %v2018
      %v2046 = vpack.c.b16 %v2021, %v2020
      %v2047 = vpack.c.b16 %v2023, %v2022
      %v2048 = vpack.c.b16 %v2025, %v2024
      %v2049 = vpack.c.b16 %v2027, %v2026
      %v2050 = vpack.c.b16 %v2029, %v2028
      %v2051 = vpack.c.b16 %v2031, %v2030
      %v2052 = vpack.c.b16 %v2033, %v2032
      %v2053 = vpack.c.b16 %v2035, %v2034
      %v2054 = vpack.c.b16 %v2037, %v2036
      %v2055 = vpack.c.b16 %v2039, %v2038
      %2072 = vmatprep.subr.bf16.mxu0 0
      %2073 = vmatpush1.bf16.msra.mxu0 %v2047
      %2074 = vmatprep.subr.bf16.mxu0 0
      %2075 = vmatpush1.bf16.msra.mxu0 %v2046
      %2076 = vmatprep.subr.bf16.mxu0 0
      %2077 = vmatpush1.bf16.msra.mxu0 %v2045
      %2078 = vmatprep.subr.bf16.mxu0 0
      %2079 = vmatpush1.bf16.msra.mxu0 %v2044
      %2080 = vmatprep.subr.bf16.mxu0 0
      %2081 = vmatpush1.bf16.msra.mxu0 %v2043
      %2082 = vmatprep.subr.bf16.mxu0 0
      %2083 = vmatpush1.bf16.msra.mxu0 %v2042
      %2084 = vmatprep.subr.bf16.mxu0 0
      %2085 = vmatpush1.bf16.msra.mxu0 %v2041
      %2086 = vmatprep.subr.bf16.mxu0 0
      %2087 = vmatpush1.bf16.msra.mxu0 %v2040
      %2088 = vmatprep.subr.bf16.mxu0 0
      %2089 = vmatpush2.bf16.msra.mxu0 %v2055
      %2090 = vmatprep.subr.bf16.mxu0 0
      %2091 = vmatpush2.bf16.msra.mxu0 %v2054
      %2092 = vmatprep.subr.bf16.mxu0 0
      %2093 = vmatpush2.bf16.msra.mxu0 %v2053
      %2094 = vmatprep.subr.bf16.mxu0 0
      %2095 = vmatpush2.bf16.msra.mxu0 %v2052
      %2096 = vmatprep.subr.bf16.mxu0 0
      %2097 = vmatpush2.bf16.msra.mxu0 %v2051
      %2098 = vmatprep.subr.bf16.mxu0 0
      %2099 = vmatpush2.bf16.msra.mxu0 %v2050
      %2100 = vmatprep.subr.bf16.mxu0 0
      %2101 = vmatpush2.bf16.msra.mxu0 %v2049
      %2102 = vmatprep.subr.bf16.mxu0 0
      %2103 = vmatpush2.bf16.msra.mxu0 %v2048
      %2104 = vmatprep.mubr.bf16.mxu0 %v467
      %2105 = vmatmul.mubr.bf16.gmra.mxu0 %v466
      %v2106 = vpop.f32.mrf.mxu0
      %v2107 = vadd.f32 0.0, %v2106
      %v2108 = vpop.f32.mrf.mxu0
      %v2109 = vpop.f32.mrf.mxu0
      %v2110 = vadd.f32 0.0, %v2109
      %v2111 = vpop.f32.mrf.mxu0
      %2112 = vmatprep.mubr.bf16.mxu0 %v469
      %2113 = vmatmul.mubr.bf16.gmra.mxu0 %v468
      %v2114 = vpop.f32.mrf.mxu0
      %v2115 = vadd.f32 0.0, %v2114
      %v2116 = vpop.f32.mrf.mxu0
      %v2117 = vpop.f32.mrf.mxu0
      %v2118 = vadd.f32 0.0, %v2117
      %v2119 = vpop.f32.mrf.mxu0
      %2120 = vmatprep.mubr.bf16.mxu0 %v471
      %2121 = vmatmul.mubr.bf16.gmra.mxu0 %v470
      %v2122 = vpop.f32.mrf.mxu0
      %v2123 = vadd.f32 0.0, %v2122
      %v2124 = vpop.f32.mrf.mxu0
      %v2125 = vpop.f32.mrf.mxu0
      %v2126 = vadd.f32 0.0, %v2125
      %v2127 = vpop.f32.mrf.mxu0
      %2128 = vmatprep.mubr.bf16.mxu0 %v473
      %2129 = vmatmul.mubr.bf16.gmra.mxu0 %v472
      %v2130 = vpop.f32.mrf.mxu0
      %v2131 = vadd.f32 0.0, %v2130
      %v2132 = vpop.f32.mrf.mxu0
      %v2133 = vpop.f32.mrf.mxu0
      %v2134 = vadd.f32 0.0, %v2133
      %v2135 = vpop.f32.mrf.mxu0
      %2136 = vmatprep.mubr.bf16.mxu0 %v475
      %2137 = vmatmul.mubr.bf16.gmra.mxu0 %v474
      %v2138 = vpop.f32.mrf.mxu0
      %v2139 = vadd.f32 0.0, %v2138
      %v2140 = vpop.f32.mrf.mxu0
      %v2141 = vpop.f32.mrf.mxu0
      %v2142 = vadd.f32 0.0, %v2141
      %v2143 = vpop.f32.mrf.mxu0
      %2144 = vmatprep.mubr.bf16.mxu0 %v477
      %2145 = vmatmul.mubr.bf16.gmra.mxu0 %v476
      %v2146 = vpop.f32.mrf.mxu0
      %v2147 = vadd.f32 0.0, %v2146
      %v2148 = vpop.f32.mrf.mxu0
      %v2149 = vpop.f32.mrf.mxu0
      %v2150 = vadd.f32 0.0, %v2149
      %v2151 = vpop.f32.mrf.mxu0
      %2152 = vmatprep.mubr.bf16.mxu0 %v479
      %2153 = vmatmul.mubr.bf16.gmra.mxu0 %v478
      %v2154 = vpop.f32.mrf.mxu0
      %v2155 = vadd.f32 0.0, %v2154
      %v2156 = vpop.f32.mrf.mxu0
      %v2157 = vpop.f32.mrf.mxu0
      %v2158 = vadd.f32 0.0, %v2157
      %v2159 = vpop.f32.mrf.mxu0
      %2160 = vmatprep.mubr.bf16.mxu0 %v481
      %2161 = vmatmul.mubr.bf16.gmra.mxu0 %v480
      %v2162 = vpop.f32.mrf.mxu0
      %v2163 = vadd.f32 0.0, %v2162
      %v2164 = vpop.f32.mrf.mxu0
      %v2165 = vpop.f32.mrf.mxu0
      %v2166 = vadd.f32 0.0, %v2165
      %v2167 = vpop.f32.mrf.mxu0
      %2168 = vmatprep.mubr.bf16.mxu0 %v483
      %2169 = vmatmul.mubr.bf16.gmra.mxu0 %v482
      %v2170 = vpop.f32.mrf.mxu0
      %v2171 = vadd.f32 0.0, %v2170
      %v2172 = vpop.f32.mrf.mxu0
      %v2173 = vpop.f32.mrf.mxu0
      %v2174 = vadd.f32 0.0, %v2173
      %v2175 = vpop.f32.mrf.mxu0
      %2176 = vmatprep.mubr.bf16.mxu0 %v485
      %2177 = vmatmul.mubr.bf16.gmra.mxu0 %v484
      %v2178 = vpop.f32.mrf.mxu0
      %v2179 = vadd.f32 0.0, %v2178
      %v2180 = vpop.f32.mrf.mxu0
      %v2181 = vpop.f32.mrf.mxu0
      %v2182 = vadd.f32 0.0, %v2181
      %v2183 = vpop.f32.mrf.mxu0
      %2184 = vmatprep.mubr.bf16.mxu0 %v487
      %2185 = vmatmul.mubr.bf16.gmra.mxu0 %v486
      %v2186 = vpop.f32.mrf.mxu0
      %v2187 = vadd.f32 0.0, %v2186
      %v2188 = vpop.f32.mrf.mxu0
      %v2189 = vpop.f32.mrf.mxu0
      %v2190 = vadd.f32 0.0, %v2189
      %v2191 = vpop.f32.mrf.mxu0
      %2192 = vmatprep.mubr.bf16.mxu0 %v489
      %2193 = vmatmul.mubr.bf16.gmra.mxu0 %v488
      %v2194 = vpop.f32.mrf.mxu0
      %v2195 = vadd.f32 0.0, %v2194
      %v2196 = vpop.f32.mrf.mxu0
      %v2197 = vpop.f32.mrf.mxu0
      %v2198 = vadd.f32 0.0, %v2197
      %v2199 = vpop.f32.mrf.mxu0
      %2200 = vmatprep.mubr.bf16.mxu0 %v491
      %2201 = vmatmul.mubr.bf16.gmra.mxu0 %v490
      %v2202 = vpop.f32.mrf.mxu0
      %v2203 = vadd.f32 0.0, %v2202
      %v2204 = vpop.f32.mrf.mxu0
      %v2205 = vpop.f32.mrf.mxu0
      %v2206 = vadd.f32 0.0, %v2205
      %v2207 = vpop.f32.mrf.mxu0
      %2208 = vmatprep.mubr.bf16.mxu0 %v493
      %2209 = vmatmul.mubr.bf16.gmra.mxu0 %v492
      %v2210 = vpop.f32.mrf.mxu0
      %v2211 = vadd.f32 0.0, %v2210
      %v2212 = vpop.f32.mrf.mxu0
      %v2213 = vpop.f32.mrf.mxu0
      %v2214 = vadd.f32 0.0, %v2213
      %v2215 = vpop.f32.mrf.mxu0
      %2216 = vmatprep.mubr.bf16.mxu0 %v495
      %2217 = vmatmul.mubr.bf16.gmra.mxu0 %v494
      %v2218 = vpop.f32.mrf.mxu0
      %v2219 = vadd.f32 0.0, %v2218
      %v2220 = vpop.f32.mrf.mxu0
      %v2221 = vpop.f32.mrf.mxu0
      %v2222 = vadd.f32 0.0, %v2221
      %v2223 = vpop.f32.mrf.mxu0
      %2224 = vmatprep.mubr.bf16.mxu0 %v497
      %2225 = vmatmul.mubr.bf16.gmra.mxu0 %v496
      %v2226 = vpop.f32.mrf.mxu0
      %v2227 = vadd.f32 0.0, %v2226
      %v2228 = vpop.f32.mrf.mxu0
      %v2229 = vpop.f32.mrf.mxu0
      %v2230 = vadd.f32 0.0, %v2229
      %v2231 = vpop.f32.mrf.mxu0
      %2232 = vmatprep.mubr.bf16.mxu0 %v499
      %2233 = vmatmul.mubr.bf16.gmra.mxu0 %v498
      %v2234 = vpop.f32.mrf.mxu0
      %v2235 = vadd.f32 0.0, %v2234
      %v2236 = vpop.f32.mrf.mxu0
      %v2237 = vpop.f32.mrf.mxu0
      %v2238 = vadd.f32 0.0, %v2237
      %v2239 = vpop.f32.mrf.mxu0
      %2240 = vmatprep.mubr.bf16.mxu0 %v501
      %2241 = vmatmul.mubr.bf16.gmra.mxu0 %v500
      %v2242 = vpop.f32.mrf.mxu0
      %v2243 = vadd.f32 0.0, %v2242
      %v2244 = vpop.f32.mrf.mxu0
      %v2245 = vpop.f32.mrf.mxu0
      %v2246 = vadd.f32 0.0, %v2245
      %v2247 = vpop.f32.mrf.mxu0
      %2248 = vmatprep.mubr.bf16.mxu0 %v503
      %2249 = vmatmul.mubr.bf16.gmra.mxu0 %v502
      %v2250 = vpop.f32.mrf.mxu0
      %v2251 = vadd.f32 0.0, %v2250
      %v2252 = vpop.f32.mrf.mxu0
      %v2253 = vpop.f32.mrf.mxu0
      %v2254 = vadd.f32 0.0, %v2253
      %v2255 = vpop.f32.mrf.mxu0
      %2256 = vmatprep.mubr.bf16.mxu0 %v505
      %2257 = vmatmul.mubr.bf16.gmra.mxu0 %v504
      %v2258 = vpop.f32.mrf.mxu0
      %v2259 = vadd.f32 0.0, %v2258
      %v2260 = vpop.f32.mrf.mxu0
      %v2261 = vpop.f32.mrf.mxu0
      %v2262 = vadd.f32 0.0, %v2261
      %v2263 = vpop.f32.mrf.mxu0
      %2264 = vmatprep.mubr.bf16.mxu0 %v507
      %2265 = vmatmul.mubr.bf16.gmra.mxu0 %v506
      %v2266 = vpop.f32.mrf.mxu0
      %v2267 = vadd.f32 0.0, %v2266
      %v2268 = vpop.f32.mrf.mxu0
      %v2269 = vpop.f32.mrf.mxu0
      %v2270 = vadd.f32 0.0, %v2269
      %v2271 = vpop.f32.mrf.mxu0
      %2272 = vmatprep.mubr.bf16.mxu0 %v509
      %2273 = vmatmul.mubr.bf16.gmra.mxu0 %v508
      %v2274 = vpop.f32.mrf.mxu0
      %v2275 = vadd.f32 0.0, %v2274
      %v2276 = vpop.f32.mrf.mxu0
      %v2277 = vpop.f32.mrf.mxu0
      %v2278 = vadd.f32 0.0, %v2277
      %v2279 = vpop.f32.mrf.mxu0
      %2280 = vmatprep.mubr.bf16.mxu0 %v511
      %2281 = vmatmul.mubr.bf16.gmra.mxu0 %v510
      %v2282 = vpop.f32.mrf.mxu0
      %v2283 = vadd.f32 0.0, %v2282
      %v2284 = vpop.f32.mrf.mxu0
      %v2285 = vpop.f32.mrf.mxu0
      %v2286 = vadd.f32 0.0, %v2285
      %v2287 = vpop.f32.mrf.mxu0
      %2288 = vmatprep.mubr.bf16.mxu0 %v513
      %2289 = vmatmul.mubr.bf16.gmra.mxu0 %v512
      %v2290 = vpop.f32.mrf.mxu0
      %v2291 = vadd.f32 0.0, %v2290
      %v2292 = vpop.f32.mrf.mxu0
      %v2293 = vpop.f32.mrf.mxu0
      %v2294 = vadd.f32 0.0, %v2293
      %v2295 = vpop.f32.mrf.mxu0
      %2296 = vmatprep.mubr.bf16.mxu0 %v515
      %2297 = vmatmul.mubr.bf16.gmra.mxu0 %v514
      %v2298 = vpop.f32.mrf.mxu0
      %v2299 = vadd.f32 0.0, %v2298
      %v2300 = vpop.f32.mrf.mxu0
      %v2301 = vpop.f32.mrf.mxu0
      %v2302 = vadd.f32 0.0, %v2301
      %v2303 = vpop.f32.mrf.mxu0
      %2304 = vmatprep.mubr.bf16.mxu0 %v517
      %2305 = vmatmul.mubr.bf16.gmra.mxu0 %v516
      %v2306 = vpop.f32.mrf.mxu0
      %v2307 = vadd.f32 0.0, %v2306
      %v2308 = vpop.f32.mrf.mxu0
      %v2309 = vpop.f32.mrf.mxu0
      %v2310 = vadd.f32 0.0, %v2309
      %v2311 = vpop.f32.mrf.mxu0
      %2312 = vmatprep.mubr.bf16.mxu0 %v519
      %2313 = vmatmul.mubr.bf16.gmra.mxu0 %v518
      %v2314 = vpop.f32.mrf.mxu0
      %v2315 = vadd.f32 0.0, %v2314
      %v2316 = vpop.f32.mrf.mxu0
      %v2317 = vpop.f32.mrf.mxu0
      %v2318 = vadd.f32 0.0, %v2317
      %v2319 = vpop.f32.mrf.mxu0
      %2320 = vmatprep.mubr.bf16.mxu0 %v521
      %2321 = vmatmul.mubr.bf16.gmra.mxu0 %v520
      %v2322 = vpop.f32.mrf.mxu0
      %v2323 = vadd.f32 0.0, %v2322
      %v2324 = vpop.f32.mrf.mxu0
      %v2325 = vpop.f32.mrf.mxu0
      %v2326 = vadd.f32 0.0, %v2325
      %v2327 = vpop.f32.mrf.mxu0
      %2328 = vmatprep.mubr.bf16.mxu0 %v523
      %2329 = vmatmul.mubr.bf16.gmra.mxu0 %v522
      %v2330 = vpop.f32.mrf.mxu0
      %v2331 = vadd.f32 0.0, %v2330
      %v2332 = vpop.f32.mrf.mxu0
      %v2333 = vpop.f32.mrf.mxu0
      %v2334 = vadd.f32 0.0, %v2333
      %v2335 = vpop.f32.mrf.mxu0
      %2336 = vmatprep.mubr.bf16.mxu0 %v525
      %2337 = vmatmul.mubr.bf16.gmra.mxu0 %v524
      %v2338 = vpop.f32.mrf.mxu0
      %v2339 = vadd.f32 0.0, %v2338
      %v2340 = vpop.f32.mrf.mxu0
      %v2341 = vpop.f32.mrf.mxu0
      %v2342 = vadd.f32 0.0, %v2341
      %v2343 = vpop.f32.mrf.mxu0
      %2344 = vmatprep.mubr.bf16.mxu0 %v527
      %2345 = vmatmul.mubr.bf16.gmra.mxu0 %v526
      %v2346 = vpop.f32.mrf.mxu0
      %v2347 = vadd.f32 0.0, %v2346
      %v2348 = vpop.f32.mrf.mxu0
      %v2349 = vpop.f32.mrf.mxu0
      %v2350 = vadd.f32 0.0, %v2349
      %v2351 = vpop.f32.mrf.mxu0
      %2352 = vmatprep.mubr.bf16.mxu0 %v529
      %2353 = vmatmul.mubr.bf16.gmra.mxu0 %v528
      %v2354 = vpop.f32.mrf.mxu0
      %v2355 = vadd.f32 0.0, %v2354
      %v2356 = vpop.f32.mrf.mxu0
      %v2357 = vpop.f32.mrf.mxu0
      %v2358 = vadd.f32 0.0, %v2357
      %v2359 = vpop.f32.mrf.mxu0
      %2360 = vdwg.mxu0
      %v2361 = vmax.f32 %v1879, %v2107
      %v2362 = vmax.f32 %v1880, %v2110
      %v2363 = vmax.f32 %v1881, %v2115
      %v2364 = vmax.f32 %v1882, %v2118
      %v2365 = vmax.f32 %v1883, %v2123
      %v2366 = vmax.f32 %v1884, %v2126
      %v2367 = vmax.f32 %v1885, %v2131
      %v2368 = vmax.f32 %v1886, %v2134
      %v2369 = vmax.f32 %v1887, %v2139
      %v2370 = vmax.f32 %v1888, %v2142
      %v2371 = vmax.f32 %v1889, %v2147
      %v2372 = vmax.f32 %v1890, %v2150
      %v2373 = vmax.f32 %v1891, %v2155
      %v2374 = vmax.f32 %v1892, %v2158
      %v2375 = vmax.f32 %v1893, %v2163
      %v2376 = vmax.f32 %v1894, %v2166
      %v2377 = vmax.f32 %v1895, %v2171
      %v2378 = vmax.f32 %v1896, %v2174
      %v2379 = vmax.f32 %v1897, %v2179
      %v2380 = vmax.f32 %v1898, %v2182
      %v2381 = vmax.f32 %v1899, %v2187
      %v2382 = vmax.f32 %v1900, %v2190
      %v2383 = vmax.f32 %v1901, %v2195
      %v2384 = vmax.f32 %v1902, %v2198
      %v2385 = vmax.f32 %v1903, %v2203
      %v2386 = vmax.f32 %v1904, %v2206
      %v2387 = vmax.f32 %v1905, %v2211
      %v2388 = vmax.f32 %v1906, %v2214
      %v2389 = vmax.f32 %v1907, %v2219
      %v2390 = vmax.f32 %v1908, %v2222
      %v2391 = vmax.f32 %v1909, %v2227
      %v2392 = vmax.f32 %v1910, %v2230
      %v2393 = vmax.f32 %v1911, %v2235
      %v2394 = vmax.f32 %v1912, %v2238
      %v2395 = vmax.f32 %v1913, %v2243
      %v2396 = vmax.f32 %v1914, %v2246
      %v2397 = vmax.f32 %v1915, %v2251
      %v2398 = vmax.f32 %v1916, %v2254
      %v2399 = vmax.f32 %v1917, %v2259
      %v2400 = vmax.f32 %v1918, %v2262
      %v2401 = vmax.f32 %v1919, %v2267
      %v2402 = vmax.f32 %v1920, %v2270
      %v2403 = vmax.f32 %v1921, %v2275
      %v2404 = vmax.f32 %v1922, %v2278
      %v2405 = vmax.f32 %v1923, %v2283
      %v2406 = vmax.f32 %v1924, %v2286
      %v2407 = vmax.f32 %v1925, %v2291
      %v2408 = vmax.f32 %v1926, %v2294
      %v2409 = vmax.f32 %v1927, %v2299
      %v2410 = vmax.f32 %v1928, %v2302
      %v2411 = vmax.f32 %v1929, %v2307
      %v2412 = vmax.f32 %v1930, %v2310
      %v2413 = vmax.f32 %v1931, %v2315
      %v2414 = vmax.f32 %v1932, %v2318
      %v2415 = vmax.f32 %v1933, %v2323
      %v2416 = vmax.f32 %v1934, %v2326
      %v2417 = vmax.f32 %v1935, %v2331
      %v2418 = vmax.f32 %v1936, %v2334
      %v2419 = vmax.f32 %v1937, %v2339
      %v2420 = vmax.f32 %v1938, %v2342
      %v2421 = vmax.f32 %v1939, %v2347
      %v2422 = vmax.f32 %v1940, %v2350
      %v2423 = vmax.f32 %v1941, %v2355
      %v2424 = vmax.f32 %v1942, %v2358
      %v2425 = vld [vmem:[%s2] sm:$0x1]
      %v2427 = vlaneseq
      %v2428 = vshrl.u32 %v2427, 7
      %v2429 = vsub.s32 0, %v2428
      %v2430 = vrot.slane %v2425, %v2429
      %v2432 = vadd.f32 %v2361, %v2430
      %v2433 = vadd.f32 %v2362, %v2430
      %v2434 = vadd.f32 %v2363, %v2430
      %v2435 = vadd.f32 %v2364, %v2430
      %v2436 = vadd.f32 %v2365, %v2430
      %v2437 = vadd.f32 %v2366, %v2430
      %v2438 = vadd.f32 %v2367, %v2430
      %v2439 = vadd.f32 %v2368, %v2430
      %v2440 = vadd.f32 %v2369, %v2430
      %v2441 = vadd.f32 %v2370, %v2430
      %v2442 = vadd.f32 %v2371, %v2430
      %v2443 = vadd.f32 %v2372, %v2430
      %v2444 = vadd.f32 %v2373, %v2430
      %v2445 = vadd.f32 %v2374, %v2430
      %v2446 = vadd.f32 %v2375, %v2430
      %v2447 = vadd.f32 %v2376, %v2430
      %v2448 = vadd.f32 %v2377, %v2430
      %v2449 = vadd.f32 %v2378, %v2430
      %v2450 = vadd.f32 %v2379, %v2430
      %v2451 = vadd.f32 %v2380, %v2430
      %v2452 = vadd.f32 %v2381, %v2430
      %v2453 = vadd.f32 %v2382, %v2430
      %v2454 = vadd.f32 %v2383, %v2430
      %v2455 = vadd.f32 %v2384, %v2430
      %v2456 = vadd.f32 %v2385, %v2430
      %v2457 = vadd.f32 %v2386, %v2430
      %v2458 = vadd.f32 %v2387, %v2430
      %v2459 = vadd.f32 %v2388, %v2430
      %v2460 = vadd.f32 %v2389, %v2430
      %v2461 = vadd.f32 %v2390, %v2430
      %v2462 = vadd.f32 %v2391, %v2430
      %v2463 = vadd.f32 %v2392, %v2430
      %v2464 = vadd.f32 %v2393, %v2430
      %v2465 = vadd.f32 %v2394, %v2430
      %v2466 = vadd.f32 %v2395, %v2430
      %v2467 = vadd.f32 %v2396, %v2430
      %v2468 = vadd.f32 %v2397, %v2430
      %v2469 = vadd.f32 %v2398, %v2430
      %v2470 = vadd.f32 %v2399, %v2430
      %v2471 = vadd.f32 %v2400, %v2430
      %v2472 = vadd.f32 %v2401, %v2430
      %v2473 = vadd.f32 %v2402, %v2430
      %v2474 = vadd.f32 %v2403, %v2430
      %v2475 = vadd.f32 %v2404, %v2430
      %v2476 = vadd.f32 %v2405, %v2430
      %v2477 = vadd.f32 %v2406, %v2430
      %v2478 = vadd.f32 %v2407, %v2430
      %v2479 = vadd.f32 %v2408, %v2430
      %v2480 = vadd.f32 %v2409, %v2430
      %v2481 = vadd.f32 %v2410, %v2430
      %v2482 = vadd.f32 %v2411, %v2430
      %v2483 = vadd.f32 %v2412, %v2430
      %v2484 = vadd.f32 %v2413, %v2430
      %v2485 = vadd.f32 %v2414, %v2430
      %v2486 = vadd.f32 %v2415, %v2430
      %v2487 = vadd.f32 %v2416, %v2430
      %v2488 = vadd.f32 %v2417, %v2430
      %v2489 = vadd.f32 %v2418, %v2430
      %v2490 = vadd.f32 %v2419, %v2430
      %v2491 = vadd.f32 %v2420, %v2430
      %v2492 = vadd.f32 %v2421, %v2430
      %v2493 = vadd.f32 %v2422, %v2430
      %v2494 = vadd.f32 %v2423, %v2430
      %v2495 = vadd.f32 %v2424, %v2430
      %v2496 = vmax.f32 %v2432, 0.0
      %v2497 = vmax.f32 %v2433, 0.0
      %v2498 = vmax.f32 %v2434, 0.0
      %v2499 = vmax.f32 %v2435, 0.0
      %v2500 = vmax.f32 %v2436, 0.0
      %v2501 = vmax.f32 %v2437, 0.0
      %v2502 = vmax.f32 %v2438, 0.0
      %v2503 = vmax.f32 %v2439, 0.0
      %v2504 = vmax.f32 %v2440, 0.0
      %v2505 = vmax.f32 %v2441, 0.0
      %v2506 = vmax.f32 %v2442, 0.0
      %v2507 = vmax.f32 %v2443, 0.0
      %v2508 = vmax.f32 %v2444, 0.0
      %v2509 = vmax.f32 %v2445, 0.0
      %v2510 = vmax.f32 %v2446, 0.0
      %v2511 = vmax.f32 %v2447, 0.0
      %v2512 = vmax.f32 %v2448, 0.0
      %v2513 = vmax.f32 %v2449, 0.0
      %v2514 = vmax.f32 %v2450, 0.0
      %v2515 = vmax.f32 %v2451, 0.0
      %v2516 = vmax.f32 %v2452, 0.0
      %v2517 = vmax.f32 %v2453, 0.0
      %v2518 = vmax.f32 %v2454, 0.0
      %v2519 = vmax.f32 %v2455, 0.0
      %v2520 = vmax.f32 %v2456, 0.0
      %v2521 = vmax.f32 %v2457, 0.0
      %v2522 = vmax.f32 %v2458, 0.0
      %v2523 = vmax.f32 %v2459, 0.0
      %v2524 = vmax.f32 %v2460, 0.0
      %v2525 = vmax.f32 %v2461, 0.0
      %v2526 = vmax.f32 %v2462, 0.0
      %v2527 = vmax.f32 %v2463, 0.0
      %v2528 = vmax.f32 %v2464, 0.0
      %v2529 = vmax.f32 %v2465, 0.0
      %v2530 = vmax.f32 %v2466, 0.0
      %v2531 = vmax.f32 %v2467, 0.0
      %v2532 = vmax.f32 %v2468, 0.0
      %v2533 = vmax.f32 %v2469, 0.0
      %v2534 = vmax.f32 %v2470, 0.0
      %v2535 = vmax.f32 %v2471, 0.0
      %v2536 = vmax.f32 %v2472, 0.0
      %v2537 = vmax.f32 %v2473, 0.0
      %v2538 = vmax.f32 %v2474, 0.0
      %v2539 = vmax.f32 %v2475, 0.0
      %v2540 = vmax.f32 %v2476, 0.0
      %v2541 = vmax.f32 %v2477, 0.0
      %v2542 = vmax.f32 %v2478, 0.0
      %v2543 = vmax.f32 %v2479, 0.0
      %v2544 = vmax.f32 %v2480, 0.0
      %v2545 = vmax.f32 %v2481, 0.0
      %v2546 = vmax.f32 %v2482, 0.0
      %v2547 = vmax.f32 %v2483, 0.0
      %v2548 = vmax.f32 %v2484, 0.0
      %v2549 = vmax.f32 %v2485, 0.0
      %v2550 = vmax.f32 %v2486, 0.0
      %v2551 = vmax.f32 %v2487, 0.0
      %v2552 = vmax.f32 %v2488, 0.0
      %v2553 = vmax.f32 %v2489, 0.0
      %v2554 = vmax.f32 %v2490, 0.0
      %v2555 = vmax.f32 %v2491, 0.0
      %v2556 = vmax.f32 %v2492, 0.0
      %v2557 = vmax.f32 %v2493, 0.0
      %v2558 = vmax.f32 %v2494, 0.0
      %v2559 = vmax.f32 %v2495, 0.0
      %v2560 = vpack.c.bf16 %v2497, %v2496
      %v2561 = vpack.c.bf16 %v2499, %v2498
      %v2562 = vpack.c.bf16 %v2501, %v2500
      %v2563 = vpack.c.bf16 %v2503, %v2502
      %v2564 = vpack.c.bf16 %v2505, %v2504
      %v2565 = vpack.c.bf16 %v2507, %v2506
      %v2566 = vpack.c.bf16 %v2509, %v2508
      %v2567 = vpack.c.bf16 %v2511, %v2510
      %v2568 = vpack.c.bf16 %v2513, %v2512
      %v2569 = vpack.c.bf16 %v2515, %v2514
      %v2570 = vpack.c.bf16 %v2517, %v2516
      %v2571 = vpack.c.bf16 %v2519, %v2518
      %v2572 = vpack.c.bf16 %v2521, %v2520
      %v2573 = vpack.c.bf16 %v2523, %v2522
      %v2574 = vpack.c.bf16 %v2525, %v2524
      %v2575 = vpack.c.bf16 %v2527, %v2526
      %v2576 = vpack.c.bf16 %v2529, %v2528
      %v2577 = vpack.c.bf16 %v2531, %v2530
      %v2578 = vpack.c.bf16 %v2533, %v2532
      %v2579 = vpack.c.bf16 %v2535, %v2534
      %v2580 = vpack.c.bf16 %v2537, %v2536
      %v2581 = vpack.c.bf16 %v2539, %v2538
      %v2582 = vpack.c.bf16 %v2541, %v2540
      %v2583 = vpack.c.bf16 %v2543, %v2542
      %v2584 = vpack.c.bf16 %v2545, %v2544
      %v2585 = vpack.c.bf16 %v2547, %v2546
      %v2586 = vpack.c.bf16 %v2549, %v2548
      %v2587 = vpack.c.bf16 %v2551, %v2550
      %v2588 = vpack.c.bf16 %v2553, %v2552
      %v2589 = vpack.c.bf16 %v2555, %v2554
      %v2590 = vpack.c.bf16 %v2557, %v2556
      %v2591 = vpack.c.bf16 %v2559, %v2558
      %v2624 = vunpack.c.l.b16 %v2560
      %v2625 = vunpack.c.h.b16 %v2560
      %v2626 = vunpack.c.l.b16 %v2561
      %v2627 = vunpack.c.h.b16 %v2561
      %v2628 = vunpack.c.l.b16 %v2562
      %v2629 = vunpack.c.h.b16 %v2562
      %v2630 = vunpack.c.l.b16 %v2563
      %v2631 = vunpack.c.h.b16 %v2563
      %v2632 = vunpack.c.l.b16 %v2564
      %v2633 = vunpack.c.h.b16 %v2564
      %v2634 = vunpack.c.l.b16 %v2565
      %v2635 = vunpack.c.h.b16 %v2565
      %v2636 = vunpack.c.l.b16 %v2566
      %v2637 = vunpack.c.h.b16 %v2566
      %v2638 = vunpack.c.l.b16 %v2567
      %v2639 = vunpack.c.h.b16 %v2567
      %v2640 = vunpack.c.l.b16 %v2568
      %v2641 = vunpack.c.h.b16 %v2568
      %v2642 = vunpack.c.l.b16 %v2569
      %v2643 = vunpack.c.h.b16 %v2569
      %v2644 = vunpack.c.l.b16 %v2570
      %v2645 = vunpack.c.h.b16 %v2570
      %v2646 = vunpack.c.l.b16 %v2571
      %v2647 = vunpack.c.h.b16 %v2571
      %v2648 = vunpack.c.l.b16 %v2572
      %v2649 = vunpack.c.h.b16 %v2572
      %v2650 = vunpack.c.l.b16 %v2573
      %v2651 = vunpack.c.h.b16 %v2573
      %v2652 = vunpack.c.l.b16 %v2574
      %v2653 = vunpack.c.h.b16 %v2574
      %v2654 = vunpack.c.l.b16 %v2575
      %v2655 = vunpack.c.h.b16 %v2575
      %v2656 = vunpack.c.l.b16 %v2576
      %v2657 = vunpack.c.h.b16 %v2576
      %v2658 = vunpack.c.l.b16 %v2577
      %v2659 = vunpack.c.h.b16 %v2577
      %v2660 = vunpack.c.l.b16 %v2578
      %v2661 = vunpack.c.h.b16 %v2578
      %v2662 = vunpack.c.l.b16 %v2579
      %v2663 = vunpack.c.h.b16 %v2579
      %v2664 = vunpack.c.l.b16 %v2580
      %v2665 = vunpack.c.h.b16 %v2580
      %v2666 = vunpack.c.l.b16 %v2581
      %v2667 = vunpack.c.h.b16 %v2581
      %v2668 = vunpack.c.l.b16 %v2582
      %v2669 = vunpack.c.h.b16 %v2582
      %v2670 = vunpack.c.l.b16 %v2583
      %v2671 = vunpack.c.h.b16 %v2583
      %v2672 = vunpack.c.l.b16 %v2584
      %v2673 = vunpack.c.h.b16 %v2584
      %v2674 = vunpack.c.l.b16 %v2585
      %v2675 = vunpack.c.h.b16 %v2585
      %v2676 = vunpack.c.l.b16 %v2586
      %v2677 = vunpack.c.h.b16 %v2586
      %v2678 = vunpack.c.l.b16 %v2587
      %v2679 = vunpack.c.h.b16 %v2587
      %v2680 = vunpack.c.l.b16 %v2588
      %v2681 = vunpack.c.h.b16 %v2588
      %v2682 = vunpack.c.l.b16 %v2589
      %v2683 = vunpack.c.h.b16 %v2589
      %v2684 = vunpack.c.l.b16 %v2590
      %v2685 = vunpack.c.h.b16 %v2590
      %v2686 = vunpack.c.l.b16 %v2591
      %v2687 = vunpack.c.h.b16 %v2591
      %v2688 = vpack.c.b16 %v2624, %v2624
      %v2689 = vpack.c.b16 %v2625, %v2625
      %v2690 = vpack.c.b16 %v2626, %v2626
      %v2691 = vpack.c.b16 %v2627, %v2627
      %v2692 = vpack.c.b16 %v2628, %v2628
      %v2693 = vpack.c.b16 %v2629, %v2629
      %v2694 = vpack.c.b16 %v2630, %v2630
      %v2695 = vpack.c.b16 %v2631, %v2631
      %v2696 = vpack.c.b16 %v2632, %v2632
      %v2697 = vpack.c.b16 %v2633, %v2633
      %v2698 = vpack.c.b16 %v2634, %v2634
      %v2699 = vpack.c.b16 %v2635, %v2635
      %v2700 = vpack.c.b16 %v2636, %v2636
      %v2701 = vpack.c.b16 %v2637, %v2637
      %v2702 = vpack.c.b16 %v2638, %v2638
      %v2703 = vpack.c.b16 %v2639, %v2639
      %v2704 = vpack.c.b16 %v2640, %v2640
      %v2705 = vpack.c.b16 %v2641, %v2641
      %v2706 = vpack.c.b16 %v2642, %v2642
      %v2707 = vpack.c.b16 %v2643, %v2643
      %v2708 = vpack.c.b16 %v2644, %v2644
      %v2709 = vpack.c.b16 %v2645, %v2645
      %v2710 = vpack.c.b16 %v2646, %v2646
      %v2711 = vpack.c.b16 %v2647, %v2647
      %v2712 = vpack.c.b16 %v2648, %v2648
      %v2713 = vpack.c.b16 %v2649, %v2649
      %v2714 = vpack.c.b16 %v2650, %v2650
      %v2715 = vpack.c.b16 %v2651, %v2651
      %v2716 = vpack.c.b16 %v2652, %v2652
      %v2717 = vpack.c.b16 %v2653, %v2653
      %v2718 = vpack.c.b16 %v2654, %v2654
      %v2719 = vpack.c.b16 %v2655, %v2655
      %v2720 = vpack.c.b16 %v2656, %v2656
      %v2721 = vpack.c.b16 %v2657, %v2657
      %v2722 = vpack.c.b16 %v2658, %v2658
      %v2723 = vpack.c.b16 %v2659, %v2659
      %v2724 = vpack.c.b16 %v2660, %v2660
      %v2725 = vpack.c.b16 %v2661, %v2661
      %v2726 = vpack.c.b16 %v2662, %v2662
      %v2727 = vpack.c.b16 %v2663, %v2663
      %v2728 = vpack.c.b16 %v2664, %v2664
      %v2729 = vpack.c.b16 %v2665, %v2665
      %v2730 = vpack.c.b16 %v2666, %v2666
      %v2731 = vpack.c.b16 %v2667, %v2667
      %v2732 = vpack.c.b16 %v2668, %v2668
      %v2733 = vpack.c.b16 %v2669, %v2669
      %v2734 = vpack.c.b16 %v2670, %v2670
      %v2735 = vpack.c.b16 %v2671, %v2671
      %v2736 = vpack.c.b16 %v2672, %v2672
      %v2737 = vpack.c.b16 %v2673, %v2673
      %v2738 = vpack.c.b16 %v2674, %v2674
      %v2739 = vpack.c.b16 %v2675, %v2675
      %v2740 = vpack.c.b16 %v2676, %v2676
      %v2741 = vpack.c.b16 %v2677, %v2677
      %v2742 = vpack.c.b16 %v2678, %v2678
      %v2743 = vpack.c.b16 %v2679, %v2679
      %v2744 = vpack.c.b16 %v2680, %v2680
      %v2745 = vpack.c.b16 %v2681, %v2681
      %v2746 = vpack.c.b16 %v2682, %v2682
      %v2747 = vpack.c.b16 %v2683, %v2683
      %v2748 = vpack.c.b16 %v2684, %v2684
      %v2749 = vpack.c.b16 %v2685, %v2685
      %v2750 = vpack.c.b16 %v2686, %v2686
      %v2751 = vpack.c.b16 %v2687, %v2687
      %vm2816 = vcmask 257024
      %2817 = vst.msk [vmem:[%s175] sm:$0xf] %vm2816, %v2688
      %2818 = vst.msk [vmem:[%s175 + $0x4] sm:$0xf] %vm2816, %v2689
      %2819 = vst.msk [vmem:[%s175 + $0x8] sm:$0xf] %vm2816, %v2690
      %2820 = vst.msk [vmem:[%s175 + $0xc] sm:$0xf] %vm2816, %v2691
      %2821 = vst.msk [vmem:[%s175 + $0x10] sm:$0xf] %vm2816, %v2692
      %2822 = vst.msk [vmem:[%s175 + $0x14] sm:$0xf] %vm2816, %v2693
      %2823 = vst.msk [vmem:[%s175 + $0x18] sm:$0xf] %vm2816, %v2694
      %2824 = vst.msk [vmem:[%s175 + $0x1c] sm:$0xf] %vm2816, %v2695
      %2825 = vst.msk [vmem:[%s175 + $0x20] sm:$0xf] %vm2816, %v2696
      %2826 = vst.msk [vmem:[%s175 + $0x24] sm:$0xf] %vm2816, %v2697
      %2827 = vst.msk [vmem:[%s175 + $0x28] sm:$0xf] %vm2816, %v2698
      %2828 = vst.msk [vmem:[%s175 + $0x2c] sm:$0xf] %vm2816, %v2699
      %2829 = vst.msk [vmem:[%s175 + $0x30] sm:$0xf] %vm2816, %v2700
      %2830 = vst.msk [vmem:[%s175 + $0x34] sm:$0xf] %vm2816, %v2701
      %2831 = vst.msk [vmem:[%s175 + $0x38] sm:$0xf] %vm2816, %v2702
      %2832 = vst.msk [vmem:[%s175 + $0x3c] sm:$0xf] %vm2816, %v2703
      %2833 = vst.msk [vmem:[%s175 + $0x40] sm:$0xf] %vm2816, %v2704
      %2834 = vst.msk [vmem:[%s175 + $0x44] sm:$0xf] %vm2816, %v2705
      %2835 = vst.msk [vmem:[%s175 + $0x48] sm:$0xf] %vm2816, %v2706
      %2836 = vst.msk [vmem:[%s175 + $0x4c] sm:$0xf] %vm2816, %v2707
      %2837 = vst.msk [vmem:[%s175 + $0x50] sm:$0xf] %vm2816, %v2708
      %2838 = vst.msk [vmem:[%s175 + $0x54] sm:$0xf] %vm2816, %v2709
      %2839 = vst.msk [vmem:[%s175 + $0x58] sm:$0xf] %vm2816, %v2710
      %2840 = vst.msk [vmem:[%s175 + $0x5c] sm:$0xf] %vm2816, %v2711
      %2841 = vst.msk [vmem:[%s175 + $0x60] sm:$0xf] %vm2816, %v2712
      %2842 = vst.msk [vmem:[%s175 + $0x64] sm:$0xf] %vm2816, %v2713
      %2843 = vst.msk [vmem:[%s175 + $0x68] sm:$0xf] %vm2816, %v2714
      %2844 = vst.msk [vmem:[%s175 + $0x6c] sm:$0xf] %vm2816, %v2715
      %2845 = vst.msk [vmem:[%s175 + $0x70] sm:$0xf] %vm2816, %v2716
      %2846 = vst.msk [vmem:[%s175 + $0x74] sm:$0xf] %vm2816, %v2717
      %2847 = vst.msk [vmem:[%s175 + $0x78] sm:$0xf] %vm2816, %v2718
      %2848 = vst.msk [vmem:[%s175 + $0x7c] sm:$0xf] %vm2816, %v2719
      %2849 = vst.msk [vmem:[%s175 + $0x80] sm:$0xf] %vm2816, %v2720
      %2850 = vst.msk [vmem:[%s175 + $0x84] sm:$0xf] %vm2816, %v2721
      %2851 = vst.msk [vmem:[%s175 + $0x88] sm:$0xf] %vm2816, %v2722
      %2852 = vst.msk [vmem:[%s175 + $0x8c] sm:$0xf] %vm2816, %v2723
      %2853 = vst.msk [vmem:[%s175 + $0x90] sm:$0xf] %vm2816, %v2724
      %2854 = vst.msk [vmem:[%s175 + $0x94] sm:$0xf] %vm2816, %v2725
      %2855 = vst.msk [vmem:[%s175 + $0x98] sm:$0xf] %vm2816, %v2726
      %2856 = vst.msk [vmem:[%s175 + $0x9c] sm:$0xf] %vm2816, %v2727
      %2857 = vst.msk [vmem:[%s175 + $0xa0] sm:$0xf] %vm2816, %v2728
      %2858 = vst.msk [vmem:[%s175 + $0xa4] sm:$0xf] %vm2816, %v2729
      %2859 = vst.msk [vmem:[%s175 + $0xa8] sm:$0xf] %vm2816, %v2730
      %2860 = vst.msk [vmem:[%s175 + $0xac] sm:$0xf] %vm2816, %v2731
      %2861 = vst.msk [vmem:[%s175 + $0xb0] sm:$0xf] %vm2816, %v2732
      %2862 = vst.msk [vmem:[%s175 + $0xb4] sm:$0xf] %vm2816, %v2733
      %2863 = vst.msk [vmem:[%s175 + $0xb8] sm:$0xf] %vm2816, %v2734
      %2864 = vst.msk [vmem:[%s175 + $0xbc] sm:$0xf] %vm2816, %v2735
      %2865 = vst.msk [vmem:[%s175 + $0xc0] sm:$0xf] %vm2816, %v2736
      %2866 = vst.msk [vmem:[%s175 + $0xc4] sm:$0xf] %vm2816, %v2737
      %2867 = vst.msk [vmem:[%s175 + $0xc8] sm:$0xf] %vm2816, %v2738
      %2868 = vst.msk [vmem:[%s175 + $0xcc] sm:$0xf] %vm2816, %v2739
      %2869 = vst.msk [vmem:[%s175 + $0xd0] sm:$0xf] %vm2816, %v2740
      %2870 = vst.msk [vmem:[%s175 + $0xd4] sm:$0xf] %vm2816, %v2741
      %2871 = vst.msk [vmem:[%s175 + $0xd8] sm:$0xf] %vm2816, %v2742
      %2872 = vst.msk [vmem:[%s175 + $0xdc] sm:$0xf] %vm2816, %v2743
      %2873 = vst.msk [vmem:[%s175 + $0xe0] sm:$0xf] %vm2816, %v2744
      %2874 = vst.msk [vmem:[%s175 + $0xe4] sm:$0xf] %vm2816, %v2745
      %2875 = vst.msk [vmem:[%s175 + $0xe8] sm:$0xf] %vm2816, %v2746
      %2876 = vst.msk [vmem:[%s175 + $0xec] sm:$0xf] %vm2816, %v2747
      %2877 = vst.msk [vmem:[%s175 + $0xf0] sm:$0xf] %vm2816, %v2748
      %2878 = vst.msk [vmem:[%s175 + $0xf4] sm:$0xf] %vm2816, %v2749
      %2879 = vst.msk [vmem:[%s175 + $0xf8] sm:$0xf] %vm2816, %v2750
      %2880 = vst.msk [vmem:[%s175 + $0xfc] sm:$0xf] %vm2816, %v2751
      %s2881 = smul.u32 64, %s14
      %p2882 = scmp.lt.s32.totalorder %s2881, 191
      %s2883 = scalar_select %p2882, %s2881, 191
      %s2884 = smul.addr %s2883, 4
      %s2885 = scalar_lea.vmem %s3, %s2884
      // Predicated region
      $region33: #{gender_classifier_forward.4} parent=31 // pred_check
        %p2886 = pneg %p100
      $region34: #{gender_classifier_forward.4} parent=31 // pred_check_branch
        %2888 = sbr.rel (%p2886) target = $region36
      $region35: #{gender_classifier_forward.4} parent=31 // pred_region
        %s2889 = smul.u32 64, %s14
      $region36: #{gender_classifier_forward.4} parent=31 // pred_fallthru
        _
    $region32: #{gender_classifier_forward.4} parent=5 // pred_fallthru
      _
    %p2890 = scmp.le.s32.totalorder 2, %s9
    // Predicated region
    $region37: #{gender_classifier_forward.4} parent=5 // pred_check
      %p2891 = pneg %p2890
    $region38: #{gender_classifier_forward.4} parent=5 // pred_check_branch
      %2893 = sbr.rel (%p2891) target = $region40
    $region39: #{gender_classifier_forward.4} parent=5 // pred_region
      %s2894 = ssub.s32 %s9, 2
      // Predicated region
      $region41: #{gender_classifier_forward.4} parent=39 // pred_check
        %p2895 = pneg %p106
      $region42: #{gender_classifier_forward.4} parent=39 // pred_check_branch
        %2897 = sbr.rel (%p2895) target = $region44
      $region43: #{gender_classifier_forward.4} parent=39 // pred_region
        %s2898 = smul.u32 64, %s15
        %p2899 = scmp.lt.s32.totalorder %s2898, 191
        %s2900 = scalar_select %p2899, %s2898, 191
        %s2901 = smul.addr %s2900, 4
        %s2902 = scalar_lea.vmem %s3, %s2901
      $region44: #{gender_classifier_forward.4} parent=39 // pred_fallthru
        _
    $region40: #{gender_classifier_forward.4} parent=5 // pred_fallthru
      _
  $region6: #{gender_classifier_forward.4} parent=0 // loop_footer
    %s13 = sadd.s32 1, %s9
  $region7: #{gender_classifier_forward.4} parent=0 // loop_footer_branch
    %8 = sbr.rel target = $region3
  $region8: #{gender_classifier_forward.4} parent=0 // loop_exit
    _

// kernel: gender_classifier_forward.5
$region0: #{gender_classifier_forward.5}
  #allocation0 [shape = 'u32[]', space=smem, size = 0x4, offset = 0x4, fixed_abs, tag = 'smem constant byte address 0x4 - core index']
  #allocation1 [shape = 'u32[144,128]{1,0:T(1,128)}', space=vmem, size = 0x12000, scoped, tag = 'internal scratch']
  #allocation2 [shape = 'f32[2,128]{1,0:T(2,128)}', space=vmem, size = 0x400, scoped, tag = 'scratch operand']
  %s0 = inlined_call_operand.vmem [shape: bf16[2,17408], index: 0, kind: input, shape index: {}]
  %s1 = inlined_call_operand.vmem [shape: bf16[17408,128], index: 1, kind: input, shape index: {}]
  %s2 = inlined_call_operand.vmem [shape: f32[1,128], index: 2, kind: input, shape index: {}]
  %s3 = inlined_call_operand.vmem [shape: bf16[128,128], index: 3, kind: input, shape index: {}]
  %s4 = inlined_call_operand.vmem [shape: f32[1,128], index: 4, kind: input, shape index: {}]
  %s5 = inlined_call_operand.hbm [shape: f32[2,128], index: 5, kind: output, shape index: {}]
  %s6 = sld [smem:[#allocation0]]
  $region61: #{gender_classifier_forward.5} parent=0
    _
  %s8 = ssub.s32 1, %s6
  %s9 = scalar_select 0, %s8, %s6
  $region1: #{gender_classifier_forward.5} parent=0
    #allocation3 [shape = 'u8[1024]{0}', space=vmem, size = 0x400, scoped, tag = 'output window, operand 0, single buffered']
    #allocation4 [shape = 's32[2]{0}', space=sflag, size = 0x8, scoped, tag = 'scoped memory for gender_classifier_forward.5']
    %10 = vsyncpa [#allocation4], 0
    loop: start=0, step=1, limit=6
    $region2: #{gender_classifier_forward.5} parent=1 // loop_pre_header
      _
    $region3: #{gender_classifier_forward.5} parent=1 // loop_header
      %s12 = sphi 0, %s16
      %p13 = scmp.ge.s32.totalorder %s12, 6
      %s22 = sphi 0, %s24
      %s25 = sphi 0, %s22
      %s26 = sphi 0, %s25
      %s42 = sphi 0, %s26
      %s48 = sphi 0, %s50
      %s51 = sphi 0, %s48
      %s52 = sphi 0, %s51
      %s68 = sphi 0, %s52
      %s72 = sphi 0, %s72
      %s74 = sphi 0, %s72
      %s75 = sphi 0, %s74
      %s89 = sphi 0, %s75
      %s93 = sphi 0, %s93
      %s95 = sphi 0, %s93
      %s96 = sphi 0, %s95
      %s110 = sphi 0, %s96
      %s114 = sphi 0, %s114
      %s116 = sphi 0, %s114
      %s117 = sphi 0, %s116
      %s131 = sphi 0, %s117
      %s135 = sphi 0, %s135
      %s137 = sphi 0, %s135
      %s138 = sphi 0, %s137
      %s152 = sphi 0, %s138
    $region4: #{gender_classifier_forward.5} parent=1 // loop_header_branch
      %15 = sbr.rel (%p13) target = $region8
    $region5: #{gender_classifier_forward.5} parent=1 // loop_body
      %s17 = ssub.s32 %s12, 1
      %s18 = ssub.s32 %s12, 2
      %s19 = sadd.s32 %s12, 1
      %s20 = ssub.s32 %s12, %s19
      %p21 = scmp.eq.s32.totalorder %s20, 0
      %s23 = sadd.s32 %s22, 1
      %s24 = scalar_select %p21, %s22, %s23
      %p27 = pneg %p21
      %p28 = scmp.eq.s32.totalorder %s12, 3
      %p29 = por %p27, %p28
      %p30 = scmp.ne.s32.totalorder %s22, %s25
      %p31 = scmp.eq.s32.totalorder %s12, 0
      %p32 = por %p30, %p31
      %p33 = scmp.ne.s32.totalorder %s22, %s25
      %p34 = scmp.eq.s32.totalorder %s17, 3
      %p35 = por %p33, %p34
      %p36 = scmp.ne.s32.totalorder %s25, %s26
      %p37 = scmp.eq.s32.totalorder %s17, 0
      %p38 = por %p36, %p37
      %p39 = scmp.ne.s32.totalorder %s25, %s26
      %p40 = scmp.eq.s32.totalorder %s18, 3
      %p41 = por %p39, %p40
      %p43 = scmp.ne.s32.totalorder %s26, %s42
      %p44 = scmp.eq.s32.totalorder %s18, 0
      %p45 = por %p43, %p44
      %s46 = ssub.s32 %s12, %s19
      %p47 = scmp.eq.s32.totalorder %s46, 0
      %s49 = sadd.s32 %s48, 1
      %s50 = scalar_select %p47, %s48, %s49
      %p53 = pneg %p47
      %p54 = scmp.eq.s32.totalorder %s12, 3
      %p55 = por %p53, %p54
      %p56 = scmp.ne.s32.totalorder %s48, %s51
      %p57 = scmp.eq.s32.totalorder %s12, 0
      %p58 = por %p56, %p57
      %p59 = scmp.ne.s32.totalorder %s48, %s51
      %p60 = scmp.eq.s32.totalorder %s17, 3
      %p61 = por %p59, %p60
      %p62 = scmp.ne.s32.totalorder %s51, %s52
      %p63 = scmp.eq.s32.totalorder %s17, 0
      %p64 = por %p62, %p63
      %p65 = scmp.ne.s32.totalorder %s51, %s52
      %p66 = scmp.eq.s32.totalorder %s18, 3
      %p67 = por %p65, %p66
      %p69 = scmp.ne.s32.totalorder %s52, %s68
      %p70 = scmp.eq.s32.totalorder %s18, 0
      %p71 = por %p69, %p70
      %s73 = sadd.s32 %s72, 1
      %p76 = scmp.eq.s32.totalorder %s12, 3
      %p77 = scmp.ne.s32.totalorder %s72, %s74
      %p78 = scmp.eq.s32.totalorder %s12, 0
      %p79 = por %p77, %p78
      %p80 = scmp.ne.s32.totalorder %s72, %s74
      %p81 = scmp.eq.s32.totalorder %s17, 3
      %p82 = por %p80, %p81
      %p83 = scmp.ne.s32.totalorder %s74, %s75
      %p84 = scmp.eq.s32.totalorder %s17, 0
      %p85 = por %p83, %p84
      %p86 = scmp.ne.s32.totalorder %s74, %s75
      %p87 = scmp.eq.s32.totalorder %s18, 3
      %p88 = por %p86, %p87
      %p90 = scmp.ne.s32.totalorder %s75, %s89
      %p91 = scmp.eq.s32.totalorder %s18, 0
      %p92 = por %p90, %p91
      %s94 = sadd.s32 %s93, 1
      %p97 = scmp.eq.s32.totalorder %s12, 3
      %p98 = scmp.ne.s32.totalorder %s93, %s95
      %p99 = scmp.eq.s32.totalorder %s12, 0
      %p100 = por %p98, %p99
      %p101 = scmp.ne.s32.totalorder %s93, %s95
      %p102 = scmp.eq.s32.totalorder %s17, 3
      %p103 = por %p101, %p102
      %p104 = scmp.ne.s32.totalorder %s95, %s96
      %p105 = scmp.eq.s32.totalorder %s17, 0
      %p106 = por %p104, %p105
      %p107 = scmp.ne.s32.totalorder %s95, %s96
      %p108 = scmp.eq.s32.totalorder %s18, 3
      %p109 = por %p107, %p108
      %p111 = scmp.ne.s32.totalorder %s96, %s110
      %p112 = scmp.eq.s32.totalorder %s18, 0
      %p113 = por %p111, %p112
      %s115 = sadd.s32 %s114, 1
      %p118 = scmp.eq.s32.totalorder %s12, 3
      %p119 = scmp.ne.s32.totalorder %s114, %s116
      %p120 = scmp.eq.s32.totalorder %s12, 0
      %p121 = por %p119, %p120
      %p122 = scmp.ne.s32.totalorder %s114, %s116
      %p123 = scmp.eq.s32.totalorder %s17, 3
      %p124 = por %p122, %p123
      %p125 = scmp.ne.s32.totalorder %s116, %s117
      %p126 = scmp.eq.s32.totalorder %s17, 0
      %p127 = por %p125, %p126
      %p128 = scmp.ne.s32.totalorder %s116, %s117
      %p129 = scmp.eq.s32.totalorder %s18, 3
      %p130 = por %p128, %p129
      %p132 = scmp.ne.s32.totalorder %s117, %s131
      %p133 = scmp.eq.s32.totalorder %s18, 0
      %p134 = por %p132, %p133
      %s136 = sadd.s32 %s135, 1
      %p139 = scmp.eq.s32.totalorder %s12, 3
      %p140 = scmp.ne.s32.totalorder %s135, %s137
      %p141 = scmp.eq.s32.totalorder %s12, 0
      %p142 = por %p140, %p141
      %p143 = scmp.ne.s32.totalorder %s135, %s137
      %p144 = scmp.eq.s32.totalorder %s17, 3
      %p145 = por %p143, %p144
      %p146 = scmp.ne.s32.totalorder %s137, %s138
      %p147 = scmp.eq.s32.totalorder %s17, 0
      %p148 = por %p146, %p147
      %p149 = scmp.ne.s32.totalorder %s137, %s138
      %p150 = scmp.eq.s32.totalorder %s18, 3
      %p151 = por %p149, %p150
      %p153 = scmp.ne.s32.totalorder %s138, %s152
      %p154 = scmp.eq.s32.totalorder %s18, 0
      %p155 = por %p153, %p154
      %p156 = scmp.le.s32.totalorder 1, %s12
      %p157 = scmp.lt.s32.totalorder %s12, 5
      %p158 = pnand %p156, %p157
      %p159 = pneg %p158
      // Predicated region
      $region9: #{gender_classifier_forward.5} parent=5 // pred_check
        _
      $region10: #{gender_classifier_forward.5} parent=5 // pred_check_branch
        %161 = sbr.rel (%p158) target = $region12
      $region11: #{gender_classifier_forward.5} parent=5 // pred_region
        %s162 = ssub.s32 %s12, 1
        // Predicated region
        $region13: #{gender_classifier_forward.5} parent=11 // pred_check
          %p163 = pneg %p85
        $region14: #{gender_classifier_forward.5} parent=11 // pred_check_branch
          %165 = sbr.rel (%p163) target = $region16
        $region15: #{gender_classifier_forward.5} parent=11 // pred_region
          _
        $region16: #{gender_classifier_forward.5} parent=11 // pred_fallthru
          _
        // Predicated region
        $region17: #{gender_classifier_forward.5} parent=11 // pred_check
          %p166 = pneg %p106
        $region18: #{gender_classifier_forward.5} parent=11 // pred_check_branch
          %168 = sbr.rel (%p166) target = $region20
        $region19: #{gender_classifier_forward.5} parent=11 // pred_region
          _
        $region20: #{gender_classifier_forward.5} parent=11 // pred_fallthru
          _
        // Predicated region
        $region21: #{gender_classifier_forward.5} parent=11 // pred_check
          %p169 = pneg %p127
        $region22: #{gender_classifier_forward.5} parent=11 // pred_check_branch
          %171 = sbr.rel (%p169) target = $region24
        $region23: #{gender_classifier_forward.5} parent=11 // pred_region
          _
        $region24: #{gender_classifier_forward.5} parent=11 // pred_fallthru
          _
      $region12: #{gender_classifier_forward.5} parent=5 // pred_fallthru
        _
      %p172 = scmp.lt.s32.totalorder %s12, 4
      // Predicated region
      $region25: #{gender_classifier_forward.5} parent=5 // pred_check
        %p173 = pneg %p172
      $region26: #{gender_classifier_forward.5} parent=5 // pred_check_branch
        %175 = sbr.rel (%p173) target = $region28
      $region27: #{gender_classifier_forward.5} parent=5 // pred_region
        // Predicated region
        $region29: #{gender_classifier_forward.5} parent=27 // pred_check
          %p176 = pneg %p32
        $region30: #{gender_classifier_forward.5} parent=27 // pred_check_branch
          %178 = sbr.rel (%p176) target = $region32
        $region31: #{gender_classifier_forward.5} parent=27 // pred_region
          %s179 = smul.u32 34, %s12
          %p180 = scmp.lt.s32.totalorder %s179, 135
          %s181 = scalar_select %p180, %s179, 135
          %s182 = scalar_lea.vmem %s0, %s181
          %s183 = smul.u32 34, %s12
        $region32: #{gender_classifier_forward.5} parent=27 // pred_fallthru
          _
        // Predicated region
        $region33: #{gender_classifier_forward.5} parent=27 // pred_check
          %p184 = pneg %p58
        $region34: #{gender_classifier_forward.5} parent=27 // pred_check_branch
          %186 = sbr.rel (%p184) target = $region36
        $region35: #{gender_classifier_forward.5} parent=27 // pred_region
          %s187 = smul.u32 544, %s12
          %p188 = scmp.lt.s32.totalorder %s187, 2175
          %s189 = scalar_select %p188, %s187, 2175
          %s190 = smul.addr %s189, 4
          %s191 = scalar_lea.vmem %s1, %s190
          %s192 = smul.u32 544, %s12
        $region36: #{gender_classifier_forward.5} parent=27 // pred_fallthru
          _
      $region28: #{gender_classifier_forward.5} parent=5 // pred_fallthru
        _
      %p193 = scmp.le.s32.totalorder 1, %s12
      %p194 = scmp.lt.s32.totalorder %s12, 5
      %p195 = pnand %p193, %p194
      %p196 = pneg %p195
      // Predicated region
      $region37: #{gender_classifier_forward.5} parent=5 // pred_check
        _
      $region38: #{gender_classifier_forward.5} parent=5 // pred_check_branch
        %198 = sbr.rel (%p195) target = $region40
      $region39: #{gender_classifier_forward.5} parent=5 // pred_region
        %s199 = ssub.s32 %s12, 1
        %s200 = smul.u32 34, %s17
        %p201 = scmp.lt.s32.totalorder %s200, 135
        %s202 = scalar_select %p201, %s200, 135
        %s203 = scalar_lea.vmem %s0, %s202
        %p204 = pneg %p38
        %p205 = pneg %p35
        %s206 = smul.u32 544, %s17
        %p207 = scmp.lt.s32.totalorder %s206, 2175
        %s208 = scalar_select %p207, %s206, 2175
        %s209 = smul.addr %s208, 4
        %s210 = scalar_lea.vmem %s1, %s209
        %p211 = pneg %p64
        %p212 = pneg %p61
        %p213 = pneg %p85
        %p214 = pneg %p82
        %p215 = pneg %p106
        %p216 = pneg %p103
        %p217 = pneg %p127
        %p218 = pneg %p124
        %p219 = pneg %p148
        %p220 = pneg %p145
        %s221 = smul.u32 34, %s17
        %p222 = scmp.lt.s32.totalorder %s221, 135
        %s223 = scalar_select %p222, %s221, 135
        %s224 = scalar_lea.vmem %s0, %s223
        %s225 = smul.u32 34, %s17
        %s226 = smul.u32 544, %s17
        %p227 = scmp.lt.s32.totalorder %s226, 2175
        %s228 = scalar_select %p227, %s226, 2175
        %s229 = smul.addr %s228, 4
        %s230 = scalar_lea.vmem %s1, %s229
        %s231 = smul.u32 544, %s17
        %p233 = scmp.eq.s32.totalorder %s17, 0
        // Predicated region
        $region41: #{gender_classifier_forward.5} parent=39 // pred_check
          %p234 = pneg %p233
        $region42: #{gender_classifier_forward.5} parent=39 // pred_check_branch
          %236 = sbr.rel (%p234) target = $region44
        $region43: #{gender_classifier_forward.5} parent=39 // pred_region
          %237 = vst [vmem:[#allocation2] sm:$0x3] 0.0
        $region44: #{gender_classifier_forward.5} parent=39 // pred_fallthru
          _
        %v238 = vld [vmem:[#allocation2] sm:$0x3]
        %v239 = vld [vmem:[%s224] sm:$0xff]
        %v240 = vld [vmem:[%s224 + $0x8] sm:$0xff]
        %v241 = vld [vmem:[%s224 + $0x10] sm:$0xff]
        %v242 = vld [vmem:[%s224 + $0x18] sm:$0xff]
        %v243 = vld [vmem:[%s224 + $0x20] sm:$0x3]
        %v244 = vld [vmem:[%s230] sm:$0xf]
        %v245 = vld [vmem:[%s230 + $0x4] sm:$0xf]
        %v246 = vld [vmem:[%s230 + $0x8] sm:$0xf]
        %v247 = vld [vmem:[%s230 + $0xc] sm:$0xf]
        %v248 = vld [vmem:[%s230 + $0x10] sm:$0xf]
        %v249 = vld [vmem:[%s230 + $0x14] sm:$0xf]
        %v250 = vld [vmem:[%s230 + $0x18] sm:$0xf]
        %v251 = vld [vmem:[%s230 + $0x1c] sm:$0xf]
        %v252 = vld [vmem:[%s230 + $0x20] sm:$0xf]
        %v253 = vld [vmem:[%s230 + $0x24] sm:$0xf]
        %v254 = vld [vmem:[%s230 + $0x28] sm:$0xf]
        %v255 = vld [vmem:[%s230 + $0x2c] sm:$0xf]
        %v256 = vld [vmem:[%s230 + $0x30] sm:$0xf]
        %v257 = vld [vmem:[%s230 + $0x34] sm:$0xf]
        %v258 = vld [vmem:[%s230 + $0x38] sm:$0xf]
        %v259 = vld [vmem:[%s230 + $0x3c] sm:$0xf]
        %v260 = vld [vmem:[%s230 + $0x40] sm:$0xf]
        %v261 = vld [vmem:[%s230 + $0x44] sm:$0xf]
        %v262 = vld [vmem:[%s230 + $0x48] sm:$0xf]
        %v263 = vld [vmem:[%s230 + $0x4c] sm:$0xf]
        %v264 = vld [vmem:[%s230 + $0x50] sm:$0xf]
        %v265 = vld [vmem:[%s230 + $0x54] sm:$0xf]
        %v266 = vld [vmem:[%s230 + $0x58] sm:$0xf]
        %v267 = vld [vmem:[%s230 + $0x5c] sm:$0xf]
        %v268 = vld [vmem:[%s230 + $0x60] sm:$0xf]
        %v269 = vld [vmem:[%s230 + $0x64] sm:$0xf]
        %v270 = vld [vmem:[%s230 + $0x68] sm:$0xf]
        %v271 = vld [vmem:[%s230 + $0x6c] sm:$0xf]
        %v272 = vld [vmem:[%s230 + $0x70] sm:$0xf]
        %v273 = vld [vmem:[%s230 + $0x74] sm:$0xf]
        %v274 = vld [vmem:[%s230 + $0x78] sm:$0xf]
        %v275 = vld [vmem:[%s230 + $0x7c] sm:$0xf]
        %v276 = vld [vmem:[%s230 + $0x80] sm:$0xf]
        %v277 = vld [vmem:[%s230 + $0x84] sm:$0xf]
        %v278 = vld [vmem:[%s230 + $0x88] sm:$0xf]
        %v279 = vld [vmem:[%s230 + $0x8c] sm:$0xf]
        %v280 = vld [vmem:[%s230 + $0x90] sm:$0xf]
        %v281 = vld [vmem:[%s230 + $0x94] sm:$0xf]
        %v282 = vld [vmem:[%s230 + $0x98] sm:$0xf]
        %v283 = vld [vmem:[%s230 + $0x9c] sm:$0xf]
        %v284 = vld [vmem:[%s230 + $0xa0] sm:$0xf]
        %v285 = vld [vmem:[%s230 + $0xa4] sm:$0xf]
        %v286 = vld [vmem:[%s230 + $0xa8] sm:$0xf]
        %v287 = vld [vmem:[%s230 + $0xac] sm:$0xf]
        %v288 = vld [vmem:[%s230 + $0xb0] sm:$0xf]
        %v289 = vld [vmem:[%s230 + $0xb4] sm:$0xf]
        %v290 = vld [vmem:[%s230 + $0xb8] sm:$0xf]
        %v291 = vld [vmem:[%s230 + $0xbc] sm:$0xf]
        %v292 = vld [vmem:[%s230 + $0xc0] sm:$0xf]
        %v293 = vld [vmem:[%s230 + $0xc4] sm:$0xf]
        %v294 = vld [vmem:[%s230 + $0xc8] sm:$0xf]
        %v295 = vld [vmem:[%s230 + $0xcc] sm:$0xf]
        %v296 = vld [vmem:[%s230 + $0xd0] sm:$0xf]
        %v297 = vld [vmem:[%s230 + $0xd4] sm:$0xf]
        %v298 = vld [vmem:[%s230 + $0xd8] sm:$0xf]
        %v299 = vld [vmem:[%s230 + $0xdc] sm:$0xf]
        %v300 = vld [vmem:[%s230 + $0xe0] sm:$0xf]
        %v301 = vld [vmem:[%s230 + $0xe4] sm:$0xf]
        %v302 = vld [vmem:[%s230 + $0xe8] sm:$0xf]
        %v303 = vld [vmem:[%s230 + $0xec] sm:$0xf]
        %v304 = vld [vmem:[%s230 + $0xf0] sm:$0xf]
        %v305 = vld [vmem:[%s230 + $0xf4] sm:$0xf]
        %v306 = vld [vmem:[%s230 + $0xf8] sm:$0xf]
        %v307 = vld [vmem:[%s230 + $0xfc] sm:$0xf]
        %v308 = vld [vmem:[%s230 + $0x100] sm:$0xf]
        %v309 = vld [vmem:[%s230 + $0x104] sm:$0xf]
        %v310 = vld [vmem:[%s230 + $0x108] sm:$0xf]
        %v311 = vld [vmem:[%s230 + $0x10c] sm:$0xf]
        %v312 = vld [vmem:[%s230 + $0x110] sm:$0xf]
        %v313 = vld [vmem:[%s230 + $0x114] sm:$0xf]
        %v314 = vld [vmem:[%s230 + $0x118] sm:$0xf]
        %v315 = vld [vmem:[%s230 + $0x11c] sm:$0xf]
        %v316 = vld [vmem:[%s230 + $0x120] sm:$0xf]
        %v317 = vld [vmem:[%s230 + $0x124] sm:$0xf]
        %v318 = vld [vmem:[%s230 + $0x128] sm:$0xf]
        %v319 = vld [vmem:[%s230 + $0x12c] sm:$0xf]
        %v320 = vld [vmem:[%s230 + $0x130] sm:$0xf]
        %v321 = vld [vmem:[%s230 + $0x134] sm:$0xf]
        %v322 = vld [vmem:[%s230 + $0x138] sm:$0xf]
        %v323 = vld [vmem:[%s230 + $0x13c] sm:$0xf]
        %v324 = vld [vmem:[%s230 + $0x140] sm:$0xf]
        %v325 = vld [vmem:[%s230 + $0x144] sm:$0xf]
        %v326 = vld [vmem:[%s230 + $0x148] sm:$0xf]
        %v327 = vld [vmem:[%s230 + $0x14c] sm:$0xf]
        %v328 = vld [vmem:[%s230 + $0x150] sm:$0xf]
        %v329 = vld [vmem:[%s230 + $0x154] sm:$0xf]
        %v330 = vld [vmem:[%s230 + $0x158] sm:$0xf]
        %v331 = vld [vmem:[%s230 + $0x15c] sm:$0xf]
        %v332 = vld [vmem:[%s230 + $0x160] sm:$0xf]
        %v333 = vld [vmem:[%s230 + $0x164] sm:$0xf]
        %v334 = vld [vmem:[%s230 + $0x168] sm:$0xf]
        %v335 = vld [vmem:[%s230 + $0x16c] sm:$0xf]
        %v336 = vld [vmem:[%s230 + $0x170] sm:$0xf]
        %v337 = vld [vmem:[%s230 + $0x174] sm:$0xf]
        %v338 = vld [vmem:[%s230 + $0x178] sm:$0xf]
        %v339 = vld [vmem:[%s230 + $0x17c] sm:$0xf]
        %v340 = vld [vmem:[%s230 + $0x180] sm:$0xf]
        %v341 = vld [vmem:[%s230 + $0x184] sm:$0xf]
        %v342 = vld [vmem:[%s230 + $0x188] sm:$0xf]
        %v343 = vld [vmem:[%s230 + $0x18c] sm:$0xf]
        %v344 = vld [vmem:[%s230 + $0x190] sm:$0xf]
        %v345 = vld [vmem:[%s230 + $0x194] sm:$0xf]
        %v346 = vld [vmem:[%s230 + $0x198] sm:$0xf]
        %v347 = vld [vmem:[%s230 + $0x19c] sm:$0xf]
        %v348 = vld [vmem:[%s230 + $0x1a0] sm:$0xf]
        %v349 = vld [vmem:[%s230 + $0x1a4] sm:$0xf]
        %v350 = vld [vmem:[%s230 + $0x1a8] sm:$0xf]
        %v351 = vld [vmem:[%s230 + $0x1ac] sm:$0xf]
        %v352 = vld [vmem:[%s230 + $0x1b0] sm:$0xf]
        %v353 = vld [vmem:[%s230 + $0x1b4] sm:$0xf]
        %v354 = vld [vmem:[%s230 + $0x1b8] sm:$0xf]
        %v355 = vld [vmem:[%s230 + $0x1bc] sm:$0xf]
        %v356 = vld [vmem:[%s230 + $0x1c0] sm:$0xf]
        %v357 = vld [vmem:[%s230 + $0x1c4] sm:$0xf]
        %v358 = vld [vmem:[%s230 + $0x1c8] sm:$0xf]
        %v359 = vld [vmem:[%s230 + $0x1cc] sm:$0xf]
        %v360 = vld [vmem:[%s230 + $0x1d0] sm:$0xf]
        %v361 = vld [vmem:[%s230 + $0x1d4] sm:$0xf]
        %v362 = vld [vmem:[%s230 + $0x1d8] sm:$0xf]
        %v363 = vld [vmem:[%s230 + $0x1dc] sm:$0xf]
        %v364 = vld [vmem:[%s230 + $0x1e0] sm:$0xf]
        %v365 = vld [vmem:[%s230 + $0x1e4] sm:$0xf]
        %v366 = vld [vmem:[%s230 + $0x1e8] sm:$0xf]
        %v367 = vld [vmem:[%s230 + $0x1ec] sm:$0xf]
        %v368 = vld [vmem:[%s230 + $0x1f0] sm:$0xf]
        %v369 = vld [vmem:[%s230 + $0x1f4] sm:$0xf]
        %v370 = vld [vmem:[%s230 + $0x1f8] sm:$0xf]
        %v371 = vld [vmem:[%s230 + $0x1fc] sm:$0xf]
        %v372 = vld [vmem:[%s230 + $0x200] sm:$0xf]
        %v373 = vld [vmem:[%s230 + $0x204] sm:$0xf]
        %v374 = vld [vmem:[%s230 + $0x208] sm:$0xf]
        %v375 = vld [vmem:[%s230 + $0x20c] sm:$0xf]
        %v376 = vld [vmem:[%s230 + $0x210] sm:$0xf]
        %v377 = vld [vmem:[%s230 + $0x214] sm:$0xf]
        %v378 = vld [vmem:[%s230 + $0x218] sm:$0xf]
        %v379 = vld [vmem:[%s230 + $0x21c] sm:$0xf]
        %v380 = vld [vmem:[%s230 + $0x220] sm:$0xf]
        %v381 = vld [vmem:[%s230 + $0x224] sm:$0xf]
        %v382 = vld [vmem:[%s230 + $0x228] sm:$0xf]
        %v383 = vld [vmem:[%s230 + $0x22c] sm:$0xf]
        %v384 = vld [vmem:[%s230 + $0x230] sm:$0xf]
        %v385 = vld [vmem:[%s230 + $0x234] sm:$0xf]
        %v386 = vld [vmem:[%s230 + $0x238] sm:$0xf]
        %v387 = vld [vmem:[%s230 + $0x23c] sm:$0xf]
        %v388 = vld [vmem:[%s230 + $0x240] sm:$0xf]
        %v389 = vld [vmem:[%s230 + $0x244] sm:$0xf]
        %v390 = vld [vmem:[%s230 + $0x248] sm:$0xf]
        %v391 = vld [vmem:[%s230 + $0x24c] sm:$0xf]
        %v392 = vld [vmem:[%s230 + $0x250] sm:$0xf]
        %v393 = vld [vmem:[%s230 + $0x254] sm:$0xf]
        %v394 = vld [vmem:[%s230 + $0x258] sm:$0xf]
        %v395 = vld [vmem:[%s230 + $0x25c] sm:$0xf]
        %v396 = vld [vmem:[%s230 + $0x260] sm:$0xf]
        %v397 = vld [vmem:[%s230 + $0x264] sm:$0xf]
        %v398 = vld [vmem:[%s230 + $0x268] sm:$0xf]
        %v399 = vld [vmem:[%s230 + $0x26c] sm:$0xf]
        %v400 = vld [vmem:[%s230 + $0x270] sm:$0xf]
        %v401 = vld [vmem:[%s230 + $0x274] sm:$0xf]
        %v402 = vld [vmem:[%s230 + $0x278] sm:$0xf]
        %v403 = vld [vmem:[%s230 + $0x27c] sm:$0xf]
        %v404 = vld [vmem:[%s230 + $0x280] sm:$0xf]
        %v405 = vld [vmem:[%s230 + $0x284] sm:$0xf]
        %v406 = vld [vmem:[%s230 + $0x288] sm:$0xf]
        %v407 = vld [vmem:[%s230 + $0x28c] sm:$0xf]
        %v408 = vld [vmem:[%s230 + $0x290] sm:$0xf]
        %v409 = vld [vmem:[%s230 + $0x294] sm:$0xf]
        %v410 = vld [vmem:[%s230 + $0x298] sm:$0xf]
        %v411 = vld [vmem:[%s230 + $0x29c] sm:$0xf]
        %v412 = vld [vmem:[%s230 + $0x2a0] sm:$0xf]
        %v413 = vld [vmem:[%s230 + $0x2a4] sm:$0xf]
        %v414 = vld [vmem:[%s230 + $0x2a8] sm:$0xf]
        %v415 = vld [vmem:[%s230 + $0x2ac] sm:$0xf]
        %v416 = vld [vmem:[%s230 + $0x2b0] sm:$0xf]
        %v417 = vld [vmem:[%s230 + $0x2b4] sm:$0xf]
        %v418 = vld [vmem:[%s230 + $0x2b8] sm:$0xf]
        %v419 = vld [vmem:[%s230 + $0x2bc] sm:$0xf]
        %v420 = vld [vmem:[%s230 + $0x2c0] sm:$0xf]
        %v421 = vld [vmem:[%s230 + $0x2c4] sm:$0xf]
        %v422 = vld [vmem:[%s230 + $0x2c8] sm:$0xf]
        %v423 = vld [vmem:[%s230 + $0x2cc] sm:$0xf]
        %v424 = vld [vmem:[%s230 + $0x2d0] sm:$0xf]
        %v425 = vld [vmem:[%s230 + $0x2d4] sm:$0xf]
        %v426 = vld [vmem:[%s230 + $0x2d8] sm:$0xf]
        %v427 = vld [vmem:[%s230 + $0x2dc] sm:$0xf]
        %v428 = vld [vmem:[%s230 + $0x2e0] sm:$0xf]
        %v429 = vld [vmem:[%s230 + $0x2e4] sm:$0xf]
        %v430 = vld [vmem:[%s230 + $0x2e8] sm:$0xf]
        %v431 = vld [vmem:[%s230 + $0x2ec] sm:$0xf]
        %v432 = vld [vmem:[%s230 + $0x2f0] sm:$0xf]
        %v433 = vld [vmem:[%s230 + $0x2f4] sm:$0xf]
        %v434 = vld [vmem:[%s230 + $0x2f8] sm:$0xf]
        %v435 = vld [vmem:[%s230 + $0x2fc] sm:$0xf]
        %v436 = vld [vmem:[%s230 + $0x300] sm:$0xf]
        %v437 = vld [vmem:[%s230 + $0x304] sm:$0xf]
        %v438 = vld [vmem:[%s230 + $0x308] sm:$0xf]
        %v439 = vld [vmem:[%s230 + $0x30c] sm:$0xf]
        %v440 = vld [vmem:[%s230 + $0x310] sm:$0xf]
        %v441 = vld [vmem:[%s230 + $0x314] sm:$0xf]
        %v442 = vld [vmem:[%s230 + $0x318] sm:$0xf]
        %v443 = vld [vmem:[%s230 + $0x31c] sm:$0xf]
        %v444 = vld [vmem:[%s230 + $0x320] sm:$0xf]
        %v445 = vld [vmem:[%s230 + $0x324] sm:$0xf]
        %v446 = vld [vmem:[%s230 + $0x328] sm:$0xf]
        %v447 = vld [vmem:[%s230 + $0x32c] sm:$0xf]
        %v448 = vld [vmem:[%s230 + $0x330] sm:$0xf]
        %v449 = vld [vmem:[%s230 + $0x334] sm:$0xf]
        %v450 = vld [vmem:[%s230 + $0x338] sm:$0xf]
        %v451 = vld [vmem:[%s230 + $0x33c] sm:$0xf]
        %v452 = vld [vmem:[%s230 + $0x340] sm:$0xf]
        %v453 = vld [vmem:[%s230 + $0x344] sm:$0xf]
        %v454 = vld [vmem:[%s230 + $0x348] sm:$0xf]
        %v455 = vld [vmem:[%s230 + $0x34c] sm:$0xf]
        %v456 = vld [vmem:[%s230 + $0x350] sm:$0xf]
        %v457 = vld [vmem:[%s230 + $0x354] sm:$0xf]
        %v458 = vld [vmem:[%s230 + $0x358] sm:$0xf]
        %v459 = vld [vmem:[%s230 + $0x35c] sm:$0xf]
        %v460 = vld [vmem:[%s230 + $0x360] sm:$0xf]
        %v461 = vld [vmem:[%s230 + $0x364] sm:$0xf]
        %v462 = vld [vmem:[%s230 + $0x368] sm:$0xf]
        %v463 = vld [vmem:[%s230 + $0x36c] sm:$0xf]
        %v464 = vld [vmem:[%s230 + $0x370] sm:$0xf]
        %v465 = vld [vmem:[%s230 + $0x374] sm:$0xf]
        %v466 = vld [vmem:[%s230 + $0x378] sm:$0xf]
        %v467 = vld [vmem:[%s230 + $0x37c] sm:$0xf]
        %v468 = vld [vmem:[%s230 + $0x380] sm:$0xf]
        %v469 = vld [vmem:[%s230 + $0x384] sm:$0xf]
        %v470 = vld [vmem:[%s230 + $0x388] sm:$0xf]
        %v471 = vld [vmem:[%s230 + $0x38c] sm:$0xf]
        %v472 = vld [vmem:[%s230 + $0x390] sm:$0xf]
        %v473 = vld [vmem:[%s230 + $0x394] sm:$0xf]
        %v474 = vld [vmem:[%s230 + $0x398] sm:$0xf]
        %v475 = vld [vmem:[%s230 + $0x39c] sm:$0xf]
        %v476 = vld [vmem:[%s230 + $0x3a0] sm:$0xf]
        %v477 = vld [vmem:[%s230 + $0x3a4] sm:$0xf]
        %v478 = vld [vmem:[%s230 + $0x3a8] sm:$0xf]
        %v479 = vld [vmem:[%s230 + $0x3ac] sm:$0xf]
        %v480 = vld [vmem:[%s230 + $0x3b0] sm:$0xf]
        %v481 = vld [vmem:[%s230 + $0x3b4] sm:$0xf]
        %v482 = vld [vmem:[%s230 + $0x3b8] sm:$0xf]
        %v483 = vld [vmem:[%s230 + $0x3bc] sm:$0xf]
        %v484 = vld [vmem:[%s230 + $0x3c0] sm:$0xf]
        %v485 = vld [vmem:[%s230 + $0x3c4] sm:$0xf]
        %v486 = vld [vmem:[%s230 + $0x3c8] sm:$0xf]
        %v487 = vld [vmem:[%s230 + $0x3cc] sm:$0xf]
        %v488 = vld [vmem:[%s230 + $0x3d0] sm:$0xf]
        %v489 = vld [vmem:[%s230 + $0x3d4] sm:$0xf]
        %v490 = vld [vmem:[%s230 + $0x3d8] sm:$0xf]
        %v491 = vld [vmem:[%s230 + $0x3dc] sm:$0xf]
        %v492 = vld [vmem:[%s230 + $0x3e0] sm:$0xf]
        %v493 = vld [vmem:[%s230 + $0x3e4] sm:$0xf]
        %v494 = vld [vmem:[%s230 + $0x3e8] sm:$0xf]
        %v495 = vld [vmem:[%s230 + $0x3ec] sm:$0xf]
        %v496 = vld [vmem:[%s230 + $0x3f0] sm:$0xf]
        %v497 = vld [vmem:[%s230 + $0x3f4] sm:$0xf]
        %v498 = vld [vmem:[%s230 + $0x3f8] sm:$0xf]
        %v499 = vld [vmem:[%s230 + $0x3fc] sm:$0xf]
        %v500 = vld [vmem:[%s230 + $0x400] sm:$0xf]
        %v501 = vld [vmem:[%s230 + $0x404] sm:$0xf]
        %v502 = vld [vmem:[%s230 + $0x408] sm:$0xf]
        %v503 = vld [vmem:[%s230 + $0x40c] sm:$0xf]
        %v504 = vld [vmem:[%s230 + $0x410] sm:$0xf]
        %v505 = vld [vmem:[%s230 + $0x414] sm:$0xf]
        %v506 = vld [vmem:[%s230 + $0x418] sm:$0xf]
        %v507 = vld [vmem:[%s230 + $0x41c] sm:$0xf]
        %v508 = vld [vmem:[%s230 + $0x420] sm:$0xf]
        %v509 = vld [vmem:[%s230 + $0x424] sm:$0xf]
        %v510 = vld [vmem:[%s230 + $0x428] sm:$0xf]
        %v511 = vld [vmem:[%s230 + $0x42c] sm:$0xf]
        %v512 = vld [vmem:[%s230 + $0x430] sm:$0xf]
        %v513 = vld [vmem:[%s230 + $0x434] sm:$0xf]
        %v514 = vld [vmem:[%s230 + $0x438] sm:$0xf]
        %v515 = vld [vmem:[%s230 + $0x43c] sm:$0xf]
        %v516 = vld [vmem:[%s230 + $0x440] sm:$0xf]
        %v517 = vld [vmem:[%s230 + $0x444] sm:$0xf]
        %v518 = vld [vmem:[%s230 + $0x448] sm:$0xf]
        %v519 = vld [vmem:[%s230 + $0x44c] sm:$0xf]
        %v520 = vld [vmem:[%s230 + $0x450] sm:$0xf]
        %v521 = vld [vmem:[%s230 + $0x454] sm:$0xf]
        %v522 = vld [vmem:[%s230 + $0x458] sm:$0xf]
        %v523 = vld [vmem:[%s230 + $0x45c] sm:$0xf]
        %v524 = vld [vmem:[%s230 + $0x460] sm:$0xf]
        %v525 = vld [vmem:[%s230 + $0x464] sm:$0xf]
        %v526 = vld [vmem:[%s230 + $0x468] sm:$0xf]
        %v527 = vld [vmem:[%s230 + $0x46c] sm:$0xf]
        %v528 = vld [vmem:[%s230 + $0x470] sm:$0xf]
        %v529 = vld [vmem:[%s230 + $0x474] sm:$0xf]
        %v530 = vld [vmem:[%s230 + $0x478] sm:$0xf]
        %v531 = vld [vmem:[%s230 + $0x47c] sm:$0xf]
        %v532 = vld [vmem:[%s230 + $0x480] sm:$0xf]
        %v533 = vld [vmem:[%s230 + $0x484] sm:$0xf]
        %v534 = vld [vmem:[%s230 + $0x488] sm:$0xf]
        %v535 = vld [vmem:[%s230 + $0x48c] sm:$0xf]
        %v536 = vld [vmem:[%s230 + $0x490] sm:$0xf]
        %v537 = vld [vmem:[%s230 + $0x494] sm:$0xf]
        %v538 = vld [vmem:[%s230 + $0x498] sm:$0xf]
        %v539 = vld [vmem:[%s230 + $0x49c] sm:$0xf]
        %v540 = vld [vmem:[%s230 + $0x4a0] sm:$0xf]
        %v541 = vld [vmem:[%s230 + $0x4a4] sm:$0xf]
        %v542 = vld [vmem:[%s230 + $0x4a8] sm:$0xf]
        %v543 = vld [vmem:[%s230 + $0x4ac] sm:$0xf]
        %v544 = vld [vmem:[%s230 + $0x4b0] sm:$0xf]
        %v545 = vld [vmem:[%s230 + $0x4b4] sm:$0xf]
        %v546 = vld [vmem:[%s230 + $0x4b8] sm:$0xf]
        %v547 = vld [vmem:[%s230 + $0x4bc] sm:$0xf]
        %v548 = vld [vmem:[%s230 + $0x4c0] sm:$0xf]
        %v549 = vld [vmem:[%s230 + $0x4c4] sm:$0xf]
        %v550 = vld [vmem:[%s230 + $0x4c8] sm:$0xf]
        %v551 = vld [vmem:[%s230 + $0x4cc] sm:$0xf]
        %v552 = vld [vmem:[%s230 + $0x4d0] sm:$0xf]
        %v553 = vld [vmem:[%s230 + $0x4d4] sm:$0xf]
        %v554 = vld [vmem:[%s230 + $0x4d8] sm:$0xf]
        %v555 = vld [vmem:[%s230 + $0x4dc] sm:$0xf]
        %v556 = vld [vmem:[%s230 + $0x4e0] sm:$0xf]
        %v557 = vld [vmem:[%s230 + $0x4e4] sm:$0xf]
        %v558 = vld [vmem:[%s230 + $0x4e8] sm:$0xf]
        %v559 = vld [vmem:[%s230 + $0x4ec] sm:$0xf]
        %v560 = vld [vmem:[%s230 + $0x4f0] sm:$0xf]
        %v561 = vld [vmem:[%s230 + $0x4f4] sm:$0xf]
        %v562 = vld [vmem:[%s230 + $0x4f8] sm:$0xf]
        %v563 = vld [vmem:[%s230 + $0x4fc] sm:$0xf]
        %v564 = vld [vmem:[%s230 + $0x500] sm:$0xf]
        %v565 = vld [vmem:[%s230 + $0x504] sm:$0xf]
        %v566 = vld [vmem:[%s230 + $0x508] sm:$0xf]
        %v567 = vld [vmem:[%s230 + $0x50c] sm:$0xf]
        %v568 = vld [vmem:[%s230 + $0x510] sm:$0xf]
        %v569 = vld [vmem:[%s230 + $0x514] sm:$0xf]
        %v570 = vld [vmem:[%s230 + $0x518] sm:$0xf]
        %v571 = vld [vmem:[%s230 + $0x51c] sm:$0xf]
        %v572 = vld [vmem:[%s230 + $0x520] sm:$0xf]
        %v573 = vld [vmem:[%s230 + $0x524] sm:$0xf]
        %v574 = vld [vmem:[%s230 + $0x528] sm:$0xf]
        %v575 = vld [vmem:[%s230 + $0x52c] sm:$0xf]
        %v576 = vld [vmem:[%s230 + $0x530] sm:$0xf]
        %v577 = vld [vmem:[%s230 + $0x534] sm:$0xf]
        %v578 = vld [vmem:[%s230 + $0x538] sm:$0xf]
        %v579 = vld [vmem:[%s230 + $0x53c] sm:$0xf]
        %v580 = vld [vmem:[%s230 + $0x540] sm:$0xf]
        %v581 = vld [vmem:[%s230 + $0x544] sm:$0xf]
        %v582 = vld [vmem:[%s230 + $0x548] sm:$0xf]
        %v583 = vld [vmem:[%s230 + $0x54c] sm:$0xf]
        %v584 = vld [vmem:[%s230 + $0x550] sm:$0xf]
        %v585 = vld [vmem:[%s230 + $0x554] sm:$0xf]
        %v586 = vld [vmem:[%s230 + $0x558] sm:$0xf]
        %v587 = vld [vmem:[%s230 + $0x55c] sm:$0xf]
        %v588 = vld [vmem:[%s230 + $0x560] sm:$0xf]
        %v589 = vld [vmem:[%s230 + $0x564] sm:$0xf]
        %v590 = vld [vmem:[%s230 + $0x568] sm:$0xf]
        %v591 = vld [vmem:[%s230 + $0x56c] sm:$0xf]
        %v592 = vld [vmem:[%s230 + $0x570] sm:$0xf]
        %v593 = vld [vmem:[%s230 + $0x574] sm:$0xf]
        %v594 = vld [vmem:[%s230 + $0x578] sm:$0xf]
        %v595 = vld [vmem:[%s230 + $0x57c] sm:$0xf]
        %v596 = vld [vmem:[%s230 + $0x580] sm:$0xf]
        %v597 = vld [vmem:[%s230 + $0x584] sm:$0xf]
        %v598 = vld [vmem:[%s230 + $0x588] sm:$0xf]
        %v599 = vld [vmem:[%s230 + $0x58c] sm:$0xf]
        %v600 = vld [vmem:[%s230 + $0x590] sm:$0xf]
        %v601 = vld [vmem:[%s230 + $0x594] sm:$0xf]
        %v602 = vld [vmem:[%s230 + $0x598] sm:$0xf]
        %v603 = vld [vmem:[%s230 + $0x59c] sm:$0xf]
        %v604 = vld [vmem:[%s230 + $0x5a0] sm:$0xf]
        %v605 = vld [vmem:[%s230 + $0x5a4] sm:$0xf]
        %v606 = vld [vmem:[%s230 + $0x5a8] sm:$0xf]
        %v607 = vld [vmem:[%s230 + $0x5ac] sm:$0xf]
        %v608 = vld [vmem:[%s230 + $0x5b0] sm:$0xf]
        %v609 = vld [vmem:[%s230 + $0x5b4] sm:$0xf]
        %v610 = vld [vmem:[%s230 + $0x5b8] sm:$0xf]
        %v611 = vld [vmem:[%s230 + $0x5bc] sm:$0xf]
        %v612 = vld [vmem:[%s230 + $0x5c0] sm:$0xf]
        %v613 = vld [vmem:[%s230 + $0x5c4] sm:$0xf]
        %v614 = vld [vmem:[%s230 + $0x5c8] sm:$0xf]
        %v615 = vld [vmem:[%s230 + $0x5cc] sm:$0xf]
        %v616 = vld [vmem:[%s230 + $0x5d0] sm:$0xf]
        %v617 = vld [vmem:[%s230 + $0x5d4] sm:$0xf]
        %v618 = vld [vmem:[%s230 + $0x5d8] sm:$0xf]
        %v619 = vld [vmem:[%s230 + $0x5dc] sm:$0xf]
        %v620 = vld [vmem:[%s230 + $0x5e0] sm:$0xf]
        %v621 = vld [vmem:[%s230 + $0x5e4] sm:$0xf]
        %v622 = vld [vmem:[%s230 + $0x5e8] sm:$0xf]
        %v623 = vld [vmem:[%s230 + $0x5ec] sm:$0xf]
        %v624 = vld [vmem:[%s230 + $0x5f0] sm:$0xf]
        %v625 = vld [vmem:[%s230 + $0x5f4] sm:$0xf]
        %v626 = vld [vmem:[%s230 + $0x5f8] sm:$0xf]
        %v627 = vld [vmem:[%s230 + $0x5fc] sm:$0xf]
        %v628 = vld [vmem:[%s230 + $0x600] sm:$0xf]
        %v629 = vld [vmem:[%s230 + $0x604] sm:$0xf]
        %v630 = vld [vmem:[%s230 + $0x608] sm:$0xf]
        %v631 = vld [vmem:[%s230 + $0x60c] sm:$0xf]
        %v632 = vld [vmem:[%s230 + $0x610] sm:$0xf]
        %v633 = vld [vmem:[%s230 + $0x614] sm:$0xf]
        %v634 = vld [vmem:[%s230 + $0x618] sm:$0xf]
        %v635 = vld [vmem:[%s230 + $0x61c] sm:$0xf]
        %v636 = vld [vmem:[%s230 + $0x620] sm:$0xf]
        %v637 = vld [vmem:[%s230 + $0x624] sm:$0xf]
        %v638 = vld [vmem:[%s230 + $0x628] sm:$0xf]
        %v639 = vld [vmem:[%s230 + $0x62c] sm:$0xf]
        %v640 = vld [vmem:[%s230 + $0x630] sm:$0xf]
        %v641 = vld [vmem:[%s230 + $0x634] sm:$0xf]
        %v642 = vld [vmem:[%s230 + $0x638] sm:$0xf]
        %v643 = vld [vmem:[%s230 + $0x63c] sm:$0xf]
        %v644 = vld [vmem:[%s230 + $0x640] sm:$0xf]
        %v645 = vld [vmem:[%s230 + $0x644] sm:$0xf]
        %v646 = vld [vmem:[%s230 + $0x648] sm:$0xf]
        %v647 = vld [vmem:[%s230 + $0x64c] sm:$0xf]
        %v648 = vld [vmem:[%s230 + $0x650] sm:$0xf]
        %v649 = vld [vmem:[%s230 + $0x654] sm:$0xf]
        %v650 = vld [vmem:[%s230 + $0x658] sm:$0xf]
        %v651 = vld [vmem:[%s230 + $0x65c] sm:$0xf]
        %v652 = vld [vmem:[%s230 + $0x660] sm:$0xf]
        %v653 = vld [vmem:[%s230 + $0x664] sm:$0xf]
        %v654 = vld [vmem:[%s230 + $0x668] sm:$0xf]
        %v655 = vld [vmem:[%s230 + $0x66c] sm:$0xf]
        %v656 = vld [vmem:[%s230 + $0x670] sm:$0xf]
        %v657 = vld [vmem:[%s230 + $0x674] sm:$0xf]
        %v658 = vld [vmem:[%s230 + $0x678] sm:$0xf]
        %v659 = vld [vmem:[%s230 + $0x67c] sm:$0xf]
        %v660 = vld [vmem:[%s230 + $0x680] sm:$0xf]
        %v661 = vld [vmem:[%s230 + $0x684] sm:$0xf]
        %v662 = vld [vmem:[%s230 + $0x688] sm:$0xf]
        %v663 = vld [vmem:[%s230 + $0x68c] sm:$0xf]
        %v664 = vld [vmem:[%s230 + $0x690] sm:$0xf]
        %v665 = vld [vmem:[%s230 + $0x694] sm:$0xf]
        %v666 = vld [vmem:[%s230 + $0x698] sm:$0xf]
        %v667 = vld [vmem:[%s230 + $0x69c] sm:$0xf]
        %v668 = vld [vmem:[%s230 + $0x6a0] sm:$0xf]
        %v669 = vld [vmem:[%s230 + $0x6a4] sm:$0xf]
        %v670 = vld [vmem:[%s230 + $0x6a8] sm:$0xf]
        %v671 = vld [vmem:[%s230 + $0x6ac] sm:$0xf]
        %v672 = vld [vmem:[%s230 + $0x6b0] sm:$0xf]
        %v673 = vld [vmem:[%s230 + $0x6b4] sm:$0xf]
        %v674 = vld [vmem:[%s230 + $0x6b8] sm:$0xf]
        %v675 = vld [vmem:[%s230 + $0x6bc] sm:$0xf]
        %v676 = vld [vmem:[%s230 + $0x6c0] sm:$0xf]
        %v677 = vld [vmem:[%s230 + $0x6c4] sm:$0xf]
        %v678 = vld [vmem:[%s230 + $0x6c8] sm:$0xf]
        %v679 = vld [vmem:[%s230 + $0x6cc] sm:$0xf]
        %v680 = vld [vmem:[%s230 + $0x6d0] sm:$0xf]
        %v681 = vld [vmem:[%s230 + $0x6d4] sm:$0xf]
        %v682 = vld [vmem:[%s230 + $0x6d8] sm:$0xf]
        %v683 = vld [vmem:[%s230 + $0x6dc] sm:$0xf]
        %v684 = vld [vmem:[%s230 + $0x6e0] sm:$0xf]
        %v685 = vld [vmem:[%s230 + $0x6e4] sm:$0xf]
        %v686 = vld [vmem:[%s230 + $0x6e8] sm:$0xf]
        %v687 = vld [vmem:[%s230 + $0x6ec] sm:$0xf]
        %v688 = vld [vmem:[%s230 + $0x6f0] sm:$0xf]
        %v689 = vld [vmem:[%s230 + $0x6f4] sm:$0xf]
        %v690 = vld [vmem:[%s230 + $0x6f8] sm:$0xf]
        %v691 = vld [vmem:[%s230 + $0x6fc] sm:$0xf]
        %v692 = vld [vmem:[%s230 + $0x700] sm:$0xf]
        %v693 = vld [vmem:[%s230 + $0x704] sm:$0xf]
        %v694 = vld [vmem:[%s230 + $0x708] sm:$0xf]
        %v695 = vld [vmem:[%s230 + $0x70c] sm:$0xf]
        %v696 = vld [vmem:[%s230 + $0x710] sm:$0xf]
        %v697 = vld [vmem:[%s230 + $0x714] sm:$0xf]
        %v698 = vld [vmem:[%s230 + $0x718] sm:$0xf]
        %v699 = vld [vmem:[%s230 + $0x71c] sm:$0xf]
        %v700 = vld [vmem:[%s230 + $0x720] sm:$0xf]
        %v701 = vld [vmem:[%s230 + $0x724] sm:$0xf]
        %v702 = vld [vmem:[%s230 + $0x728] sm:$0xf]
        %v703 = vld [vmem:[%s230 + $0x72c] sm:$0xf]
        %v704 = vld [vmem:[%s230 + $0x730] sm:$0xf]
        %v705 = vld [vmem:[%s230 + $0x734] sm:$0xf]
        %v706 = vld [vmem:[%s230 + $0x738] sm:$0xf]
        %v707 = vld [vmem:[%s230 + $0x73c] sm:$0xf]
        %v708 = vld [vmem:[%s230 + $0x740] sm:$0xf]
        %v709 = vld [vmem:[%s230 + $0x744] sm:$0xf]
        %v710 = vld [vmem:[%s230 + $0x748] sm:$0xf]
        %v711 = vld [vmem:[%s230 + $0x74c] sm:$0xf]
        %v712 = vld [vmem:[%s230 + $0x750] sm:$0xf]
        %v713 = vld [vmem:[%s230 + $0x754] sm:$0xf]
        %v714 = vld [vmem:[%s230 + $0x758] sm:$0xf]
        %v715 = vld [vmem:[%s230 + $0x75c] sm:$0xf]
        %v716 = vld [vmem:[%s230 + $0x760] sm:$0xf]
        %v717 = vld [vmem:[%s230 + $0x764] sm:$0xf]
        %v718 = vld [vmem:[%s230 + $0x768] sm:$0xf]
        %v719 = vld [vmem:[%s230 + $0x76c] sm:$0xf]
        %v720 = vld [vmem:[%s230 + $0x770] sm:$0xf]
        %v721 = vld [vmem:[%s230 + $0x774] sm:$0xf]
        %v722 = vld [vmem:[%s230 + $0x778] sm:$0xf]
        %v723 = vld [vmem:[%s230 + $0x77c] sm:$0xf]
        %v724 = vld [vmem:[%s230 + $0x780] sm:$0xf]
        %v725 = vld [vmem:[%s230 + $0x784] sm:$0xf]
        %v726 = vld [vmem:[%s230 + $0x788] sm:$0xf]
        %v727 = vld [vmem:[%s230 + $0x78c] sm:$0xf]
        %v728 = vld [vmem:[%s230 + $0x790] sm:$0xf]
        %v729 = vld [vmem:[%s230 + $0x794] sm:$0xf]
        %v730 = vld [vmem:[%s230 + $0x798] sm:$0xf]
        %v731 = vld [vmem:[%s230 + $0x79c] sm:$0xf]
        %v732 = vld [vmem:[%s230 + $0x7a0] sm:$0xf]
        %v733 = vld [vmem:[%s230 + $0x7a4] sm:$0xf]
        %v734 = vld [vmem:[%s230 + $0x7a8] sm:$0xf]
        %v735 = vld [vmem:[%s230 + $0x7ac] sm:$0xf]
        %v736 = vld [vmem:[%s230 + $0x7b0] sm:$0xf]
        %v737 = vld [vmem:[%s230 + $0x7b4] sm:$0xf]
        %v738 = vld [vmem:[%s230 + $0x7b8] sm:$0xf]
        %v739 = vld [vmem:[%s230 + $0x7bc] sm:$0xf]
        %v740 = vld [vmem:[%s230 + $0x7c0] sm:$0xf]
        %v741 = vld [vmem:[%s230 + $0x7c4] sm:$0xf]
        %v742 = vld [vmem:[%s230 + $0x7c8] sm:$0xf]
        %v743 = vld [vmem:[%s230 + $0x7cc] sm:$0xf]
        %v744 = vld [vmem:[%s230 + $0x7d0] sm:$0xf]
        %v745 = vld [vmem:[%s230 + $0x7d4] sm:$0xf]
        %v746 = vld [vmem:[%s230 + $0x7d8] sm:$0xf]
        %v747 = vld [vmem:[%s230 + $0x7dc] sm:$0xf]
        %v748 = vld [vmem:[%s230 + $0x7e0] sm:$0xf]
        %v749 = vld [vmem:[%s230 + $0x7e4] sm:$0xf]
        %v750 = vld [vmem:[%s230 + $0x7e8] sm:$0xf]
        %v751 = vld [vmem:[%s230 + $0x7ec] sm:$0xf]
        %v752 = vld [vmem:[%s230 + $0x7f0] sm:$0xf]
        %v753 = vld [vmem:[%s230 + $0x7f4] sm:$0xf]
        %v754 = vld [vmem:[%s230 + $0x7f8] sm:$0xf]
        %v755 = vld [vmem:[%s230 + $0x7fc] sm:$0xf]
        %v756 = vld [vmem:[%s230 + $0x800] sm:$0xf]
        %v757 = vld [vmem:[%s230 + $0x804] sm:$0xf]
        %v758 = vld [vmem:[%s230 + $0x808] sm:$0xf]
        %v759 = vld [vmem:[%s230 + $0x80c] sm:$0xf]
        %v760 = vld [vmem:[%s230 + $0x810] sm:$0xf]
        %v761 = vld [vmem:[%s230 + $0x814] sm:$0xf]
        %v762 = vld [vmem:[%s230 + $0x818] sm:$0xf]
        %v763 = vld [vmem:[%s230 + $0x81c] sm:$0xf]
        %v764 = vld [vmem:[%s230 + $0x820] sm:$0xf]
        %v765 = vld [vmem:[%s230 + $0x824] sm:$0xf]
        %v766 = vld [vmem:[%s230 + $0x828] sm:$0xf]
        %v767 = vld [vmem:[%s230 + $0x82c] sm:$0xf]
        %v768 = vld [vmem:[%s230 + $0x830] sm:$0xf]
        %v769 = vld [vmem:[%s230 + $0x834] sm:$0xf]
        %v770 = vld [vmem:[%s230 + $0x838] sm:$0xf]
        %v771 = vld [vmem:[%s230 + $0x83c] sm:$0xf]
        %v772 = vld [vmem:[%s230 + $0x840] sm:$0xf]
        %v773 = vld [vmem:[%s230 + $0x844] sm:$0xf]
        %v774 = vld [vmem:[%s230 + $0x848] sm:$0xf]
        %v775 = vld [vmem:[%s230 + $0x84c] sm:$0xf]
        %v776 = vld [vmem:[%s230 + $0x850] sm:$0xf]
        %v777 = vld [vmem:[%s230 + $0x854] sm:$0xf]
        %v778 = vld [vmem:[%s230 + $0x858] sm:$0xf]
        %v779 = vld [vmem:[%s230 + $0x85c] sm:$0xf]
        %v780 = vld [vmem:[%s230 + $0x860] sm:$0xf]
        %v781 = vld [vmem:[%s230 + $0x864] sm:$0xf]
        %v782 = vld [vmem:[%s230 + $0x868] sm:$0xf]
        %v783 = vld [vmem:[%s230 + $0x86c] sm:$0xf]
        %v784 = vld [vmem:[%s230 + $0x870] sm:$0xf]
        %v785 = vld [vmem:[%s230 + $0x874] sm:$0xf]
        %v786 = vld [vmem:[%s230 + $0x878] sm:$0xf]
        %v787 = vld [vmem:[%s230 + $0x87c] sm:$0xf]
        %v793 = vcombine.high %v239, %v239
        %v795 = vunpack.c.l.s4 1966171168
        %v796 = vunpack.c.0.s8 %v795
        %v797 = vlaneseq
        %v798 = vshrl.u32 %v797, 7
        %v799 = vsub.s32 %v796, %v798
        %v800 = vrot.slane %v239, %v799
        %v802 = vunpack.c.l.s4 1966171168
        %v803 = vunpack.c.0.s8 %v802
        %v804 = vlaneseq
        %v805 = vshrl.u32 %v804, 7
        %v806 = vsub.s32 %v803, %v805
        %v807 = vrot.slane %v793, %v806
        %v808 = vcombine.high %v800, %v800
        %v809 = vcombine.high %v807, %v807
        %v811 = vunpack.c.l.s4 1966171168
        %v812 = vunpack.c.0.s8 %v811
        %v813 = vlaneseq
        %v814 = vshrl.u32 %v813, 7
        %v815 = vsub.s32 %v812, %v814
        %v816 = vrot.slane %v800, %v815
        %v818 = vunpack.c.l.s4 1966171168
        %v819 = vunpack.c.0.s8 %v818
        %v820 = vlaneseq
        %v821 = vshrl.u32 %v820, 7
        %v822 = vsub.s32 %v819, %v821
        %v823 = vrot.slane %v807, %v822
        %v825 = vunpack.c.l.s4 1966171168
        %v826 = vunpack.c.0.s8 %v825
        %v827 = vlaneseq
        %v828 = vshrl.u32 %v827, 7
        %v829 = vsub.s32 %v826, %v828
        %v830 = vrot.slane %v808, %v829
        %v832 = vunpack.c.l.s4 1966171168
        %v833 = vunpack.c.0.s8 %v832
        %v834 = vlaneseq
        %v835 = vshrl.u32 %v834, 7
        %v836 = vsub.s32 %v833, %v835
        %v837 = vrot.slane %v809, %v836
        %v838 = vcombine.high %v816, %v816
        %v839 = vcombine.high %v823, %v823
        %v840 = vcombine.high %v830, %v830
        %v841 = vcombine.high %v837, %v837
        %v842 = vcombine.high %v240, %v240
        %v844 = vunpack.c.l.s4 1966171168
        %v845 = vunpack.c.0.s8 %v844
        %v846 = vlaneseq
        %v847 = vshrl.u32 %v846, 7
        %v848 = vsub.s32 %v845, %v847
        %v849 = vrot.slane %v240, %v848
        %v851 = vunpack.c.l.s4 1966171168
        %v852 = vunpack.c.0.s8 %v851
        %v853 = vlaneseq
        %v854 = vshrl.u32 %v853, 7
        %v855 = vsub.s32 %v852, %v854
        %v856 = vrot.slane %v842, %v855
        %v857 = vcombine.high %v849, %v849
        %v858 = vcombine.high %v856, %v856
        %v860 = vunpack.c.l.s4 1966171168
        %v861 = vunpack.c.0.s8 %v860
        %v862 = vlaneseq
        %v863 = vshrl.u32 %v862, 7
        %v864 = vsub.s32 %v861, %v863
        %v865 = vrot.slane %v849, %v864
        %v867 = vunpack.c.l.s4 1966171168
        %v868 = vunpack.c.0.s8 %v867
        %v869 = vlaneseq
        %v870 = vshrl.u32 %v869, 7
        %v871 = vsub.s32 %v868, %v870
        %v872 = vrot.slane %v856, %v871
        %v874 = vunpack.c.l.s4 1966171168
        %v875 = vunpack.c.0.s8 %v874
        %v876 = vlaneseq
        %v877 = vshrl.u32 %v876, 7
        %v878 = vsub.s32 %v875, %v877
        %v879 = vrot.slane %v857, %v878
        %v881 = vunpack.c.l.s4 1966171168
        %v882 = vunpack.c.0.s8 %v881
        %v883 = vlaneseq
        %v884 = vshrl.u32 %v883, 7
        %v885 = vsub.s32 %v882, %v884
        %v886 = vrot.slane %v858, %v885
        %v887 = vcombine.high %v865, %v865
        %v888 = vcombine.high %v872, %v872
        %v889 = vcombine.high %v879, %v879
        %v890 = vcombine.high %v886, %v886
        %v891 = vcombine.high %v241, %v241
        %v893 = vunpack.c.l.s4 1966171168
        %v894 = vunpack.c.0.s8 %v893
        %v895 = vlaneseq
        %v896 = vshrl.u32 %v895, 7
        %v897 = vsub.s32 %v894, %v896
        %v898 = vrot.slane %v241, %v897
        %v900 = vunpack.c.l.s4 1966171168
        %v901 = vunpack.c.0.s8 %v900
        %v902 = vlaneseq
        %v903 = vshrl.u32 %v902, 7
        %v904 = vsub.s32 %v901, %v903
        %v905 = vrot.slane %v891, %v904
        %v906 = vcombine.high %v898, %v898
        %v907 = vcombine.high %v905, %v905
        %v909 = vunpack.c.l.s4 1966171168
        %v910 = vunpack.c.0.s8 %v909
        %v911 = vlaneseq
        %v912 = vshrl.u32 %v911, 7
        %v913 = vsub.s32 %v910, %v912
        %v914 = vrot.slane %v898, %v913
        %v916 = vunpack.c.l.s4 1966171168
        %v917 = vunpack.c.0.s8 %v916
        %v918 = vlaneseq
        %v919 = vshrl.u32 %v918, 7
        %v920 = vsub.s32 %v917, %v919
        %v921 = vrot.slane %v905, %v920
        %v923 = vunpack.c.l.s4 1966171168
        %v924 = vunpack.c.0.s8 %v923
        %v925 = vlaneseq
        %v926 = vshrl.u32 %v925, 7
        %v927 = vsub.s32 %v924, %v926
        %v928 = vrot.slane %v906, %v927
        %v930 = vunpack.c.l.s4 1966171168
        %v931 = vunpack.c.0.s8 %v930
        %v932 = vlaneseq
        %v933 = vshrl.u32 %v932, 7
        %v934 = vsub.s32 %v931, %v933
        %v935 = vrot.slane %v907, %v934
        %v936 = vcombine.high %v914, %v914
        %v937 = vcombine.high %v921, %v921
        %v938 = vcombine.high %v928, %v928
        %v939 = vcombine.high %v935, %v935
        %v940 = vcombine.high %v242, %v242
        %v942 = vunpack.c.l.s4 1966171168
        %v943 = vunpack.c.0.s8 %v942
        %v944 = vlaneseq
        %v945 = vshrl.u32 %v944, 7
        %v946 = vsub.s32 %v943, %v945
        %v947 = vrot.slane %v242, %v946
        %v949 = vunpack.c.l.s4 1966171168
        %v950 = vunpack.c.0.s8 %v949
        %v951 = vlaneseq
        %v952 = vshrl.u32 %v951, 7
        %v953 = vsub.s32 %v950, %v952
        %v954 = vrot.slane %v940, %v953
        %v955 = vcombine.high %v947, %v947
        %v956 = vcombine.high %v954, %v954
        %v958 = vunpack.c.l.s4 1966171168
        %v959 = vunpack.c.0.s8 %v958
        %v960 = vlaneseq
        %v961 = vshrl.u32 %v960, 7
        %v962 = vsub.s32 %v959, %v961
        %v963 = vrot.slane %v947, %v962
        %v965 = vunpack.c.l.s4 1966171168
        %v966 = vunpack.c.0.s8 %v965
        %v967 = vlaneseq
        %v968 = vshrl.u32 %v967, 7
        %v969 = vsub.s32 %v966, %v968
        %v970 = vrot.slane %v954, %v969
        %v972 = vunpack.c.l.s4 1966171168
        %v973 = vunpack.c.0.s8 %v972
        %v974 = vlaneseq
        %v975 = vshrl.u32 %v974, 7
        %v976 = vsub.s32 %v973, %v975
        %v977 = vrot.slane %v955, %v976
        %v979 = vunpack.c.l.s4 1966171168
        %v980 = vunpack.c.0.s8 %v979
        %v981 = vlaneseq
        %v982 = vshrl.u32 %v981, 7
        %v983 = vsub.s32 %v980, %v982
        %v984 = vrot.slane %v956, %v983
        %v985 = vcombine.high %v963, %v963
        %v986 = vcombine.high %v970, %v970
        %v987 = vcombine.high %v977, %v977
        %v988 = vcombine.high %v984, %v984
        %v990 = vunpack.c.l.s4 1966171168
        %v991 = vunpack.c.0.s8 %v990
        %v992 = vlaneseq
        %v993 = vshrl.u32 %v992, 7
        %v994 = vsub.s32 %v991, %v993
        %v995 = vrot.slane %v243, %v994
        %v996 = vcombine.high %v995, %v995
        %v998 = vunpack.c.l.s4 1966171168
        %v999 = vunpack.c.0.s8 %v998
        %v1000 = vlaneseq
        %v1001 = vshrl.u32 %v1000, 7
        %v1002 = vsub.s32 %v999, %v1001
        %v1003 = vrot.slane %v995, %v1002
        %v1005 = vunpack.c.l.s4 1966171168
        %v1006 = vunpack.c.0.s8 %v1005
        %v1007 = vlaneseq
        %v1008 = vshrl.u32 %v1007, 7
        %v1009 = vsub.s32 %v1006, %v1008
        %v1010 = vrot.slane %v996, %v1009
        %v1589 = vunpack.c.l.b16 %v244
        %v1590 = vunpack.c.l.b16 %v245
        %v1591 = vunpack.c.l.b16 %v246
        %v1592 = vunpack.c.l.b16 %v247
        %v1593 = vunpack.c.l.b16 %v248
        %v1594 = vunpack.c.l.b16 %v249
        %v1595 = vunpack.c.l.b16 %v250
        %v1596 = vunpack.c.l.b16 %v251
        %v1597 = vunpack.c.l.b16 %v252
        %v1598 = vunpack.c.l.b16 %v253
        %v1599 = vunpack.c.l.b16 %v254
        %v1600 = vunpack.c.l.b16 %v255
        %v1601 = vunpack.c.l.b16 %v256
        %v1602 = vunpack.c.l.b16 %v257
        %v1603 = vunpack.c.l.b16 %v258
        %v1604 = vunpack.c.l.b16 %v259
        %v1605 = vunpack.c.l.b16 %v260
        %v1606 = vunpack.c.l.b16 %v261
        %v1607 = vunpack.c.l.b16 %v262
        %v1608 = vunpack.c.l.b16 %v263
        %v1609 = vunpack.c.l.b16 %v264
        %v1610 = vunpack.c.l.b16 %v265
        %v1611 = vunpack.c.l.b16 %v266
        %v1612 = vunpack.c.l.b16 %v267
        %v1613 = vunpack.c.l.b16 %v268
        %v1614 = vunpack.c.l.b16 %v269
        %v1615 = vunpack.c.l.b16 %v270
        %v1616 = vunpack.c.l.b16 %v271
        %v1617 = vunpack.c.l.b16 %v272
        %v1618 = vunpack.c.l.b16 %v273
        %v1619 = vunpack.c.l.b16 %v274
        %v1620 = vunpack.c.l.b16 %v275
        %v1621 = vunpack.c.l.b16 %v276
        %v1622 = vunpack.c.l.b16 %v277
        %v1623 = vunpack.c.l.b16 %v278
        %v1624 = vunpack.c.l.b16 %v279
        %v1625 = vunpack.c.l.b16 %v280
        %v1626 = vunpack.c.l.b16 %v281
        %v1627 = vunpack.c.l.b16 %v282
        %v1628 = vunpack.c.l.b16 %v283
        %v1629 = vunpack.c.l.b16 %v284
        %v1630 = vunpack.c.l.b16 %v285
        %v1631 = vunpack.c.l.b16 %v286
        %v1632 = vunpack.c.l.b16 %v287
        %v1633 = vunpack.c.l.b16 %v288
        %v1634 = vunpack.c.l.b16 %v289
        %v1635 = vunpack.c.l.b16 %v290
        %v1636 = vunpack.c.l.b16 %v291
        %v1637 = vunpack.c.l.b16 %v292
        %v1638 = vunpack.c.l.b16 %v293
        %v1639 = vunpack.c.l.b16 %v294
        %v1640 = vunpack.c.l.b16 %v295
        %v1641 = vunpack.c.l.b16 %v296
        %v1642 = vunpack.c.l.b16 %v297
        %v1643 = vunpack.c.l.b16 %v298
        %v1644 = vunpack.c.l.b16 %v299
        %v1645 = vunpack.c.l.b16 %v300
        %v1646 = vunpack.c.l.b16 %v301
        %v1647 = vunpack.c.l.b16 %v302
        %v1648 = vunpack.c.l.b16 %v303
        %v1649 = vunpack.c.l.b16 %v304
        %v1650 = vunpack.c.l.b16 %v305
        %v1651 = vunpack.c.l.b16 %v306
        %v1652 = vunpack.c.l.b16 %v307
        %v1653 = vunpack.c.l.b16 %v308
        %v1654 = vunpack.c.l.b16 %v309
        %v1655 = vunpack.c.l.b16 %v310
        %v1656 = vunpack.c.l.b16 %v311
        %v1657 = vunpack.c.l.b16 %v312
        %v1658 = vunpack.c.l.b16 %v313
        %v1659 = vunpack.c.l.b16 %v314
        %v1660 = vunpack.c.l.b16 %v315
        %v1661 = vunpack.c.l.b16 %v316
        %v1662 = vunpack.c.l.b16 %v317
        %v1663 = vunpack.c.l.b16 %v318
        %v1664 = vunpack.c.l.b16 %v319
        %v1665 = vunpack.c.l.b16 %v320
        %v1666 = vunpack.c.l.b16 %v321
        %v1667 = vunpack.c.l.b16 %v322
        %v1668 = vunpack.c.l.b16 %v323
        %v1669 = vunpack.c.l.b16 %v324
        %v1670 = vunpack.c.l.b16 %v325
        %v1671 = vunpack.c.l.b16 %v326
        %v1672 = vunpack.c.l.b16 %v327
        %v1673 = vunpack.c.l.b16 %v328
        %v1674 = vunpack.c.l.b16 %v329
        %v1675 = vunpack.c.l.b16 %v330
        %v1676 = vunpack.c.l.b16 %v331
        %v1677 = vunpack.c.l.b16 %v332
        %v1678 = vunpack.c.l.b16 %v333
        %v1679 = vunpack.c.l.b16 %v334
        %v1680 = vunpack.c.l.b16 %v335
        %v1681 = vunpack.c.l.b16 %v336
        %v1682 = vunpack.c.l.b16 %v337
        %v1683 = vunpack.c.l.b16 %v338
        %v1684 = vunpack.c.l.b16 %v339
        %v1685 = vunpack.c.l.b16 %v340
        %v1686 = vunpack.c.l.b16 %v341
        %v1687 = vunpack.c.l.b16 %v342
        %v1688 = vunpack.c.l.b16 %v343
        %v1689 = vunpack.c.l.b16 %v344
        %v1690 = vunpack.c.l.b16 %v345
        %v1691 = vunpack.c.l.b16 %v346
        %v1692 = vunpack.c.l.b16 %v347
        %v1693 = vunpack.c.l.b16 %v348
        %v1694 = vunpack.c.l.b16 %v349
        %v1695 = vunpack.c.l.b16 %v350
        %v1696 = vunpack.c.l.b16 %v351
        %v1697 = vunpack.c.l.b16 %v352
        %v1698 = vunpack.c.l.b16 %v353
        %v1699 = vunpack.c.l.b16 %v354
        %v1700 = vunpack.c.l.b16 %v355
        %v1701 = vunpack.c.l.b16 %v356
        %v1702 = vunpack.c.l.b16 %v357
        %v1703 = vunpack.c.l.b16 %v358
        %v1704 = vunpack.c.l.b16 %v359
        %v1705 = vunpack.c.l.b16 %v360
        %v1706 = vunpack.c.l.b16 %v361
        %v1707 = vunpack.c.l.b16 %v362
        %v1708 = vunpack.c.l.b16 %v363
        %v1709 = vunpack.c.l.b16 %v364
        %v1710 = vunpack.c.l.b16 %v365
        %v1711 = vunpack.c.l.b16 %v366
        %v1712 = vunpack.c.l.b16 %v367
        %v1713 = vunpack.c.l.b16 %v368
        %v1714 = vunpack.c.l.b16 %v369
        %v1715 = vunpack.c.l.b16 %v370
        %v1716 = vunpack.c.l.b16 %v371
        %v1717 = vunpack.c.l.b16 %v372
        %v1718 = vunpack.c.l.b16 %v373
        %v1719 = vunpack.c.l.b16 %v374
        %v1720 = vunpack.c.l.b16 %v375
        %v1721 = vunpack.c.l.b16 %v376
        %v1722 = vunpack.c.l.b16 %v377
        %v1723 = vunpack.c.l.b16 %v378
        %v1724 = vunpack.c.l.b16 %v379
        %v1725 = vunpack.c.l.b16 %v380
        %v1726 = vunpack.c.l.b16 %v381
        %v1727 = vunpack.c.l.b16 %v382
        %v1728 = vunpack.c.l.b16 %v383
        %v1729 = vunpack.c.l.b16 %v384
        %v1730 = vunpack.c.l.b16 %v385
        %v1731 = vunpack.c.l.b16 %v386
        %v1732 = vunpack.c.l.b16 %v387
        %v1733 = vunpack.c.l.b16 %v388
        %v1734 = vunpack.c.l.b16 %v389
        %v1735 = vunpack.c.l.b16 %v390
        %v1736 = vunpack.c.l.b16 %v391
        %v1737 = vunpack.c.l.b16 %v392
        %v1738 = vunpack.c.l.b16 %v393
        %v1739 = vunpack.c.l.b16 %v394
        %v1740 = vunpack.c.l.b16 %v395
        %v1741 = vunpack.c.l.b16 %v396
        %v1742 = vunpack.c.l.b16 %v397
        %v1743 = vunpack.c.l.b16 %v398
        %v1744 = vunpack.c.l.b16 %v399
        %v1745 = vunpack.c.l.b16 %v400
        %v1746 = vunpack.c.l.b16 %v401
        %v1747 = vunpack.c.l.b16 %v402
        %v1748 = vunpack.c.l.b16 %v403
        %v1749 = vunpack.c.l.b16 %v404
        %v1750 = vunpack.c.l.b16 %v405
        %v1751 = vunpack.c.l.b16 %v406
        %v1752 = vunpack.c.l.b16 %v407
        %v1753 = vunpack.c.l.b16 %v408
        %v1754 = vunpack.c.l.b16 %v409
        %v1755 = vunpack.c.l.b16 %v410
        %v1756 = vunpack.c.l.b16 %v411
        %v1757 = vunpack.c.l.b16 %v412
        %v1758 = vunpack.c.l.b16 %v413
        %v1759 = vunpack.c.l.b16 %v414
        %v1760 = vunpack.c.l.b16 %v415
        %v1761 = vunpack.c.l.b16 %v416
        %v1762 = vunpack.c.l.b16 %v417
        %v1763 = vunpack.c.l.b16 %v418
        %v1764 = vunpack.c.l.b16 %v419
        %v1765 = vunpack.c.l.b16 %v420
        %v1766 = vunpack.c.l.b16 %v421
        %v1767 = vunpack.c.l.b16 %v422
        %v1768 = vunpack.c.l.b16 %v423
        %v1769 = vunpack.c.l.b16 %v424
        %v1770 = vunpack.c.l.b16 %v425
        %v1771 = vunpack.c.l.b16 %v426
        %v1772 = vunpack.c.l.b16 %v427
        %v1773 = vunpack.c.l.b16 %v428
        %v1774 = vunpack.c.l.b16 %v429
        %v1775 = vunpack.c.l.b16 %v430
        %v1776 = vunpack.c.l.b16 %v431
        %v1777 = vunpack.c.l.b16 %v432
        %v1778 = vunpack.c.l.b16 %v433
        %v1779 = vunpack.c.l.b16 %v434
        %v1780 = vunpack.c.l.b16 %v435
        %v1781 = vunpack.c.l.b16 %v436
        %v1782 = vunpack.c.l.b16 %v437
        %v1783 = vunpack.c.l.b16 %v438
        %v1784 = vunpack.c.l.b16 %v439
        %v1785 = vunpack.c.l.b16 %v440
        %v1786 = vunpack.c.l.b16 %v441
        %v1787 = vunpack.c.l.b16 %v442
        %v1788 = vunpack.c.l.b16 %v443
        %v1789 = vunpack.c.l.b16 %v444
        %v1790 = vunpack.c.l.b16 %v445
        %v1791 = vunpack.c.l.b16 %v446
        %v1792 = vunpack.c.l.b16 %v447
        %v1793 = vunpack.c.l.b16 %v448
        %v1794 = vunpack.c.l.b16 %v449
        %v1795 = vunpack.c.l.b16 %v450
        %v1796 = vunpack.c.l.b16 %v451
        %v1797 = vunpack.c.l.b16 %v452
        %v1798 = vunpack.c.l.b16 %v453
        %v1799 = vunpack.c.l.b16 %v454
        %v1800 = vunpack.c.l.b16 %v455
        %v1801 = vunpack.c.l.b16 %v456
        %v1802 = vunpack.c.l.b16 %v457
        %v1803 = vunpack.c.l.b16 %v458
        %v1804 = vunpack.c.l.b16 %v459
        %v1805 = vunpack.c.l.b16 %v460
        %v1806 = vunpack.c.l.b16 %v461
        %v1807 = vunpack.c.l.b16 %v462
        %v1808 = vunpack.c.l.b16 %v463
        %v1809 = vunpack.c.l.b16 %v464
        %v1810 = vunpack.c.l.b16 %v465
        %v1811 = vunpack.c.l.b16 %v466
        %v1812 = vunpack.c.l.b16 %v467
        %v1813 = vunpack.c.l.b16 %v468
        %v1814 = vunpack.c.l.b16 %v469
        %v1815 = vunpack.c.l.b16 %v470
        %v1816 = vunpack.c.l.b16 %v471
        %v1817 = vunpack.c.l.b16 %v472
        %v1818 = vunpack.c.l.b16 %v473
        %v1819 = vunpack.c.l.b16 %v474
        %v1820 = vunpack.c.l.b16 %v475
        %v1821 = vunpack.c.l.b16 %v476
        %v1822 = vunpack.c.l.b16 %v477
        %v1823 = vunpack.c.l.b16 %v478
        %v1824 = vunpack.c.l.b16 %v479
        %v1825 = vunpack.c.l.b16 %v480
        %v1826 = vunpack.c.l.b16 %v481
        %v1827 = vunpack.c.l.b16 %v482
        %v1828 = vunpack.c.l.b16 %v483
        %v1829 = vunpack.c.l.b16 %v484
        %v1830 = vunpack.c.l.b16 %v485
        %v1831 = vunpack.c.l.b16 %v486
        %v1832 = vunpack.c.l.b16 %v487
        %v1833 = vunpack.c.l.b16 %v488
        %v1834 = vunpack.c.l.b16 %v489
        %v1835 = vunpack.c.l.b16 %v490
        %v1836 = vunpack.c.l.b16 %v491
        %v1837 = vunpack.c.l.b16 %v492
        %v1838 = vunpack.c.l.b16 %v493
        %v1839 = vunpack.c.l.b16 %v494
        %v1840 = vunpack.c.l.b16 %v495
        %v1841 = vunpack.c.l.b16 %v496
        %v1842 = vunpack.c.l.b16 %v497
        %v1843 = vunpack.c.l.b16 %v498
        %v1844 = vunpack.c.l.b16 %v499
        %v1845 = vunpack.c.l.b16 %v500
        %v1846 = vunpack.c.l.b16 %v501
        %v1847 = vunpack.c.l.b16 %v502
        %v1848 = vunpack.c.l.b16 %v503
        %v1849 = vunpack.c.l.b16 %v504
        %v1850 = vunpack.c.l.b16 %v505
        %v1851 = vunpack.c.l.b16 %v506
        %v1852 = vunpack.c.l.b16 %v507
        %v1853 = vunpack.c.l.b16 %v508
        %v1854 = vunpack.c.l.b16 %v509
        %v1855 = vunpack.c.l.b16 %v510
        %v1856 = vunpack.c.l.b16 %v511
        %v1857 = vunpack.c.l.b16 %v512
        %v1858 = vunpack.c.l.b16 %v513
        %v1859 = vunpack.c.l.b16 %v514
        %v1860 = vunpack.c.l.b16 %v515
        %v1861 = vunpack.c.l.b16 %v516
        %v1862 = vunpack.c.l.b16 %v517
        %v1863 = vunpack.c.l.b16 %v518
        %v1864 = vunpack.c.l.b16 %v519
        %v1865 = vunpack.c.l.b16 %v520
        %v1866 = vunpack.c.l.b16 %v521
        %v1867 = vunpack.c.l.b16 %v522
        %v1868 = vunpack.c.l.b16 %v523
        %v1869 = vunpack.c.l.b16 %v524
        %v1870 = vunpack.c.l.b16 %v525
        %v1871 = vunpack.c.l.b16 %v526
        %v1872 = vunpack.c.l.b16 %v527
        %v1873 = vunpack.c.l.b16 %v528
        %v1874 = vunpack.c.l.b16 %v529
        %v1875 = vunpack.c.l.b16 %v530
        %v1876 = vunpack.c.l.b16 %v531
        %v1877 = vunpack.c.l.b16 %v532
        %v1878 = vunpack.c.l.b16 %v533
        %v1879 = vunpack.c.l.b16 %v534
        %v1880 = vunpack.c.l.b16 %v535
        %v1881 = vunpack.c.l.b16 %v536
        %v1882 = vunpack.c.l.b16 %v537
        %v1883 = vunpack.c.l.b16 %v538
        %v1884 = vunpack.c.l.b16 %v539
        %v1885 = vunpack.c.l.b16 %v540
        %v1886 = vunpack.c.l.b16 %v541
        %v1887 = vunpack.c.l.b16 %v542
        %v1888 = vunpack.c.l.b16 %v543
        %v1889 = vunpack.c.l.b16 %v544
        %v1890 = vunpack.c.l.b16 %v545
        %v1891 = vunpack.c.l.b16 %v546
        %v1892 = vunpack.c.l.b16 %v547
        %v1893 = vunpack.c.l.b16 %v548
        %v1894 = vunpack.c.l.b16 %v549
        %v1895 = vunpack.c.l.b16 %v550
        %v1896 = vunpack.c.l.b16 %v551
        %v1897 = vunpack.c.l.b16 %v552
        %v1898 = vunpack.c.l.b16 %v553
        %v1899 = vunpack.c.l.b16 %v554
        %v1900 = vunpack.c.l.b16 %v555
        %v1901 = vunpack.c.l.b16 %v556
        %v1902 = vunpack.c.l.b16 %v557
        %v1903 = vunpack.c.l.b16 %v558
        %v1904 = vunpack.c.l.b16 %v559
        %v1905 = vunpack.c.l.b16 %v560
        %v1906 = vunpack.c.l.b16 %v561
        %v1907 = vunpack.c.l.b16 %v562
        %v1908 = vunpack.c.l.b16 %v563
        %v1909 = vunpack.c.l.b16 %v564
        %v1910 = vunpack.c.l.b16 %v565
        %v1911 = vunpack.c.l.b16 %v566
        %v1912 = vunpack.c.l.b16 %v567
        %v1913 = vunpack.c.l.b16 %v568
        %v1914 = vunpack.c.l.b16 %v569
        %v1915 = vunpack.c.l.b16 %v570
        %v1916 = vunpack.c.l.b16 %v571
        %v1917 = vunpack.c.l.b16 %v572
        %v1918 = vunpack.c.l.b16 %v573
        %v1919 = vunpack.c.l.b16 %v574
        %v1920 = vunpack.c.l.b16 %v575
        %v1921 = vunpack.c.l.b16 %v576
        %v1922 = vunpack.c.l.b16 %v577
        %v1923 = vunpack.c.l.b16 %v578
        %v1924 = vunpack.c.l.b16 %v579
        %v1925 = vunpack.c.l.b16 %v580
        %v1926 = vunpack.c.l.b16 %v581
        %v1927 = vunpack.c.l.b16 %v582
        %v1928 = vunpack.c.l.b16 %v583
        %v1929 = vunpack.c.l.b16 %v584
        %v1930 = vunpack.c.l.b16 %v585
        %v1931 = vunpack.c.l.b16 %v586
        %v1932 = vunpack.c.l.b16 %v587
        %v1933 = vunpack.c.l.b16 %v588
        %v1934 = vunpack.c.l.b16 %v589
        %v1935 = vunpack.c.l.b16 %v590
        %v1936 = vunpack.c.l.b16 %v591
        %v1937 = vunpack.c.l.b16 %v592
        %v1938 = vunpack.c.l.b16 %v593
        %v1939 = vunpack.c.l.b16 %v594
        %v1940 = vunpack.c.l.b16 %v595
        %v1941 = vunpack.c.l.b16 %v596
        %v1942 = vunpack.c.l.b16 %v597
        %v1943 = vunpack.c.l.b16 %v598
        %v1944 = vunpack.c.l.b16 %v599
        %v1945 = vunpack.c.l.b16 %v600
        %v1946 = vunpack.c.l.b16 %v601
        %v1947 = vunpack.c.l.b16 %v602
        %v1948 = vunpack.c.l.b16 %v603
        %v1949 = vunpack.c.l.b16 %v604
        %v1950 = vunpack.c.l.b16 %v605
        %v1951 = vunpack.c.l.b16 %v606
        %v1952 = vunpack.c.l.b16 %v607
        %v1953 = vunpack.c.l.b16 %v608
        %v1954 = vunpack.c.l.b16 %v609
        %v1955 = vunpack.c.l.b16 %v610
        %v1956 = vunpack.c.l.b16 %v611
        %v1957 = vunpack.c.l.b16 %v612
        %v1958 = vunpack.c.l.b16 %v613
        %v1959 = vunpack.c.l.b16 %v614
        %v1960 = vunpack.c.l.b16 %v615
        %v1961 = vunpack.c.l.b16 %v616
        %v1962 = vunpack.c.l.b16 %v617
        %v1963 = vunpack.c.l.b16 %v618
        %v1964 = vunpack.c.l.b16 %v619
        %v1965 = vunpack.c.l.b16 %v620
        %v1966 = vunpack.c.l.b16 %v621
        %v1967 = vunpack.c.l.b16 %v622
        %v1968 = vunpack.c.l.b16 %v623
        %v1969 = vunpack.c.l.b16 %v624
        %v1970 = vunpack.c.l.b16 %v625
        %v1971 = vunpack.c.l.b16 %v626
        %v1972 = vunpack.c.l.b16 %v627
        %v1973 = vunpack.c.l.b16 %v628
        %v1974 = vunpack.c.l.b16 %v629
        %v1975 = vunpack.c.l.b16 %v630
        %v1976 = vunpack.c.l.b16 %v631
        %v1977 = vunpack.c.l.b16 %v632
        %v1978 = vunpack.c.l.b16 %v633
        %v1979 = vunpack.c.l.b16 %v634
        %v1980 = vunpack.c.l.b16 %v635
        %v1981 = vunpack.c.l.b16 %v636
        %v1982 = vunpack.c.l.b16 %v637
        %v1983 = vunpack.c.l.b16 %v638
        %v1984 = vunpack.c.l.b16 %v639
        %v1985 = vunpack.c.l.b16 %v640
        %v1986 = vunpack.c.l.b16 %v641
        %v1987 = vunpack.c.l.b16 %v642
        %v1988 = vunpack.c.l.b16 %v643
        %v1989 = vunpack.c.l.b16 %v644
        %v1990 = vunpack.c.l.b16 %v645
        %v1991 = vunpack.c.l.b16 %v646
        %v1992 = vunpack.c.l.b16 %v647
        %v1993 = vunpack.c.l.b16 %v648
        %v1994 = vunpack.c.l.b16 %v649
        %v1995 = vunpack.c.l.b16 %v650
        %v1996 = vunpack.c.l.b16 %v651
        %v1997 = vunpack.c.l.b16 %v652
        %v1998 = vunpack.c.l.b16 %v653
        %v1999 = vunpack.c.l.b16 %v654
        %v2000 = vunpack.c.l.b16 %v655
        %v2001 = vunpack.c.l.b16 %v656
        %v2002 = vunpack.c.l.b16 %v657
        %v2003 = vunpack.c.l.b16 %v658
        %v2004 = vunpack.c.l.b16 %v659
        %v2005 = vunpack.c.l.b16 %v660
        %v2006 = vunpack.c.l.b16 %v661
        %v2007 = vunpack.c.l.b16 %v662
        %v2008 = vunpack.c.l.b16 %v663
        %v2009 = vunpack.c.l.b16 %v664
        %v2010 = vunpack.c.l.b16 %v665
        %v2011 = vunpack.c.l.b16 %v666
        %v2012 = vunpack.c.l.b16 %v667
        %v2013 = vunpack.c.l.b16 %v668
        %v2014 = vunpack.c.l.b16 %v669
        %v2015 = vunpack.c.l.b16 %v670
        %v2016 = vunpack.c.l.b16 %v671
        %v2017 = vunpack.c.l.b16 %v672
        %v2018 = vunpack.c.l.b16 %v673
        %v2019 = vunpack.c.l.b16 %v674
        %v2020 = vunpack.c.l.b16 %v675
        %v2021 = vunpack.c.l.b16 %v676
        %v2022 = vunpack.c.l.b16 %v677
        %v2023 = vunpack.c.l.b16 %v678
        %v2024 = vunpack.c.l.b16 %v679
        %v2025 = vunpack.c.l.b16 %v680
        %v2026 = vunpack.c.l.b16 %v681
        %v2027 = vunpack.c.l.b16 %v682
        %v2028 = vunpack.c.l.b16 %v683
        %v2029 = vunpack.c.l.b16 %v684
        %v2030 = vunpack.c.l.b16 %v685
        %v2031 = vunpack.c.l.b16 %v686
        %v2032 = vunpack.c.l.b16 %v687
        %v2033 = vunpack.c.l.b16 %v688
        %v2034 = vunpack.c.l.b16 %v689
        %v2035 = vunpack.c.l.b16 %v690
        %v2036 = vunpack.c.l.b16 %v691
        %v2037 = vunpack.c.l.b16 %v692
        %v2038 = vunpack.c.l.b16 %v693
        %v2039 = vunpack.c.l.b16 %v694
        %v2040 = vunpack.c.l.b16 %v695
        %v2041 = vunpack.c.l.b16 %v696
        %v2042 = vunpack.c.l.b16 %v697
        %v2043 = vunpack.c.l.b16 %v698
        %v2044 = vunpack.c.l.b16 %v699
        %v2045 = vunpack.c.l.b16 %v700
        %v2046 = vunpack.c.l.b16 %v701
        %v2047 = vunpack.c.l.b16 %v702
        %v2048 = vunpack.c.l.b16 %v703
        %v2049 = vunpack.c.l.b16 %v704
        %v2050 = vunpack.c.l.b16 %v705
        %v2051 = vunpack.c.l.b16 %v706
        %v2052 = vunpack.c.l.b16 %v707
        %v2053 = vunpack.c.l.b16 %v708
        %v2054 = vunpack.c.l.b16 %v709
        %v2055 = vunpack.c.l.b16 %v710
        %v2056 = vunpack.c.l.b16 %v711
        %v2057 = vunpack.c.l.b16 %v712
        %v2058 = vunpack.c.l.b16 %v713
        %v2059 = vunpack.c.l.b16 %v714
        %v2060 = vunpack.c.l.b16 %v715
        %v2061 = vunpack.c.l.b16 %v716
        %v2062 = vunpack.c.l.b16 %v717
        %v2063 = vunpack.c.l.b16 %v718
        %v2064 = vunpack.c.l.b16 %v719
        %v2065 = vunpack.c.l.b16 %v720
        %v2066 = vunpack.c.l.b16 %v721
        %v2067 = vunpack.c.l.b16 %v722
        %v2068 = vunpack.c.l.b16 %v723
        %v2069 = vunpack.c.l.b16 %v724
        %v2070 = vunpack.c.l.b16 %v725
        %v2071 = vunpack.c.l.b16 %v726
        %v2072 = vunpack.c.l.b16 %v727
        %v2073 = vunpack.c.l.b16 %v728
        %v2074 = vunpack.c.l.b16 %v729
        %v2075 = vunpack.c.l.b16 %v730
        %v2076 = vunpack.c.l.b16 %v731
        %v2077 = vunpack.c.l.b16 %v732
        %v2078 = vunpack.c.l.b16 %v733
        %v2079 = vunpack.c.l.b16 %v734
        %v2080 = vunpack.c.l.b16 %v735
        %v2081 = vunpack.c.l.b16 %v736
        %v2082 = vunpack.c.l.b16 %v737
        %v2083 = vunpack.c.l.b16 %v738
        %v2084 = vunpack.c.l.b16 %v739
        %v2085 = vunpack.c.l.b16 %v740
        %v2086 = vunpack.c.l.b16 %v741
        %v2087 = vunpack.c.l.b16 %v742
        %v2088 = vunpack.c.l.b16 %v743
        %v2089 = vunpack.c.l.b16 %v744
        %v2090 = vunpack.c.l.b16 %v745
        %v2091 = vunpack.c.l.b16 %v746
        %v2092 = vunpack.c.l.b16 %v747
        %v2093 = vunpack.c.l.b16 %v748
        %v2094 = vunpack.c.l.b16 %v749
        %v2095 = vunpack.c.l.b16 %v750
        %v2096 = vunpack.c.l.b16 %v751
        %v2097 = vunpack.c.l.b16 %v752
        %v2098 = vunpack.c.l.b16 %v753
        %v2099 = vunpack.c.l.b16 %v754
        %v2100 = vunpack.c.l.b16 %v755
        %v2101 = vunpack.c.l.b16 %v756
        %v2102 = vunpack.c.l.b16 %v757
        %v2103 = vunpack.c.l.b16 %v758
        %v2104 = vunpack.c.l.b16 %v759
        %v2105 = vunpack.c.l.b16 %v760
        %v2106 = vunpack.c.l.b16 %v761
        %v2107 = vunpack.c.l.b16 %v762
        %v2108 = vunpack.c.l.b16 %v763
        %v2109 = vunpack.c.l.b16 %v764
        %v2110 = vunpack.c.l.b16 %v765
        %v2111 = vunpack.c.l.b16 %v766
        %v2112 = vunpack.c.l.b16 %v767
        %v2113 = vunpack.c.l.b16 %v768
        %v2114 = vunpack.c.l.b16 %v769
        %v2115 = vunpack.c.l.b16 %v770
        %v2116 = vunpack.c.l.b16 %v771
        %v2117 = vunpack.c.l.b16 %v772
        %v2118 = vunpack.c.l.b16 %v773
        %v2119 = vunpack.c.l.b16 %v774
        %v2120 = vunpack.c.l.b16 %v775
        %v2121 = vunpack.c.l.b16 %v776
        %v2122 = vunpack.c.l.b16 %v777
        %v2123 = vunpack.c.l.b16 %v778
        %v2124 = vunpack.c.l.b16 %v779
        %v2125 = vunpack.c.l.b16 %v780
        %v2126 = vunpack.c.l.b16 %v781
        %v2127 = vunpack.c.l.b16 %v782
        %v2128 = vunpack.c.l.b16 %v783
        %v2129 = vunpack.c.l.b16 %v784
        %v2130 = vunpack.c.l.b16 %v785
        %v2131 = vunpack.c.l.b16 %v786
        %v2132 = vunpack.c.l.b16 %v787
        %v2133 = vpack.c.b16 %v1590, %v1589
        %v2134 = vpack.c.b16 %v1592, %v1591
        %v2135 = vpack.c.b16 %v1594, %v1593
        %v2136 = vpack.c.b16 %v1596, %v1595
        %v2137 = vpack.c.b16 %v1598, %v1597
        %v2138 = vpack.c.b16 %v1600, %v1599
        %v2139 = vpack.c.b16 %v1602, %v1601
        %v2140 = vpack.c.b16 %v1604, %v1603
        %v2141 = vpack.c.b16 %v1606, %v1605
        %v2142 = vpack.c.b16 %v1608, %v1607
        %v2143 = vpack.c.b16 %v1610, %v1609
        %v2144 = vpack.c.b16 %v1612, %v1611
        %v2145 = vpack.c.b16 %v1614, %v1613
        %v2146 = vpack.c.b16 %v1616, %v1615
        %v2147 = vpack.c.b16 %v1618, %v1617
        %v2148 = vpack.c.b16 %v1620, %v1619
        %v2149 = vpack.c.b16 %v1622, %v1621
        %v2150 = vpack.c.b16 %v1624, %v1623
        %v2151 = vpack.c.b16 %v1626, %v1625
        %v2152 = vpack.c.b16 %v1628, %v1627
        %v2153 = vpack.c.b16 %v1630, %v1629
        %v2154 = vpack.c.b16 %v1632, %v1631
        %v2155 = vpack.c.b16 %v1634, %v1633
        %v2156 = vpack.c.b16 %v1636, %v1635
        %v2157 = vpack.c.b16 %v1638, %v1637
        %v2158 = vpack.c.b16 %v1640, %v1639
        %v2159 = vpack.c.b16 %v1642, %v1641
        %v2160 = vpack.c.b16 %v1644, %v1643
        %v2161 = vpack.c.b16 %v1646, %v1645
        %v2162 = vpack.c.b16 %v1648, %v1647
        %v2163 = vpack.c.b16 %v1650, %v1649
        %v2164 = vpack.c.b16 %v1652, %v1651
        %v2165 = vpack.c.b16 %v1654, %v1653
        %v2166 = vpack.c.b16 %v1656, %v1655
        %v2167 = vpack.c.b16 %v1658, %v1657
        %v2168 = vpack.c.b16 %v1660, %v1659
        %v2169 = vpack.c.b16 %v1662, %v1661
        %v2170 = vpack.c.b16 %v1664, %v1663
        %v2171 = vpack.c.b16 %v1666, %v1665
        %v2172 = vpack.c.b16 %v1668, %v1667
        %v2173 = vpack.c.b16 %v1670, %v1669
        %v2174 = vpack.c.b16 %v1672, %v1671
        %v2175 = vpack.c.b16 %v1674, %v1673
        %v2176 = vpack.c.b16 %v1676, %v1675
        %v2177 = vpack.c.b16 %v1678, %v1677
        %v2178 = vpack.c.b16 %v1680, %v1679
        %v2179 = vpack.c.b16 %v1682, %v1681
        %v2180 = vpack.c.b16 %v1684, %v1683
        %v2181 = vpack.c.b16 %v1686, %v1685
        %v2182 = vpack.c.b16 %v1688, %v1687
        %v2183 = vpack.c.b16 %v1690, %v1689
        %v2184 = vpack.c.b16 %v1692, %v1691
        %v2185 = vpack.c.b16 %v1694, %v1693
        %v2186 = vpack.c.b16 %v1696, %v1695
        %v2187 = vpack.c.b16 %v1698, %v1697
        %v2188 = vpack.c.b16 %v1700, %v1699
        %v2189 = vpack.c.b16 %v1702, %v1701
        %v2190 = vpack.c.b16 %v1704, %v1703
        %v2191 = vpack.c.b16 %v1706, %v1705
        %v2192 = vpack.c.b16 %v1708, %v1707
        %v2193 = vpack.c.b16 %v1710, %v1709
        %v2194 = vpack.c.b16 %v1712, %v1711
        %v2195 = vpack.c.b16 %v1714, %v1713
        %v2196 = vpack.c.b16 %v1716, %v1715
        %v2197 = vpack.c.b16 %v1718, %v1717
        %v2198 = vpack.c.b16 %v1720, %v1719
        %v2199 = vpack.c.b16 %v1722, %v1721
        %v2200 = vpack.c.b16 %v1724, %v1723
        %v2201 = vpack.c.b16 %v1726, %v1725
        %v2202 = vpack.c.b16 %v1728, %v1727
        %v2203 = vpack.c.b16 %v1730, %v1729
        %v2204 = vpack.c.b16 %v1732, %v1731
        %v2205 = vpack.c.b16 %v1734, %v1733
        %v2206 = vpack.c.b16 %v1736, %v1735
        %v2207 = vpack.c.b16 %v1738, %v1737
        %v2208 = vpack.c.b16 %v1740, %v1739
        %v2209 = vpack.c.b16 %v1742, %v1741
        %v2210 = vpack.c.b16 %v1744, %v1743
        %v2211 = vpack.c.b16 %v1746, %v1745
        %v2212 = vpack.c.b16 %v1748, %v1747
        %v2213 = vpack.c.b16 %v1750, %v1749
        %v2214 = vpack.c.b16 %v1752, %v1751
        %v2215 = vpack.c.b16 %v1754, %v1753
        %v2216 = vpack.c.b16 %v1756, %v1755
        %v2217 = vpack.c.b16 %v1758, %v1757
        %v2218 = vpack.c.b16 %v1760, %v1759
        %v2219 = vpack.c.b16 %v1762, %v1761
        %v2220 = vpack.c.b16 %v1764, %v1763
        %v2221 = vpack.c.b16 %v1766, %v1765
        %v2222 = vpack.c.b16 %v1768, %v1767
        %v2223 = vpack.c.b16 %v1770, %v1769
        %v2224 = vpack.c.b16 %v1772, %v1771
        %v2225 = vpack.c.b16 %v1774, %v1773
        %v2226 = vpack.c.b16 %v1776, %v1775
        %v2227 = vpack.c.b16 %v1778, %v1777
        %v2228 = vpack.c.b16 %v1780, %v1779
        %v2229 = vpack.c.b16 %v1782, %v1781
        %v2230 = vpack.c.b16 %v1784, %v1783
        %v2231 = vpack.c.b16 %v1786, %v1785
        %v2232 = vpack.c.b16 %v1788, %v1787
        %v2233 = vpack.c.b16 %v1790, %v1789
        %v2234 = vpack.c.b16 %v1792, %v1791
        %v2235 = vpack.c.b16 %v1794, %v1793
        %v2236 = vpack.c.b16 %v1796, %v1795
        %v2237 = vpack.c.b16 %v1798, %v1797
        %v2238 = vpack.c.b16 %v1800, %v1799
        %v2239 = vpack.c.b16 %v1802, %v1801
        %v2240 = vpack.c.b16 %v1804, %v1803
        %v2241 = vpack.c.b16 %v1806, %v1805
        %v2242 = vpack.c.b16 %v1808, %v1807
        %v2243 = vpack.c.b16 %v1810, %v1809
        %v2244 = vpack.c.b16 %v1812, %v1811
        %v2245 = vpack.c.b16 %v1814, %v1813
        %v2246 = vpack.c.b16 %v1816, %v1815
        %v2247 = vpack.c.b16 %v1818, %v1817
        %v2248 = vpack.c.b16 %v1820, %v1819
        %v2249 = vpack.c.b16 %v1822, %v1821
        %v2250 = vpack.c.b16 %v1824, %v1823
        %v2251 = vpack.c.b16 %v1826, %v1825
        %v2252 = vpack.c.b16 %v1828, %v1827
        %v2253 = vpack.c.b16 %v1830, %v1829
        %v2254 = vpack.c.b16 %v1832, %v1831
        %v2255 = vpack.c.b16 %v1834, %v1833
        %v2256 = vpack.c.b16 %v1836, %v1835
        %v2257 = vpack.c.b16 %v1838, %v1837
        %v2258 = vpack.c.b16 %v1840, %v1839
        %v2259 = vpack.c.b16 %v1842, %v1841
        %v2260 = vpack.c.b16 %v1844, %v1843
        %v2261 = vpack.c.b16 %v1846, %v1845
        %v2262 = vpack.c.b16 %v1848, %v1847
        %v2263 = vpack.c.b16 %v1850, %v1849
        %v2264 = vpack.c.b16 %v1852, %v1851
        %v2265 = vpack.c.b16 %v1854, %v1853
        %v2266 = vpack.c.b16 %v1856, %v1855
        %v2267 = vpack.c.b16 %v1858, %v1857
        %v2268 = vpack.c.b16 %v1860, %v1859
        %v2269 = vpack.c.b16 %v1862, %v1861
        %v2270 = vpack.c.b16 %v1864, %v1863
        %v2271 = vpack.c.b16 %v1866, %v1865
        %v2272 = vpack.c.b16 %v1868, %v1867
        %v2273 = vpack.c.b16 %v1870, %v1869
        %v2274 = vpack.c.b16 %v1872, %v1871
        %v2275 = vpack.c.b16 %v1874, %v1873
        %v2276 = vpack.c.b16 %v1876, %v1875
        %v2277 = vpack.c.b16 %v1878, %v1877
        %v2278 = vpack.c.b16 %v1880, %v1879
        %v2279 = vpack.c.b16 %v1882, %v1881
        %v2280 = vpack.c.b16 %v1884, %v1883
        %v2281 = vpack.c.b16 %v1886, %v1885
        %v2282 = vpack.c.b16 %v1888, %v1887
        %v2283 = vpack.c.b16 %v1890, %v1889
        %v2284 = vpack.c.b16 %v1892, %v1891
        %v2285 = vpack.c.b16 %v1894, %v1893
        %v2286 = vpack.c.b16 %v1896, %v1895
        %v2287 = vpack.c.b16 %v1898, %v1897
        %v2288 = vpack.c.b16 %v1900, %v1899
        %v2289 = vpack.c.b16 %v1902, %v1901
        %v2290 = vpack.c.b16 %v1904, %v1903
        %v2291 = vpack.c.b16 %v1906, %v1905
        %v2292 = vpack.c.b16 %v1908, %v1907
        %v2293 = vpack.c.b16 %v1910, %v1909
        %v2294 = vpack.c.b16 %v1912, %v1911
        %v2295 = vpack.c.b16 %v1914, %v1913
        %v2296 = vpack.c.b16 %v1916, %v1915
        %v2297 = vpack.c.b16 %v1918, %v1917
        %v2298 = vpack.c.b16 %v1920, %v1919
        %v2299 = vpack.c.b16 %v1922, %v1921
        %v2300 = vpack.c.b16 %v1924, %v1923
        %v2301 = vpack.c.b16 %v1926, %v1925
        %v2302 = vpack.c.b16 %v1928, %v1927
        %v2303 = vpack.c.b16 %v1930, %v1929
        %v2304 = vpack.c.b16 %v1932, %v1931
        %v2305 = vpack.c.b16 %v1934, %v1933
        %v2306 = vpack.c.b16 %v1936, %v1935
        %v2307 = vpack.c.b16 %v1938, %v1937
        %v2308 = vpack.c.b16 %v1940, %v1939
        %v2309 = vpack.c.b16 %v1942, %v1941
        %v2310 = vpack.c.b16 %v1944, %v1943
        %v2311 = vpack.c.b16 %v1946, %v1945
        %v2312 = vpack.c.b16 %v1948, %v1947
        %v2313 = vpack.c.b16 %v1950, %v1949
        %v2314 = vpack.c.b16 %v1952, %v1951
        %v2315 = vpack.c.b16 %v1954, %v1953
        %v2316 = vpack.c.b16 %v1956, %v1955
        %v2317 = vpack.c.b16 %v1958, %v1957
        %v2318 = vpack.c.b16 %v1960, %v1959
        %v2319 = vpack.c.b16 %v1962, %v1961
        %v2320 = vpack.c.b16 %v1964, %v1963
        %v2321 = vpack.c.b16 %v1966, %v1965
        %v2322 = vpack.c.b16 %v1968, %v1967
        %v2323 = vpack.c.b16 %v1970, %v1969
        %v2324 = vpack.c.b16 %v1972, %v1971
        %v2325 = vpack.c.b16 %v1974, %v1973
        %v2326 = vpack.c.b16 %v1976, %v1975
        %v2327 = vpack.c.b16 %v1978, %v1977
        %v2328 = vpack.c.b16 %v1980, %v1979
        %v2329 = vpack.c.b16 %v1982, %v1981
        %v2330 = vpack.c.b16 %v1984, %v1983
        %v2331 = vpack.c.b16 %v1986, %v1985
        %v2332 = vpack.c.b16 %v1988, %v1987
        %v2333 = vpack.c.b16 %v1990, %v1989
        %v2334 = vpack.c.b16 %v1992, %v1991
        %v2335 = vpack.c.b16 %v1994, %v1993
        %v2336 = vpack.c.b16 %v1996, %v1995
        %v2337 = vpack.c.b16 %v1998, %v1997
        %v2338 = vpack.c.b16 %v2000, %v1999
        %v2339 = vpack.c.b16 %v2002, %v2001
        %v2340 = vpack.c.b16 %v2004, %v2003
        %v2341 = vpack.c.b16 %v2006, %v2005
        %v2342 = vpack.c.b16 %v2008, %v2007
        %v2343 = vpack.c.b16 %v2010, %v2009
        %v2344 = vpack.c.b16 %v2012, %v2011
        %v2345 = vpack.c.b16 %v2014, %v2013
        %v2346 = vpack.c.b16 %v2016, %v2015
        %v2347 = vpack.c.b16 %v2018, %v2017
        %v2348 = vpack.c.b16 %v2020, %v2019
        %v2349 = vpack.c.b16 %v2022, %v2021
        %v2350 = vpack.c.b16 %v2024, %v2023
        %v2351 = vpack.c.b16 %v2026, %v2025
        %v2352 = vpack.c.b16 %v2028, %v2027
        %v2353 = vpack.c.b16 %v2030, %v2029
        %v2354 = vpack.c.b16 %v2032, %v2031
        %v2355 = vpack.c.b16 %v2034, %v2033
        %v2356 = vpack.c.b16 %v2036, %v2035
        %v2357 = vpack.c.b16 %v2038, %v2037
        %v2358 = vpack.c.b16 %v2040, %v2039
        %v2359 = vpack.c.b16 %v2042, %v2041
        %v2360 = vpack.c.b16 %v2044, %v2043
        %v2361 = vpack.c.b16 %v2046, %v2045
        %v2362 = vpack.c.b16 %v2048, %v2047
        %v2363 = vpack.c.b16 %v2050, %v2049
        %v2364 = vpack.c.b16 %v2052, %v2051
        %v2365 = vpack.c.b16 %v2054, %v2053
        %v2366 = vpack.c.b16 %v2056, %v2055
        %v2367 = vpack.c.b16 %v2058, %v2057
        %v2368 = vpack.c.b16 %v2060, %v2059
        %v2369 = vpack.c.b16 %v2062, %v2061
        %v2370 = vpack.c.b16 %v2064, %v2063
        %v2371 = vpack.c.b16 %v2066, %v2065
        %v2372 = vpack.c.b16 %v2068, %v2067
        %v2373 = vpack.c.b16 %v2070, %v2069
        %v2374 = vpack.c.b16 %v2072, %v2071
        %v2375 = vpack.c.b16 %v2074, %v2073
        %v2376 = vpack.c.b16 %v2076, %v2075
        %v2377 = vpack.c.b16 %v2078, %v2077
        %v2378 = vpack.c.b16 %v2080, %v2079
        %v2379 = vpack.c.b16 %v2082, %v2081
        %v2380 = vpack.c.b16 %v2084, %v2083
        %v2381 = vpack.c.b16 %v2086, %v2085
        %v2382 = vpack.c.b16 %v2088, %v2087
        %v2383 = vpack.c.b16 %v2090, %v2089
        %v2384 = vpack.c.b16 %v2092, %v2091
        %v2385 = vpack.c.b16 %v2094, %v2093
        %v2386 = vpack.c.b16 %v2096, %v2095
        %v2387 = vpack.c.b16 %v2098, %v2097
        %v2388 = vpack.c.b16 %v2100, %v2099
        %v2389 = vpack.c.b16 %v2102, %v2101
        %v2390 = vpack.c.b16 %v2104, %v2103
        %v2391 = vpack.c.b16 %v2106, %v2105
        %v2392 = vpack.c.b16 %v2108, %v2107
        %v2393 = vpack.c.b16 %v2110, %v2109
        %v2394 = vpack.c.b16 %v2112, %v2111
        %v2395 = vpack.c.b16 %v2114, %v2113
        %v2396 = vpack.c.b16 %v2116, %v2115
        %v2397 = vpack.c.b16 %v2118, %v2117
        %v2398 = vpack.c.b16 %v2120, %v2119
        %v2399 = vpack.c.b16 %v2122, %v2121
        %v2400 = vpack.c.b16 %v2124, %v2123
        %v2401 = vpack.c.b16 %v2126, %v2125
        %v2402 = vpack.c.b16 %v2128, %v2127
        %v2403 = vpack.c.b16 %v2130, %v2129
        %v2404 = vpack.c.b16 %v2132, %v2131
        %2677 = vmatprep.subr.bf16.mxu0 0
        %2678 = vmatpush1.bf16.msra.mxu0 %v2140
        %2679 = vmatprep.subr.bf16.mxu0 0
        %2680 = vmatpush1.bf16.msra.mxu0 %v2139
        %2681 = vmatprep.subr.bf16.mxu0 0
        %2682 = vmatpush1.bf16.msra.mxu0 %v2138
        %2683 = vmatprep.subr.bf16.mxu0 0
        %2684 = vmatpush1.bf16.msra.mxu0 %v2137
        %2685 = vmatprep.subr.bf16.mxu0 0
        %2686 = vmatpush1.bf16.msra.mxu0 %v2136
        %2687 = vmatprep.subr.bf16.mxu0 0
        %2688 = vmatpush1.bf16.msra.mxu0 %v2135
        %2689 = vmatprep.subr.bf16.mxu0 0
        %2690 = vmatpush1.bf16.msra.mxu0 %v2134
        %2691 = vmatprep.subr.bf16.mxu0 0
        %2692 = vmatpush1.bf16.msra.mxu0 %v2133
        %2693 = vmatprep.subr.bf16.mxu0 0
        %2694 = vmatpush2.bf16.msra.mxu0 %v2148
        %2695 = vmatprep.subr.bf16.mxu0 0
        %2696 = vmatpush2.bf16.msra.mxu0 %v2147
        %2697 = vmatprep.subr.bf16.mxu0 0
        %2698 = vmatpush2.bf16.msra.mxu0 %v2146
        %2699 = vmatprep.subr.bf16.mxu0 0
        %2700 = vmatpush2.bf16.msra.mxu0 %v2145
        %2701 = vmatprep.subr.bf16.mxu0 0
        %2702 = vmatpush2.bf16.msra.mxu0 %v2144
        %2703 = vmatprep.subr.bf16.mxu0 0
        %2704 = vmatpush2.bf16.msra.mxu0 %v2143
        %2705 = vmatprep.subr.bf16.mxu0 0
        %2706 = vmatpush2.bf16.msra.mxu0 %v2142
        %2707 = vmatprep.subr.bf16.mxu0 0
        %2708 = vmatpush2.bf16.msra.mxu0 %v2141
        %2709 = vmatprep.mubr.bf16.mxu0 %v830
        %2710 = vmatmul.mubr.bf16.gmra.mxu0 %v816
        %v2711 = vpop.f32.mrf.mxu0
        %v2712 = vadd.f32 0.0, %v2711
        %v2713 = vpop.f32.mrf.mxu0
        %v2714 = vpop.f32.mrf.mxu0
        %v2715 = vpop.f32.mrf.mxu0
        %2716 = vdwg.mxu0
        %2717 = vmatprep.subr.bf16.mxu0 0
        %2718 = vmatpush1.bf16.msra.mxu0 %v2156
        %2719 = vmatprep.subr.bf16.mxu0 0
        %2720 = vmatpush1.bf16.msra.mxu0 %v2155
        %2721 = vmatprep.subr.bf16.mxu0 0
        %2722 = vmatpush1.bf16.msra.mxu0 %v2154
        %2723 = vmatprep.subr.bf16.mxu0 0
        %2724 = vmatpush1.bf16.msra.mxu0 %v2153
        %2725 = vmatprep.subr.bf16.mxu0 0
        %2726 = vmatpush1.bf16.msra.mxu0 %v2152
        %2727 = vmatprep.subr.bf16.mxu0 0
        %2728 = vmatpush1.bf16.msra.mxu0 %v2151
        %2729 = vmatprep.subr.bf16.mxu0 0
        %2730 = vmatpush1.bf16.msra.mxu0 %v2150
        %2731 = vmatprep.subr.bf16.mxu0 0
        %2732 = vmatpush1.bf16.msra.mxu0 %v2149
        %2733 = vmatprep.subr.bf16.mxu0 0
        %2734 = vmatpush2.bf16.msra.mxu0 %v2164
        %2735 = vmatprep.subr.bf16.mxu0 0
        %2736 = vmatpush2.bf16.msra.mxu0 %v2163
        %2737 = vmatprep.subr.bf16.mxu0 0
        %2738 = vmatpush2.bf16.msra.mxu0 %v2162
        %2739 = vmatprep.subr.bf16.mxu0 0
        %2740 = vmatpush2.bf16.msra.mxu0 %v2161
        %2741 = vmatprep.subr.bf16.mxu0 0
        %2742 = vmatpush2.bf16.msra.mxu0 %v2160
        %2743 = vmatprep.subr.bf16.mxu0 0
        %2744 = vmatpush2.bf16.msra.mxu0 %v2159
        %2745 = vmatprep.subr.bf16.mxu0 0
        %2746 = vmatpush2.bf16.msra.mxu0 %v2158
        %2747 = vmatprep.subr.bf16.mxu0 0
        %2748 = vmatpush2.bf16.msra.mxu0 %v2157
        %2749 = vmatprep.mubr.bf16.mxu0 %v840
        %2750 = vmatmul.mubr.bf16.gmra.mxu0 %v838
        %v2751 = vpop.f32.mrf.mxu0
        %v2752 = vadd.f32 %v2712, %v2751
        %v2753 = vpop.f32.mrf.mxu0
        %v2754 = vpop.f32.mrf.mxu0
        %v2755 = vpop.f32.mrf.mxu0
        %2756 = vdwg.mxu0
        %2757 = vmatprep.subr.bf16.mxu0 0
        %2758 = vmatpush1.bf16.msra.mxu0 %v2172
        %2759 = vmatprep.subr.bf16.mxu0 0
        %2760 = vmatpush1.bf16.msra.mxu0 %v2171
        %2761 = vmatprep.subr.bf16.mxu0 0
        %2762 = vmatpush1.bf16.msra.mxu0 %v2170
        %2763 = vmatprep.subr.bf16.mxu0 0
        %2764 = vmatpush1.bf16.msra.mxu0 %v2169
        %2765 = vmatprep.subr.bf16.mxu0 0
        %2766 = vmatpush1.bf16.msra.mxu0 %v2168
        %2767 = vmatprep.subr.bf16.mxu0 0
        %2768 = vmatpush1.bf16.msra.mxu0 %v2167
        %2769 = vmatprep.subr.bf16.mxu0 0
        %2770 = vmatpush1.bf16.msra.mxu0 %v2166
        %2771 = vmatprep.subr.bf16.mxu0 0
        %2772 = vmatpush1.bf16.msra.mxu0 %v2165
        %2773 = vmatprep.subr.bf16.mxu0 0
        %2774 = vmatpush2.bf16.msra.mxu0 %v2180
        %2775 = vmatprep.subr.bf16.mxu0 0
        %2776 = vmatpush2.bf16.msra.mxu0 %v2179
        %2777 = vmatprep.subr.bf16.mxu0 0
        %2778 = vmatpush2.bf16.msra.mxu0 %v2178
        %2779 = vmatprep.subr.bf16.mxu0 0
        %2780 = vmatpush2.bf16.msra.mxu0 %v2177
        %2781 = vmatprep.subr.bf16.mxu0 0
        %2782 = vmatpush2.bf16.msra.mxu0 %v2176
        %2783 = vmatprep.subr.bf16.mxu0 0
        %2784 = vmatpush2.bf16.msra.mxu0 %v2175
        %2785 = vmatprep.subr.bf16.mxu0 0
        %2786 = vmatpush2.bf16.msra.mxu0 %v2174
        %2787 = vmatprep.subr.bf16.mxu0 0
        %2788 = vmatpush2.bf16.msra.mxu0 %v2173
        %2789 = vmatprep.mubr.bf16.mxu0 %v837
        %2790 = vmatmul.mubr.bf16.gmra.mxu0 %v823
        %v2791 = vpop.f32.mrf.mxu0
        %v2792 = vadd.f32 %v2752, %v2791
        %v2793 = vpop.f32.mrf.mxu0
        %v2794 = vpop.f32.mrf.mxu0
        %v2795 = vpop.f32.mrf.mxu0
        %2796 = vdwg.mxu0
        %2797 = vmatprep.subr.bf16.mxu0 0
        %2798 = vmatpush1.bf16.msra.mxu0 %v2188
        %2799 = vmatprep.subr.bf16.mxu0 0
        %2800 = vmatpush1.bf16.msra.mxu0 %v2187
        %2801 = vmatprep.subr.bf16.mxu0 0
        %2802 = vmatpush1.bf16.msra.mxu0 %v2186
        %2803 = vmatprep.subr.bf16.mxu0 0
        %2804 = vmatpush1.bf16.msra.mxu0 %v2185
        %2805 = vmatprep.subr.bf16.mxu0 0
        %2806 = vmatpush1.bf16.msra.mxu0 %v2184
        %2807 = vmatprep.subr.bf16.mxu0 0
        %2808 = vmatpush1.bf16.msra.mxu0 %v2183
        %2809 = vmatprep.subr.bf16.mxu0 0
        %2810 = vmatpush1.bf16.msra.mxu0 %v2182
        %2811 = vmatprep.subr.bf16.mxu0 0
        %2812 = vmatpush1.bf16.msra.mxu0 %v2181
        %2813 = vmatprep.subr.bf16.mxu0 0
        %2814 = vmatpush2.bf16.msra.mxu0 %v2196
        %2815 = vmatprep.subr.bf16.mxu0 0
        %2816 = vmatpush2.bf16.msra.mxu0 %v2195
        %2817 = vmatprep.subr.bf16.mxu0 0
        %2818 = vmatpush2.bf16.msra.mxu0 %v2194
        %2819 = vmatprep.subr.bf16.mxu0 0
        %2820 = vmatpush2.bf16.msra.mxu0 %v2193
        %2821 = vmatprep.subr.bf16.mxu0 0
        %2822 = vmatpush2.bf16.msra.mxu0 %v2192
        %2823 = vmatprep.subr.bf16.mxu0 0
        %2824 = vmatpush2.bf16.msra.mxu0 %v2191
        %2825 = vmatprep.subr.bf16.mxu0 0
        %2826 = vmatpush2.bf16.msra.mxu0 %v2190
        %2827 = vmatprep.subr.bf16.mxu0 0
        %2828 = vmatpush2.bf16.msra.mxu0 %v2189
        %2829 = vmatprep.mubr.bf16.mxu0 %v841
        %2830 = vmatmul.mubr.bf16.gmra.mxu0 %v839
        %v2831 = vpop.f32.mrf.mxu0
        %v2832 = vadd.f32 %v2792, %v2831
        %v2833 = vpop.f32.mrf.mxu0
        %v2834 = vpop.f32.mrf.mxu0
        %v2835 = vpop.f32.mrf.mxu0
        %2836 = vdwg.mxu0
        %2837 = vmatprep.subr.bf16.mxu0 0
        %2838 = vmatpush1.bf16.msra.mxu0 %v2204
        %2839 = vmatprep.subr.bf16.mxu0 0
        %2840 = vmatpush1.bf16.msra.mxu0 %v2203
        %2841 = vmatprep.subr.bf16.mxu0 0
        %2842 = vmatpush1.bf16.msra.mxu0 %v2202
        %2843 = vmatprep.subr.bf16.mxu0 0
        %2844 = vmatpush1.bf16.msra.mxu0 %v2201
        %2845 = vmatprep.subr.bf16.mxu0 0
        %2846 = vmatpush1.bf16.msra.mxu0 %v2200
        %2847 = vmatprep.subr.bf16.mxu0 0
        %2848 = vmatpush1.bf16.msra.mxu0 %v2199
        %2849 = vmatprep.subr.bf16.mxu0 0
        %2850 = vmatpush1.bf16.msra.mxu0 %v2198
        %2851 = vmatprep.subr.bf16.mxu0 0
        %2852 = vmatpush1.bf16.msra.mxu0 %v2197
        %2853 = vmatprep.subr.bf16.mxu0 0
        %2854 = vmatpush2.bf16.msra.mxu0 %v2212
        %2855 = vmatprep.subr.bf16.mxu0 0
        %2856 = vmatpush2.bf16.msra.mxu0 %v2211
        %2857 = vmatprep.subr.bf16.mxu0 0
        %2858 = vmatpush2.bf16.msra.mxu0 %v2210
        %2859 = vmatprep.subr.bf16.mxu0 0
        %2860 = vmatpush2.bf16.msra.mxu0 %v2209
        %2861 = vmatprep.subr.bf16.mxu0 0
        %2862 = vmatpush2.bf16.msra.mxu0 %v2208
        %2863 = vmatprep.subr.bf16.mxu0 0
        %2864 = vmatpush2.bf16.msra.mxu0 %v2207
        %2865 = vmatprep.subr.bf16.mxu0 0
        %2866 = vmatpush2.bf16.msra.mxu0 %v2206
        %2867 = vmatprep.subr.bf16.mxu0 0
        %2868 = vmatpush2.bf16.msra.mxu0 %v2205
        %2869 = vmatprep.mubr.bf16.mxu0 %v879
        %2870 = vmatmul.mubr.bf16.gmra.mxu0 %v865
        %v2871 = vpop.f32.mrf.mxu0
        %v2872 = vadd.f32 %v2832, %v2871
        %v2873 = vpop.f32.mrf.mxu0
        %v2874 = vpop.f32.mrf.mxu0
        %v2875 = vpop.f32.mrf.mxu0
        %2876 = vdwg.mxu0
        %2877 = vmatprep.subr.bf16.mxu0 0
        %2878 = vmatpush1.bf16.msra.mxu0 %v2220
        %2879 = vmatprep.subr.bf16.mxu0 0
        %2880 = vmatpush1.bf16.msra.mxu0 %v2219
        %2881 = vmatprep.subr.bf16.mxu0 0
        %2882 = vmatpush1.bf16.msra.mxu0 %v2218
        %2883 = vmatprep.subr.bf16.mxu0 0
        %2884 = vmatpush1.bf16.msra.mxu0 %v2217
        %2885 = vmatprep.subr.bf16.mxu0 0
        %2886 = vmatpush1.bf16.msra.mxu0 %v2216
        %2887 = vmatprep.subr.bf16.mxu0 0
        %2888 = vmatpush1.bf16.msra.mxu0 %v2215
        %2889 = vmatprep.subr.bf16.mxu0 0
        %2890 = vmatpush1.bf16.msra.mxu0 %v2214
        %2891 = vmatprep.subr.bf16.mxu0 0
        %2892 = vmatpush1.bf16.msra.mxu0 %v2213
        %2893 = vmatprep.subr.bf16.mxu0 0
        %2894 = vmatpush2.bf16.msra.mxu0 %v2228
        %2895 = vmatprep.subr.bf16.mxu0 0
        %2896 = vmatpush2.bf16.msra.mxu0 %v2227
        %2897 = vmatprep.subr.bf16.mxu0 0
        %2898 = vmatpush2.bf16.msra.mxu0 %v2226
        %2899 = vmatprep.subr.bf16.mxu0 0
        %2900 = vmatpush2.bf16.msra.mxu0 %v2225
        %2901 = vmatprep.subr.bf16.mxu0 0
        %2902 = vmatpush2.bf16.msra.mxu0 %v2224
        %2903 = vmatprep.subr.bf16.mxu0 0
        %2904 = vmatpush2.bf16.msra.mxu0 %v2223
        %2905 = vmatprep.subr.bf16.mxu0 0
        %2906 = vmatpush2.bf16.msra.mxu0 %v2222
        %2907 = vmatprep.subr.bf16.mxu0 0
        %2908 = vmatpush2.bf16.msra.mxu0 %v2221
        %2909 = vmatprep.mubr.bf16.mxu0 %v889
        %2910 = vmatmul.mubr.bf16.gmra.mxu0 %v887
        %v2911 = vpop.f32.mrf.mxu0
        %v2912 = vadd.f32 %v2872, %v2911
        %v2913 = vpop.f32.mrf.mxu0
        %v2914 = vpop.f32.mrf.mxu0
        %v2915 = vpop.f32.mrf.mxu0
        %2916 = vdwg.mxu0
        %2917 = vmatprep.subr.bf16.mxu0 0
        %2918 = vmatpush1.bf16.msra.mxu0 %v2236
        %2919 = vmatprep.subr.bf16.mxu0 0
        %2920 = vmatpush1.bf16.msra.mxu0 %v2235
        %2921 = vmatprep.subr.bf16.mxu0 0
        %2922 = vmatpush1.bf16.msra.mxu0 %v2234
        %2923 = vmatprep.subr.bf16.mxu0 0
        %2924 = vmatpush1.bf16.msra.mxu0 %v2233
        %2925 = vmatprep.subr.bf16.mxu0 0
        %2926 = vmatpush1.bf16.msra.mxu0 %v2232
        %2927 = vmatprep.subr.bf16.mxu0 0
        %2928 = vmatpush1.bf16.msra.mxu0 %v2231
        %2929 = vmatprep.subr.bf16.mxu0 0
        %2930 = vmatpush1.bf16.msra.mxu0 %v2230
        %2931 = vmatprep.subr.bf16.mxu0 0
        %2932 = vmatpush1.bf16.msra.mxu0 %v2229
        %2933 = vmatprep.subr.bf16.mxu0 0
        %2934 = vmatpush2.bf16.msra.mxu0 %v2244
        %2935 = vmatprep.subr.bf16.mxu0 0
        %2936 = vmatpush2.bf16.msra.mxu0 %v2243
        %2937 = vmatprep.subr.bf16.mxu0 0
        %2938 = vmatpush2.bf16.msra.mxu0 %v2242
        %2939 = vmatprep.subr.bf16.mxu0 0
        %2940 = vmatpush2.bf16.msra.mxu0 %v2241
        %2941 = vmatprep.subr.bf16.mxu0 0
        %2942 = vmatpush2.bf16.msra.mxu0 %v2240
        %2943 = vmatprep.subr.bf16.mxu0 0
        %2944 = vmatpush2.bf16.msra.mxu0 %v2239
        %2945 = vmatprep.subr.bf16.mxu0 0
        %2946 = vmatpush2.bf16.msra.mxu0 %v2238
        %2947 = vmatprep.subr.bf16.mxu0 0
        %2948 = vmatpush2.bf16.msra.mxu0 %v2237
        %2949 = vmatprep.mubr.bf16.mxu0 %v886
        %2950 = vmatmul.mubr.bf16.gmra.mxu0 %v872
        %v2951 = vpop.f32.mrf.mxu0
        %v2952 = vadd.f32 %v2912, %v2951
        %v2953 = vpop.f32.mrf.mxu0
        %v2954 = vpop.f32.mrf.mxu0
        %v2955 = vpop.f32.mrf.mxu0
        %2956 = vdwg.mxu0
        %2957 = vmatprep.subr.bf16.mxu0 0
        %2958 = vmatpush1.bf16.msra.mxu0 %v2252
        %2959 = vmatprep.subr.bf16.mxu0 0
        %2960 = vmatpush1.bf16.msra.mxu0 %v2251
        %2961 = vmatprep.subr.bf16.mxu0 0
        %2962 = vmatpush1.bf16.msra.mxu0 %v2250
        %2963 = vmatprep.subr.bf16.mxu0 0
        %2964 = vmatpush1.bf16.msra.mxu0 %v2249
        %2965 = vmatprep.subr.bf16.mxu0 0
        %2966 = vmatpush1.bf16.msra.mxu0 %v2248
        %2967 = vmatprep.subr.bf16.mxu0 0
        %2968 = vmatpush1.bf16.msra.mxu0 %v2247
        %2969 = vmatprep.subr.bf16.mxu0 0
        %2970 = vmatpush1.bf16.msra.mxu0 %v2246
        %2971 = vmatprep.subr.bf16.mxu0 0
        %2972 = vmatpush1.bf16.msra.mxu0 %v2245
        %2973 = vmatprep.subr.bf16.mxu0 0
        %2974 = vmatpush2.bf16.msra.mxu0 %v2260
        %2975 = vmatprep.subr.bf16.mxu0 0
        %2976 = vmatpush2.bf16.msra.mxu0 %v2259
        %2977 = vmatprep.subr.bf16.mxu0 0
        %2978 = vmatpush2.bf16.msra.mxu0 %v2258
        %2979 = vmatprep.subr.bf16.mxu0 0
        %2980 = vmatpush2.bf16.msra.mxu0 %v2257
        %2981 = vmatprep.subr.bf16.mxu0 0
        %2982 = vmatpush2.bf16.msra.mxu0 %v2256
        %2983 = vmatprep.subr.bf16.mxu0 0
        %2984 = vmatpush2.bf16.msra.mxu0 %v2255
        %2985 = vmatprep.subr.bf16.mxu0 0
        %2986 = vmatpush2.bf16.msra.mxu0 %v2254
        %2987 = vmatprep.subr.bf16.mxu0 0
        %2988 = vmatpush2.bf16.msra.mxu0 %v2253
        %2989 = vmatprep.mubr.bf16.mxu0 %v890
        %2990 = vmatmul.mubr.bf16.gmra.mxu0 %v888
        %v2991 = vpop.f32.mrf.mxu0
        %v2992 = vadd.f32 %v2952, %v2991
        %v2993 = vpop.f32.mrf.mxu0
        %v2994 = vpop.f32.mrf.mxu0
        %v2995 = vpop.f32.mrf.mxu0
        %2996 = vdwg.mxu0
        %2997 = vmatprep.subr.bf16.mxu0 0
        %2998 = vmatpush1.bf16.msra.mxu0 %v2268
        %2999 = vmatprep.subr.bf16.mxu0 0
        %3000 = vmatpush1.bf16.msra.mxu0 %v2267
        %3001 = vmatprep.subr.bf16.mxu0 0
        %3002 = vmatpush1.bf16.msra.mxu0 %v2266
        %3003 = vmatprep.subr.bf16.mxu0 0
        %3004 = vmatpush1.bf16.msra.mxu0 %v2265
        %3005 = vmatprep.subr.bf16.mxu0 0
        %3006 = vmatpush1.bf16.msra.mxu0 %v2264
        %3007 = vmatprep.subr.bf16.mxu0 0
        %3008 = vmatpush1.bf16.msra.mxu0 %v2263
        %3009 = vmatprep.subr.bf16.mxu0 0
        %3010 = vmatpush1.bf16.msra.mxu0 %v2262
        %3011 = vmatprep.subr.bf16.mxu0 0
        %3012 = vmatpush1.bf16.msra.mxu0 %v2261
        %3013 = vmatprep.subr.bf16.mxu0 0
        %3014 = vmatpush2.bf16.msra.mxu0 %v2276
        %3015 = vmatprep.subr.bf16.mxu0 0
        %3016 = vmatpush2.bf16.msra.mxu0 %v2275
        %3017 = vmatprep.subr.bf16.mxu0 0
        %3018 = vmatpush2.bf16.msra.mxu0 %v2274
        %3019 = vmatprep.subr.bf16.mxu0 0
        %3020 = vmatpush2.bf16.msra.mxu0 %v2273
        %3021 = vmatprep.subr.bf16.mxu0 0
        %3022 = vmatpush2.bf16.msra.mxu0 %v2272
        %3023 = vmatprep.subr.bf16.mxu0 0
        %3024 = vmatpush2.bf16.msra.mxu0 %v2271
        %3025 = vmatprep.subr.bf16.mxu0 0
        %3026 = vmatpush2.bf16.msra.mxu0 %v2270
        %3027 = vmatprep.subr.bf16.mxu0 0
        %3028 = vmatpush2.bf16.msra.mxu0 %v2269
        %3029 = vmatprep.mubr.bf16.mxu0 %v928
        %3030 = vmatmul.mubr.bf16.gmra.mxu0 %v914
        %v3031 = vpop.f32.mrf.mxu0
        %v3032 = vadd.f32 %v2992, %v3031
        %v3033 = vpop.f32.mrf.mxu0
        %v3034 = vpop.f32.mrf.mxu0
        %v3035 = vpop.f32.mrf.mxu0
        %3036 = vdwg.mxu0
        %3037 = vmatprep.subr.bf16.mxu0 0
        %3038 = vmatpush1.bf16.msra.mxu0 %v2284
        %3039 = vmatprep.subr.bf16.mxu0 0
        %3040 = vmatpush1.bf16.msra.mxu0 %v2283
        %3041 = vmatprep.subr.bf16.mxu0 0
        %3042 = vmatpush1.bf16.msra.mxu0 %v2282
        %3043 = vmatprep.subr.bf16.mxu0 0
        %3044 = vmatpush1.bf16.msra.mxu0 %v2281
        %3045 = vmatprep.subr.bf16.mxu0 0
        %3046 = vmatpush1.bf16.msra.mxu0 %v2280
        %3047 = vmatprep.subr.bf16.mxu0 0
        %3048 = vmatpush1.bf16.msra.mxu0 %v2279
        %3049 = vmatprep.subr.bf16.mxu0 0
        %3050 = vmatpush1.bf16.msra.mxu0 %v2278
        %3051 = vmatprep.subr.bf16.mxu0 0
        %3052 = vmatpush1.bf16.msra.mxu0 %v2277
        %3053 = vmatprep.subr.bf16.mxu0 0
        %3054 = vmatpush2.bf16.msra.mxu0 %v2292
        %3055 = vmatprep.subr.bf16.mxu0 0
        %3056 = vmatpush2.bf16.msra.mxu0 %v2291
        %3057 = vmatprep.subr.bf16.mxu0 0
        %3058 = vmatpush2.bf16.msra.mxu0 %v2290
        %3059 = vmatprep.subr.bf16.mxu0 0
        %3060 = vmatpush2.bf16.msra.mxu0 %v2289
        %3061 = vmatprep.subr.bf16.mxu0 0
        %3062 = vmatpush2.bf16.msra.mxu0 %v2288
        %3063 = vmatprep.subr.bf16.mxu0 0
        %3064 = vmatpush2.bf16.msra.mxu0 %v2287
        %3065 = vmatprep.subr.bf16.mxu0 0
        %3066 = vmatpush2.bf16.msra.mxu0 %v2286
        %3067 = vmatprep.subr.bf16.mxu0 0
        %3068 = vmatpush2.bf16.msra.mxu0 %v2285
        %3069 = vmatprep.mubr.bf16.mxu0 %v938
        %3070 = vmatmul.mubr.bf16.gmra.mxu0 %v936
        %v3071 = vpop.f32.mrf.mxu0
        %v3072 = vadd.f32 %v3032, %v3071
        %v3073 = vpop.f32.mrf.mxu0
        %v3074 = vpop.f32.mrf.mxu0
        %v3075 = vpop.f32.mrf.mxu0
        %3076 = vdwg.mxu0
        %3077 = vmatprep.subr.bf16.mxu0 0
        %3078 = vmatpush1.bf16.msra.mxu0 %v2300
        %3079 = vmatprep.subr.bf16.mxu0 0
        %3080 = vmatpush1.bf16.msra.mxu0 %v2299
        %3081 = vmatprep.subr.bf16.mxu0 0
        %3082 = vmatpush1.bf16.msra.mxu0 %v2298
        %3083 = vmatprep.subr.bf16.mxu0 0
        %3084 = vmatpush1.bf16.msra.mxu0 %v2297
        %3085 = vmatprep.subr.bf16.mxu0 0
        %3086 = vmatpush1.bf16.msra.mxu0 %v2296
        %3087 = vmatprep.subr.bf16.mxu0 0
        %3088 = vmatpush1.bf16.msra.mxu0 %v2295
        %3089 = vmatprep.subr.bf16.mxu0 0
        %3090 = vmatpush1.bf16.msra.mxu0 %v2294
        %3091 = vmatprep.subr.bf16.mxu0 0
        %3092 = vmatpush1.bf16.msra.mxu0 %v2293
        %3093 = vmatprep.subr.bf16.mxu0 0
        %3094 = vmatpush2.bf16.msra.mxu0 %v2308
        %3095 = vmatprep.subr.bf16.mxu0 0
        %3096 = vmatpush2.bf16.msra.mxu0 %v2307
        %3097 = vmatprep.subr.bf16.mxu0 0
        %3098 = vmatpush2.bf16.msra.mxu0 %v2306
        %3099 = vmatprep.subr.bf16.mxu0 0
        %3100 = vmatpush2.bf16.msra.mxu0 %v2305
        %3101 = vmatprep.subr.bf16.mxu0 0
        %3102 = vmatpush2.bf16.msra.mxu0 %v2304
        %3103 = vmatprep.subr.bf16.mxu0 0
        %3104 = vmatpush2.bf16.msra.mxu0 %v2303
        %3105 = vmatprep.subr.bf16.mxu0 0
        %3106 = vmatpush2.bf16.msra.mxu0 %v2302
        %3107 = vmatprep.subr.bf16.mxu0 0
        %3108 = vmatpush2.bf16.msra.mxu0 %v2301
        %3109 = vmatprep.mubr.bf16.mxu0 %v935
        %3110 = vmatmul.mubr.bf16.gmra.mxu0 %v921
        %v3111 = vpop.f32.mrf.mxu0
        %v3112 = vadd.f32 %v3072, %v3111
        %v3113 = vpop.f32.mrf.mxu0
        %v3114 = vpop.f32.mrf.mxu0
        %v3115 = vpop.f32.mrf.mxu0
        %3116 = vdwg.mxu0
        %3117 = vmatprep.subr.bf16.mxu0 0
        %3118 = vmatpush1.bf16.msra.mxu0 %v2316
        %3119 = vmatprep.subr.bf16.mxu0 0
        %3120 = vmatpush1.bf16.msra.mxu0 %v2315
        %3121 = vmatprep.subr.bf16.mxu0 0
        %3122 = vmatpush1.bf16.msra.mxu0 %v2314
        %3123 = vmatprep.subr.bf16.mxu0 0
        %3124 = vmatpush1.bf16.msra.mxu0 %v2313
        %3125 = vmatprep.subr.bf16.mxu0 0
        %3126 = vmatpush1.bf16.msra.mxu0 %v2312
        %3127 = vmatprep.subr.bf16.mxu0 0
        %3128 = vmatpush1.bf16.msra.mxu0 %v2311
        %3129 = vmatprep.subr.bf16.mxu0 0
        %3130 = vmatpush1.bf16.msra.mxu0 %v2310
        %3131 = vmatprep.subr.bf16.mxu0 0
        %3132 = vmatpush1.bf16.msra.mxu0 %v2309
        %3133 = vmatprep.subr.bf16.mxu0 0
        %3134 = vmatpush2.bf16.msra.mxu0 %v2324
        %3135 = vmatprep.subr.bf16.mxu0 0
        %3136 = vmatpush2.bf16.msra.mxu0 %v2323
        %3137 = vmatprep.subr.bf16.mxu0 0
        %3138 = vmatpush2.bf16.msra.mxu0 %v2322
        %3139 = vmatprep.subr.bf16.mxu0 0
        %3140 = vmatpush2.bf16.msra.mxu0 %v2321
        %3141 = vmatprep.subr.bf16.mxu0 0
        %3142 = vmatpush2.bf16.msra.mxu0 %v2320
        %3143 = vmatprep.subr.bf16.mxu0 0
        %3144 = vmatpush2.bf16.msra.mxu0 %v2319
        %3145 = vmatprep.subr.bf16.mxu0 0
        %3146 = vmatpush2.bf16.msra.mxu0 %v2318
        %3147 = vmatprep.subr.bf16.mxu0 0
        %3148 = vmatpush2.bf16.msra.mxu0 %v2317
        %3149 = vmatprep.mubr.bf16.mxu0 %v939
        %3150 = vmatmul.mubr.bf16.gmra.mxu0 %v937
        %v3151 = vpop.f32.mrf.mxu0
        %v3152 = vadd.f32 %v3112, %v3151
        %v3153 = vpop.f32.mrf.mxu0
        %v3154 = vpop.f32.mrf.mxu0
        %v3155 = vpop.f32.mrf.mxu0
        %3156 = vdwg.mxu0
        %3157 = vmatprep.subr.bf16.mxu0 0
        %3158 = vmatpush1.bf16.msra.mxu0 %v2332
        %3159 = vmatprep.subr.bf16.mxu0 0
        %3160 = vmatpush1.bf16.msra.mxu0 %v2331
        %3161 = vmatprep.subr.bf16.mxu0 0
        %3162 = vmatpush1.bf16.msra.mxu0 %v2330
        %3163 = vmatprep.subr.bf16.mxu0 0
        %3164 = vmatpush1.bf16.msra.mxu0 %v2329
        %3165 = vmatprep.subr.bf16.mxu0 0
        %3166 = vmatpush1.bf16.msra.mxu0 %v2328
        %3167 = vmatprep.subr.bf16.mxu0 0
        %3168 = vmatpush1.bf16.msra.mxu0 %v2327
        %3169 = vmatprep.subr.bf16.mxu0 0
        %3170 = vmatpush1.bf16.msra.mxu0 %v2326
        %3171 = vmatprep.subr.bf16.mxu0 0
        %3172 = vmatpush1.bf16.msra.mxu0 %v2325
        %3173 = vmatprep.subr.bf16.mxu0 0
        %3174 = vmatpush2.bf16.msra.mxu0 %v2340
        %3175 = vmatprep.subr.bf16.mxu0 0
        %3176 = vmatpush2.bf16.msra.mxu0 %v2339
        %3177 = vmatprep.subr.bf16.mxu0 0
        %3178 = vmatpush2.bf16.msra.mxu0 %v2338
        %3179 = vmatprep.subr.bf16.mxu0 0
        %3180 = vmatpush2.bf16.msra.mxu0 %v2337
        %3181 = vmatprep.subr.bf16.mxu0 0
        %3182 = vmatpush2.bf16.msra.mxu0 %v2336
        %3183 = vmatprep.subr.bf16.mxu0 0
        %3184 = vmatpush2.bf16.msra.mxu0 %v2335
        %3185 = vmatprep.subr.bf16.mxu0 0
        %3186 = vmatpush2.bf16.msra.mxu0 %v2334
        %3187 = vmatprep.subr.bf16.mxu0 0
        %3188 = vmatpush2.bf16.msra.mxu0 %v2333
        %3189 = vmatprep.mubr.bf16.mxu0 %v977
        %3190 = vmatmul.mubr.bf16.gmra.mxu0 %v963
        %v3191 = vpop.f32.mrf.mxu0
        %v3192 = vadd.f32 %v3152, %v3191
        %v3193 = vpop.f32.mrf.mxu0
        %v3194 = vpop.f32.mrf.mxu0
        %v3195 = vpop.f32.mrf.mxu0
        %3196 = vdwg.mxu0
        %3197 = vmatprep.subr.bf16.mxu0 0
        %3198 = vmatpush1.bf16.msra.mxu0 %v2348
        %3199 = vmatprep.subr.bf16.mxu0 0
        %3200 = vmatpush1.bf16.msra.mxu0 %v2347
        %3201 = vmatprep.subr.bf16.mxu0 0
        %3202 = vmatpush1.bf16.msra.mxu0 %v2346
        %3203 = vmatprep.subr.bf16.mxu0 0
        %3204 = vmatpush1.bf16.msra.mxu0 %v2345
        %3205 = vmatprep.subr.bf16.mxu0 0
        %3206 = vmatpush1.bf16.msra.mxu0 %v2344
        %3207 = vmatprep.subr.bf16.mxu0 0
        %3208 = vmatpush1.bf16.msra.mxu0 %v2343
        %3209 = vmatprep.subr.bf16.mxu0 0
        %3210 = vmatpush1.bf16.msra.mxu0 %v2342
        %3211 = vmatprep.subr.bf16.mxu0 0
        %3212 = vmatpush1.bf16.msra.mxu0 %v2341
        %3213 = vmatprep.subr.bf16.mxu0 0
        %3214 = vmatpush2.bf16.msra.mxu0 %v2356
        %3215 = vmatprep.subr.bf16.mxu0 0
        %3216 = vmatpush2.bf16.msra.mxu0 %v2355
        %3217 = vmatprep.subr.bf16.mxu0 0
        %3218 = vmatpush2.bf16.msra.mxu0 %v2354
        %3219 = vmatprep.subr.bf16.mxu0 0
        %3220 = vmatpush2.bf16.msra.mxu0 %v2353
        %3221 = vmatprep.subr.bf16.mxu0 0
        %3222 = vmatpush2.bf16.msra.mxu0 %v2352
        %3223 = vmatprep.subr.bf16.mxu0 0
        %3224 = vmatpush2.bf16.msra.mxu0 %v2351
        %3225 = vmatprep.subr.bf16.mxu0 0
        %3226 = vmatpush2.bf16.msra.mxu0 %v2350
        %3227 = vmatprep.subr.bf16.mxu0 0
        %3228 = vmatpush2.bf16.msra.mxu0 %v2349
        %3229 = vmatprep.mubr.bf16.mxu0 %v987
        %3230 = vmatmul.mubr.bf16.gmra.mxu0 %v985
        %v3231 = vpop.f32.mrf.mxu0
        %v3232 = vadd.f32 %v3192, %v3231
        %v3233 = vpop.f32.mrf.mxu0
        %v3234 = vpop.f32.mrf.mxu0
        %v3235 = vpop.f32.mrf.mxu0
        %3236 = vdwg.mxu0
        %3237 = vmatprep.subr.bf16.mxu0 0
        %3238 = vmatpush1.bf16.msra.mxu0 %v2364
        %3239 = vmatprep.subr.bf16.mxu0 0
        %3240 = vmatpush1.bf16.msra.mxu0 %v2363
        %3241 = vmatprep.subr.bf16.mxu0 0
        %3242 = vmatpush1.bf16.msra.mxu0 %v2362
        %3243 = vmatprep.subr.bf16.mxu0 0
        %3244 = vmatpush1.bf16.msra.mxu0 %v2361
        %3245 = vmatprep.subr.bf16.mxu0 0
        %3246 = vmatpush1.bf16.msra.mxu0 %v2360
        %3247 = vmatprep.subr.bf16.mxu0 0
        %3248 = vmatpush1.bf16.msra.mxu0 %v2359
        %3249 = vmatprep.subr.bf16.mxu0 0
        %3250 = vmatpush1.bf16.msra.mxu0 %v2358
        %3251 = vmatprep.subr.bf16.mxu0 0
        %3252 = vmatpush1.bf16.msra.mxu0 %v2357
        %3253 = vmatprep.subr.bf16.mxu0 0
        %3254 = vmatpush2.bf16.msra.mxu0 %v2372
        %3255 = vmatprep.subr.bf16.mxu0 0
        %3256 = vmatpush2.bf16.msra.mxu0 %v2371
        %3257 = vmatprep.subr.bf16.mxu0 0
        %3258 = vmatpush2.bf16.msra.mxu0 %v2370
        %3259 = vmatprep.subr.bf16.mxu0 0
        %3260 = vmatpush2.bf16.msra.mxu0 %v2369
        %3261 = vmatprep.subr.bf16.mxu0 0
        %3262 = vmatpush2.bf16.msra.mxu0 %v2368
        %3263 = vmatprep.subr.bf16.mxu0 0
        %3264 = vmatpush2.bf16.msra.mxu0 %v2367
        %3265 = vmatprep.subr.bf16.mxu0 0
        %3266 = vmatpush2.bf16.msra.mxu0 %v2366
        %3267 = vmatprep.subr.bf16.mxu0 0
        %3268 = vmatpush2.bf16.msra.mxu0 %v2365
        %3269 = vmatprep.mubr.bf16.mxu0 %v984
        %3270 = vmatmul.mubr.bf16.gmra.mxu0 %v970
        %v3271 = vpop.f32.mrf.mxu0
        %v3272 = vadd.f32 %v3232, %v3271
        %v3273 = vpop.f32.mrf.mxu0
        %v3274 = vpop.f32.mrf.mxu0
        %v3275 = vpop.f32.mrf.mxu0
        %3276 = vdwg.mxu0
        %3277 = vmatprep.subr.bf16.mxu0 0
        %3278 = vmatpush1.bf16.msra.mxu0 %v2380
        %3279 = vmatprep.subr.bf16.mxu0 0
        %3280 = vmatpush1.bf16.msra.mxu0 %v2379
        %3281 = vmatprep.subr.bf16.mxu0 0
        %3282 = vmatpush1.bf16.msra.mxu0 %v2378
        %3283 = vmatprep.subr.bf16.mxu0 0
        %3284 = vmatpush1.bf16.msra.mxu0 %v2377
        %3285 = vmatprep.subr.bf16.mxu0 0
        %3286 = vmatpush1.bf16.msra.mxu0 %v2376
        %3287 = vmatprep.subr.bf16.mxu0 0
        %3288 = vmatpush1.bf16.msra.mxu0 %v2375
        %3289 = vmatprep.subr.bf16.mxu0 0
        %3290 = vmatpush1.bf16.msra.mxu0 %v2374
        %3291 = vmatprep.subr.bf16.mxu0 0
        %3292 = vmatpush1.bf16.msra.mxu0 %v2373
        %3293 = vmatprep.subr.bf16.mxu0 0
        %3294 = vmatpush2.bf16.msra.mxu0 %v2388
        %3295 = vmatprep.subr.bf16.mxu0 0
        %3296 = vmatpush2.bf16.msra.mxu0 %v2387
        %3297 = vmatprep.subr.bf16.mxu0 0
        %3298 = vmatpush2.bf16.msra.mxu0 %v2386
        %3299 = vmatprep.subr.bf16.mxu0 0
        %3300 = vmatpush2.bf16.msra.mxu0 %v2385
        %3301 = vmatprep.subr.bf16.mxu0 0
        %3302 = vmatpush2.bf16.msra.mxu0 %v2384
        %3303 = vmatprep.subr.bf16.mxu0 0
        %3304 = vmatpush2.bf16.msra.mxu0 %v2383
        %3305 = vmatprep.subr.bf16.mxu0 0
        %3306 = vmatpush2.bf16.msra.mxu0 %v2382
        %3307 = vmatprep.subr.bf16.mxu0 0
        %3308 = vmatpush2.bf16.msra.mxu0 %v2381
        %3309 = vmatprep.mubr.bf16.mxu0 %v988
        %3310 = vmatmul.mubr.bf16.gmra.mxu0 %v986
        %v3311 = vpop.f32.mrf.mxu0
        %v3312 = vadd.f32 %v3272, %v3311
        %v3313 = vpop.f32.mrf.mxu0
        %v3314 = vpop.f32.mrf.mxu0
        %v3315 = vpop.f32.mrf.mxu0
        %3316 = vdwg.mxu0
        %3317 = vmatprep.subr.bf16.mxu0 0
        %3318 = vmatpush1.bf16.msra.mxu0 %v2396
        %3319 = vmatprep.subr.bf16.mxu0 0
        %3320 = vmatpush1.bf16.msra.mxu0 %v2395
        %3321 = vmatprep.subr.bf16.mxu0 0
        %3322 = vmatpush1.bf16.msra.mxu0 %v2394
        %3323 = vmatprep.subr.bf16.mxu0 0
        %3324 = vmatpush1.bf16.msra.mxu0 %v2393
        %3325 = vmatprep.subr.bf16.mxu0 0
        %3326 = vmatpush1.bf16.msra.mxu0 %v2392
        %3327 = vmatprep.subr.bf16.mxu0 0
        %3328 = vmatpush1.bf16.msra.mxu0 %v2391
        %3329 = vmatprep.subr.bf16.mxu0 0
        %3330 = vmatpush1.bf16.msra.mxu0 %v2390
        %3331 = vmatprep.subr.bf16.mxu0 0
        %3332 = vmatpush1.bf16.msra.mxu0 %v2389
        %3333 = vmatprep.subr.bf16.mxu0 0
        %3334 = vmatpush2.bf16.msra.mxu0 %v2404
        %3335 = vmatprep.subr.bf16.mxu0 0
        %3336 = vmatpush2.bf16.msra.mxu0 %v2403
        %3337 = vmatprep.subr.bf16.mxu0 0
        %3338 = vmatpush2.bf16.msra.mxu0 %v2402
        %3339 = vmatprep.subr.bf16.mxu0 0
        %3340 = vmatpush2.bf16.msra.mxu0 %v2401
        %3341 = vmatprep.subr.bf16.mxu0 0
        %3342 = vmatpush2.bf16.msra.mxu0 %v2400
        %3343 = vmatprep.subr.bf16.mxu0 0
        %3344 = vmatpush2.bf16.msra.mxu0 %v2399
        %3345 = vmatprep.subr.bf16.mxu0 0
        %3346 = vmatpush2.bf16.msra.mxu0 %v2398
        %3347 = vmatprep.subr.bf16.mxu0 0
        %3348 = vmatpush2.bf16.msra.mxu0 %v2397
        %3349 = vmatprep.mubr.bf16.mxu0 %v1010
        %3350 = vmatmul.mubr.bf16.gmra.mxu0 %v1003
        %v3351 = vpop.f32.mrf.mxu0
        %v3352 = vadd.f32 %v3312, %v3351
        %v3353 = vpop.f32.mrf.mxu0
        %v3354 = vpop.f32.mrf.mxu0
        %v3355 = vpop.f32.mrf.mxu0
        %3356 = vdwg.mxu0
        %v3357 = vadd.f32 %v238, %v3352
        %3358 = vst [vmem:[#allocation2] sm:$0x3] %v3357
        %p3359 = scmp.eq.s32.totalorder %s17, 3
        // Predicated region
        $region45: #{gender_classifier_forward.5} parent=39 // pred_check
          %p3360 = pneg %p3359
        $region46: #{gender_classifier_forward.5} parent=39 // pred_check_branch
          %3362 = sbr.rel (%p3360) target = $region48
        $region47: #{gender_classifier_forward.5} parent=39 // pred_region
          %v3363 = vld [vmem:[#allocation2] sm:$0x3]
          %v3364 = vld [vmem:[%s2] sm:$0x1]
          %v3366 = vlaneseq
          %v3367 = vshrl.u32 %v3366, 7
          %v3368 = vsub.s32 0, %v3367
          %v3369 = vrot.slane %v3364, %v3368
          %v3371 = vadd.f32 %v3363, %v3369
          %v3372 = vmax.f32 %v3371, 0.0
          %v3373 = vpack.c.bf16 %v3372, %v3372
          %v3374 = vld [vmem:[%s3] sm:$0xf]
          %v3375 = vld [vmem:[%s3 + $0x4] sm:$0xf]
          %v3376 = vld [vmem:[%s3 + $0x8] sm:$0xf]
          %v3377 = vld [vmem:[%s3 + $0xc] sm:$0xf]
          %v3378 = vld [vmem:[%s3 + $0x10] sm:$0xf]
          %v3379 = vld [vmem:[%s3 + $0x14] sm:$0xf]
          %v3380 = vld [vmem:[%s3 + $0x18] sm:$0xf]
          %v3381 = vld [vmem:[%s3 + $0x1c] sm:$0xf]
          %v3382 = vld [vmem:[%s3 + $0x20] sm:$0xf]
          %v3383 = vld [vmem:[%s3 + $0x24] sm:$0xf]
          %v3384 = vld [vmem:[%s3 + $0x28] sm:$0xf]
          %v3385 = vld [vmem:[%s3 + $0x2c] sm:$0xf]
          %v3386 = vld [vmem:[%s3 + $0x30] sm:$0xf]
          %v3387 = vld [vmem:[%s3 + $0x34] sm:$0xf]
          %v3388 = vld [vmem:[%s3 + $0x38] sm:$0xf]
          %v3389 = vld [vmem:[%s3 + $0x3c] sm:$0xf]
          %v3390 = vld [vmem:[%s4] sm:$0x1]
          %v3392 = vlaneseq
          %v3393 = vshrl.u32 %v3392, 7
          %v3394 = vsub.s32 0, %v3393
          %v3395 = vrot.slane %v3390, %v3394
          %v3413 = vunpack.c.l.b16 %v3374
          %v3414 = vunpack.c.l.b16 %v3375
          %v3415 = vunpack.c.l.b16 %v3376
          %v3416 = vunpack.c.l.b16 %v3377
          %v3417 = vunpack.c.l.b16 %v3378
          %v3418 = vunpack.c.l.b16 %v3379
          %v3419 = vunpack.c.l.b16 %v3380
          %v3420 = vunpack.c.l.b16 %v3381
          %v3421 = vunpack.c.l.b16 %v3382
          %v3422 = vunpack.c.l.b16 %v3383
          %v3423 = vunpack.c.l.b16 %v3384
          %v3424 = vunpack.c.l.b16 %v3385
          %v3425 = vunpack.c.l.b16 %v3386
          %v3426 = vunpack.c.l.b16 %v3387
          %v3427 = vunpack.c.l.b16 %v3388
          %v3428 = vunpack.c.l.b16 %v3389
          %v3429 = vpack.c.b16 %v3414, %v3413
          %v3430 = vpack.c.b16 %v3416, %v3415
          %v3431 = vpack.c.b16 %v3418, %v3417
          %v3432 = vpack.c.b16 %v3420, %v3419
          %v3433 = vpack.c.b16 %v3422, %v3421
          %v3434 = vpack.c.b16 %v3424, %v3423
          %v3435 = vpack.c.b16 %v3426, %v3425
          %v3436 = vpack.c.b16 %v3428, %v3427
          %3445 = vmatprep.subr.bf16.mxu0 0
          %3446 = vmatpush1.bf16.msra.mxu0 %v3436
          %3447 = vmatprep.subr.bf16.mxu0 0
          %3448 = vmatpush1.bf16.msra.mxu0 %v3435
          %3449 = vmatprep.subr.bf16.mxu0 0
          %3450 = vmatpush1.bf16.msra.mxu0 %v3434
          %3451 = vmatprep.subr.bf16.mxu0 0
          %3452 = vmatpush1.bf16.msra.mxu0 %v3433
          %3453 = vmatprep.subr.bf16.mxu0 0
          %3454 = vmatpush1.bf16.msra.mxu0 %v3432
          %3455 = vmatprep.subr.bf16.mxu0 0
          %3456 = vmatpush1.bf16.msra.mxu0 %v3431
          %3457 = vmatprep.subr.bf16.mxu0 0
          %3458 = vmatpush1.bf16.msra.mxu0 %v3430
          %3459 = vmatprep.subr.bf16.mxu0 0
          %3460 = vmatpush1.bf16.msra.mxu0 %v3429
          %3461 = vmatprep.subr.bf16.mxu0 0
          %3462 = vmatpush2.bf16.msra.mxu0 0
          %3463 = vmatprep.subr.bf16.mxu0 0
          %3464 = vmatpush2.bf16.msra.mxu0 0
          %3465 = vmatprep.subr.bf16.mxu0 0
          %3466 = vmatpush2.bf16.msra.mxu0 0
          %3467 = vmatprep.subr.bf16.mxu0 0
          %3468 = vmatpush2.bf16.msra.mxu0 0
          %3469 = vmatprep.subr.bf16.mxu0 0
          %3470 = vmatpush2.bf16.msra.mxu0 0
          %3471 = vmatprep.subr.bf16.mxu0 0
          %3472 = vmatpush2.bf16.msra.mxu0 0
          %3473 = vmatprep.subr.bf16.mxu0 0
          %3474 = vmatpush2.bf16.msra.mxu0 0
          %3475 = vmatprep.subr.bf16.mxu0 0
          %3476 = vmatpush2.bf16.msra.mxu0 0
          %3477 = vmatprep.mubr.bf16.mxu0 0
          %3478 = vmatmul.mubr.bf16.gmra.mxu0 %v3373
          %v3479 = vpop.f32.mrf.mxu0
          %v3480 = vadd.f32 %v3395, %v3479
          %v3481 = vpop.f32.mrf.mxu0
          %v3482 = vpop.f32.mrf.mxu0
          %v3483 = vpop.f32.mrf.mxu0
          %3484 = vdwg.mxu0
          %vm3485 = vcmask 1041408
          %v3486 = vsel %vm3485, %v3480, -inf
          %3487 = vmax.xlane.f32.xlu0 %v3486
          %v3488 = vpop.xlane.xlu0 %3487
          %v3489 = vsub.f32 %v3480, %v3488
          %v3490 = vmul.f32 %v3489, 1.442695
          %v3491 = vpow.pop %v3490
          %v3492 = vsel %vm3485, %v3491, 0.0
          %3493 = vadd.xlane.f32.xlu0 %v3492
          %v3494 = vpop.xlane.xlu0 %3493
          %v3495 = vrcp.pop %v3494
          %v3496 = vmul.f32 %v3491, %v3495
          %3497 = vst [vmem:[#allocation3] sm:$0x3] %v3496
        $region48: #{gender_classifier_forward.5} parent=39 // pred_fallthru
          _
        // Predicated region
        $region49: #{gender_classifier_forward.5} parent=39 // pred_check
          %p3498 = pneg %p145
        $region50: #{gender_classifier_forward.5} parent=39 // pred_check_branch
          %3500 = sbr.rel (%p3498) target = $region52
        $region51: #{gender_classifier_forward.5} parent=39 // pred_region
          %s3502 = ssub.s32 32, 32
          %3503 = vsyncadd [#allocation4], %s3502
          %s3505 = sshll.u32 [#allocation3], 4
          %s3506 = int_to_ptr.vmem [resolvable:$true] %s3505
          %3508 = dma.vmem_to_hbm [thread:$0]  %s3506, 32, %s5, [#allocation4]
        $region52: #{gender_classifier_forward.5} parent=39 // pred_fallthru
          _
        // Predicated region
        $region53: #{gender_classifier_forward.5} parent=39 // pred_check
          %p3509 = pneg %p145
        $region54: #{gender_classifier_forward.5} parent=39 // pred_check_branch
          %3511 = sbr.rel (%p3509) target = $region56
        $region55: #{gender_classifier_forward.5} parent=39 // pred_region
          %3512 = dma.done [#allocation4], 32
        $region56: #{gender_classifier_forward.5} parent=39 // pred_fallthru
          _
      $region40: #{gender_classifier_forward.5} parent=5 // pred_fallthru
        _
      %p3513 = scmp.le.s32.totalorder 2, %s12
      // Predicated region
      $region57: #{gender_classifier_forward.5} parent=5 // pred_check
        %p3514 = pneg %p3513
      $region58: #{gender_classifier_forward.5} parent=5 // pred_check_branch
        %3516 = sbr.rel (%p3514) target = $region60
      $region59: #{gender_classifier_forward.5} parent=5 // pred_region
        %s3517 = ssub.s32 %s12, 2
      $region60: #{gender_classifier_forward.5} parent=5 // pred_fallthru
        _
    $region6: #{gender_classifier_forward.5} parent=1 // loop_footer
      %s16 = sadd.s32 1, %s12
    $region7: #{gender_classifier_forward.5} parent=1 // loop_footer_branch
      %11 = sbr.rel target = $region3
    $region8: #{gender_classifier_forward.5} parent=1 // loop_exit
      _
    %3518 = vsyncpa [#allocation4], 1
    %s3519 = scalar_lea.sflag [#allocation4], 1
    %3520 = vsyncpa %s3519, 1

</llo_original>
